<compile_context>
chip_gen: v6e
topology: v6e:2x2x1
jax: 0.10.0
libtpu: 0.0.40
codegen_flags: <defaults>
</compile_context>

<pallas_src>
import functools

import jax
import jax.numpy as jnp
from jax.experimental import pallas as pl
from jax.experimental.pallas import tpu as pltpu

D = 8
W = 256
INPUT_CH = 3
INPUT_CH_VIEWS = 3
OUTPUT_CH = 4
OUT_PAD = 128            # MXU-aligned width for the output matmul (store is narrow)
SKIPS = (4,)             # skip concat happens *after* layer index 4


def nerf_kernel(x_ref, wp_ref, wh_ref, b_ref, wo_ref, bo_ref, o_ref):
    # x_ref : (TM, 6)   f32   pts in cols [0:3]; view cols unused (use_viewdirs=False)
    # wp_ref: (2, 3, 256) f32  [layer-0 weight, pts-half of the skip-layer weight]
    # wh_ref: (7, 256, 256) bf16  hidden weights: layers 1..4, h-half of 5, 6, 7
    # b_ref : (8, 256)  f32   biases for layers 0..7
    # wo_ref: (256, 128) bf16  output weight, zero-padded to 128 lanes (cols [0:4] real)
    # bo_ref: (1, 128)  f32
    # o_ref : (TM, 4)   f32
    x = x_ref[...]
    wp = wp_ref[...]
    b = b_ref[...]

    # K=3 pts projections on the VPU in f32 (3 broadcast MACs each).  On the
    # MXU a (TM,3)x(3,256) matmul rounds K up to a full K-tile; the kernel is
    # MXU-bound with VALU slack, so this is ~free filler and keeps the raw
    # coordinates in f32 (no bf16 loss on the inputs).
    def pts_proj(k):
        return (x[:, 0:1] * wp[k, 0:1, :]
                + x[:, 1:2] * wp[k, 1:2, :]
                + x[:, 2:3] * wp[k, 2:3, :])

    skip_pts = pts_proj(1)                         # no dependency on layers 1..4
    h = jnp.maximum(pts_proj(0) + b[0:1], 0.0)     # layer 0: Linear(3,256) + relu

    # layers 1..4: Linear(256, 256) + relu (bf16 operands, f32 accumulation)
    for i in range(4):
        h = jnp.dot(h.astype(jnp.bfloat16), wh_ref[i],
                    preferred_element_type=jnp.float32) + b[i + 1:i + 2]
        h = jnp.maximum(h, 0.0)

    # skip after layer 4: concat([pts, h]) @ W5 == pts@W5[:3,:] + h@W5[3:,:]
    h = (jnp.dot(h.astype(jnp.bfloat16), wh_ref[4],
                 preferred_element_type=jnp.float32) + skip_pts + b[5:6])
    h = jnp.maximum(h, 0.0)

    # layers 6, 7: Linear(256, 256) + relu
    for i in (5, 6):
        h = jnp.dot(h.astype(jnp.bfloat16), wh_ref[i],
                    preferred_element_type=jnp.float32) + b[i + 1:i + 2]
        h = jnp.maximum(h, 0.0)

    # output_linear: matmul stays 128 lanes wide (MXU-aligned); store only the
    # 4 real channels (narrow lane store is hidden by store-slot slack).
    out = jnp.dot(h.astype(jnp.bfloat16), wo_ref[...],
                  preferred_element_type=jnp.float32) + bo_ref[...]
    o_ref[...] = out[:, :OUTPUT_CH]


def init_params(key):
    """Deterministic synthetic f32 parameters; weights stored as (in, out)."""
    in_dims = [INPUT_CH] + [W + INPUT_CH if i in SKIPS else W for i in range(D - 1)]
    keys = jax.random.split(key, D + 1)
    params = []
    for i, d_in in enumerate(in_dims):
        w = jax.random.normal(keys[i], (d_in, W), jnp.float32) / jnp.sqrt(d_in)
        b = 0.01 * jax.random.normal(jax.random.fold_in(keys[i], 1), (W,), jnp.float32)
        params.append((w, b))
    wo = jax.random.normal(keys[D], (W, OUTPUT_CH), jnp.float32) / jnp.sqrt(W)
    bo = 0.01 * jax.random.normal(jax.random.fold_in(keys[D], 1), (OUTPUT_CH,), jnp.float32)
    params.append((wo, bo))
    return params


def pack_params_for_kernel(params):
    """Pack/cast params into the 5 arrays the kernel consumes."""
    w0, _ = params[0]
    w5, _ = params[5]
    # Small (3,256) weights: layer 0 and the pts-part of the skip layer.
    # Kept f32 -> consumed on the VPU (accuracy + free).
    wp = jnp.stack([w0, w5[:INPUT_CH, :]]).astype(jnp.float32)            # (2,3,256)
    # Seven (256,256) hidden weights: layers 1..4, h-part of layer 5, 6, 7.
    wh = jnp.stack([params[1][0], params[2][0], params[3][0], params[4][0],
                    w5[INPUT_CH:, :], params[6][0], params[7][0]]
                   ).astype(jnp.bfloat16)                                  # (7,256,256)
    # Biases for layers 0..7, kept f32.
    b = jnp.stack([params[i][1] for i in range(D)]).astype(jnp.float32)    # (8,256)
    # Output weight/bias zero-padded to 128 lanes for an MXU-aligned matmul;
    # only the first 4 lanes are stored by the kernel.
    wo, bo = params[D]
    wo_pad = (jnp.zeros((W, OUT_PAD), jnp.float32)
              .at[:, :OUTPUT_CH].set(wo).astype(jnp.bfloat16))             # (256,128)
    bo_pad = jnp.zeros((1, OUT_PAD), jnp.float32).at[0, :OUTPUT_CH].set(bo)  # (1,128)
    return wp, wh, b, wo_pad, bo_pad


@functools.partial(jax.jit, static_argnames=("tm",))
def nerf_forward(x, wp, wh, b, wo, bo, *, tm=2048):
    n = x.shape[0]
    # Cap the tile for small N so the grid keeps >= 2 steps when possible
    # (v7x has 2 TCs/chip); tile stays a multiple of 512 for full MXU M-tiles.
    tile = tm
    while tile > 512 and n <= tile:
        tile //= 2
    n_pad = ((n + tile - 1) // tile) * tile
    if n_pad != n:
        # Padded rows compute bias-only garbage on zero inputs; sliced off below.
        x = jnp.pad(x, ((0, n_pad - n), (0, 0)))

    in_specs = [
        pl.BlockSpec((tile, INPUT_CH + INPUT_CH_VIEWS), lambda i: (i, 0)),
        pl.BlockSpec((2, INPUT_CH, W), lambda i: (0, 0, 0)),
        pl.BlockSpec((7, W, W), lambda i: (0, 0, 0)),
        pl.BlockSpec((D, W), lambda i: (0, 0)),
        pl.BlockSpec((W, OUT_PAD), lambda i: (0, 0)),
        pl.BlockSpec((1, OUT_PAD), lambda i: (0, 0)),
    ]
    out = pl.pallas_call(
        nerf_kernel,
        out_shape=jax.ShapeDtypeStruct((n_pad, OUTPUT_CH), jnp.float32),
        grid=(n_pad // tile,),
        in_specs=in_specs,
        out_specs=pl.BlockSpec((tile, OUTPUT_CH), lambda i: (i, 0)),
        compiler_params=pltpu.CompilerParams(
            dimension_semantics=("parallel",),
            vmem_limit_bytes=24 * 1024 * 1024,
        ),
    )(x, wp, wh, b, wo, bo)
    return out[:n]        # row slice only; channels are already narrow


def nerf_reference_f32(x, params):
    """Pure-JAX f32 mirror of the PyTorch forward (use_viewdirs=False path)."""
    input_pts = x[:, :INPUT_CH]
    h = input_pts
    for i in range(D):
        w, b = params[i]
        h = jnp.maximum(
            jnp.dot(h, w, precision=jax.lax.Precision.HIGHEST) + b, 0.0)
        if i in SKIPS:
            h = jnp.concatenate([input_pts, h], axis=-1)
    wo, bo = params[D]
    return jnp.dot(h, wo, precision=jax.lax.Precision.HIGHEST) + bo


def nerf_reference_matched(x, params):
    """Reference mirroring the kernel's numerics: f32 VPU pts projections,
    bf16-operand / f32-accumulate hidden matmuls."""
    def mm(a, w):
        return jnp.dot(a.astype(jnp.bfloat16), w.astype(jnp.bfloat16),
                       preferred_element_type=jnp.float32)
    pts = x[:, :INPUT_CH]

    def pts_proj(w):   # f32 broadcast MAC, like the kernel's VPU path
        return (pts[:, 0:1] * w[0:1, :] + pts[:, 1:2] * w[1:2, :]
                + pts[:, 2:3] * w[2:3, :])

    w0, b0 = params[0]
    h = jnp.maximum(pts_proj(w0) + b0, 0.0)
    for i in range(1, 5):
        w, bi = params[i]
        h = jnp.maximum(mm(h, w) + bi, 0.0)
    w5, b5 = params[5]
    h = jnp.maximum(mm(h, w5[INPUT_CH:]) + pts_proj(w5[:INPUT_CH]) + b5, 0.0)
    for i in (6, 7):
        w, bi = params[i]
        h = jnp.maximum(mm(h, w) + bi, 0.0)
    wo, bo = params[D]
    return mm(h, wo) + bo


if __name__ == "__main__":
    key = jax.random.PRNGKey(0)
    k_x, k_p = jax.random.split(key)

    # Deliberately not a multiple of the tile -> exercises padding and the
    # adaptive tile cap (tile drops to 512, grid has 2 steps).
    N = 1000
    x = jax.random.normal(k_x, (N, INPUT_CH + INPUT_CH_VIEWS), jnp.float32)

    params = init_params(k_p)
    wp, wh, b, wo, bo = pack_params_for_kernel(params)

    out = nerf_forward(x, wp, wh, b, wo, bo)
    out = jax.block_until_ready(out)
    assert out.shape == (N, OUTPUT_CH)

    # Structural check: matches a pure-JAX model with the identical
    # f32-pts / bf16-hidden / f32-accumulation scheme.
    ref_matched = nerf_reference_matched(x, params)
    assert jnp.allclose(out, ref_matched, rtol=2e-2, atol=2e-2), \
        "mismatch vs matched-precision reference"

    # Semantic sanity check vs the full-f32 PyTorch-equivalent forward
    # (loose tolerance accounts for bf16 matmul operands through the hidden stack).
    ref_f32 = nerf_reference_f32(x, params)
    assert jnp.allclose(out, ref_f32, rtol=5e-2, atol=5e-2), \
        "mismatch vs f32 reference"

    print("KERNEL_OK")
</pallas_src>

<mosaic_0001>
module attributes {stable_mosaic.version = 11 : i64} {
  func.func @nerf_kernel(%arg0: i32, %arg1: memref<512x6xf32, #tpu.memory_space<vmem>>, %arg2: memref<2x3x256xf32, #tpu.memory_space<vmem>>, %arg3: memref<7x256x256xbf16, #tpu.memory_space<vmem>>, %arg4: memref<8x256xf32, #tpu.memory_space<vmem>>, %arg5: memref<256x128xbf16, #tpu.memory_space<vmem>>, %arg6: memref<1x128xf32, #tpu.memory_space<vmem>>, %arg7: memref<512x4xf32, #tpu.memory_space<vmem>>) attributes {dimension_semantics = [#tpu.dimension_semantics<parallel>], iteration_bounds = array<i64: 2>, scalar_prefetch = 0 : i64, scratch_operands = 0 : i64, tpu.core_type = #tpu.core_type<tc>, window_params = [{transform_indices = @transform_0, window_bounds = array<i64: 512, 6>}, {pipeline_mode = #tpu.pipeline_mode<synchronous>, transform_indices = @transform_1, window_bounds = array<i64: 2, 3, 256>}, {pipeline_mode = #tpu.pipeline_mode<synchronous>, transform_indices = @transform_2, window_bounds = array<i64: 7, 256, 256>}, {pipeline_mode = #tpu.pipeline_mode<synchronous>, transform_indices = @transform_3, window_bounds = array<i64: 8, 256>}, {pipeline_mode = #tpu.pipeline_mode<synchronous>, transform_indices = @transform_4, window_bounds = array<i64: 256, 128>}, {pipeline_mode = #tpu.pipeline_mode<synchronous>, transform_indices = @transform_5, window_bounds = array<i64: 1, 128>}, {transform_indices = @transform_6, window_bounds = array<i64: 512, 4>}]} {
    %c0 = arith.constant 0 : index
    %c0_0 = arith.constant 0 : index
    %0 = vector.load %arg1[%c0, %c0_0] : memref<512x6xf32, #tpu.memory_space<vmem>>, vector<512x6xf32>
    %c0_1 = arith.constant 0 : index
    %c0_2 = arith.constant 0 : index
    %c0_3 = arith.constant 0 : index
    %1 = vector.load %arg2[%c0_1, %c0_2, %c0_3] : memref<2x3x256xf32, #tpu.memory_space<vmem>>, vector<2x3x256xf32>
    %c0_4 = arith.constant 0 : index
    %c0_5 = arith.constant 0 : index
    %2 = vector.load %arg4[%c0_4, %c0_5] : memref<8x256xf32, #tpu.memory_space<vmem>>, vector<8x256xf32>
    %3 = vector.extract_strided_slice %0 {offsets = [0, 0], sizes = [512, 1], strides = [1, 1]} : vector<512x6xf32> to vector<512x1xf32>
    %4 = vector.extract_strided_slice %1 {offsets = [1, 0, 0], sizes = [1, 1, 256], strides = [1, 1, 1]} : vector<2x3x256xf32> to vector<1x1x256xf32>
    %5 = vector.shape_cast %4 : vector<1x1x256xf32> to vector<1x256xf32>
    %6 = vector.broadcast %3 : vector<512x1xf32> to vector<512x256xf32>
    %7 = vector.broadcast %5 : vector<1x256xf32> to vector<512x256xf32>
    %8 = arith.mulf %6, %7 : vector<512x256xf32>
    %9 = vector.extract_strided_slice %0 {offsets = [0, 1], sizes = [512, 1], strides = [1, 1]} : vector<512x6xf32> to vector<512x1xf32>
    %10 = vector.extract_strided_slice %1 {offsets = [1, 1, 0], sizes = [1, 1, 256], strides = [1, 1, 1]} : vector<2x3x256xf32> to vector<1x1x256xf32>
    %11 = vector.shape_cast %10 : vector<1x1x256xf32> to vector<1x256xf32>
    %12 = vector.broadcast %9 : vector<512x1xf32> to vector<512x256xf32>
    %13 = vector.broadcast %11 : vector<1x256xf32> to vector<512x256xf32>
    %14 = arith.mulf %12, %13 : vector<512x256xf32>
    %15 = arith.addf %8, %14 : vector<512x256xf32>
    %16 = vector.extract_strided_slice %0 {offsets = [0, 2], sizes = [512, 1], strides = [1, 1]} : vector<512x6xf32> to vector<512x1xf32>
    %17 = vector.extract_strided_slice %1 {offsets = [1, 2, 0], sizes = [1, 1, 256], strides = [1, 1, 1]} : vector<2x3x256xf32> to vector<1x1x256xf32>
    %18 = vector.shape_cast %17 : vector<1x1x256xf32> to vector<1x256xf32>
    %19 = vector.broadcast %16 : vector<512x1xf32> to vector<512x256xf32>
    %20 = vector.broadcast %18 : vector<1x256xf32> to vector<512x256xf32>
    %21 = arith.mulf %19, %20 : vector<512x256xf32>
    %22 = arith.addf %15, %21 : vector<512x256xf32>
    %23 = vector.extract_strided_slice %0 {offsets = [0, 0], sizes = [512, 1], strides = [1, 1]} : vector<512x6xf32> to vector<512x1xf32>
    %24 = vector.extract_strided_slice %1 {offsets = [0, 0, 0], sizes = [1, 1, 256], strides = [1, 1, 1]} : vector<2x3x256xf32> to vector<1x1x256xf32>
    %25 = vector.shape_cast %24 : vector<1x1x256xf32> to vector<1x256xf32>
    %26 = vector.broadcast %23 : vector<512x1xf32> to vector<512x256xf32>
    %27 = vector.broadcast %25 : vector<1x256xf32> to vector<512x256xf32>
    %28 = arith.mulf %26, %27 : vector<512x256xf32>
    %29 = vector.extract_strided_slice %0 {offsets = [0, 1], sizes = [512, 1], strides = [1, 1]} : vector<512x6xf32> to vector<512x1xf32>
    %30 = vector.extract_strided_slice %1 {offsets = [0, 1, 0], sizes = [1, 1, 256], strides = [1, 1, 1]} : vector<2x3x256xf32> to vector<1x1x256xf32>
    %31 = vector.shape_cast %30 : vector<1x1x256xf32> to vector<1x256xf32>
    %32 = vector.broadcast %29 : vector<512x1xf32> to vector<512x256xf32>
    %33 = vector.broadcast %31 : vector<1x256xf32> to vector<512x256xf32>
    %34 = arith.mulf %32, %33 : vector<512x256xf32>
    %35 = arith.addf %28, %34 : vector<512x256xf32>
    %36 = vector.extract_strided_slice %0 {offsets = [0, 2], sizes = [512, 1], strides = [1, 1]} : vector<512x6xf32> to vector<512x1xf32>
    %37 = vector.extract_strided_slice %1 {offsets = [0, 2, 0], sizes = [1, 1, 256], strides = [1, 1, 1]} : vector<2x3x256xf32> to vector<1x1x256xf32>
    %38 = vector.shape_cast %37 : vector<1x1x256xf32> to vector<1x256xf32>
    %39 = vector.broadcast %36 : vector<512x1xf32> to vector<512x256xf32>
    %40 = vector.broadcast %38 : vector<1x256xf32> to vector<512x256xf32>
    %41 = arith.mulf %39, %40 : vector<512x256xf32>
    %42 = arith.addf %35, %41 : vector<512x256xf32>
    %43 = vector.extract_strided_slice %2 {offsets = [0, 0], sizes = [1, 256], strides = [1, 1]} : vector<8x256xf32> to vector<1x256xf32>
    %44 = vector.broadcast %43 : vector<1x256xf32> to vector<512x256xf32>
    %45 = arith.addf %42, %44 : vector<512x256xf32>
    %cst = arith.constant 0.000000e+00 : f32
    %46 = vector.broadcast %cst : f32 to vector<512x256xf32>
    %47 = arith.maximumf %45, %46 : vector<512x256xf32>
    %48 = arith.truncf %47 : vector<512x256xf32> to vector<512x256xbf16>
    %c0_6 = arith.constant 0 : index
    %c0_7 = arith.constant 0 : index
    %c0_8 = arith.constant 0 : index
    %49 = vector.load %arg3[%c0_6, %c0_7, %c0_8] : memref<7x256x256xbf16, #tpu.memory_space<vmem>>, vector<1x256x256xbf16>
    %50 = vector.shape_cast %49 : vector<1x256x256xbf16> to vector<256x256xbf16>
    %cst_9 = arith.constant dense<0.000000e+00> : vector<512x256xf32>
    %51 = tpu.matmul %48, %50, %cst_9 {dimension_numbers = #tpu.dot_dimension_numbers<[1], [0], [0], [1], [0, 0, 1, 1], [], []>} : vector<512x256xbf16>, vector<256x256xbf16>, vector<512x256xf32> -> vector<512x256xf32>
    %52 = vector.extract_strided_slice %2 {offsets = [1, 0], sizes = [1, 256], strides = [1, 1]} : vector<8x256xf32> to vector<1x256xf32>
    %53 = vector.broadcast %52 : vector<1x256xf32> to vector<512x256xf32>
    %54 = arith.addf %51, %53 : vector<512x256xf32>
    %cst_10 = arith.constant 0.000000e+00 : f32
    %55 = vector.broadcast %cst_10 : f32 to vector<512x256xf32>
    %56 = arith.maximumf %54, %55 : vector<512x256xf32>
    %57 = arith.truncf %56 : vector<512x256xf32> to vector<512x256xbf16>
    %c1 = arith.constant 1 : index
    %c0_11 = arith.constant 0 : index
    %c0_12 = arith.constant 0 : index
    %58 = vector.load %arg3[%c1, %c0_11, %c0_12] : memref<7x256x256xbf16, #tpu.memory_space<vmem>>, vector<1x256x256xbf16>
    %59 = vector.shape_cast %58 : vector<1x256x256xbf16> to vector<256x256xbf16>
    %cst_13 = arith.constant dense<0.000000e+00> : vector<512x256xf32>
    %60 = tpu.matmul %57, %59, %cst_13 {dimension_numbers = #tpu.dot_dimension_numbers<[1], [0], [0], [1], [0, 0, 1, 1], [], []>} : vector<512x256xbf16>, vector<256x256xbf16>, vector<512x256xf32> -> vector<512x256xf32>
    %61 = vector.extract_strided_slice %2 {offsets = [2, 0], sizes = [1, 256], strides = [1, 1]} : vector<8x256xf32> to vector<1x256xf32>
    %62 = vector.broadcast %61 : vector<1x256xf32> to vector<512x256xf32>
    %63 = arith.addf %60, %62 : vector<512x256xf32>
    %cst_14 = arith.constant 0.000000e+00 : f32
    %64 = vector.broadcast %cst_14 : f32 to vector<512x256xf32>
    %65 = arith.maximumf %63, %64 : vector<512x256xf32>
    %66 = arith.truncf %65 : vector<512x256xf32> to vector<512x256xbf16>
    %c2 = arith.constant 2 : index
    %c0_15 = arith.constant 0 : index
    %c0_16 = arith.constant 0 : index
    %67 = vector.load %arg3[%c2, %c0_15, %c0_16] : memref<7x256x256xbf16, #tpu.memory_space<vmem>>, vector<1x256x256xbf16>
    %68 = vector.shape_cast %67 : vector<1x256x256xbf16> to vector<256x256xbf16>
    %cst_17 = arith.constant dense<0.000000e+00> : vector<512x256xf32>
    %69 = tpu.matmul %66, %68, %cst_17 {dimension_numbers = #tpu.dot_dimension_numbers<[1], [0], [0], [1], [0, 0, 1, 1], [], []>} : vector<512x256xbf16>, vector<256x256xbf16>, vector<512x256xf32> -> vector<512x256xf32>
    %70 = vector.extract_strided_slice %2 {offsets = [3, 0], sizes = [1, 256], strides = [1, 1]} : vector<8x256xf32> to vector<1x256xf32>
    %71 = vector.broadcast %70 : vector<1x256xf32> to vector<512x256xf32>
    %72 = arith.addf %69, %71 : vector<512x256xf32>
    %cst_18 = arith.constant 0.000000e+00 : f32
    %73 = vector.broadcast %cst_18 : f32 to vector<512x256xf32>
    %74 = arith.maximumf %72, %73 : vector<512x256xf32>
    %75 = arith.truncf %74 : vector<512x256xf32> to vector<512x256xbf16>
    %c3 = arith.constant 3 : index
    %c0_19 = arith.constant 0 : index
    %c0_20 = arith.constant 0 : index
    %76 = vector.load %arg3[%c3, %c0_19, %c0_20] : memref<7x256x256xbf16, #tpu.memory_space<vmem>>, vector<1x256x256xbf16>
    %77 = vector.shape_cast %76 : vector<1x256x256xbf16> to vector<256x256xbf16>
    %cst_21 = arith.constant dense<0.000000e+00> : vector<512x256xf32>
    %78 = tpu.matmul %75, %77, %cst_21 {dimension_numbers = #tpu.dot_dimension_numbers<[1], [0], [0], [1], [0, 0, 1, 1], [], []>} : vector<512x256xbf16>, vector<256x256xbf16>, vector<512x256xf32> -> vector<512x256xf32>
    %79 = vector.extract_strided_slice %2 {offsets = [4, 0], sizes = [1, 256], strides = [1, 1]} : vector<8x256xf32> to vector<1x256xf32>
    %80 = vector.broadcast %79 : vector<1x256xf32> to vector<512x256xf32>
    %81 = arith.addf %78, %80 : vector<512x256xf32>
    %cst_22 = arith.constant 0.000000e+00 : f32
    %82 = vector.broadcast %cst_22 : f32 to vector<512x256xf32>
    %83 = arith.maximumf %81, %82 : vector<512x256xf32>
    %84 = arith.truncf %83 : vector<512x256xf32> to vector<512x256xbf16>
    %c4 = arith.constant 4 : index
    %c0_23 = arith.constant 0 : index
    %c0_24 = arith.constant 0 : index
    %85 = vector.load %arg3[%c4, %c0_23, %c0_24] : memref<7x256x256xbf16, #tpu.memory_space<vmem>>, vector<1x256x256xbf16>
    %86 = vector.shape_cast %85 : vector<1x256x256xbf16> to vector<256x256xbf16>
    %cst_25 = arith.constant dense<0.000000e+00> : vector<512x256xf32>
    %87 = tpu.matmul %84, %86, %cst_25 {dimension_numbers = #tpu.dot_dimension_numbers<[1], [0], [0], [1], [0, 0, 1, 1], [], []>} : vector<512x256xbf16>, vector<256x256xbf16>, vector<512x256xf32> -> vector<512x256xf32>
    %88 = arith.addf %87, %22 : vector<512x256xf32>
    %89 = vector.extract_strided_slice %2 {offsets = [5, 0], sizes = [1, 256], strides = [1, 1]} : vector<8x256xf32> to vector<1x256xf32>
    %90 = vector.broadcast %89 : vector<1x256xf32> to vector<512x256xf32>
    %91 = arith.addf %88, %90 : vector<512x256xf32>
    %cst_26 = arith.constant 0.000000e+00 : f32
    %92 = vector.broadcast %cst_26 : f32 to vector<512x256xf32>
    %93 = arith.maximumf %91, %92 : vector<512x256xf32>
    %94 = arith.truncf %93 : vector<512x256xf32> to vector<512x256xbf16>
    %c5 = arith.constant 5 : index
    %c0_27 = arith.constant 0 : index
    %c0_28 = arith.constant 0 : index
    %95 = vector.load %arg3[%c5, %c0_27, %c0_28] : memref<7x256x256xbf16, #tpu.memory_space<vmem>>, vector<1x256x256xbf16>
    %96 = vector.shape_cast %95 : vector<1x256x256xbf16> to vector<256x256xbf16>
    %cst_29 = arith.constant dense<0.000000e+00> : vector<512x256xf32>
    %97 = tpu.matmul %94, %96, %cst_29 {dimension_numbers = #tpu.dot_dimension_numbers<[1], [0], [0], [1], [0, 0, 1, 1], [], []>} : vector<512x256xbf16>, vector<256x256xbf16>, vector<512x256xf32> -> vector<512x256xf32>
    %98 = vector.extract_strided_slice %2 {offsets = [6, 0], sizes = [1, 256], strides = [1, 1]} : vector<8x256xf32> to vector<1x256xf32>
    %99 = vector.broadcast %98 : vector<1x256xf32> to vector<512x256xf32>
    %100 = arith.addf %97, %99 : vector<512x256xf32>
    %cst_30 = arith.constant 0.000000e+00 : f32
    %101 = vector.broadcast %cst_30 : f32 to vector<512x256xf32>
    %102 = arith.maximumf %100, %101 : vector<512x256xf32>
    %103 = arith.truncf %102 : vector<512x256xf32> to vector<512x256xbf16>
    %c6 = arith.constant 6 : index
    %c0_31 = arith.constant 0 : index
    %c0_32 = arith.constant 0 : index
    %104 = vector.load %arg3[%c6, %c0_31, %c0_32] : memref<7x256x256xbf16, #tpu.memory_space<vmem>>, vector<1x256x256xbf16>
    %105 = vector.shape_cast %104 : vector<1x256x256xbf16> to vector<256x256xbf16>
    %cst_33 = arith.constant dense<0.000000e+00> : vector<512x256xf32>
    %106 = tpu.matmul %103, %105, %cst_33 {dimension_numbers = #tpu.dot_dimension_numbers<[1], [0], [0], [1], [0, 0, 1, 1], [], []>} : vector<512x256xbf16>, vector<256x256xbf16>, vector<512x256xf32> -> vector<512x256xf32>
    %107 = vector.extract_strided_slice %2 {offsets = [7, 0], sizes = [1, 256], strides = [1, 1]} : vector<8x256xf32> to vector<1x256xf32>
    %108 = vector.broadcast %107 : vector<1x256xf32> to vector<512x256xf32>
    %109 = arith.addf %106, %108 : vector<512x256xf32>
    %cst_34 = arith.constant 0.000000e+00 : f32
    %110 = vector.broadcast %cst_34 : f32 to vector<512x256xf32>
    %111 = arith.maximumf %109, %110 : vector<512x256xf32>
    %112 = arith.truncf %111 : vector<512x256xf32> to vector<512x256xbf16>
    %c0_35 = arith.constant 0 : index
    %c0_36 = arith.constant 0 : index
    %113 = vector.load %arg5[%c0_35, %c0_36] : memref<256x128xbf16, #tpu.memory_space<vmem>>, vector<256x128xbf16>
    %cst_37 = arith.constant dense<0.000000e+00> : vector<512x128xf32>
    %114 = tpu.matmul %112, %113, %cst_37 {dimension_numbers = #tpu.dot_dimension_numbers<[1], [0], [0], [1], [0, 0, 1, 1], [], []>} : vector<512x256xbf16>, vector<256x128xbf16>, vector<512x128xf32> -> vector<512x128xf32>
    %c0_38 = arith.constant 0 : index
    %c0_39 = arith.constant 0 : index
    %115 = vector.load %arg6[%c0_38, %c0_39] : memref<1x128xf32, #tpu.memory_space<vmem>>, vector<1x128xf32>
    %116 = vector.broadcast %115 : vector<1x128xf32> to vector<512x128xf32>
    %117 = arith.addf %114, %116 : vector<512x128xf32>
    %118 = vector.extract_strided_slice %117 {offsets = [0, 0], sizes = [512, 4], strides = [1, 1]} : vector<512x128xf32> to vector<512x4xf32>
    %c0_40 = arith.constant 0 : index
    %c0_41 = arith.constant 0 : index
    %119 = vector.load %arg7[%c0_40, %c0_41] : memref<512x4xf32, #tpu.memory_space<vmem>>, vector<512x4xf32>
    tpu.vector_store %arg7[%c0_40, %c0_41], %118 {strides = array<i32>} : memref<512x4xf32, #tpu.memory_space<vmem>>, vector<512x4xf32>,
    return
  }
  func.func @transform_0(%arg0: i32) -> (i32, i32) {
    %c0_i32 = arith.constant 0 : i32
    %c0_i32_0 = arith.constant 0 : i32
    return %arg0, %c0_i32 : i32, i32
  }
  func.func @transform_1(%arg0: i32) -> (i32, i32, i32) {
    %c0_i32 = arith.constant 0 : i32
    %c0_i32_0 = arith.constant 0 : i32
    %c0_i32_1 = arith.constant 0 : i32
    %c0_i32_2 = arith.constant 0 : i32
    return %c0_i32, %c0_i32_0, %c0_i32_1 : i32, i32, i32
  }
  func.func @transform_2(%arg0: i32) -> (i32, i32, i32) {
    %c0_i32 = arith.constant 0 : i32
    %c0_i32_0 = arith.constant 0 : i32
    %c0_i32_1 = arith.constant 0 : i32
    %c0_i32_2 = arith.constant 0 : i32
    return %c0_i32, %c0_i32_0, %c0_i32_1 : i32, i32, i32
  }
  func.func @transform_3(%arg0: i32) -> (i32, i32) {
    %c0_i32 = arith.constant 0 : i32
    %c0_i32_0 = arith.constant 0 : i32
    %c0_i32_1 = arith.constant 0 : i32
    return %c0_i32, %c0_i32_0 : i32, i32
  }
  func.func @transform_4(%arg0: i32) -> (i32, i32) {
    %c0_i32 = arith.constant 0 : i32
    %c0_i32_0 = arith.constant 0 : i32
    %c0_i32_1 = arith.constant 0 : i32
    return %c0_i32, %c0_i32_0 : i32, i32
  }
  func.func @transform_5(%arg0: i32) -> (i32, i32) {
    %c0_i32 = arith.constant 0 : i32
    %c0_i32_0 = arith.constant 0 : i32
    %c0_i32_1 = arith.constant 0 : i32
    return %c0_i32, %c0_i32_0 : i32, i32
  }
  func.func @transform_6(%arg0: i32) -> (i32, i32) {
    %c0_i32 = arith.constant 0 : i32
    %c0_i32_0 = arith.constant 0 : i32
    return %arg0, %c0_i32 : i32, i32
  }
}

</mosaic_0001>

<llo_original>
// kernel: nerf_forward.1
$region0: #{nerf_forward.1}
  #allocation0 [shape = 'u32[]', space=smem, size = 0x4, offset = 0x4, fixed_abs, tag = 'smem constant byte address 0x4 - core index']
  #allocation1 [shape = 'u32[144,128]{1,0:T(1,128)}', space=vmem, size = 0x12000, scoped, tag = 'internal scratch']
  %s0 = inlined_call_operand.vmem [shape: f32[1024,6], index: 0, kind: input, shape index: {}]
  %s1 = inlined_call_operand.vmem [shape: f32[2,3,256], index: 1, kind: input, shape index: {}]
  %s2 = inlined_call_operand.vmem [shape: bf16[7,256,256], index: 2, kind: input, shape index: {}]
  %s3 = inlined_call_operand.vmem [shape: f32[8,256], index: 3, kind: input, shape index: {}]
  %s4 = inlined_call_operand.vmem [shape: bf16[256,128], index: 4, kind: input, shape index: {}]
  %s5 = inlined_call_operand.vmem [shape: f32[1,128], index: 5, kind: input, shape index: {}]
  %s6 = inlined_call_operand.vmem [shape: f32[1024,4], index: 6, kind: output, shape index: {}]
  %s7 = sld [smem:[#allocation0]]
  $region57: #{nerf_forward.1} parent=0
    _
  %s9 = ssub.s32 1, %s7
  %s10 = scalar_select 0, %s9, %s7
  loop: start=0, step=1, limit=4
  $region2: #{nerf_forward.1} parent=0 // loop_pre_header
    _
  $region3: #{nerf_forward.1} parent=0 // loop_header
    %s12 = sphi 0, %s16
    %p13 = scmp.ge.s32.totalorder %s12, 4
    %s22 = sphi 0, %s24
    %s25 = sphi 0, %s22
    %s26 = sphi 0, %s25
    %s42 = sphi 0, %s26
    %s46 = sphi 0, %s46
    %s48 = sphi 0, %s46
    %s49 = sphi 0, %s48
    %s63 = sphi 0, %s49
    %s67 = sphi 0, %s67
    %s69 = sphi 0, %s67
    %s70 = sphi 0, %s69
    %s84 = sphi 0, %s70
    %s88 = sphi 0, %s88
    %s90 = sphi 0, %s88
    %s91 = sphi 0, %s90
    %s105 = sphi 0, %s91
    %s109 = sphi 0, %s109
    %s111 = sphi 0, %s109
    %s112 = sphi 0, %s111
    %s126 = sphi 0, %s112
    %s130 = sphi 0, %s130
    %s132 = sphi 0, %s130
    %s133 = sphi 0, %s132
    %s147 = sphi 0, %s133
    %s153 = sphi 0, %s155
    %s156 = sphi 0, %s153
    %s157 = sphi 0, %s156
    %s173 = sphi 0, %s157
  $region4: #{nerf_forward.1} parent=0 // loop_header_branch
    %15 = sbr.rel (%p13) target = $region8
  $region5: #{nerf_forward.1} parent=0 // loop_body
    %s17 = ssub.s32 %s12, 1
    %s18 = ssub.s32 %s12, 2
    %s19 = sadd.s32 %s12, 1
    %s20 = ssub.s32 %s12, %s19
    %p21 = scmp.eq.s32.totalorder %s20, 0
    %s23 = sadd.s32 %s22, 1
    %s24 = scalar_select %p21, %s22, %s23
    %p27 = pneg %p21
    %p28 = scmp.eq.s32.totalorder %s12, 1
    %p29 = por %p27, %p28
    %p30 = scmp.ne.s32.totalorder %s22, %s25
    %p31 = scmp.eq.s32.totalorder %s12, 0
    %p32 = por %p30, %p31
    %p33 = scmp.ne.s32.totalorder %s22, %s25
    %p34 = scmp.eq.s32.totalorder %s17, 1
    %p35 = por %p33, %p34
    %p36 = scmp.ne.s32.totalorder %s25, %s26
    %p37 = scmp.eq.s32.totalorder %s17, 0
    %p38 = por %p36, %p37
    %p39 = scmp.ne.s32.totalorder %s25, %s26
    %p40 = scmp.eq.s32.totalorder %s18, 1
    %p41 = por %p39, %p40
    %p43 = scmp.ne.s32.totalorder %s26, %s42
    %p44 = scmp.eq.s32.totalorder %s18, 0
    %p45 = por %p43, %p44
    %s47 = sadd.s32 %s46, 1
    %p50 = scmp.eq.s32.totalorder %s12, 1
    %p51 = scmp.ne.s32.totalorder %s46, %s48
    %p52 = scmp.eq.s32.totalorder %s12, 0
    %p53 = por %p51, %p52
    %p54 = scmp.ne.s32.totalorder %s46, %s48
    %p55 = scmp.eq.s32.totalorder %s17, 1
    %p56 = por %p54, %p55
    %p57 = scmp.ne.s32.totalorder %s48, %s49
    %p58 = scmp.eq.s32.totalorder %s17, 0
    %p59 = por %p57, %p58
    %p60 = scmp.ne.s32.totalorder %s48, %s49
    %p61 = scmp.eq.s32.totalorder %s18, 1
    %p62 = por %p60, %p61
    %p64 = scmp.ne.s32.totalorder %s49, %s63
    %p65 = scmp.eq.s32.totalorder %s18, 0
    %p66 = por %p64, %p65
    %s68 = sadd.s32 %s67, 1
    %p71 = scmp.eq.s32.totalorder %s12, 1
    %p72 = scmp.ne.s32.totalorder %s67, %s69
    %p73 = scmp.eq.s32.totalorder %s12, 0
    %p74 = por %p72, %p73
    %p75 = scmp.ne.s32.totalorder %s67, %s69
    %p76 = scmp.eq.s32.totalorder %s17, 1
    %p77 = por %p75, %p76
    %p78 = scmp.ne.s32.totalorder %s69, %s70
    %p79 = scmp.eq.s32.totalorder %s17, 0
    %p80 = por %p78, %p79
    %p81 = scmp.ne.s32.totalorder %s69, %s70
    %p82 = scmp.eq.s32.totalorder %s18, 1
    %p83 = por %p81, %p82
    %p85 = scmp.ne.s32.totalorder %s70, %s84
    %p86 = scmp.eq.s32.totalorder %s18, 0
    %p87 = por %p85, %p86
    %s89 = sadd.s32 %s88, 1
    %p92 = scmp.eq.s32.totalorder %s12, 1
    %p93 = scmp.ne.s32.totalorder %s88, %s90
    %p94 = scmp.eq.s32.totalorder %s12, 0
    %p95 = por %p93, %p94
    %p96 = scmp.ne.s32.totalorder %s88, %s90
    %p97 = scmp.eq.s32.totalorder %s17, 1
    %p98 = por %p96, %p97
    %p99 = scmp.ne.s32.totalorder %s90, %s91
    %p100 = scmp.eq.s32.totalorder %s17, 0
    %p101 = por %p99, %p100
    %p102 = scmp.ne.s32.totalorder %s90, %s91
    %p103 = scmp.eq.s32.totalorder %s18, 1
    %p104 = por %p102, %p103
    %p106 = scmp.ne.s32.totalorder %s91, %s105
    %p107 = scmp.eq.s32.totalorder %s18, 0
    %p108 = por %p106, %p107
    %s110 = sadd.s32 %s109, 1
    %p113 = scmp.eq.s32.totalorder %s12, 1
    %p114 = scmp.ne.s32.totalorder %s109, %s111
    %p115 = scmp.eq.s32.totalorder %s12, 0
    %p116 = por %p114, %p115
    %p117 = scmp.ne.s32.totalorder %s109, %s111
    %p118 = scmp.eq.s32.totalorder %s17, 1
    %p119 = por %p117, %p118
    %p120 = scmp.ne.s32.totalorder %s111, %s112
    %p121 = scmp.eq.s32.totalorder %s17, 0
    %p122 = por %p120, %p121
    %p123 = scmp.ne.s32.totalorder %s111, %s112
    %p124 = scmp.eq.s32.totalorder %s18, 1
    %p125 = por %p123, %p124
    %p127 = scmp.ne.s32.totalorder %s112, %s126
    %p128 = scmp.eq.s32.totalorder %s18, 0
    %p129 = por %p127, %p128
    %s131 = sadd.s32 %s130, 1
    %p134 = scmp.eq.s32.totalorder %s12, 1
    %p135 = scmp.ne.s32.totalorder %s130, %s132
    %p136 = scmp.eq.s32.totalorder %s12, 0
    %p137 = por %p135, %p136
    %p138 = scmp.ne.s32.totalorder %s130, %s132
    %p139 = scmp.eq.s32.totalorder %s17, 1
    %p140 = por %p138, %p139
    %p141 = scmp.ne.s32.totalorder %s132, %s133
    %p142 = scmp.eq.s32.totalorder %s17, 0
    %p143 = por %p141, %p142
    %p144 = scmp.ne.s32.totalorder %s132, %s133
    %p145 = scmp.eq.s32.totalorder %s18, 1
    %p146 = por %p144, %p145
    %p148 = scmp.ne.s32.totalorder %s133, %s147
    %p149 = scmp.eq.s32.totalorder %s18, 0
    %p150 = por %p148, %p149
    %s151 = ssub.s32 %s12, %s19
    %p152 = scmp.eq.s32.totalorder %s151, 0
    %s154 = sadd.s32 %s153, 1
    %s155 = scalar_select %p152, %s153, %s154
    %p158 = pneg %p152
    %p159 = scmp.eq.s32.totalorder %s12, 1
    %p160 = por %p158, %p159
    %p161 = scmp.ne.s32.totalorder %s153, %s156
    %p162 = scmp.eq.s32.totalorder %s12, 0
    %p163 = por %p161, %p162
    %p164 = scmp.ne.s32.totalorder %s153, %s156
    %p165 = scmp.eq.s32.totalorder %s17, 1
    %p166 = por %p164, %p165
    %p167 = scmp.ne.s32.totalorder %s156, %s157
    %p168 = scmp.eq.s32.totalorder %s17, 0
    %p169 = por %p167, %p168
    %p170 = scmp.ne.s32.totalorder %s156, %s157
    %p171 = scmp.eq.s32.totalorder %s18, 1
    %p172 = por %p170, %p171
    %p174 = scmp.ne.s32.totalorder %s157, %s173
    %p175 = scmp.eq.s32.totalorder %s18, 0
    %p176 = por %p174, %p175
    %p177 = scmp.le.s32.totalorder 1, %s12
    %p178 = scmp.lt.s32.totalorder %s12, 3
    %p179 = pnand %p177, %p178
    %p180 = pneg %p179
    // Predicated region
    $region9: #{nerf_forward.1} parent=5 // pred_check
      _
    $region10: #{nerf_forward.1} parent=5 // pred_check_branch
      %182 = sbr.rel (%p179) target = $region12
    $region11: #{nerf_forward.1} parent=5 // pred_region
      %s183 = ssub.s32 %s12, 1
      // Predicated region
      $region13: #{nerf_forward.1} parent=11 // pred_check
        %p184 = pneg %p59
      $region14: #{nerf_forward.1} parent=11 // pred_check_branch
        %186 = sbr.rel (%p184) target = $region16
      $region15: #{nerf_forward.1} parent=11 // pred_region
        _
      $region16: #{nerf_forward.1} parent=11 // pred_fallthru
        _
      // Predicated region
      $region17: #{nerf_forward.1} parent=11 // pred_check
        %p187 = pneg %p80
      $region18: #{nerf_forward.1} parent=11 // pred_check_branch
        %189 = sbr.rel (%p187) target = $region20
      $region19: #{nerf_forward.1} parent=11 // pred_region
        _
      $region20: #{nerf_forward.1} parent=11 // pred_fallthru
        _
      // Predicated region
      $region21: #{nerf_forward.1} parent=11 // pred_check
        %p190 = pneg %p101
      $region22: #{nerf_forward.1} parent=11 // pred_check_branch
        %192 = sbr.rel (%p190) target = $region24
      $region23: #{nerf_forward.1} parent=11 // pred_region
        _
      $region24: #{nerf_forward.1} parent=11 // pred_fallthru
        _
      // Predicated region
      $region25: #{nerf_forward.1} parent=11 // pred_check
        %p193 = pneg %p122
      $region26: #{nerf_forward.1} parent=11 // pred_check_branch
        %195 = sbr.rel (%p193) target = $region28
      $region27: #{nerf_forward.1} parent=11 // pred_region
        _
      $region28: #{nerf_forward.1} parent=11 // pred_fallthru
        _
      // Predicated region
      $region29: #{nerf_forward.1} parent=11 // pred_check
        %p196 = pneg %p143
      $region30: #{nerf_forward.1} parent=11 // pred_check_branch
        %198 = sbr.rel (%p196) target = $region32
      $region31: #{nerf_forward.1} parent=11 // pred_region
        _
      $region32: #{nerf_forward.1} parent=11 // pred_fallthru
        _
    $region12: #{nerf_forward.1} parent=5 // pred_fallthru
      _
    %p199 = scmp.lt.s32.totalorder %s12, 2
    // Predicated region
    $region33: #{nerf_forward.1} parent=5 // pred_check
      %p200 = pneg %p199
    $region34: #{nerf_forward.1} parent=5 // pred_check_branch
      %202 = sbr.rel (%p200) target = $region36
    $region35: #{nerf_forward.1} parent=5 // pred_region
      // Predicated region
      $region37: #{nerf_forward.1} parent=35 // pred_check
        %p203 = pneg %p32
      $region38: #{nerf_forward.1} parent=35 // pred_check_branch
        %205 = sbr.rel (%p203) target = $region40
      $region39: #{nerf_forward.1} parent=35 // pred_region
        %s206 = smul.u32 64, %s12
        %p207 = scmp.lt.s32.totalorder %s206, 127
        %s208 = scalar_select %p207, %s206, 127
        %s209 = smul.addr %s208, 8
        %s210 = scalar_lea.vmem %s0, %s209
        %s211 = smul.u32 64, %s12
      $region40: #{nerf_forward.1} parent=35 // pred_fallthru
        _
    $region36: #{nerf_forward.1} parent=5 // pred_fallthru
      _
    %p212 = scmp.le.s32.totalorder 1, %s12
    %p213 = scmp.lt.s32.totalorder %s12, 3
    %p214 = pnand %p212, %p213
    %p215 = pneg %p214
    // Predicated region
    $region41: #{nerf_forward.1} parent=5 // pred_check
      _
    $region42: #{nerf_forward.1} parent=5 // pred_check_branch
      %217 = sbr.rel (%p214) target = $region44
    $region43: #{nerf_forward.1} parent=5 // pred_region
      %s218 = ssub.s32 %s12, 1
      %s219 = smul.u32 64, %s17
      %p220 = scmp.lt.s32.totalorder %s219, 127
      %s221 = scalar_select %p220, %s219, 127
      %s222 = smul.addr %s221, 8
      %s223 = scalar_lea.vmem %s0, %s222
      %p224 = pneg %p38
      %p225 = pneg %p35
      %p226 = pneg %p59
      %p227 = pneg %p56
      %p228 = pneg %p80
      %p229 = pneg %p77
      %p230 = pneg %p101
      %p231 = pneg %p98
      %p232 = pneg %p122
      %p233 = pneg %p119
      %p234 = pneg %p143
      %p235 = pneg %p140
      %p236 = pneg %p169
      %p237 = pneg %p166
      %s238 = smul.u32 64, %s17
      %p239 = scmp.lt.s32.totalorder %s238, 127
      %s240 = scalar_select %p239, %s238, 127
      %s241 = smul.addr %s240, 8
      %s242 = scalar_lea.vmem %s6, %s241
      %s243 = smul.u32 64, %s17
      %p244 = scmp.lt.s32.totalorder %s243, 127
      %s245 = scalar_select %p244, %s243, 127
      %s246 = smul.addr %s245, 8
      %s247 = scalar_lea.vmem %s0, %s246
      %s248 = smul.u32 64, %s17
      %s249 = smul.u32 64, %s17
      %p250 = scmp.lt.s32.totalorder %s249, 127
      %s251 = scalar_select %p250, %s249, 127
      %s252 = smul.addr %s251, 8
      %s253 = scalar_lea.vmem %s6, %s252
      %s254 = smul.u32 64, %s17
      %v256 = vld [vmem:[%s247] sm:$0xff]
      %v257 = vld [vmem:[%s247 + $0x8] sm:$0xff]
      %v258 = vld [vmem:[%s247 + $0x10] sm:$0xff]
      %v259 = vld [vmem:[%s247 + $0x18] sm:$0xff]
      %v260 = vld [vmem:[%s247 + $0x20] sm:$0xff]
      %v261 = vld [vmem:[%s247 + $0x28] sm:$0xff]
      %v262 = vld [vmem:[%s247 + $0x30] sm:$0xff]
      %v263 = vld [vmem:[%s247 + $0x38] sm:$0xff]
      %v264 = vld [vmem:[%s247 + $0x40] sm:$0xff]
      %v265 = vld [vmem:[%s247 + $0x48] sm:$0xff]
      %v266 = vld [vmem:[%s247 + $0x50] sm:$0xff]
      %v267 = vld [vmem:[%s247 + $0x58] sm:$0xff]
      %v268 = vld [vmem:[%s247 + $0x60] sm:$0xff]
      %v269 = vld [vmem:[%s247 + $0x68] sm:$0xff]
      %v270 = vld [vmem:[%s247 + $0x70] sm:$0xff]
      %v271 = vld [vmem:[%s247 + $0x78] sm:$0xff]
      %v272 = vld [vmem:[%s247 + $0x80] sm:$0xff]
      %v273 = vld [vmem:[%s247 + $0x88] sm:$0xff]
      %v274 = vld [vmem:[%s247 + $0x90] sm:$0xff]
      %v275 = vld [vmem:[%s247 + $0x98] sm:$0xff]
      %v276 = vld [vmem:[%s247 + $0xa0] sm:$0xff]
      %v277 = vld [vmem:[%s247 + $0xa8] sm:$0xff]
      %v278 = vld [vmem:[%s247 + $0xb0] sm:$0xff]
      %v279 = vld [vmem:[%s247 + $0xb8] sm:$0xff]
      %v280 = vld [vmem:[%s247 + $0xc0] sm:$0xff]
      %v281 = vld [vmem:[%s247 + $0xc8] sm:$0xff]
      %v282 = vld [vmem:[%s247 + $0xd0] sm:$0xff]
      %v283 = vld [vmem:[%s247 + $0xd8] sm:$0xff]
      %v284 = vld [vmem:[%s247 + $0xe0] sm:$0xff]
      %v285 = vld [vmem:[%s247 + $0xe8] sm:$0xff]
      %v286 = vld [vmem:[%s247 + $0xf0] sm:$0xff]
      %v287 = vld [vmem:[%s247 + $0xf8] sm:$0xff]
      %v288 = vld [vmem:[%s247 + $0x100] sm:$0xff]
      %v289 = vld [vmem:[%s247 + $0x108] sm:$0xff]
      %v290 = vld [vmem:[%s247 + $0x110] sm:$0xff]
      %v291 = vld [vmem:[%s247 + $0x118] sm:$0xff]
      %v292 = vld [vmem:[%s247 + $0x120] sm:$0xff]
      %v293 = vld [vmem:[%s247 + $0x128] sm:$0xff]
      %v294 = vld [vmem:[%s247 + $0x130] sm:$0xff]
      %v295 = vld [vmem:[%s247 + $0x138] sm:$0xff]
      %v296 = vld [vmem:[%s247 + $0x140] sm:$0xff]
      %v297 = vld [vmem:[%s247 + $0x148] sm:$0xff]
      %v298 = vld [vmem:[%s247 + $0x150] sm:$0xff]
      %v299 = vld [vmem:[%s247 + $0x158] sm:$0xff]
      %v300 = vld [vmem:[%s247 + $0x160] sm:$0xff]
      %v301 = vld [vmem:[%s247 + $0x168] sm:$0xff]
      %v302 = vld [vmem:[%s247 + $0x170] sm:$0xff]
      %v303 = vld [vmem:[%s247 + $0x178] sm:$0xff]
      %v304 = vld [vmem:[%s247 + $0x180] sm:$0xff]
      %v305 = vld [vmem:[%s247 + $0x188] sm:$0xff]
      %v306 = vld [vmem:[%s247 + $0x190] sm:$0xff]
      %v307 = vld [vmem:[%s247 + $0x198] sm:$0xff]
      %v308 = vld [vmem:[%s247 + $0x1a0] sm:$0xff]
      %v309 = vld [vmem:[%s247 + $0x1a8] sm:$0xff]
      %v310 = vld [vmem:[%s247 + $0x1b0] sm:$0xff]
      %v311 = vld [vmem:[%s247 + $0x1b8] sm:$0xff]
      %v312 = vld [vmem:[%s247 + $0x1c0] sm:$0xff]
      %v313 = vld [vmem:[%s247 + $0x1c8] sm:$0xff]
      %v314 = vld [vmem:[%s247 + $0x1d0] sm:$0xff]
      %v315 = vld [vmem:[%s247 + $0x1d8] sm:$0xff]
      %v316 = vld [vmem:[%s247 + $0x1e0] sm:$0xff]
      %v317 = vld [vmem:[%s247 + $0x1e8] sm:$0xff]
      %v318 = vld [vmem:[%s247 + $0x1f0] sm:$0xff]
      %v319 = vld [vmem:[%s247 + $0x1f8] sm:$0xff]
      %v320 = vld [vmem:[%s1] sm:$0x77]
      %v321 = vld [vmem:[%s1 + $0x8] sm:$0x77]
      %v322 = vld [vmem:[%s3] sm:$0xff]
      %v323 = vld [vmem:[%s3 + $0x8] sm:$0xff]
      %325 = vset.pattern.permute.xlu0 0
      %326 = vperm.xlu0 %325, %v256
      %v327 = vpop.permute.xlu0 %326
      %330 = vset.pattern.permute.xlu0 0
      %331 = vperm.xlu0 %330, %v257
      %v332 = vpop.permute.xlu0 %331
      %335 = vset.pattern.permute.xlu0 0
      %336 = vperm.xlu0 %335, %v258
      %v337 = vpop.permute.xlu0 %336
      %340 = vset.pattern.permute.xlu0 0
      %341 = vperm.xlu0 %340, %v259
      %v342 = vpop.permute.xlu0 %341
      %345 = vset.pattern.permute.xlu0 0
      %346 = vperm.xlu0 %345, %v260
      %v347 = vpop.permute.xlu0 %346
      %350 = vset.pattern.permute.xlu0 0
      %351 = vperm.xlu0 %350, %v261
      %v352 = vpop.permute.xlu0 %351
      %355 = vset.pattern.permute.xlu0 0
      %356 = vperm.xlu0 %355, %v262
      %v357 = vpop.permute.xlu0 %356
      %360 = vset.pattern.permute.xlu0 0
      %361 = vperm.xlu0 %360, %v263
      %v362 = vpop.permute.xlu0 %361
      %365 = vset.pattern.permute.xlu0 0
      %366 = vperm.xlu0 %365, %v264
      %v367 = vpop.permute.xlu0 %366
      %370 = vset.pattern.permute.xlu0 0
      %371 = vperm.xlu0 %370, %v265
      %v372 = vpop.permute.xlu0 %371
      %375 = vset.pattern.permute.xlu0 0
      %376 = vperm.xlu0 %375, %v266
      %v377 = vpop.permute.xlu0 %376
      %380 = vset.pattern.permute.xlu0 0
      %381 = vperm.xlu0 %380, %v267
      %v382 = vpop.permute.xlu0 %381
      %385 = vset.pattern.permute.xlu0 0
      %386 = vperm.xlu0 %385, %v268
      %v387 = vpop.permute.xlu0 %386
      %390 = vset.pattern.permute.xlu0 0
      %391 = vperm.xlu0 %390, %v269
      %v392 = vpop.permute.xlu0 %391
      %395 = vset.pattern.permute.xlu0 0
      %396 = vperm.xlu0 %395, %v270
      %v397 = vpop.permute.xlu0 %396
      %400 = vset.pattern.permute.xlu0 0
      %401 = vperm.xlu0 %400, %v271
      %v402 = vpop.permute.xlu0 %401
      %405 = vset.pattern.permute.xlu0 0
      %406 = vperm.xlu0 %405, %v272
      %v407 = vpop.permute.xlu0 %406
      %410 = vset.pattern.permute.xlu0 0
      %411 = vperm.xlu0 %410, %v273
      %v412 = vpop.permute.xlu0 %411
      %415 = vset.pattern.permute.xlu0 0
      %416 = vperm.xlu0 %415, %v274
      %v417 = vpop.permute.xlu0 %416
      %420 = vset.pattern.permute.xlu0 0
      %421 = vperm.xlu0 %420, %v275
      %v422 = vpop.permute.xlu0 %421
      %425 = vset.pattern.permute.xlu0 0
      %426 = vperm.xlu0 %425, %v276
      %v427 = vpop.permute.xlu0 %426
      %430 = vset.pattern.permute.xlu0 0
      %431 = vperm.xlu0 %430, %v277
      %v432 = vpop.permute.xlu0 %431
      %435 = vset.pattern.permute.xlu0 0
      %436 = vperm.xlu0 %435, %v278
      %v437 = vpop.permute.xlu0 %436
      %440 = vset.pattern.permute.xlu0 0
      %441 = vperm.xlu0 %440, %v279
      %v442 = vpop.permute.xlu0 %441
      %445 = vset.pattern.permute.xlu0 0
      %446 = vperm.xlu0 %445, %v280
      %v447 = vpop.permute.xlu0 %446
      %450 = vset.pattern.permute.xlu0 0
      %451 = vperm.xlu0 %450, %v281
      %v452 = vpop.permute.xlu0 %451
      %455 = vset.pattern.permute.xlu0 0
      %456 = vperm.xlu0 %455, %v282
      %v457 = vpop.permute.xlu0 %456
      %460 = vset.pattern.permute.xlu0 0
      %461 = vperm.xlu0 %460, %v283
      %v462 = vpop.permute.xlu0 %461
      %465 = vset.pattern.permute.xlu0 0
      %466 = vperm.xlu0 %465, %v284
      %v467 = vpop.permute.xlu0 %466
      %470 = vset.pattern.permute.xlu0 0
      %471 = vperm.xlu0 %470, %v285
      %v472 = vpop.permute.xlu0 %471
      %475 = vset.pattern.permute.xlu0 0
      %476 = vperm.xlu0 %475, %v286
      %v477 = vpop.permute.xlu0 %476
      %480 = vset.pattern.permute.xlu0 0
      %481 = vperm.xlu0 %480, %v287
      %v482 = vpop.permute.xlu0 %481
      %485 = vset.pattern.permute.xlu0 0
      %486 = vperm.xlu0 %485, %v288
      %v487 = vpop.permute.xlu0 %486
      %490 = vset.pattern.permute.xlu0 0
      %491 = vperm.xlu0 %490, %v289
      %v492 = vpop.permute.xlu0 %491
      %495 = vset.pattern.permute.xlu0 0
      %496 = vperm.xlu0 %495, %v290
      %v497 = vpop.permute.xlu0 %496
      %500 = vset.pattern.permute.xlu0 0
      %501 = vperm.xlu0 %500, %v291
      %v502 = vpop.permute.xlu0 %501
      %505 = vset.pattern.permute.xlu0 0
      %506 = vperm.xlu0 %505, %v292
      %v507 = vpop.permute.xlu0 %506
      %510 = vset.pattern.permute.xlu0 0
      %511 = vperm.xlu0 %510, %v293
      %v512 = vpop.permute.xlu0 %511
      %515 = vset.pattern.permute.xlu0 0
      %516 = vperm.xlu0 %515, %v294
      %v517 = vpop.permute.xlu0 %516
      %520 = vset.pattern.permute.xlu0 0
      %521 = vperm.xlu0 %520, %v295
      %v522 = vpop.permute.xlu0 %521
      %525 = vset.pattern.permute.xlu0 0
      %526 = vperm.xlu0 %525, %v296
      %v527 = vpop.permute.xlu0 %526
      %530 = vset.pattern.permute.xlu0 0
      %531 = vperm.xlu0 %530, %v297
      %v532 = vpop.permute.xlu0 %531
      %535 = vset.pattern.permute.xlu0 0
      %536 = vperm.xlu0 %535, %v298
      %v537 = vpop.permute.xlu0 %536
      %540 = vset.pattern.permute.xlu0 0
      %541 = vperm.xlu0 %540, %v299
      %v542 = vpop.permute.xlu0 %541
      %545 = vset.pattern.permute.xlu0 0
      %546 = vperm.xlu0 %545, %v300
      %v547 = vpop.permute.xlu0 %546
      %550 = vset.pattern.permute.xlu0 0
      %551 = vperm.xlu0 %550, %v301
      %v552 = vpop.permute.xlu0 %551
      %555 = vset.pattern.permute.xlu0 0
      %556 = vperm.xlu0 %555, %v302
      %v557 = vpop.permute.xlu0 %556
      %560 = vset.pattern.permute.xlu0 0
      %561 = vperm.xlu0 %560, %v303
      %v562 = vpop.permute.xlu0 %561
      %565 = vset.pattern.permute.xlu0 0
      %566 = vperm.xlu0 %565, %v304
      %v567 = vpop.permute.xlu0 %566
      %570 = vset.pattern.permute.xlu0 0
      %571 = vperm.xlu0 %570, %v305
      %v572 = vpop.permute.xlu0 %571
      %575 = vset.pattern.permute.xlu0 0
      %576 = vperm.xlu0 %575, %v306
      %v577 = vpop.permute.xlu0 %576
      %580 = vset.pattern.permute.xlu0 0
      %581 = vperm.xlu0 %580, %v307
      %v582 = vpop.permute.xlu0 %581
      %585 = vset.pattern.permute.xlu0 0
      %586 = vperm.xlu0 %585, %v308
      %v587 = vpop.permute.xlu0 %586
      %590 = vset.pattern.permute.xlu0 0
      %591 = vperm.xlu0 %590, %v309
      %v592 = vpop.permute.xlu0 %591
      %595 = vset.pattern.permute.xlu0 0
      %596 = vperm.xlu0 %595, %v310
      %v597 = vpop.permute.xlu0 %596
      %600 = vset.pattern.permute.xlu0 0
      %601 = vperm.xlu0 %600, %v311
      %v602 = vpop.permute.xlu0 %601
      %605 = vset.pattern.permute.xlu0 0
      %606 = vperm.xlu0 %605, %v312
      %v607 = vpop.permute.xlu0 %606
      %610 = vset.pattern.permute.xlu0 0
      %611 = vperm.xlu0 %610, %v313
      %v612 = vpop.permute.xlu0 %611
      %615 = vset.pattern.permute.xlu0 0
      %616 = vperm.xlu0 %615, %v314
      %v617 = vpop.permute.xlu0 %616
      %620 = vset.pattern.permute.xlu0 0
      %621 = vperm.xlu0 %620, %v315
      %v622 = vpop.permute.xlu0 %621
      %625 = vset.pattern.permute.xlu0 0
      %626 = vperm.xlu0 %625, %v316
      %v627 = vpop.permute.xlu0 %626
      %630 = vset.pattern.permute.xlu0 0
      %631 = vperm.xlu0 %630, %v317
      %v632 = vpop.permute.xlu0 %631
      %635 = vset.pattern.permute.xlu0 0
      %636 = vperm.xlu0 %635, %v318
      %v637 = vpop.permute.xlu0 %636
      %640 = vset.pattern.permute.xlu0 0
      %641 = vperm.xlu0 %640, %v319
      %v642 = vpop.permute.xlu0 %641
      %v645 = vlaneseq
      %v646 = vshrl.u32 %v645, 7
      %v647 = vsub.s32 0, %v646
      %v648 = vrot.slane %v321, %v647
      %v649 = vlaneseq
      %v650 = vshrl.u32 %v649, 7
      %v651 = vsub.s32 4, %v650
      %v652 = vrot.slane %v321, %v651
      %v655 = vlaneseq
      %v656 = vshrl.u32 %v655, 7
      %v657 = vsub.s32 0, %v656
      %v658 = vrot.slane %v648, %v657
      %v659 = vlaneseq
      %v660 = vshrl.u32 %v659, 7
      %v661 = vsub.s32 0, %v660
      %v662 = vrot.slane %v652, %v661
      %v663 = vmul.f32 %v327, %v658
      %v664 = vmul.f32 %v327, %v662
      %v665 = vmul.f32 %v332, %v658
      %v666 = vmul.f32 %v332, %v662
      %v667 = vmul.f32 %v337, %v658
      %v668 = vmul.f32 %v337, %v662
      %v669 = vmul.f32 %v342, %v658
      %v670 = vmul.f32 %v342, %v662
      %v671 = vmul.f32 %v347, %v658
      %v672 = vmul.f32 %v347, %v662
      %v673 = vmul.f32 %v352, %v658
      %v674 = vmul.f32 %v352, %v662
      %v675 = vmul.f32 %v357, %v658
      %v676 = vmul.f32 %v357, %v662
      %v677 = vmul.f32 %v362, %v658
      %v678 = vmul.f32 %v362, %v662
      %v679 = vmul.f32 %v367, %v658
      %v680 = vmul.f32 %v367, %v662
      %v681 = vmul.f32 %v372, %v658
      %v682 = vmul.f32 %v372, %v662
      %v683 = vmul.f32 %v377, %v658
      %v684 = vmul.f32 %v377, %v662
      %v685 = vmul.f32 %v382, %v658
      %v686 = vmul.f32 %v382, %v662
      %v687 = vmul.f32 %v387, %v658
      %v688 = vmul.f32 %v387, %v662
      %v689 = vmul.f32 %v392, %v658
      %v690 = vmul.f32 %v392, %v662
      %v691 = vmul.f32 %v397, %v658
      %v692 = vmul.f32 %v397, %v662
      %v693 = vmul.f32 %v402, %v658
      %v694 = vmul.f32 %v402, %v662
      %v695 = vmul.f32 %v407, %v658
      %v696 = vmul.f32 %v407, %v662
      %v697 = vmul.f32 %v412, %v658
      %v698 = vmul.f32 %v412, %v662
      %v699 = vmul.f32 %v417, %v658
      %v700 = vmul.f32 %v417, %v662
      %v701 = vmul.f32 %v422, %v658
      %v702 = vmul.f32 %v422, %v662
      %v703 = vmul.f32 %v427, %v658
      %v704 = vmul.f32 %v427, %v662
      %v705 = vmul.f32 %v432, %v658
      %v706 = vmul.f32 %v432, %v662
      %v707 = vmul.f32 %v437, %v658
      %v708 = vmul.f32 %v437, %v662
      %v709 = vmul.f32 %v442, %v658
      %v710 = vmul.f32 %v442, %v662
      %v711 = vmul.f32 %v447, %v658
      %v712 = vmul.f32 %v447, %v662
      %v713 = vmul.f32 %v452, %v658
      %v714 = vmul.f32 %v452, %v662
      %v715 = vmul.f32 %v457, %v658
      %v716 = vmul.f32 %v457, %v662
      %v717 = vmul.f32 %v462, %v658
      %v718 = vmul.f32 %v462, %v662
      %v719 = vmul.f32 %v467, %v658
      %v720 = vmul.f32 %v467, %v662
      %v721 = vmul.f32 %v472, %v658
      %v722 = vmul.f32 %v472, %v662
      %v723 = vmul.f32 %v477, %v658
      %v724 = vmul.f32 %v477, %v662
      %v725 = vmul.f32 %v482, %v658
      %v726 = vmul.f32 %v482, %v662
      %v727 = vmul.f32 %v487, %v658
      %v728 = vmul.f32 %v487, %v662
      %v729 = vmul.f32 %v492, %v658
      %v730 = vmul.f32 %v492, %v662
      %v731 = vmul.f32 %v497, %v658
      %v732 = vmul.f32 %v497, %v662
      %v733 = vmul.f32 %v502, %v658
      %v734 = vmul.f32 %v502, %v662
      %v735 = vmul.f32 %v507, %v658
      %v736 = vmul.f32 %v507, %v662
      %v737 = vmul.f32 %v512, %v658
      %v738 = vmul.f32 %v512, %v662
      %v739 = vmul.f32 %v517, %v658
      %v740 = vmul.f32 %v517, %v662
      %v741 = vmul.f32 %v522, %v658
      %v742 = vmul.f32 %v522, %v662
      %v743 = vmul.f32 %v527, %v658
      %v744 = vmul.f32 %v527, %v662
      %v745 = vmul.f32 %v532, %v658
      %v746 = vmul.f32 %v532, %v662
      %v747 = vmul.f32 %v537, %v658
      %v748 = vmul.f32 %v537, %v662
      %v749 = vmul.f32 %v542, %v658
      %v750 = vmul.f32 %v542, %v662
      %v751 = vmul.f32 %v547, %v658
      %v752 = vmul.f32 %v547, %v662
      %v753 = vmul.f32 %v552, %v658
      %v754 = vmul.f32 %v552, %v662
      %v755 = vmul.f32 %v557, %v658
      %v756 = vmul.f32 %v557, %v662
      %v757 = vmul.f32 %v562, %v658
      %v758 = vmul.f32 %v562, %v662
      %v759 = vmul.f32 %v567, %v658
      %v760 = vmul.f32 %v567, %v662
      %v761 = vmul.f32 %v572, %v658
      %v762 = vmul.f32 %v572, %v662
      %v763 = vmul.f32 %v577, %v658
      %v764 = vmul.f32 %v577, %v662
      %v765 = vmul.f32 %v582, %v658
      %v766 = vmul.f32 %v582, %v662
      %v767 = vmul.f32 %v587, %v658
      %v768 = vmul.f32 %v587, %v662
      %v769 = vmul.f32 %v592, %v658
      %v770 = vmul.f32 %v592, %v662
      %v771 = vmul.f32 %v597, %v658
      %v772 = vmul.f32 %v597, %v662
      %v773 = vmul.f32 %v602, %v658
      %v774 = vmul.f32 %v602, %v662
      %v775 = vmul.f32 %v607, %v658
      %v776 = vmul.f32 %v607, %v662
      %v777 = vmul.f32 %v612, %v658
      %v778 = vmul.f32 %v612, %v662
      %v779 = vmul.f32 %v617, %v658
      %v780 = vmul.f32 %v617, %v662
      %v781 = vmul.f32 %v622, %v658
      %v782 = vmul.f32 %v622, %v662
      %v783 = vmul.f32 %v627, %v658
      %v784 = vmul.f32 %v627, %v662
      %v785 = vmul.f32 %v632, %v658
      %v786 = vmul.f32 %v632, %v662
      %v787 = vmul.f32 %v637, %v658
      %v788 = vmul.f32 %v637, %v662
      %v789 = vmul.f32 %v642, %v658
      %v790 = vmul.f32 %v642, %v662
      %791 = vset.pattern.permute.xlu0 1
      %792 = vperm.xlu0 %791, %v256
      %v793 = vpop.permute.xlu0 %792
      %795 = vset.pattern.permute.xlu0 1
      %796 = vperm.xlu0 %795, %v257
      %v797 = vpop.permute.xlu0 %796
      %799 = vset.pattern.permute.xlu0 1
      %800 = vperm.xlu0 %799, %v258
      %v801 = vpop.permute.xlu0 %800
      %803 = vset.pattern.permute.xlu0 1
      %804 = vperm.xlu0 %803, %v259
      %v805 = vpop.permute.xlu0 %804
      %807 = vset.pattern.permute.xlu0 1
      %808 = vperm.xlu0 %807, %v260
      %v809 = vpop.permute.xlu0 %808
      %811 = vset.pattern.permute.xlu0 1
      %812 = vperm.xlu0 %811, %v261
      %v813 = vpop.permute.xlu0 %812
      %815 = vset.pattern.permute.xlu0 1
      %816 = vperm.xlu0 %815, %v262
      %v817 = vpop.permute.xlu0 %816
      %819 = vset.pattern.permute.xlu0 1
      %820 = vperm.xlu0 %819, %v263
      %v821 = vpop.permute.xlu0 %820
      %823 = vset.pattern.permute.xlu0 1
      %824 = vperm.xlu0 %823, %v264
      %v825 = vpop.permute.xlu0 %824
      %827 = vset.pattern.permute.xlu0 1
      %828 = vperm.xlu0 %827, %v265
      %v829 = vpop.permute.xlu0 %828
      %831 = vset.pattern.permute.xlu0 1
      %832 = vperm.xlu0 %831, %v266
      %v833 = vpop.permute.xlu0 %832
      %835 = vset.pattern.permute.xlu0 1
      %836 = vperm.xlu0 %835, %v267
      %v837 = vpop.permute.xlu0 %836
      %839 = vset.pattern.permute.xlu0 1
      %840 = vperm.xlu0 %839, %v268
      %v841 = vpop.permute.xlu0 %840
      %843 = vset.pattern.permute.xlu0 1
      %844 = vperm.xlu0 %843, %v269
      %v845 = vpop.permute.xlu0 %844
      %847 = vset.pattern.permute.xlu0 1
      %848 = vperm.xlu0 %847, %v270
      %v849 = vpop.permute.xlu0 %848
      %851 = vset.pattern.permute.xlu0 1
      %852 = vperm.xlu0 %851, %v271
      %v853 = vpop.permute.xlu0 %852
      %855 = vset.pattern.permute.xlu0 1
      %856 = vperm.xlu0 %855, %v272
      %v857 = vpop.permute.xlu0 %856
      %859 = vset.pattern.permute.xlu0 1
      %860 = vperm.xlu0 %859, %v273
      %v861 = vpop.permute.xlu0 %860
      %863 = vset.pattern.permute.xlu0 1
      %864 = vperm.xlu0 %863, %v274
      %v865 = vpop.permute.xlu0 %864
      %867 = vset.pattern.permute.xlu0 1
      %868 = vperm.xlu0 %867, %v275
      %v869 = vpop.permute.xlu0 %868
      %871 = vset.pattern.permute.xlu0 1
      %872 = vperm.xlu0 %871, %v276
      %v873 = vpop.permute.xlu0 %872
      %875 = vset.pattern.permute.xlu0 1
      %876 = vperm.xlu0 %875, %v277
      %v877 = vpop.permute.xlu0 %876
      %879 = vset.pattern.permute.xlu0 1
      %880 = vperm.xlu0 %879, %v278
      %v881 = vpop.permute.xlu0 %880
      %883 = vset.pattern.permute.xlu0 1
      %884 = vperm.xlu0 %883, %v279
      %v885 = vpop.permute.xlu0 %884
      %887 = vset.pattern.permute.xlu0 1
      %888 = vperm.xlu0 %887, %v280
      %v889 = vpop.permute.xlu0 %888
      %891 = vset.pattern.permute.xlu0 1
      %892 = vperm.xlu0 %891, %v281
      %v893 = vpop.permute.xlu0 %892
      %895 = vset.pattern.permute.xlu0 1
      %896 = vperm.xlu0 %895, %v282
      %v897 = vpop.permute.xlu0 %896
      %899 = vset.pattern.permute.xlu0 1
      %900 = vperm.xlu0 %899, %v283
      %v901 = vpop.permute.xlu0 %900
      %903 = vset.pattern.permute.xlu0 1
      %904 = vperm.xlu0 %903, %v284
      %v905 = vpop.permute.xlu0 %904
      %907 = vset.pattern.permute.xlu0 1
      %908 = vperm.xlu0 %907, %v285
      %v909 = vpop.permute.xlu0 %908
      %911 = vset.pattern.permute.xlu0 1
      %912 = vperm.xlu0 %911, %v286
      %v913 = vpop.permute.xlu0 %912
      %915 = vset.pattern.permute.xlu0 1
      %916 = vperm.xlu0 %915, %v287
      %v917 = vpop.permute.xlu0 %916
      %919 = vset.pattern.permute.xlu0 1
      %920 = vperm.xlu0 %919, %v288
      %v921 = vpop.permute.xlu0 %920
      %923 = vset.pattern.permute.xlu0 1
      %924 = vperm.xlu0 %923, %v289
      %v925 = vpop.permute.xlu0 %924
      %927 = vset.pattern.permute.xlu0 1
      %928 = vperm.xlu0 %927, %v290
      %v929 = vpop.permute.xlu0 %928
      %931 = vset.pattern.permute.xlu0 1
      %932 = vperm.xlu0 %931, %v291
      %v933 = vpop.permute.xlu0 %932
      %935 = vset.pattern.permute.xlu0 1
      %936 = vperm.xlu0 %935, %v292
      %v937 = vpop.permute.xlu0 %936
      %939 = vset.pattern.permute.xlu0 1
      %940 = vperm.xlu0 %939, %v293
      %v941 = vpop.permute.xlu0 %940
      %943 = vset.pattern.permute.xlu0 1
      %944 = vperm.xlu0 %943, %v294
      %v945 = vpop.permute.xlu0 %944
      %947 = vset.pattern.permute.xlu0 1
      %948 = vperm.xlu0 %947, %v295
      %v949 = vpop.permute.xlu0 %948
      %951 = vset.pattern.permute.xlu0 1
      %952 = vperm.xlu0 %951, %v296
      %v953 = vpop.permute.xlu0 %952
      %955 = vset.pattern.permute.xlu0 1
      %956 = vperm.xlu0 %955, %v297
      %v957 = vpop.permute.xlu0 %956
      %959 = vset.pattern.permute.xlu0 1
      %960 = vperm.xlu0 %959, %v298
      %v961 = vpop.permute.xlu0 %960
      %963 = vset.pattern.permute.xlu0 1
      %964 = vperm.xlu0 %963, %v299
      %v965 = vpop.permute.xlu0 %964
      %967 = vset.pattern.permute.xlu0 1
      %968 = vperm.xlu0 %967, %v300
      %v969 = vpop.permute.xlu0 %968
      %971 = vset.pattern.permute.xlu0 1
      %972 = vperm.xlu0 %971, %v301
      %v973 = vpop.permute.xlu0 %972
      %975 = vset.pattern.permute.xlu0 1
      %976 = vperm.xlu0 %975, %v302
      %v977 = vpop.permute.xlu0 %976
      %979 = vset.pattern.permute.xlu0 1
      %980 = vperm.xlu0 %979, %v303
      %v981 = vpop.permute.xlu0 %980
      %983 = vset.pattern.permute.xlu0 1
      %984 = vperm.xlu0 %983, %v304
      %v985 = vpop.permute.xlu0 %984
      %987 = vset.pattern.permute.xlu0 1
      %988 = vperm.xlu0 %987, %v305
      %v989 = vpop.permute.xlu0 %988
      %991 = vset.pattern.permute.xlu0 1
      %992 = vperm.xlu0 %991, %v306
      %v993 = vpop.permute.xlu0 %992
      %995 = vset.pattern.permute.xlu0 1
      %996 = vperm.xlu0 %995, %v307
      %v997 = vpop.permute.xlu0 %996
      %999 = vset.pattern.permute.xlu0 1
      %1000 = vperm.xlu0 %999, %v308
      %v1001 = vpop.permute.xlu0 %1000
      %1003 = vset.pattern.permute.xlu0 1
      %1004 = vperm.xlu0 %1003, %v309
      %v1005 = vpop.permute.xlu0 %1004
      %1007 = vset.pattern.permute.xlu0 1
      %1008 = vperm.xlu0 %1007, %v310
      %v1009 = vpop.permute.xlu0 %1008
      %1011 = vset.pattern.permute.xlu0 1
      %1012 = vperm.xlu0 %1011, %v311
      %v1013 = vpop.permute.xlu0 %1012
      %1015 = vset.pattern.permute.xlu0 1
      %1016 = vperm.xlu0 %1015, %v312
      %v1017 = vpop.permute.xlu0 %1016
      %1019 = vset.pattern.permute.xlu0 1
      %1020 = vperm.xlu0 %1019, %v313
      %v1021 = vpop.permute.xlu0 %1020
      %1023 = vset.pattern.permute.xlu0 1
      %1024 = vperm.xlu0 %1023, %v314
      %v1025 = vpop.permute.xlu0 %1024
      %1027 = vset.pattern.permute.xlu0 1
      %1028 = vperm.xlu0 %1027, %v315
      %v1029 = vpop.permute.xlu0 %1028
      %1031 = vset.pattern.permute.xlu0 1
      %1032 = vperm.xlu0 %1031, %v316
      %v1033 = vpop.permute.xlu0 %1032
      %1035 = vset.pattern.permute.xlu0 1
      %1036 = vperm.xlu0 %1035, %v317
      %v1037 = vpop.permute.xlu0 %1036
      %1039 = vset.pattern.permute.xlu0 1
      %1040 = vperm.xlu0 %1039, %v318
      %v1041 = vpop.permute.xlu0 %1040
      %1043 = vset.pattern.permute.xlu0 1
      %1044 = vperm.xlu0 %1043, %v319
      %v1045 = vpop.permute.xlu0 %1044
      %v1047 = vlaneseq
      %v1048 = vshrl.u32 %v1047, 7
      %v1049 = vsub.s32 1, %v1048
      %v1050 = vrot.slane %v321, %v1049
      %v1051 = vlaneseq
      %v1052 = vshrl.u32 %v1051, 7
      %v1053 = vsub.s32 5, %v1052
      %v1054 = vrot.slane %v321, %v1053
      %v1057 = vlaneseq
      %v1058 = vshrl.u32 %v1057, 7
      %v1059 = vsub.s32 1, %v1058
      %v1060 = vrot.slane %v1050, %v1059
      %v1061 = vlaneseq
      %v1062 = vshrl.u32 %v1061, 7
      %v1063 = vsub.s32 1, %v1062
      %v1064 = vrot.slane %v1054, %v1063
      %v1065 = vmul.f32 %v793, %v1060
      %v1066 = vmul.f32 %v793, %v1064
      %v1067 = vmul.f32 %v797, %v1060
      %v1068 = vmul.f32 %v797, %v1064
      %v1069 = vmul.f32 %v801, %v1060
      %v1070 = vmul.f32 %v801, %v1064
      %v1071 = vmul.f32 %v805, %v1060
      %v1072 = vmul.f32 %v805, %v1064
      %v1073 = vmul.f32 %v809, %v1060
      %v1074 = vmul.f32 %v809, %v1064
      %v1075 = vmul.f32 %v813, %v1060
      %v1076 = vmul.f32 %v813, %v1064
      %v1077 = vmul.f32 %v817, %v1060
      %v1078 = vmul.f32 %v817, %v1064
      %v1079 = vmul.f32 %v821, %v1060
      %v1080 = vmul.f32 %v821, %v1064
      %v1081 = vmul.f32 %v825, %v1060
      %v1082 = vmul.f32 %v825, %v1064
      %v1083 = vmul.f32 %v829, %v1060
      %v1084 = vmul.f32 %v829, %v1064
      %v1085 = vmul.f32 %v833, %v1060
      %v1086 = vmul.f32 %v833, %v1064
      %v1087 = vmul.f32 %v837, %v1060
      %v1088 = vmul.f32 %v837, %v1064
      %v1089 = vmul.f32 %v841, %v1060
      %v1090 = vmul.f32 %v841, %v1064
      %v1091 = vmul.f32 %v845, %v1060
      %v1092 = vmul.f32 %v845, %v1064
      %v1093 = vmul.f32 %v849, %v1060
      %v1094 = vmul.f32 %v849, %v1064
      %v1095 = vmul.f32 %v853, %v1060
      %v1096 = vmul.f32 %v853, %v1064
      %v1097 = vmul.f32 %v857, %v1060
      %v1098 = vmul.f32 %v857, %v1064
      %v1099 = vmul.f32 %v861, %v1060
      %v1100 = vmul.f32 %v861, %v1064
      %v1101 = vmul.f32 %v865, %v1060
      %v1102 = vmul.f32 %v865, %v1064
      %v1103 = vmul.f32 %v869, %v1060
      %v1104 = vmul.f32 %v869, %v1064
      %v1105 = vmul.f32 %v873, %v1060
      %v1106 = vmul.f32 %v873, %v1064
      %v1107 = vmul.f32 %v877, %v1060
      %v1108 = vmul.f32 %v877, %v1064
      %v1109 = vmul.f32 %v881, %v1060
      %v1110 = vmul.f32 %v881, %v1064
      %v1111 = vmul.f32 %v885, %v1060
      %v1112 = vmul.f32 %v885, %v1064
      %v1113 = vmul.f32 %v889, %v1060
      %v1114 = vmul.f32 %v889, %v1064
      %v1115 = vmul.f32 %v893, %v1060
      %v1116 = vmul.f32 %v893, %v1064
      %v1117 = vmul.f32 %v897, %v1060
      %v1118 = vmul.f32 %v897, %v1064
      %v1119 = vmul.f32 %v901, %v1060
      %v1120 = vmul.f32 %v901, %v1064
      %v1121 = vmul.f32 %v905, %v1060
      %v1122 = vmul.f32 %v905, %v1064
      %v1123 = vmul.f32 %v909, %v1060
      %v1124 = vmul.f32 %v909, %v1064
      %v1125 = vmul.f32 %v913, %v1060
      %v1126 = vmul.f32 %v913, %v1064
      %v1127 = vmul.f32 %v917, %v1060
      %v1128 = vmul.f32 %v917, %v1064
      %v1129 = vmul.f32 %v921, %v1060
      %v1130 = vmul.f32 %v921, %v1064
      %v1131 = vmul.f32 %v925, %v1060
      %v1132 = vmul.f32 %v925, %v1064
      %v1133 = vmul.f32 %v929, %v1060
      %v1134 = vmul.f32 %v929, %v1064
      %v1135 = vmul.f32 %v933, %v1060
      %v1136 = vmul.f32 %v933, %v1064
      %v1137 = vmul.f32 %v937, %v1060
      %v1138 = vmul.f32 %v937, %v1064
      %v1139 = vmul.f32 %v941, %v1060
      %v1140 = vmul.f32 %v941, %v1064
      %v1141 = vmul.f32 %v945, %v1060
      %v1142 = vmul.f32 %v945, %v1064
      %v1143 = vmul.f32 %v949, %v1060
      %v1144 = vmul.f32 %v949, %v1064
      %v1145 = vmul.f32 %v953, %v1060
      %v1146 = vmul.f32 %v953, %v1064
      %v1147 = vmul.f32 %v957, %v1060
      %v1148 = vmul.f32 %v957, %v1064
      %v1149 = vmul.f32 %v961, %v1060
      %v1150 = vmul.f32 %v961, %v1064
      %v1151 = vmul.f32 %v965, %v1060
      %v1152 = vmul.f32 %v965, %v1064
      %v1153 = vmul.f32 %v969, %v1060
      %v1154 = vmul.f32 %v969, %v1064
      %v1155 = vmul.f32 %v973, %v1060
      %v1156 = vmul.f32 %v973, %v1064
      %v1157 = vmul.f32 %v977, %v1060
      %v1158 = vmul.f32 %v977, %v1064
      %v1159 = vmul.f32 %v981, %v1060
      %v1160 = vmul.f32 %v981, %v1064
      %v1161 = vmul.f32 %v985, %v1060
      %v1162 = vmul.f32 %v985, %v1064
      %v1163 = vmul.f32 %v989, %v1060
      %v1164 = vmul.f32 %v989, %v1064
      %v1165 = vmul.f32 %v993, %v1060
      %v1166 = vmul.f32 %v993, %v1064
      %v1167 = vmul.f32 %v997, %v1060
      %v1168 = vmul.f32 %v997, %v1064
      %v1169 = vmul.f32 %v1001, %v1060
      %v1170 = vmul.f32 %v1001, %v1064
      %v1171 = vmul.f32 %v1005, %v1060
      %v1172 = vmul.f32 %v1005, %v1064
      %v1173 = vmul.f32 %v1009, %v1060
      %v1174 = vmul.f32 %v1009, %v1064
      %v1175 = vmul.f32 %v1013, %v1060
      %v1176 = vmul.f32 %v1013, %v1064
      %v1177 = vmul.f32 %v1017, %v1060
      %v1178 = vmul.f32 %v1017, %v1064
      %v1179 = vmul.f32 %v1021, %v1060
      %v1180 = vmul.f32 %v1021, %v1064
      %v1181 = vmul.f32 %v1025, %v1060
      %v1182 = vmul.f32 %v1025, %v1064
      %v1183 = vmul.f32 %v1029, %v1060
      %v1184 = vmul.f32 %v1029, %v1064
      %v1185 = vmul.f32 %v1033, %v1060
      %v1186 = vmul.f32 %v1033, %v1064
      %v1187 = vmul.f32 %v1037, %v1060
      %v1188 = vmul.f32 %v1037, %v1064
      %v1189 = vmul.f32 %v1041, %v1060
      %v1190 = vmul.f32 %v1041, %v1064
      %v1191 = vmul.f32 %v1045, %v1060
      %v1192 = vmul.f32 %v1045, %v1064
      %v1193 = vadd.f32 %v663, %v1065
      %v1194 = vadd.f32 %v664, %v1066
      %v1195 = vadd.f32 %v665, %v1067
      %v1196 = vadd.f32 %v666, %v1068
      %v1197 = vadd.f32 %v667, %v1069
      %v1198 = vadd.f32 %v668, %v1070
      %v1199 = vadd.f32 %v669, %v1071
      %v1200 = vadd.f32 %v670, %v1072
      %v1201 = vadd.f32 %v671, %v1073
      %v1202 = vadd.f32 %v672, %v1074
      %v1203 = vadd.f32 %v673, %v1075
      %v1204 = vadd.f32 %v674, %v1076
      %v1205 = vadd.f32 %v675, %v1077
      %v1206 = vadd.f32 %v676, %v1078
      %v1207 = vadd.f32 %v677, %v1079
      %v1208 = vadd.f32 %v678, %v1080
      %v1209 = vadd.f32 %v679, %v1081
      %v1210 = vadd.f32 %v680, %v1082
      %v1211 = vadd.f32 %v681, %v1083
      %v1212 = vadd.f32 %v682, %v1084
      %v1213 = vadd.f32 %v683, %v1085
      %v1214 = vadd.f32 %v684, %v1086
      %v1215 = vadd.f32 %v685, %v1087
      %v1216 = vadd.f32 %v686, %v1088
      %v1217 = vadd.f32 %v687, %v1089
      %v1218 = vadd.f32 %v688, %v1090
      %v1219 = vadd.f32 %v689, %v1091
      %v1220 = vadd.f32 %v690, %v1092
      %v1221 = vadd.f32 %v691, %v1093
      %v1222 = vadd.f32 %v692, %v1094
      %v1223 = vadd.f32 %v693, %v1095
      %v1224 = vadd.f32 %v694, %v1096
      %v1225 = vadd.f32 %v695, %v1097
      %v1226 = vadd.f32 %v696, %v1098
      %v1227 = vadd.f32 %v697, %v1099
      %v1228 = vadd.f32 %v698, %v1100
      %v1229 = vadd.f32 %v699, %v1101
      %v1230 = vadd.f32 %v700, %v1102
      %v1231 = vadd.f32 %v701, %v1103
      %v1232 = vadd.f32 %v702, %v1104
      %v1233 = vadd.f32 %v703, %v1105
      %v1234 = vadd.f32 %v704, %v1106
      %v1235 = vadd.f32 %v705, %v1107
      %v1236 = vadd.f32 %v706, %v1108
      %v1237 = vadd.f32 %v707, %v1109
      %v1238 = vadd.f32 %v708, %v1110
      %v1239 = vadd.f32 %v709, %v1111
      %v1240 = vadd.f32 %v710, %v1112
      %v1241 = vadd.f32 %v711, %v1113
      %v1242 = vadd.f32 %v712, %v1114
      %v1243 = vadd.f32 %v713, %v1115
      %v1244 = vadd.f32 %v714, %v1116
      %v1245 = vadd.f32 %v715, %v1117
      %v1246 = vadd.f32 %v716, %v1118
      %v1247 = vadd.f32 %v717, %v1119
      %v1248 = vadd.f32 %v718, %v1120
      %v1249 = vadd.f32 %v719, %v1121
      %v1250 = vadd.f32 %v720, %v1122
      %v1251 = vadd.f32 %v721, %v1123
      %v1252 = vadd.f32 %v722, %v1124
      %v1253 = vadd.f32 %v723, %v1125
      %v1254 = vadd.f32 %v724, %v1126
      %v1255 = vadd.f32 %v725, %v1127
      %v1256 = vadd.f32 %v726, %v1128
      %v1257 = vadd.f32 %v727, %v1129
      %v1258 = vadd.f32 %v728, %v1130
      %v1259 = vadd.f32 %v729, %v1131
      %v1260 = vadd.f32 %v730, %v1132
      %v1261 = vadd.f32 %v731, %v1133
      %v1262 = vadd.f32 %v732, %v1134
      %v1263 = vadd.f32 %v733, %v1135
      %v1264 = vadd.f32 %v734, %v1136
      %v1265 = vadd.f32 %v735, %v1137
      %v1266 = vadd.f32 %v736, %v1138
      %v1267 = vadd.f32 %v737, %v1139
      %v1268 = vadd.f32 %v738, %v1140
      %v1269 = vadd.f32 %v739, %v1141
      %v1270 = vadd.f32 %v740, %v1142
      %v1271 = vadd.f32 %v741, %v1143
      %v1272 = vadd.f32 %v742, %v1144
      %v1273 = vadd.f32 %v743, %v1145
      %v1274 = vadd.f32 %v744, %v1146
      %v1275 = vadd.f32 %v745, %v1147
      %v1276 = vadd.f32 %v746, %v1148
      %v1277 = vadd.f32 %v747, %v1149
      %v1278 = vadd.f32 %v748, %v1150
      %v1279 = vadd.f32 %v749, %v1151
      %v1280 = vadd.f32 %v750, %v1152
      %v1281 = vadd.f32 %v751, %v1153
      %v1282 = vadd.f32 %v752, %v1154
      %v1283 = vadd.f32 %v753, %v1155
      %v1284 = vadd.f32 %v754, %v1156
      %v1285 = vadd.f32 %v755, %v1157
      %v1286 = vadd.f32 %v756, %v1158
      %v1287 = vadd.f32 %v757, %v1159
      %v1288 = vadd.f32 %v758, %v1160
      %v1289 = vadd.f32 %v759, %v1161
      %v1290 = vadd.f32 %v760, %v1162
      %v1291 = vadd.f32 %v761, %v1163
      %v1292 = vadd.f32 %v762, %v1164
      %v1293 = vadd.f32 %v763, %v1165
      %v1294 = vadd.f32 %v764, %v1166
      %v1295 = vadd.f32 %v765, %v1167
      %v1296 = vadd.f32 %v766, %v1168
      %v1297 = vadd.f32 %v767, %v1169
      %v1298 = vadd.f32 %v768, %v1170
      %v1299 = vadd.f32 %v769, %v1171
      %v1300 = vadd.f32 %v770, %v1172
      %v1301 = vadd.f32 %v771, %v1173
      %v1302 = vadd.f32 %v772, %v1174
      %v1303 = vadd.f32 %v773, %v1175
      %v1304 = vadd.f32 %v774, %v1176
      %v1305 = vadd.f32 %v775, %v1177
      %v1306 = vadd.f32 %v776, %v1178
      %v1307 = vadd.f32 %v777, %v1179
      %v1308 = vadd.f32 %v778, %v1180
      %v1309 = vadd.f32 %v779, %v1181
      %v1310 = vadd.f32 %v780, %v1182
      %v1311 = vadd.f32 %v781, %v1183
      %v1312 = vadd.f32 %v782, %v1184
      %v1313 = vadd.f32 %v783, %v1185
      %v1314 = vadd.f32 %v784, %v1186
      %v1315 = vadd.f32 %v785, %v1187
      %v1316 = vadd.f32 %v786, %v1188
      %v1317 = vadd.f32 %v787, %v1189
      %v1318 = vadd.f32 %v788, %v1190
      %v1319 = vadd.f32 %v789, %v1191
      %v1320 = vadd.f32 %v790, %v1192
      %1321 = vset.pattern.permute.xlu0 2
      %1322 = vperm.xlu0 %1321, %v256
      %v1323 = vpop.permute.xlu0 %1322
      %1325 = vset.pattern.permute.xlu0 2
      %1326 = vperm.xlu0 %1325, %v257
      %v1327 = vpop.permute.xlu0 %1326
      %1329 = vset.pattern.permute.xlu0 2
      %1330 = vperm.xlu0 %1329, %v258
      %v1331 = vpop.permute.xlu0 %1330
      %1333 = vset.pattern.permute.xlu0 2
      %1334 = vperm.xlu0 %1333, %v259
      %v1335 = vpop.permute.xlu0 %1334
      %1337 = vset.pattern.permute.xlu0 2
      %1338 = vperm.xlu0 %1337, %v260
      %v1339 = vpop.permute.xlu0 %1338
      %1341 = vset.pattern.permute.xlu0 2
      %1342 = vperm.xlu0 %1341, %v261
      %v1343 = vpop.permute.xlu0 %1342
      %1345 = vset.pattern.permute.xlu0 2
      %1346 = vperm.xlu0 %1345, %v262
      %v1347 = vpop.permute.xlu0 %1346
      %1349 = vset.pattern.permute.xlu0 2
      %1350 = vperm.xlu0 %1349, %v263
      %v1351 = vpop.permute.xlu0 %1350
      %1353 = vset.pattern.permute.xlu0 2
      %1354 = vperm.xlu0 %1353, %v264
      %v1355 = vpop.permute.xlu0 %1354
      %1357 = vset.pattern.permute.xlu0 2
      %1358 = vperm.xlu0 %1357, %v265
      %v1359 = vpop.permute.xlu0 %1358
      %1361 = vset.pattern.permute.xlu0 2
      %1362 = vperm.xlu0 %1361, %v266
      %v1363 = vpop.permute.xlu0 %1362
      %1365 = vset.pattern.permute.xlu0 2
      %1366 = vperm.xlu0 %1365, %v267
      %v1367 = vpop.permute.xlu0 %1366
      %1369 = vset.pattern.permute.xlu0 2
      %1370 = vperm.xlu0 %1369, %v268
      %v1371 = vpop.permute.xlu0 %1370
      %1373 = vset.pattern.permute.xlu0 2
      %1374 = vperm.xlu0 %1373, %v269
      %v1375 = vpop.permute.xlu0 %1374
      %1377 = vset.pattern.permute.xlu0 2
      %1378 = vperm.xlu0 %1377, %v270
      %v1379 = vpop.permute.xlu0 %1378
      %1381 = vset.pattern.permute.xlu0 2
      %1382 = vperm.xlu0 %1381, %v271
      %v1383 = vpop.permute.xlu0 %1382
      %1385 = vset.pattern.permute.xlu0 2
      %1386 = vperm.xlu0 %1385, %v272
      %v1387 = vpop.permute.xlu0 %1386
      %1389 = vset.pattern.permute.xlu0 2
      %1390 = vperm.xlu0 %1389, %v273
      %v1391 = vpop.permute.xlu0 %1390
      %1393 = vset.pattern.permute.xlu0 2
      %1394 = vperm.xlu0 %1393, %v274
      %v1395 = vpop.permute.xlu0 %1394
      %1397 = vset.pattern.permute.xlu0 2
      %1398 = vperm.xlu0 %1397, %v275
      %v1399 = vpop.permute.xlu0 %1398
      %1401 = vset.pattern.permute.xlu0 2
      %1402 = vperm.xlu0 %1401, %v276
      %v1403 = vpop.permute.xlu0 %1402
      %1405 = vset.pattern.permute.xlu0 2
      %1406 = vperm.xlu0 %1405, %v277
      %v1407 = vpop.permute.xlu0 %1406
      %1409 = vset.pattern.permute.xlu0 2
      %1410 = vperm.xlu0 %1409, %v278
      %v1411 = vpop.permute.xlu0 %1410
      %1413 = vset.pattern.permute.xlu0 2
      %1414 = vperm.xlu0 %1413, %v279
      %v1415 = vpop.permute.xlu0 %1414
      %1417 = vset.pattern.permute.xlu0 2
      %1418 = vperm.xlu0 %1417, %v280
      %v1419 = vpop.permute.xlu0 %1418
      %1421 = vset.pattern.permute.xlu0 2
      %1422 = vperm.xlu0 %1421, %v281
      %v1423 = vpop.permute.xlu0 %1422
      %1425 = vset.pattern.permute.xlu0 2
      %1426 = vperm.xlu0 %1425, %v282
      %v1427 = vpop.permute.xlu0 %1426
      %1429 = vset.pattern.permute.xlu0 2
      %1430 = vperm.xlu0 %1429, %v283
      %v1431 = vpop.permute.xlu0 %1430
      %1433 = vset.pattern.permute.xlu0 2
      %1434 = vperm.xlu0 %1433, %v284
      %v1435 = vpop.permute.xlu0 %1434
      %1437 = vset.pattern.permute.xlu0 2
      %1438 = vperm.xlu0 %1437, %v285
      %v1439 = vpop.permute.xlu0 %1438
      %1441 = vset.pattern.permute.xlu0 2
      %1442 = vperm.xlu0 %1441, %v286
      %v1443 = vpop.permute.xlu0 %1442
      %1445 = vset.pattern.permute.xlu0 2
      %1446 = vperm.xlu0 %1445, %v287
      %v1447 = vpop.permute.xlu0 %1446
      %1449 = vset.pattern.permute.xlu0 2
      %1450 = vperm.xlu0 %1449, %v288
      %v1451 = vpop.permute.xlu0 %1450
      %1453 = vset.pattern.permute.xlu0 2
      %1454 = vperm.xlu0 %1453, %v289
      %v1455 = vpop.permute.xlu0 %1454
      %1457 = vset.pattern.permute.xlu0 2
      %1458 = vperm.xlu0 %1457, %v290
      %v1459 = vpop.permute.xlu0 %1458
      %1461 = vset.pattern.permute.xlu0 2
      %1462 = vperm.xlu0 %1461, %v291
      %v1463 = vpop.permute.xlu0 %1462
      %1465 = vset.pattern.permute.xlu0 2
      %1466 = vperm.xlu0 %1465, %v292
      %v1467 = vpop.permute.xlu0 %1466
      %1469 = vset.pattern.permute.xlu0 2
      %1470 = vperm.xlu0 %1469, %v293
      %v1471 = vpop.permute.xlu0 %1470
      %1473 = vset.pattern.permute.xlu0 2
      %1474 = vperm.xlu0 %1473, %v294
      %v1475 = vpop.permute.xlu0 %1474
      %1477 = vset.pattern.permute.xlu0 2
      %1478 = vperm.xlu0 %1477, %v295
      %v1479 = vpop.permute.xlu0 %1478
      %1481 = vset.pattern.permute.xlu0 2
      %1482 = vperm.xlu0 %1481, %v296
      %v1483 = vpop.permute.xlu0 %1482
      %1485 = vset.pattern.permute.xlu0 2
      %1486 = vperm.xlu0 %1485, %v297
      %v1487 = vpop.permute.xlu0 %1486
      %1489 = vset.pattern.permute.xlu0 2
      %1490 = vperm.xlu0 %1489, %v298
      %v1491 = vpop.permute.xlu0 %1490
      %1493 = vset.pattern.permute.xlu0 2
      %1494 = vperm.xlu0 %1493, %v299
      %v1495 = vpop.permute.xlu0 %1494
      %1497 = vset.pattern.permute.xlu0 2
      %1498 = vperm.xlu0 %1497, %v300
      %v1499 = vpop.permute.xlu0 %1498
      %1501 = vset.pattern.permute.xlu0 2
      %1502 = vperm.xlu0 %1501, %v301
      %v1503 = vpop.permute.xlu0 %1502
      %1505 = vset.pattern.permute.xlu0 2
      %1506 = vperm.xlu0 %1505, %v302
      %v1507 = vpop.permute.xlu0 %1506
      %1509 = vset.pattern.permute.xlu0 2
      %1510 = vperm.xlu0 %1509, %v303
      %v1511 = vpop.permute.xlu0 %1510
      %1513 = vset.pattern.permute.xlu0 2
      %1514 = vperm.xlu0 %1513, %v304
      %v1515 = vpop.permute.xlu0 %1514
      %1517 = vset.pattern.permute.xlu0 2
      %1518 = vperm.xlu0 %1517, %v305
      %v1519 = vpop.permute.xlu0 %1518
      %1521 = vset.pattern.permute.xlu0 2
      %1522 = vperm.xlu0 %1521, %v306
      %v1523 = vpop.permute.xlu0 %1522
      %1525 = vset.pattern.permute.xlu0 2
      %1526 = vperm.xlu0 %1525, %v307
      %v1527 = vpop.permute.xlu0 %1526
      %1529 = vset.pattern.permute.xlu0 2
      %1530 = vperm.xlu0 %1529, %v308
      %v1531 = vpop.permute.xlu0 %1530
      %1533 = vset.pattern.permute.xlu0 2
      %1534 = vperm.xlu0 %1533, %v309
      %v1535 = vpop.permute.xlu0 %1534
      %1537 = vset.pattern.permute.xlu0 2
      %1538 = vperm.xlu0 %1537, %v310
      %v1539 = vpop.permute.xlu0 %1538
      %1541 = vset.pattern.permute.xlu0 2
      %1542 = vperm.xlu0 %1541, %v311
      %v1543 = vpop.permute.xlu0 %1542
      %1545 = vset.pattern.permute.xlu0 2
      %1546 = vperm.xlu0 %1545, %v312
      %v1547 = vpop.permute.xlu0 %1546
      %1549 = vset.pattern.permute.xlu0 2
      %1550 = vperm.xlu0 %1549, %v313
      %v1551 = vpop.permute.xlu0 %1550
      %1553 = vset.pattern.permute.xlu0 2
      %1554 = vperm.xlu0 %1553, %v314
      %v1555 = vpop.permute.xlu0 %1554
      %1557 = vset.pattern.permute.xlu0 2
      %1558 = vperm.xlu0 %1557, %v315
      %v1559 = vpop.permute.xlu0 %1558
      %1561 = vset.pattern.permute.xlu0 2
      %1562 = vperm.xlu0 %1561, %v316
      %v1563 = vpop.permute.xlu0 %1562
      %1565 = vset.pattern.permute.xlu0 2
      %1566 = vperm.xlu0 %1565, %v317
      %v1567 = vpop.permute.xlu0 %1566
      %1569 = vset.pattern.permute.xlu0 2
      %1570 = vperm.xlu0 %1569, %v318
      %v1571 = vpop.permute.xlu0 %1570
      %1573 = vset.pattern.permute.xlu0 2
      %1574 = vperm.xlu0 %1573, %v319
      %v1575 = vpop.permute.xlu0 %1574
      %v1577 = vlaneseq
      %v1578 = vshrl.u32 %v1577, 7
      %v1579 = vsub.s32 2, %v1578
      %v1580 = vrot.slane %v321, %v1579
      %v1581 = vlaneseq
      %v1582 = vshrl.u32 %v1581, 7
      %v1583 = vsub.s32 6, %v1582
      %v1584 = vrot.slane %v321, %v1583
      %v1587 = vlaneseq
      %v1588 = vshrl.u32 %v1587, 7
      %v1589 = vsub.s32 2, %v1588
      %v1590 = vrot.slane %v1580, %v1589
      %v1591 = vlaneseq
      %v1592 = vshrl.u32 %v1591, 7
      %v1593 = vsub.s32 2, %v1592
      %v1594 = vrot.slane %v1584, %v1593
      %v1595 = vmul.f32 %v1323, %v1590
      %v1596 = vmul.f32 %v1323, %v1594
      %v1597 = vmul.f32 %v1327, %v1590
      %v1598 = vmul.f32 %v1327, %v1594
      %v1599 = vmul.f32 %v1331, %v1590
      %v1600 = vmul.f32 %v1331, %v1594
      %v1601 = vmul.f32 %v1335, %v1590
      %v1602 = vmul.f32 %v1335, %v1594
      %v1603 = vmul.f32 %v1339, %v1590
      %v1604 = vmul.f32 %v1339, %v1594
      %v1605 = vmul.f32 %v1343, %v1590
      %v1606 = vmul.f32 %v1343, %v1594
      %v1607 = vmul.f32 %v1347, %v1590
      %v1608 = vmul.f32 %v1347, %v1594
      %v1609 = vmul.f32 %v1351, %v1590
      %v1610 = vmul.f32 %v1351, %v1594
      %v1611 = vmul.f32 %v1355, %v1590
      %v1612 = vmul.f32 %v1355, %v1594
      %v1613 = vmul.f32 %v1359, %v1590
      %v1614 = vmul.f32 %v1359, %v1594
      %v1615 = vmul.f32 %v1363, %v1590
      %v1616 = vmul.f32 %v1363, %v1594
      %v1617 = vmul.f32 %v1367, %v1590
      %v1618 = vmul.f32 %v1367, %v1594
      %v1619 = vmul.f32 %v1371, %v1590
      %v1620 = vmul.f32 %v1371, %v1594
      %v1621 = vmul.f32 %v1375, %v1590
      %v1622 = vmul.f32 %v1375, %v1594
      %v1623 = vmul.f32 %v1379, %v1590
      %v1624 = vmul.f32 %v1379, %v1594
      %v1625 = vmul.f32 %v1383, %v1590
      %v1626 = vmul.f32 %v1383, %v1594
      %v1627 = vmul.f32 %v1387, %v1590
      %v1628 = vmul.f32 %v1387, %v1594
      %v1629 = vmul.f32 %v1391, %v1590
      %v1630 = vmul.f32 %v1391, %v1594
      %v1631 = vmul.f32 %v1395, %v1590
      %v1632 = vmul.f32 %v1395, %v1594
      %v1633 = vmul.f32 %v1399, %v1590
      %v1634 = vmul.f32 %v1399, %v1594
      %v1635 = vmul.f32 %v1403, %v1590
      %v1636 = vmul.f32 %v1403, %v1594
      %v1637 = vmul.f32 %v1407, %v1590
      %v1638 = vmul.f32 %v1407, %v1594
      %v1639 = vmul.f32 %v1411, %v1590
      %v1640 = vmul.f32 %v1411, %v1594
      %v1641 = vmul.f32 %v1415, %v1590
      %v1642 = vmul.f32 %v1415, %v1594
      %v1643 = vmul.f32 %v1419, %v1590
      %v1644 = vmul.f32 %v1419, %v1594
      %v1645 = vmul.f32 %v1423, %v1590
      %v1646 = vmul.f32 %v1423, %v1594
      %v1647 = vmul.f32 %v1427, %v1590
      %v1648 = vmul.f32 %v1427, %v1594
      %v1649 = vmul.f32 %v1431, %v1590
      %v1650 = vmul.f32 %v1431, %v1594
      %v1651 = vmul.f32 %v1435, %v1590
      %v1652 = vmul.f32 %v1435, %v1594
      %v1653 = vmul.f32 %v1439, %v1590
      %v1654 = vmul.f32 %v1439, %v1594
      %v1655 = vmul.f32 %v1443, %v1590
      %v1656 = vmul.f32 %v1443, %v1594
      %v1657 = vmul.f32 %v1447, %v1590
      %v1658 = vmul.f32 %v1447, %v1594
      %v1659 = vmul.f32 %v1451, %v1590
      %v1660 = vmul.f32 %v1451, %v1594
      %v1661 = vmul.f32 %v1455, %v1590
      %v1662 = vmul.f32 %v1455, %v1594
      %v1663 = vmul.f32 %v1459, %v1590
      %v1664 = vmul.f32 %v1459, %v1594
      %v1665 = vmul.f32 %v1463, %v1590
      %v1666 = vmul.f32 %v1463, %v1594
      %v1667 = vmul.f32 %v1467, %v1590
      %v1668 = vmul.f32 %v1467, %v1594
      %v1669 = vmul.f32 %v1471, %v1590
      %v1670 = vmul.f32 %v1471, %v1594
      %v1671 = vmul.f32 %v1475, %v1590
      %v1672 = vmul.f32 %v1475, %v1594
      %v1673 = vmul.f32 %v1479, %v1590
      %v1674 = vmul.f32 %v1479, %v1594
      %v1675 = vmul.f32 %v1483, %v1590
      %v1676 = vmul.f32 %v1483, %v1594
      %v1677 = vmul.f32 %v1487, %v1590
      %v1678 = vmul.f32 %v1487, %v1594
      %v1679 = vmul.f32 %v1491, %v1590
      %v1680 = vmul.f32 %v1491, %v1594
      %v1681 = vmul.f32 %v1495, %v1590
      %v1682 = vmul.f32 %v1495, %v1594
      %v1683 = vmul.f32 %v1499, %v1590
      %v1684 = vmul.f32 %v1499, %v1594
      %v1685 = vmul.f32 %v1503, %v1590
      %v1686 = vmul.f32 %v1503, %v1594
      %v1687 = vmul.f32 %v1507, %v1590
      %v1688 = vmul.f32 %v1507, %v1594
      %v1689 = vmul.f32 %v1511, %v1590
      %v1690 = vmul.f32 %v1511, %v1594
      %v1691 = vmul.f32 %v1515, %v1590
      %v1692 = vmul.f32 %v1515, %v1594
      %v1693 = vmul.f32 %v1519, %v1590
      %v1694 = vmul.f32 %v1519, %v1594
      %v1695 = vmul.f32 %v1523, %v1590
      %v1696 = vmul.f32 %v1523, %v1594
      %v1697 = vmul.f32 %v1527, %v1590
      %v1698 = vmul.f32 %v1527, %v1594
      %v1699 = vmul.f32 %v1531, %v1590
      %v1700 = vmul.f32 %v1531, %v1594
      %v1701 = vmul.f32 %v1535, %v1590
      %v1702 = vmul.f32 %v1535, %v1594
      %v1703 = vmul.f32 %v1539, %v1590
      %v1704 = vmul.f32 %v1539, %v1594
      %v1705 = vmul.f32 %v1543, %v1590
      %v1706 = vmul.f32 %v1543, %v1594
      %v1707 = vmul.f32 %v1547, %v1590
      %v1708 = vmul.f32 %v1547, %v1594
      %v1709 = vmul.f32 %v1551, %v1590
      %v1710 = vmul.f32 %v1551, %v1594
      %v1711 = vmul.f32 %v1555, %v1590
      %v1712 = vmul.f32 %v1555, %v1594
      %v1713 = vmul.f32 %v1559, %v1590
      %v1714 = vmul.f32 %v1559, %v1594
      %v1715 = vmul.f32 %v1563, %v1590
      %v1716 = vmul.f32 %v1563, %v1594
      %v1717 = vmul.f32 %v1567, %v1590
      %v1718 = vmul.f32 %v1567, %v1594
      %v1719 = vmul.f32 %v1571, %v1590
      %v1720 = vmul.f32 %v1571, %v1594
      %v1721 = vmul.f32 %v1575, %v1590
      %v1722 = vmul.f32 %v1575, %v1594
      %v1723 = vadd.f32 %v1193, %v1595
      %v1724 = vadd.f32 %v1194, %v1596
      %v1725 = vadd.f32 %v1195, %v1597
      %v1726 = vadd.f32 %v1196, %v1598
      %v1727 = vadd.f32 %v1197, %v1599
      %v1728 = vadd.f32 %v1198, %v1600
      %v1729 = vadd.f32 %v1199, %v1601
      %v1730 = vadd.f32 %v1200, %v1602
      %v1731 = vadd.f32 %v1201, %v1603
      %v1732 = vadd.f32 %v1202, %v1604
      %v1733 = vadd.f32 %v1203, %v1605
      %v1734 = vadd.f32 %v1204, %v1606
      %v1735 = vadd.f32 %v1205, %v1607
      %v1736 = vadd.f32 %v1206, %v1608
      %v1737 = vadd.f32 %v1207, %v1609
      %v1738 = vadd.f32 %v1208, %v1610
      %v1739 = vadd.f32 %v1209, %v1611
      %v1740 = vadd.f32 %v1210, %v1612
      %v1741 = vadd.f32 %v1211, %v1613
      %v1742 = vadd.f32 %v1212, %v1614
      %v1743 = vadd.f32 %v1213, %v1615
      %v1744 = vadd.f32 %v1214, %v1616
      %v1745 = vadd.f32 %v1215, %v1617
      %v1746 = vadd.f32 %v1216, %v1618
      %v1747 = vadd.f32 %v1217, %v1619
      %v1748 = vadd.f32 %v1218, %v1620
      %v1749 = vadd.f32 %v1219, %v1621
      %v1750 = vadd.f32 %v1220, %v1622
      %v1751 = vadd.f32 %v1221, %v1623
      %v1752 = vadd.f32 %v1222, %v1624
      %v1753 = vadd.f32 %v1223, %v1625
      %v1754 = vadd.f32 %v1224, %v1626
      %v1755 = vadd.f32 %v1225, %v1627
      %v1756 = vadd.f32 %v1226, %v1628
      %v1757 = vadd.f32 %v1227, %v1629
      %v1758 = vadd.f32 %v1228, %v1630
      %v1759 = vadd.f32 %v1229, %v1631
      %v1760 = vadd.f32 %v1230, %v1632
      %v1761 = vadd.f32 %v1231, %v1633
      %v1762 = vadd.f32 %v1232, %v1634
      %v1763 = vadd.f32 %v1233, %v1635
      %v1764 = vadd.f32 %v1234, %v1636
      %v1765 = vadd.f32 %v1235, %v1637
      %v1766 = vadd.f32 %v1236, %v1638
      %v1767 = vadd.f32 %v1237, %v1639
      %v1768 = vadd.f32 %v1238, %v1640
      %v1769 = vadd.f32 %v1239, %v1641
      %v1770 = vadd.f32 %v1240, %v1642
      %v1771 = vadd.f32 %v1241, %v1643
      %v1772 = vadd.f32 %v1242, %v1644
      %v1773 = vadd.f32 %v1243, %v1645
      %v1774 = vadd.f32 %v1244, %v1646
      %v1775 = vadd.f32 %v1245, %v1647
      %v1776 = vadd.f32 %v1246, %v1648
      %v1777 = vadd.f32 %v1247, %v1649
      %v1778 = vadd.f32 %v1248, %v1650
      %v1779 = vadd.f32 %v1249, %v1651
      %v1780 = vadd.f32 %v1250, %v1652
      %v1781 = vadd.f32 %v1251, %v1653
      %v1782 = vadd.f32 %v1252, %v1654
      %v1783 = vadd.f32 %v1253, %v1655
      %v1784 = vadd.f32 %v1254, %v1656
      %v1785 = vadd.f32 %v1255, %v1657
      %v1786 = vadd.f32 %v1256, %v1658
      %v1787 = vadd.f32 %v1257, %v1659
      %v1788 = vadd.f32 %v1258, %v1660
      %v1789 = vadd.f32 %v1259, %v1661
      %v1790 = vadd.f32 %v1260, %v1662
      %v1791 = vadd.f32 %v1261, %v1663
      %v1792 = vadd.f32 %v1262, %v1664
      %v1793 = vadd.f32 %v1263, %v1665
      %v1794 = vadd.f32 %v1264, %v1666
      %v1795 = vadd.f32 %v1265, %v1667
      %v1796 = vadd.f32 %v1266, %v1668
      %v1797 = vadd.f32 %v1267, %v1669
      %v1798 = vadd.f32 %v1268, %v1670
      %v1799 = vadd.f32 %v1269, %v1671
      %v1800 = vadd.f32 %v1270, %v1672
      %v1801 = vadd.f32 %v1271, %v1673
      %v1802 = vadd.f32 %v1272, %v1674
      %v1803 = vadd.f32 %v1273, %v1675
      %v1804 = vadd.f32 %v1274, %v1676
      %v1805 = vadd.f32 %v1275, %v1677
      %v1806 = vadd.f32 %v1276, %v1678
      %v1807 = vadd.f32 %v1277, %v1679
      %v1808 = vadd.f32 %v1278, %v1680
      %v1809 = vadd.f32 %v1279, %v1681
      %v1810 = vadd.f32 %v1280, %v1682
      %v1811 = vadd.f32 %v1281, %v1683
      %v1812 = vadd.f32 %v1282, %v1684
      %v1813 = vadd.f32 %v1283, %v1685
      %v1814 = vadd.f32 %v1284, %v1686
      %v1815 = vadd.f32 %v1285, %v1687
      %v1816 = vadd.f32 %v1286, %v1688
      %v1817 = vadd.f32 %v1287, %v1689
      %v1818 = vadd.f32 %v1288, %v1690
      %v1819 = vadd.f32 %v1289, %v1691
      %v1820 = vadd.f32 %v1290, %v1692
      %v1821 = vadd.f32 %v1291, %v1693
      %v1822 = vadd.f32 %v1292, %v1694
      %v1823 = vadd.f32 %v1293, %v1695
      %v1824 = vadd.f32 %v1294, %v1696
      %v1825 = vadd.f32 %v1295, %v1697
      %v1826 = vadd.f32 %v1296, %v1698
      %v1827 = vadd.f32 %v1297, %v1699
      %v1828 = vadd.f32 %v1298, %v1700
      %v1829 = vadd.f32 %v1299, %v1701
      %v1830 = vadd.f32 %v1300, %v1702
      %v1831 = vadd.f32 %v1301, %v1703
      %v1832 = vadd.f32 %v1302, %v1704
      %v1833 = vadd.f32 %v1303, %v1705
      %v1834 = vadd.f32 %v1304, %v1706
      %v1835 = vadd.f32 %v1305, %v1707
      %v1836 = vadd.f32 %v1306, %v1708
      %v1837 = vadd.f32 %v1307, %v1709
      %v1838 = vadd.f32 %v1308, %v1710
      %v1839 = vadd.f32 %v1309, %v1711
      %v1840 = vadd.f32 %v1310, %v1712
      %v1841 = vadd.f32 %v1311, %v1713
      %v1842 = vadd.f32 %v1312, %v1714
      %v1843 = vadd.f32 %v1313, %v1715
      %v1844 = vadd.f32 %v1314, %v1716
      %v1845 = vadd.f32 %v1315, %v1717
      %v1846 = vadd.f32 %v1316, %v1718
      %v1847 = vadd.f32 %v1317, %v1719
      %v1848 = vadd.f32 %v1318, %v1720
      %v1849 = vadd.f32 %v1319, %v1721
      %v1850 = vadd.f32 %v1320, %v1722
      %v1852 = vlaneseq
      %v1853 = vshrl.u32 %v1852, 7
      %v1854 = vsub.s32 0, %v1853
      %v1855 = vrot.slane %v320, %v1854
      %v1856 = vlaneseq
      %v1857 = vshrl.u32 %v1856, 7
      %v1858 = vsub.s32 4, %v1857
      %v1859 = vrot.slane %v320, %v1858
      %v1862 = vlaneseq
      %v1863 = vshrl.u32 %v1862, 7
      %v1864 = vsub.s32 0, %v1863
      %v1865 = vrot.slane %v1855, %v1864
      %v1866 = vlaneseq
      %v1867 = vshrl.u32 %v1866, 7
      %v1868 = vsub.s32 0, %v1867
      %v1869 = vrot.slane %v1859, %v1868
      %v1870 = vmul.f32 %v327, %v1865
      %v1871 = vmul.f32 %v327, %v1869
      %v1872 = vmul.f32 %v332, %v1865
      %v1873 = vmul.f32 %v332, %v1869
      %v1874 = vmul.f32 %v337, %v1865
      %v1875 = vmul.f32 %v337, %v1869
      %v1876 = vmul.f32 %v342, %v1865
      %v1877 = vmul.f32 %v342, %v1869
      %v1878 = vmul.f32 %v347, %v1865
      %v1879 = vmul.f32 %v347, %v1869
      %v1880 = vmul.f32 %v352, %v1865
      %v1881 = vmul.f32 %v352, %v1869
      %v1882 = vmul.f32 %v357, %v1865
      %v1883 = vmul.f32 %v357, %v1869
      %v1884 = vmul.f32 %v362, %v1865
      %v1885 = vmul.f32 %v362, %v1869
      %v1886 = vmul.f32 %v367, %v1865
      %v1887 = vmul.f32 %v367, %v1869
      %v1888 = vmul.f32 %v372, %v1865
      %v1889 = vmul.f32 %v372, %v1869
      %v1890 = vmul.f32 %v377, %v1865
      %v1891 = vmul.f32 %v377, %v1869
      %v1892 = vmul.f32 %v382, %v1865
      %v1893 = vmul.f32 %v382, %v1869
      %v1894 = vmul.f32 %v387, %v1865
      %v1895 = vmul.f32 %v387, %v1869
      %v1896 = vmul.f32 %v392, %v1865
      %v1897 = vmul.f32 %v392, %v1869
      %v1898 = vmul.f32 %v397, %v1865
      %v1899 = vmul.f32 %v397, %v1869
      %v1900 = vmul.f32 %v402, %v1865
      %v1901 = vmul.f32 %v402, %v1869
      %v1902 = vmul.f32 %v407, %v1865
      %v1903 = vmul.f32 %v407, %v1869
      %v1904 = vmul.f32 %v412, %v1865
      %v1905 = vmul.f32 %v412, %v1869
      %v1906 = vmul.f32 %v417, %v1865
      %v1907 = vmul.f32 %v417, %v1869
      %v1908 = vmul.f32 %v422, %v1865
      %v1909 = vmul.f32 %v422, %v1869
      %v1910 = vmul.f32 %v427, %v1865
      %v1911 = vmul.f32 %v427, %v1869
      %v1912 = vmul.f32 %v432, %v1865
      %v1913 = vmul.f32 %v432, %v1869
      %v1914 = vmul.f32 %v437, %v1865
      %v1915 = vmul.f32 %v437, %v1869
      %v1916 = vmul.f32 %v442, %v1865
      %v1917 = vmul.f32 %v442, %v1869
      %v1918 = vmul.f32 %v447, %v1865
      %v1919 = vmul.f32 %v447, %v1869
      %v1920 = vmul.f32 %v452, %v1865
      %v1921 = vmul.f32 %v452, %v1869
      %v1922 = vmul.f32 %v457, %v1865
      %v1923 = vmul.f32 %v457, %v1869
      %v1924 = vmul.f32 %v462, %v1865
      %v1925 = vmul.f32 %v462, %v1869
      %v1926 = vmul.f32 %v467, %v1865
      %v1927 = vmul.f32 %v467, %v1869
      %v1928 = vmul.f32 %v472, %v1865
      %v1929 = vmul.f32 %v472, %v1869
      %v1930 = vmul.f32 %v477, %v1865
      %v1931 = vmul.f32 %v477, %v1869
      %v1932 = vmul.f32 %v482, %v1865
      %v1933 = vmul.f32 %v482, %v1869
      %v1934 = vmul.f32 %v487, %v1865
      %v1935 = vmul.f32 %v487, %v1869
      %v1936 = vmul.f32 %v492, %v1865
      %v1937 = vmul.f32 %v492, %v1869
      %v1938 = vmul.f32 %v497, %v1865
      %v1939 = vmul.f32 %v497, %v1869
      %v1940 = vmul.f32 %v502, %v1865
      %v1941 = vmul.f32 %v502, %v1869
      %v1942 = vmul.f32 %v507, %v1865
      %v1943 = vmul.f32 %v507, %v1869
      %v1944 = vmul.f32 %v512, %v1865
      %v1945 = vmul.f32 %v512, %v1869
      %v1946 = vmul.f32 %v517, %v1865
      %v1947 = vmul.f32 %v517, %v1869
      %v1948 = vmul.f32 %v522, %v1865
      %v1949 = vmul.f32 %v522, %v1869
      %v1950 = vmul.f32 %v527, %v1865
      %v1951 = vmul.f32 %v527, %v1869
      %v1952 = vmul.f32 %v532, %v1865
      %v1953 = vmul.f32 %v532, %v1869
      %v1954 = vmul.f32 %v537, %v1865
      %v1955 = vmul.f32 %v537, %v1869
      %v1956 = vmul.f32 %v542, %v1865
      %v1957 = vmul.f32 %v542, %v1869
      %v1958 = vmul.f32 %v547, %v1865
      %v1959 = vmul.f32 %v547, %v1869
      %v1960 = vmul.f32 %v552, %v1865
      %v1961 = vmul.f32 %v552, %v1869
      %v1962 = vmul.f32 %v557, %v1865
      %v1963 = vmul.f32 %v557, %v1869
      %v1964 = vmul.f32 %v562, %v1865
      %v1965 = vmul.f32 %v562, %v1869
      %v1966 = vmul.f32 %v567, %v1865
      %v1967 = vmul.f32 %v567, %v1869
      %v1968 = vmul.f32 %v572, %v1865
      %v1969 = vmul.f32 %v572, %v1869
      %v1970 = vmul.f32 %v577, %v1865
      %v1971 = vmul.f32 %v577, %v1869
      %v1972 = vmul.f32 %v582, %v1865
      %v1973 = vmul.f32 %v582, %v1869
      %v1974 = vmul.f32 %v587, %v1865
      %v1975 = vmul.f32 %v587, %v1869
      %v1976 = vmul.f32 %v592, %v1865
      %v1977 = vmul.f32 %v592, %v1869
      %v1978 = vmul.f32 %v597, %v1865
      %v1979 = vmul.f32 %v597, %v1869
      %v1980 = vmul.f32 %v602, %v1865
      %v1981 = vmul.f32 %v602, %v1869
      %v1982 = vmul.f32 %v607, %v1865
      %v1983 = vmul.f32 %v607, %v1869
      %v1984 = vmul.f32 %v612, %v1865
      %v1985 = vmul.f32 %v612, %v1869
      %v1986 = vmul.f32 %v617, %v1865
      %v1987 = vmul.f32 %v617, %v1869
      %v1988 = vmul.f32 %v622, %v1865
      %v1989 = vmul.f32 %v622, %v1869
      %v1990 = vmul.f32 %v627, %v1865
      %v1991 = vmul.f32 %v627, %v1869
      %v1992 = vmul.f32 %v632, %v1865
      %v1993 = vmul.f32 %v632, %v1869
      %v1994 = vmul.f32 %v637, %v1865
      %v1995 = vmul.f32 %v637, %v1869
      %v1996 = vmul.f32 %v642, %v1865
      %v1997 = vmul.f32 %v642, %v1869
      %v1998 = vlaneseq
      %v1999 = vshrl.u32 %v1998, 7
      %v2000 = vsub.s32 1, %v1999
      %v2001 = vrot.slane %v320, %v2000
      %v2002 = vlaneseq
      %v2003 = vshrl.u32 %v2002, 7
      %v2004 = vsub.s32 5, %v2003
      %v2005 = vrot.slane %v320, %v2004
      %v2008 = vlaneseq
      %v2009 = vshrl.u32 %v2008, 7
      %v2010 = vsub.s32 1, %v2009
      %v2011 = vrot.slane %v2001, %v2010
      %v2012 = vlaneseq
      %v2013 = vshrl.u32 %v2012, 7
      %v2014 = vsub.s32 1, %v2013
      %v2015 = vrot.slane %v2005, %v2014
      %v2016 = vmul.f32 %v793, %v2011
      %v2017 = vmul.f32 %v793, %v2015
      %v2018 = vmul.f32 %v797, %v2011
      %v2019 = vmul.f32 %v797, %v2015
      %v2020 = vmul.f32 %v801, %v2011
      %v2021 = vmul.f32 %v801, %v2015
      %v2022 = vmul.f32 %v805, %v2011
      %v2023 = vmul.f32 %v805, %v2015
      %v2024 = vmul.f32 %v809, %v2011
      %v2025 = vmul.f32 %v809, %v2015
      %v2026 = vmul.f32 %v813, %v2011
      %v2027 = vmul.f32 %v813, %v2015
      %v2028 = vmul.f32 %v817, %v2011
      %v2029 = vmul.f32 %v817, %v2015
      %v2030 = vmul.f32 %v821, %v2011
      %v2031 = vmul.f32 %v821, %v2015
      %v2032 = vmul.f32 %v825, %v2011
      %v2033 = vmul.f32 %v825, %v2015
      %v2034 = vmul.f32 %v829, %v2011
      %v2035 = vmul.f32 %v829, %v2015
      %v2036 = vmul.f32 %v833, %v2011
      %v2037 = vmul.f32 %v833, %v2015
      %v2038 = vmul.f32 %v837, %v2011
      %v2039 = vmul.f32 %v837, %v2015
      %v2040 = vmul.f32 %v841, %v2011
      %v2041 = vmul.f32 %v841, %v2015
      %v2042 = vmul.f32 %v845, %v2011
      %v2043 = vmul.f32 %v845, %v2015
      %v2044 = vmul.f32 %v849, %v2011
      %v2045 = vmul.f32 %v849, %v2015
      %v2046 = vmul.f32 %v853, %v2011
      %v2047 = vmul.f32 %v853, %v2015
      %v2048 = vmul.f32 %v857, %v2011
      %v2049 = vmul.f32 %v857, %v2015
      %v2050 = vmul.f32 %v861, %v2011
      %v2051 = vmul.f32 %v861, %v2015
      %v2052 = vmul.f32 %v865, %v2011
      %v2053 = vmul.f32 %v865, %v2015
      %v2054 = vmul.f32 %v869, %v2011
      %v2055 = vmul.f32 %v869, %v2015
      %v2056 = vmul.f32 %v873, %v2011
      %v2057 = vmul.f32 %v873, %v2015
      %v2058 = vmul.f32 %v877, %v2011
      %v2059 = vmul.f32 %v877, %v2015
      %v2060 = vmul.f32 %v881, %v2011
      %v2061 = vmul.f32 %v881, %v2015
      %v2062 = vmul.f32 %v885, %v2011
      %v2063 = vmul.f32 %v885, %v2015
      %v2064 = vmul.f32 %v889, %v2011
      %v2065 = vmul.f32 %v889, %v2015
      %v2066 = vmul.f32 %v893, %v2011
      %v2067 = vmul.f32 %v893, %v2015
      %v2068 = vmul.f32 %v897, %v2011
      %v2069 = vmul.f32 %v897, %v2015
      %v2070 = vmul.f32 %v901, %v2011
      %v2071 = vmul.f32 %v901, %v2015
      %v2072 = vmul.f32 %v905, %v2011
      %v2073 = vmul.f32 %v905, %v2015
      %v2074 = vmul.f32 %v909, %v2011
      %v2075 = vmul.f32 %v909, %v2015
      %v2076 = vmul.f32 %v913, %v2011
      %v2077 = vmul.f32 %v913, %v2015
      %v2078 = vmul.f32 %v917, %v2011
      %v2079 = vmul.f32 %v917, %v2015
      %v2080 = vmul.f32 %v921, %v2011
      %v2081 = vmul.f32 %v921, %v2015
      %v2082 = vmul.f32 %v925, %v2011
      %v2083 = vmul.f32 %v925, %v2015
      %v2084 = vmul.f32 %v929, %v2011
      %v2085 = vmul.f32 %v929, %v2015
      %v2086 = vmul.f32 %v933, %v2011
      %v2087 = vmul.f32 %v933, %v2015
      %v2088 = vmul.f32 %v937, %v2011
      %v2089 = vmul.f32 %v937, %v2015
      %v2090 = vmul.f32 %v941, %v2011
      %v2091 = vmul.f32 %v941, %v2015
      %v2092 = vmul.f32 %v945, %v2011
      %v2093 = vmul.f32 %v945, %v2015
      %v2094 = vmul.f32 %v949, %v2011
      %v2095 = vmul.f32 %v949, %v2015
      %v2096 = vmul.f32 %v953, %v2011
      %v2097 = vmul.f32 %v953, %v2015
      %v2098 = vmul.f32 %v957, %v2011
      %v2099 = vmul.f32 %v957, %v2015
      %v2100 = vmul.f32 %v961, %v2011
      %v2101 = vmul.f32 %v961, %v2015
      %v2102 = vmul.f32 %v965, %v2011
      %v2103 = vmul.f32 %v965, %v2015
      %v2104 = vmul.f32 %v969, %v2011
      %v2105 = vmul.f32 %v969, %v2015
      %v2106 = vmul.f32 %v973, %v2011
      %v2107 = vmul.f32 %v973, %v2015
      %v2108 = vmul.f32 %v977, %v2011
      %v2109 = vmul.f32 %v977, %v2015
      %v2110 = vmul.f32 %v981, %v2011
      %v2111 = vmul.f32 %v981, %v2015
      %v2112 = vmul.f32 %v985, %v2011
      %v2113 = vmul.f32 %v985, %v2015
      %v2114 = vmul.f32 %v989, %v2011
      %v2115 = vmul.f32 %v989, %v2015
      %v2116 = vmul.f32 %v993, %v2011
      %v2117 = vmul.f32 %v993, %v2015
      %v2118 = vmul.f32 %v997, %v2011
      %v2119 = vmul.f32 %v997, %v2015
      %v2120 = vmul.f32 %v1001, %v2011
      %v2121 = vmul.f32 %v1001, %v2015
      %v2122 = vmul.f32 %v1005, %v2011
      %v2123 = vmul.f32 %v1005, %v2015
      %v2124 = vmul.f32 %v1009, %v2011
      %v2125 = vmul.f32 %v1009, %v2015
      %v2126 = vmul.f32 %v1013, %v2011
      %v2127 = vmul.f32 %v1013, %v2015
      %v2128 = vmul.f32 %v1017, %v2011
      %v2129 = vmul.f32 %v1017, %v2015
      %v2130 = vmul.f32 %v1021, %v2011
      %v2131 = vmul.f32 %v1021, %v2015
      %v2132 = vmul.f32 %v1025, %v2011
      %v2133 = vmul.f32 %v1025, %v2015
      %v2134 = vmul.f32 %v1029, %v2011
      %v2135 = vmul.f32 %v1029, %v2015
      %v2136 = vmul.f32 %v1033, %v2011
      %v2137 = vmul.f32 %v1033, %v2015
      %v2138 = vmul.f32 %v1037, %v2011
      %v2139 = vmul.f32 %v1037, %v2015
      %v2140 = vmul.f32 %v1041, %v2011
      %v2141 = vmul.f32 %v1041, %v2015
      %v2142 = vmul.f32 %v1045, %v2011
      %v2143 = vmul.f32 %v1045, %v2015
      %v2144 = vadd.f32 %v1870, %v2016
      %v2145 = vadd.f32 %v1871, %v2017
      %v2146 = vadd.f32 %v1872, %v2018
      %v2147 = vadd.f32 %v1873, %v2019
      %v2148 = vadd.f32 %v1874, %v2020
      %v2149 = vadd.f32 %v1875, %v2021
      %v2150 = vadd.f32 %v1876, %v2022
      %v2151 = vadd.f32 %v1877, %v2023
      %v2152 = vadd.f32 %v1878, %v2024
      %v2153 = vadd.f32 %v1879, %v2025
      %v2154 = vadd.f32 %v1880, %v2026
      %v2155 = vadd.f32 %v1881, %v2027
      %v2156 = vadd.f32 %v1882, %v2028
      %v2157 = vadd.f32 %v1883, %v2029
      %v2158 = vadd.f32 %v1884, %v2030
      %v2159 = vadd.f32 %v1885, %v2031
      %v2160 = vadd.f32 %v1886, %v2032
      %v2161 = vadd.f32 %v1887, %v2033
      %v2162 = vadd.f32 %v1888, %v2034
      %v2163 = vadd.f32 %v1889, %v2035
      %v2164 = vadd.f32 %v1890, %v2036
      %v2165 = vadd.f32 %v1891, %v2037
      %v2166 = vadd.f32 %v1892, %v2038
      %v2167 = vadd.f32 %v1893, %v2039
      %v2168 = vadd.f32 %v1894, %v2040
      %v2169 = vadd.f32 %v1895, %v2041
      %v2170 = vadd.f32 %v1896, %v2042
      %v2171 = vadd.f32 %v1897, %v2043
      %v2172 = vadd.f32 %v1898, %v2044
      %v2173 = vadd.f32 %v1899, %v2045
      %v2174 = vadd.f32 %v1900, %v2046
      %v2175 = vadd.f32 %v1901, %v2047
      %v2176 = vadd.f32 %v1902, %v2048
      %v2177 = vadd.f32 %v1903, %v2049
      %v2178 = vadd.f32 %v1904, %v2050
      %v2179 = vadd.f32 %v1905, %v2051
      %v2180 = vadd.f32 %v1906, %v2052
      %v2181 = vadd.f32 %v1907, %v2053
      %v2182 = vadd.f32 %v1908, %v2054
      %v2183 = vadd.f32 %v1909, %v2055
      %v2184 = vadd.f32 %v1910, %v2056
      %v2185 = vadd.f32 %v1911, %v2057
      %v2186 = vadd.f32 %v1912, %v2058
      %v2187 = vadd.f32 %v1913, %v2059
      %v2188 = vadd.f32 %v1914, %v2060
      %v2189 = vadd.f32 %v1915, %v2061
      %v2190 = vadd.f32 %v1916, %v2062
      %v2191 = vadd.f32 %v1917, %v2063
      %v2192 = vadd.f32 %v1918, %v2064
      %v2193 = vadd.f32 %v1919, %v2065
      %v2194 = vadd.f32 %v1920, %v2066
      %v2195 = vadd.f32 %v1921, %v2067
      %v2196 = vadd.f32 %v1922, %v2068
      %v2197 = vadd.f32 %v1923, %v2069
      %v2198 = vadd.f32 %v1924, %v2070
      %v2199 = vadd.f32 %v1925, %v2071
      %v2200 = vadd.f32 %v1926, %v2072
      %v2201 = vadd.f32 %v1927, %v2073
      %v2202 = vadd.f32 %v1928, %v2074
      %v2203 = vadd.f32 %v1929, %v2075
      %v2204 = vadd.f32 %v1930, %v2076
      %v2205 = vadd.f32 %v1931, %v2077
      %v2206 = vadd.f32 %v1932, %v2078
      %v2207 = vadd.f32 %v1933, %v2079
      %v2208 = vadd.f32 %v1934, %v2080
      %v2209 = vadd.f32 %v1935, %v2081
      %v2210 = vadd.f32 %v1936, %v2082
      %v2211 = vadd.f32 %v1937, %v2083
      %v2212 = vadd.f32 %v1938, %v2084
      %v2213 = vadd.f32 %v1939, %v2085
      %v2214 = vadd.f32 %v1940, %v2086
      %v2215 = vadd.f32 %v1941, %v2087
      %v2216 = vadd.f32 %v1942, %v2088
      %v2217 = vadd.f32 %v1943, %v2089
      %v2218 = vadd.f32 %v1944, %v2090
      %v2219 = vadd.f32 %v1945, %v2091
      %v2220 = vadd.f32 %v1946, %v2092
      %v2221 = vadd.f32 %v1947, %v2093
      %v2222 = vadd.f32 %v1948, %v2094
      %v2223 = vadd.f32 %v1949, %v2095
      %v2224 = vadd.f32 %v1950, %v2096
      %v2225 = vadd.f32 %v1951, %v2097
      %v2226 = vadd.f32 %v1952, %v2098
      %v2227 = vadd.f32 %v1953, %v2099
      %v2228 = vadd.f32 %v1954, %v2100
      %v2229 = vadd.f32 %v1955, %v2101
      %v2230 = vadd.f32 %v1956, %v2102
      %v2231 = vadd.f32 %v1957, %v2103
      %v2232 = vadd.f32 %v1958, %v2104
      %v2233 = vadd.f32 %v1959, %v2105
      %v2234 = vadd.f32 %v1960, %v2106
      %v2235 = vadd.f32 %v1961, %v2107
      %v2236 = vadd.f32 %v1962, %v2108
      %v2237 = vadd.f32 %v1963, %v2109
      %v2238 = vadd.f32 %v1964, %v2110
      %v2239 = vadd.f32 %v1965, %v2111
      %v2240 = vadd.f32 %v1966, %v2112
      %v2241 = vadd.f32 %v1967, %v2113
      %v2242 = vadd.f32 %v1968, %v2114
      %v2243 = vadd.f32 %v1969, %v2115
      %v2244 = vadd.f32 %v1970, %v2116
      %v2245 = vadd.f32 %v1971, %v2117
      %v2246 = vadd.f32 %v1972, %v2118
      %v2247 = vadd.f32 %v1973, %v2119
      %v2248 = vadd.f32 %v1974, %v2120
      %v2249 = vadd.f32 %v1975, %v2121
      %v2250 = vadd.f32 %v1976, %v2122
      %v2251 = vadd.f32 %v1977, %v2123
      %v2252 = vadd.f32 %v1978, %v2124
      %v2253 = vadd.f32 %v1979, %v2125
      %v2254 = vadd.f32 %v1980, %v2126
      %v2255 = vadd.f32 %v1981, %v2127
      %v2256 = vadd.f32 %v1982, %v2128
      %v2257 = vadd.f32 %v1983, %v2129
      %v2258 = vadd.f32 %v1984, %v2130
      %v2259 = vadd.f32 %v1985, %v2131
      %v2260 = vadd.f32 %v1986, %v2132
      %v2261 = vadd.f32 %v1987, %v2133
      %v2262 = vadd.f32 %v1988, %v2134
      %v2263 = vadd.f32 %v1989, %v2135
      %v2264 = vadd.f32 %v1990, %v2136
      %v2265 = vadd.f32 %v1991, %v2137
      %v2266 = vadd.f32 %v1992, %v2138
      %v2267 = vadd.f32 %v1993, %v2139
      %v2268 = vadd.f32 %v1994, %v2140
      %v2269 = vadd.f32 %v1995, %v2141
      %v2270 = vadd.f32 %v1996, %v2142
      %v2271 = vadd.f32 %v1997, %v2143
      %v2272 = vlaneseq
      %v2273 = vshrl.u32 %v2272, 7
      %v2274 = vsub.s32 2, %v2273
      %v2275 = vrot.slane %v320, %v2274
      %v2276 = vlaneseq
      %v2277 = vshrl.u32 %v2276, 7
      %v2278 = vsub.s32 6, %v2277
      %v2279 = vrot.slane %v320, %v2278
      %v2282 = vlaneseq
      %v2283 = vshrl.u32 %v2282, 7
      %v2284 = vsub.s32 2, %v2283
      %v2285 = vrot.slane %v2275, %v2284
      %v2286 = vlaneseq
      %v2287 = vshrl.u32 %v2286, 7
      %v2288 = vsub.s32 2, %v2287
      %v2289 = vrot.slane %v2279, %v2288
      %v2290 = vmul.f32 %v1323, %v2285
      %v2291 = vmul.f32 %v1323, %v2289
      %v2292 = vmul.f32 %v1327, %v2285
      %v2293 = vmul.f32 %v1327, %v2289
      %v2294 = vmul.f32 %v1331, %v2285
      %v2295 = vmul.f32 %v1331, %v2289
      %v2296 = vmul.f32 %v1335, %v2285
      %v2297 = vmul.f32 %v1335, %v2289
      %v2298 = vmul.f32 %v1339, %v2285
      %v2299 = vmul.f32 %v1339, %v2289
      %v2300 = vmul.f32 %v1343, %v2285
      %v2301 = vmul.f32 %v1343, %v2289
      %v2302 = vmul.f32 %v1347, %v2285
      %v2303 = vmul.f32 %v1347, %v2289
      %v2304 = vmul.f32 %v1351, %v2285
      %v2305 = vmul.f32 %v1351, %v2289
      %v2306 = vmul.f32 %v1355, %v2285
      %v2307 = vmul.f32 %v1355, %v2289
      %v2308 = vmul.f32 %v1359, %v2285
      %v2309 = vmul.f32 %v1359, %v2289
      %v2310 = vmul.f32 %v1363, %v2285
      %v2311 = vmul.f32 %v1363, %v2289
      %v2312 = vmul.f32 %v1367, %v2285
      %v2313 = vmul.f32 %v1367, %v2289
      %v2314 = vmul.f32 %v1371, %v2285
      %v2315 = vmul.f32 %v1371, %v2289
      %v2316 = vmul.f32 %v1375, %v2285
      %v2317 = vmul.f32 %v1375, %v2289
      %v2318 = vmul.f32 %v1379, %v2285
      %v2319 = vmul.f32 %v1379, %v2289
      %v2320 = vmul.f32 %v1383, %v2285
      %v2321 = vmul.f32 %v1383, %v2289
      %v2322 = vmul.f32 %v1387, %v2285
      %v2323 = vmul.f32 %v1387, %v2289
      %v2324 = vmul.f32 %v1391, %v2285
      %v2325 = vmul.f32 %v1391, %v2289
      %v2326 = vmul.f32 %v1395, %v2285
      %v2327 = vmul.f32 %v1395, %v2289
      %v2328 = vmul.f32 %v1399, %v2285
      %v2329 = vmul.f32 %v1399, %v2289
      %v2330 = vmul.f32 %v1403, %v2285
      %v2331 = vmul.f32 %v1403, %v2289
      %v2332 = vmul.f32 %v1407, %v2285
      %v2333 = vmul.f32 %v1407, %v2289
      %v2334 = vmul.f32 %v1411, %v2285
      %v2335 = vmul.f32 %v1411, %v2289
      %v2336 = vmul.f32 %v1415, %v2285
      %v2337 = vmul.f32 %v1415, %v2289
      %v2338 = vmul.f32 %v1419, %v2285
      %v2339 = vmul.f32 %v1419, %v2289
      %v2340 = vmul.f32 %v1423, %v2285
      %v2341 = vmul.f32 %v1423, %v2289
      %v2342 = vmul.f32 %v1427, %v2285
      %v2343 = vmul.f32 %v1427, %v2289
      %v2344 = vmul.f32 %v1431, %v2285
      %v2345 = vmul.f32 %v1431, %v2289
      %v2346 = vmul.f32 %v1435, %v2285
      %v2347 = vmul.f32 %v1435, %v2289
      %v2348 = vmul.f32 %v1439, %v2285
      %v2349 = vmul.f32 %v1439, %v2289
      %v2350 = vmul.f32 %v1443, %v2285
      %v2351 = vmul.f32 %v1443, %v2289
      %v2352 = vmul.f32 %v1447, %v2285
      %v2353 = vmul.f32 %v1447, %v2289
      %v2354 = vmul.f32 %v1451, %v2285
      %v2355 = vmul.f32 %v1451, %v2289
      %v2356 = vmul.f32 %v1455, %v2285
      %v2357 = vmul.f32 %v1455, %v2289
      %v2358 = vmul.f32 %v1459, %v2285
      %v2359 = vmul.f32 %v1459, %v2289
      %v2360 = vmul.f32 %v1463, %v2285
      %v2361 = vmul.f32 %v1463, %v2289
      %v2362 = vmul.f32 %v1467, %v2285
      %v2363 = vmul.f32 %v1467, %v2289
      %v2364 = vmul.f32 %v1471, %v2285
      %v2365 = vmul.f32 %v1471, %v2289
      %v2366 = vmul.f32 %v1475, %v2285
      %v2367 = vmul.f32 %v1475, %v2289
      %v2368 = vmul.f32 %v1479, %v2285
      %v2369 = vmul.f32 %v1479, %v2289
      %v2370 = vmul.f32 %v1483, %v2285
      %v2371 = vmul.f32 %v1483, %v2289
      %v2372 = vmul.f32 %v1487, %v2285
      %v2373 = vmul.f32 %v1487, %v2289
      %v2374 = vmul.f32 %v1491, %v2285
      %v2375 = vmul.f32 %v1491, %v2289
      %v2376 = vmul.f32 %v1495, %v2285
      %v2377 = vmul.f32 %v1495, %v2289
      %v2378 = vmul.f32 %v1499, %v2285
      %v2379 = vmul.f32 %v1499, %v2289
      %v2380 = vmul.f32 %v1503, %v2285
      %v2381 = vmul.f32 %v1503, %v2289
      %v2382 = vmul.f32 %v1507, %v2285
      %v2383 = vmul.f32 %v1507, %v2289
      %v2384 = vmul.f32 %v1511, %v2285
      %v2385 = vmul.f32 %v1511, %v2289
      %v2386 = vmul.f32 %v1515, %v2285
      %v2387 = vmul.f32 %v1515, %v2289
      %v2388 = vmul.f32 %v1519, %v2285
      %v2389 = vmul.f32 %v1519, %v2289
      %v2390 = vmul.f32 %v1523, %v2285
      %v2391 = vmul.f32 %v1523, %v2289
      %v2392 = vmul.f32 %v1527, %v2285
      %v2393 = vmul.f32 %v1527, %v2289
      %v2394 = vmul.f32 %v1531, %v2285
      %v2395 = vmul.f32 %v1531, %v2289
      %v2396 = vmul.f32 %v1535, %v2285
      %v2397 = vmul.f32 %v1535, %v2289
      %v2398 = vmul.f32 %v1539, %v2285
      %v2399 = vmul.f32 %v1539, %v2289
      %v2400 = vmul.f32 %v1543, %v2285
      %v2401 = vmul.f32 %v1543, %v2289
      %v2402 = vmul.f32 %v1547, %v2285
      %v2403 = vmul.f32 %v1547, %v2289
      %v2404 = vmul.f32 %v1551, %v2285
      %v2405 = vmul.f32 %v1551, %v2289
      %v2406 = vmul.f32 %v1555, %v2285
      %v2407 = vmul.f32 %v1555, %v2289
      %v2408 = vmul.f32 %v1559, %v2285
      %v2409 = vmul.f32 %v1559, %v2289
      %v2410 = vmul.f32 %v1563, %v2285
      %v2411 = vmul.f32 %v1563, %v2289
      %v2412 = vmul.f32 %v1567, %v2285
      %v2413 = vmul.f32 %v1567, %v2289
      %v2414 = vmul.f32 %v1571, %v2285
      %v2415 = vmul.f32 %v1571, %v2289
      %v2416 = vmul.f32 %v1575, %v2285
      %v2417 = vmul.f32 %v1575, %v2289
      %v2418 = vadd.f32 %v2144, %v2290
      %v2419 = vadd.f32 %v2145, %v2291
      %v2420 = vadd.f32 %v2146, %v2292
      %v2421 = vadd.f32 %v2147, %v2293
      %v2422 = vadd.f32 %v2148, %v2294
      %v2423 = vadd.f32 %v2149, %v2295
      %v2424 = vadd.f32 %v2150, %v2296
      %v2425 = vadd.f32 %v2151, %v2297
      %v2426 = vadd.f32 %v2152, %v2298
      %v2427 = vadd.f32 %v2153, %v2299
      %v2428 = vadd.f32 %v2154, %v2300
      %v2429 = vadd.f32 %v2155, %v2301
      %v2430 = vadd.f32 %v2156, %v2302
      %v2431 = vadd.f32 %v2157, %v2303
      %v2432 = vadd.f32 %v2158, %v2304
      %v2433 = vadd.f32 %v2159, %v2305
      %v2434 = vadd.f32 %v2160, %v2306
      %v2435 = vadd.f32 %v2161, %v2307
      %v2436 = vadd.f32 %v2162, %v2308
      %v2437 = vadd.f32 %v2163, %v2309
      %v2438 = vadd.f32 %v2164, %v2310
      %v2439 = vadd.f32 %v2165, %v2311
      %v2440 = vadd.f32 %v2166, %v2312
      %v2441 = vadd.f32 %v2167, %v2313
      %v2442 = vadd.f32 %v2168, %v2314
      %v2443 = vadd.f32 %v2169, %v2315
      %v2444 = vadd.f32 %v2170, %v2316
      %v2445 = vadd.f32 %v2171, %v2317
      %v2446 = vadd.f32 %v2172, %v2318
      %v2447 = vadd.f32 %v2173, %v2319
      %v2448 = vadd.f32 %v2174, %v2320
      %v2449 = vadd.f32 %v2175, %v2321
      %v2450 = vadd.f32 %v2176, %v2322
      %v2451 = vadd.f32 %v2177, %v2323
      %v2452 = vadd.f32 %v2178, %v2324
      %v2453 = vadd.f32 %v2179, %v2325
      %v2454 = vadd.f32 %v2180, %v2326
      %v2455 = vadd.f32 %v2181, %v2327
      %v2456 = vadd.f32 %v2182, %v2328
      %v2457 = vadd.f32 %v2183, %v2329
      %v2458 = vadd.f32 %v2184, %v2330
      %v2459 = vadd.f32 %v2185, %v2331
      %v2460 = vadd.f32 %v2186, %v2332
      %v2461 = vadd.f32 %v2187, %v2333
      %v2462 = vadd.f32 %v2188, %v2334
      %v2463 = vadd.f32 %v2189, %v2335
      %v2464 = vadd.f32 %v2190, %v2336
      %v2465 = vadd.f32 %v2191, %v2337
      %v2466 = vadd.f32 %v2192, %v2338
      %v2467 = vadd.f32 %v2193, %v2339
      %v2468 = vadd.f32 %v2194, %v2340
      %v2469 = vadd.f32 %v2195, %v2341
      %v2470 = vadd.f32 %v2196, %v2342
      %v2471 = vadd.f32 %v2197, %v2343
      %v2472 = vadd.f32 %v2198, %v2344
      %v2473 = vadd.f32 %v2199, %v2345
      %v2474 = vadd.f32 %v2200, %v2346
      %v2475 = vadd.f32 %v2201, %v2347
      %v2476 = vadd.f32 %v2202, %v2348
      %v2477 = vadd.f32 %v2203, %v2349
      %v2478 = vadd.f32 %v2204, %v2350
      %v2479 = vadd.f32 %v2205, %v2351
      %v2480 = vadd.f32 %v2206, %v2352
      %v2481 = vadd.f32 %v2207, %v2353
      %v2482 = vadd.f32 %v2208, %v2354
      %v2483 = vadd.f32 %v2209, %v2355
      %v2484 = vadd.f32 %v2210, %v2356
      %v2485 = vadd.f32 %v2211, %v2357
      %v2486 = vadd.f32 %v2212, %v2358
      %v2487 = vadd.f32 %v2213, %v2359
      %v2488 = vadd.f32 %v2214, %v2360
      %v2489 = vadd.f32 %v2215, %v2361
      %v2490 = vadd.f32 %v2216, %v2362
      %v2491 = vadd.f32 %v2217, %v2363
      %v2492 = vadd.f32 %v2218, %v2364
      %v2493 = vadd.f32 %v2219, %v2365
      %v2494 = vadd.f32 %v2220, %v2366
      %v2495 = vadd.f32 %v2221, %v2367
      %v2496 = vadd.f32 %v2222, %v2368
      %v2497 = vadd.f32 %v2223, %v2369
      %v2498 = vadd.f32 %v2224, %v2370
      %v2499 = vadd.f32 %v2225, %v2371
      %v2500 = vadd.f32 %v2226, %v2372
      %v2501 = vadd.f32 %v2227, %v2373
      %v2502 = vadd.f32 %v2228, %v2374
      %v2503 = vadd.f32 %v2229, %v2375
      %v2504 = vadd.f32 %v2230, %v2376
      %v2505 = vadd.f32 %v2231, %v2377
      %v2506 = vadd.f32 %v2232, %v2378
      %v2507 = vadd.f32 %v2233, %v2379
      %v2508 = vadd.f32 %v2234, %v2380
      %v2509 = vadd.f32 %v2235, %v2381
      %v2510 = vadd.f32 %v2236, %v2382
      %v2511 = vadd.f32 %v2237, %v2383
      %v2512 = vadd.f32 %v2238, %v2384
      %v2513 = vadd.f32 %v2239, %v2385
      %v2514 = vadd.f32 %v2240, %v2386
      %v2515 = vadd.f32 %v2241, %v2387
      %v2516 = vadd.f32 %v2242, %v2388
      %v2517 = vadd.f32 %v2243, %v2389
      %v2518 = vadd.f32 %v2244, %v2390
      %v2519 = vadd.f32 %v2245, %v2391
      %v2520 = vadd.f32 %v2246, %v2392
      %v2521 = vadd.f32 %v2247, %v2393
      %v2522 = vadd.f32 %v2248, %v2394
      %v2523 = vadd.f32 %v2249, %v2395
      %v2524 = vadd.f32 %v2250, %v2396
      %v2525 = vadd.f32 %v2251, %v2397
      %v2526 = vadd.f32 %v2252, %v2398
      %v2527 = vadd.f32 %v2253, %v2399
      %v2528 = vadd.f32 %v2254, %v2400
      %v2529 = vadd.f32 %v2255, %v2401
      %v2530 = vadd.f32 %v2256, %v2402
      %v2531 = vadd.f32 %v2257, %v2403
      %v2532 = vadd.f32 %v2258, %v2404
      %v2533 = vadd.f32 %v2259, %v2405
      %v2534 = vadd.f32 %v2260, %v2406
      %v2535 = vadd.f32 %v2261, %v2407
      %v2536 = vadd.f32 %v2262, %v2408
      %v2537 = vadd.f32 %v2263, %v2409
      %v2538 = vadd.f32 %v2264, %v2410
      %v2539 = vadd.f32 %v2265, %v2411
      %v2540 = vadd.f32 %v2266, %v2412
      %v2541 = vadd.f32 %v2267, %v2413
      %v2542 = vadd.f32 %v2268, %v2414
      %v2543 = vadd.f32 %v2269, %v2415
      %v2544 = vadd.f32 %v2270, %v2416
      %v2545 = vadd.f32 %v2271, %v2417
      %v2546 = vlaneseq
      %v2547 = vshrl.u32 %v2546, 7
      %v2548 = vsub.s32 0, %v2547
      %v2549 = vrot.slane %v322, %v2548
      %v2550 = vlaneseq
      %v2551 = vshrl.u32 %v2550, 7
      %v2552 = vsub.s32 0, %v2551
      %v2553 = vrot.slane %v323, %v2552
      %v2554 = vadd.f32 %v2418, %v2549
      %v2555 = vadd.f32 %v2419, %v2553
      %v2556 = vadd.f32 %v2420, %v2549
      %v2557 = vadd.f32 %v2421, %v2553
      %v2558 = vadd.f32 %v2422, %v2549
      %v2559 = vadd.f32 %v2423, %v2553
      %v2560 = vadd.f32 %v2424, %v2549
      %v2561 = vadd.f32 %v2425, %v2553
      %v2562 = vadd.f32 %v2426, %v2549
      %v2563 = vadd.f32 %v2427, %v2553
      %v2564 = vadd.f32 %v2428, %v2549
      %v2565 = vadd.f32 %v2429, %v2553
      %v2566 = vadd.f32 %v2430, %v2549
      %v2567 = vadd.f32 %v2431, %v2553
      %v2568 = vadd.f32 %v2432, %v2549
      %v2569 = vadd.f32 %v2433, %v2553
      %v2570 = vadd.f32 %v2434, %v2549
      %v2571 = vadd.f32 %v2435, %v2553
      %v2572 = vadd.f32 %v2436, %v2549
      %v2573 = vadd.f32 %v2437, %v2553
      %v2574 = vadd.f32 %v2438, %v2549
      %v2575 = vadd.f32 %v2439, %v2553
      %v2576 = vadd.f32 %v2440, %v2549
      %v2577 = vadd.f32 %v2441, %v2553
      %v2578 = vadd.f32 %v2442, %v2549
      %v2579 = vadd.f32 %v2443, %v2553
      %v2580 = vadd.f32 %v2444, %v2549
      %v2581 = vadd.f32 %v2445, %v2553
      %v2582 = vadd.f32 %v2446, %v2549
      %v2583 = vadd.f32 %v2447, %v2553
      %v2584 = vadd.f32 %v2448, %v2549
      %v2585 = vadd.f32 %v2449, %v2553
      %v2586 = vadd.f32 %v2450, %v2549
      %v2587 = vadd.f32 %v2451, %v2553
      %v2588 = vadd.f32 %v2452, %v2549
      %v2589 = vadd.f32 %v2453, %v2553
      %v2590 = vadd.f32 %v2454, %v2549
      %v2591 = vadd.f32 %v2455, %v2553
      %v2592 = vadd.f32 %v2456, %v2549
      %v2593 = vadd.f32 %v2457, %v2553
      %v2594 = vadd.f32 %v2458, %v2549
      %v2595 = vadd.f32 %v2459, %v2553
      %v2596 = vadd.f32 %v2460, %v2549
      %v2597 = vadd.f32 %v2461, %v2553
      %v2598 = vadd.f32 %v2462, %v2549
      %v2599 = vadd.f32 %v2463, %v2553
      %v2600 = vadd.f32 %v2464, %v2549
      %v2601 = vadd.f32 %v2465, %v2553
      %v2602 = vadd.f32 %v2466, %v2549
      %v2603 = vadd.f32 %v2467, %v2553
      %v2604 = vadd.f32 %v2468, %v2549
      %v2605 = vadd.f32 %v2469, %v2553
      %v2606 = vadd.f32 %v2470, %v2549
      %v2607 = vadd.f32 %v2471, %v2553
      %v2608 = vadd.f32 %v2472, %v2549
      %v2609 = vadd.f32 %v2473, %v2553
      %v2610 = vadd.f32 %v2474, %v2549
      %v2611 = vadd.f32 %v2475, %v2553
      %v2612 = vadd.f32 %v2476, %v2549
      %v2613 = vadd.f32 %v2477, %v2553
      %v2614 = vadd.f32 %v2478, %v2549
      %v2615 = vadd.f32 %v2479, %v2553
      %v2616 = vadd.f32 %v2480, %v2549
      %v2617 = vadd.f32 %v2481, %v2553
      %v2618 = vadd.f32 %v2482, %v2549
      %v2619 = vadd.f32 %v2483, %v2553
      %v2620 = vadd.f32 %v2484, %v2549
      %v2621 = vadd.f32 %v2485, %v2553
      %v2622 = vadd.f32 %v2486, %v2549
      %v2623 = vadd.f32 %v2487, %v2553
      %v2624 = vadd.f32 %v2488, %v2549
      %v2625 = vadd.f32 %v2489, %v2553
      %v2626 = vadd.f32 %v2490, %v2549
      %v2627 = vadd.f32 %v2491, %v2553
      %v2628 = vadd.f32 %v2492, %v2549
      %v2629 = vadd.f32 %v2493, %v2553
      %v2630 = vadd.f32 %v2494, %v2549
      %v2631 = vadd.f32 %v2495, %v2553
      %v2632 = vadd.f32 %v2496, %v2549
      %v2633 = vadd.f32 %v2497, %v2553
      %v2634 = vadd.f32 %v2498, %v2549
      %v2635 = vadd.f32 %v2499, %v2553
      %v2636 = vadd.f32 %v2500, %v2549
      %v2637 = vadd.f32 %v2501, %v2553
      %v2638 = vadd.f32 %v2502, %v2549
      %v2639 = vadd.f32 %v2503, %v2553
      %v2640 = vadd.f32 %v2504, %v2549
      %v2641 = vadd.f32 %v2505, %v2553
      %v2642 = vadd.f32 %v2506, %v2549
      %v2643 = vadd.f32 %v2507, %v2553
      %v2644 = vadd.f32 %v2508, %v2549
      %v2645 = vadd.f32 %v2509, %v2553
      %v2646 = vadd.f32 %v2510, %v2549
      %v2647 = vadd.f32 %v2511, %v2553
      %v2648 = vadd.f32 %v2512, %v2549
      %v2649 = vadd.f32 %v2513, %v2553
      %v2650 = vadd.f32 %v2514, %v2549
      %v2651 = vadd.f32 %v2515, %v2553
      %v2652 = vadd.f32 %v2516, %v2549
      %v2653 = vadd.f32 %v2517, %v2553
      %v2654 = vadd.f32 %v2518, %v2549
      %v2655 = vadd.f32 %v2519, %v2553
      %v2656 = vadd.f32 %v2520, %v2549
      %v2657 = vadd.f32 %v2521, %v2553
      %v2658 = vadd.f32 %v2522, %v2549
      %v2659 = vadd.f32 %v2523, %v2553
      %v2660 = vadd.f32 %v2524, %v2549
      %v2661 = vadd.f32 %v2525, %v2553
      %v2662 = vadd.f32 %v2526, %v2549
      %v2663 = vadd.f32 %v2527, %v2553
      %v2664 = vadd.f32 %v2528, %v2549
      %v2665 = vadd.f32 %v2529, %v2553
      %v2666 = vadd.f32 %v2530, %v2549
      %v2667 = vadd.f32 %v2531, %v2553
      %v2668 = vadd.f32 %v2532, %v2549
      %v2669 = vadd.f32 %v2533, %v2553
      %v2670 = vadd.f32 %v2534, %v2549
      %v2671 = vadd.f32 %v2535, %v2553
      %v2672 = vadd.f32 %v2536, %v2549
      %v2673 = vadd.f32 %v2537, %v2553
      %v2674 = vadd.f32 %v2538, %v2549
      %v2675 = vadd.f32 %v2539, %v2553
      %v2676 = vadd.f32 %v2540, %v2549
      %v2677 = vadd.f32 %v2541, %v2553
      %v2678 = vadd.f32 %v2542, %v2549
      %v2679 = vadd.f32 %v2543, %v2553
      %v2680 = vadd.f32 %v2544, %v2549
      %v2681 = vadd.f32 %v2545, %v2553
      %v2682 = vmax.f32 %v2554, 0.0
      %v2683 = vmax.f32 %v2555, 0.0
      %v2684 = vmax.f32 %v2556, 0.0
      %v2685 = vmax.f32 %v2557, 0.0
      %v2686 = vmax.f32 %v2558, 0.0
      %v2687 = vmax.f32 %v2559, 0.0
      %v2688 = vmax.f32 %v2560, 0.0
      %v2689 = vmax.f32 %v2561, 0.0
      %v2690 = vmax.f32 %v2562, 0.0
      %v2691 = vmax.f32 %v2563, 0.0
      %v2692 = vmax.f32 %v2564, 0.0
      %v2693 = vmax.f32 %v2565, 0.0
      %v2694 = vmax.f32 %v2566, 0.0
      %v2695 = vmax.f32 %v2567, 0.0
      %v2696 = vmax.f32 %v2568, 0.0
      %v2697 = vmax.f32 %v2569, 0.0
      %v2698 = vmax.f32 %v2570, 0.0
      %v2699 = vmax.f32 %v2571, 0.0
      %v2700 = vmax.f32 %v2572, 0.0
      %v2701 = vmax.f32 %v2573, 0.0
      %v2702 = vmax.f32 %v2574, 0.0
      %v2703 = vmax.f32 %v2575, 0.0
      %v2704 = vmax.f32 %v2576, 0.0
      %v2705 = vmax.f32 %v2577, 0.0
      %v2706 = vmax.f32 %v2578, 0.0
      %v2707 = vmax.f32 %v2579, 0.0
      %v2708 = vmax.f32 %v2580, 0.0
      %v2709 = vmax.f32 %v2581, 0.0
      %v2710 = vmax.f32 %v2582, 0.0
      %v2711 = vmax.f32 %v2583, 0.0
      %v2712 = vmax.f32 %v2584, 0.0
      %v2713 = vmax.f32 %v2585, 0.0
      %v2714 = vmax.f32 %v2586, 0.0
      %v2715 = vmax.f32 %v2587, 0.0
      %v2716 = vmax.f32 %v2588, 0.0
      %v2717 = vmax.f32 %v2589, 0.0
      %v2718 = vmax.f32 %v2590, 0.0
      %v2719 = vmax.f32 %v2591, 0.0
      %v2720 = vmax.f32 %v2592, 0.0
      %v2721 = vmax.f32 %v2593, 0.0
      %v2722 = vmax.f32 %v2594, 0.0
      %v2723 = vmax.f32 %v2595, 0.0
      %v2724 = vmax.f32 %v2596, 0.0
      %v2725 = vmax.f32 %v2597, 0.0
      %v2726 = vmax.f32 %v2598, 0.0
      %v2727 = vmax.f32 %v2599, 0.0
      %v2728 = vmax.f32 %v2600, 0.0
      %v2729 = vmax.f32 %v2601, 0.0
      %v2730 = vmax.f32 %v2602, 0.0
      %v2731 = vmax.f32 %v2603, 0.0
      %v2732 = vmax.f32 %v2604, 0.0
      %v2733 = vmax.f32 %v2605, 0.0
      %v2734 = vmax.f32 %v2606, 0.0
      %v2735 = vmax.f32 %v2607, 0.0
      %v2736 = vmax.f32 %v2608, 0.0
      %v2737 = vmax.f32 %v2609, 0.0
      %v2738 = vmax.f32 %v2610, 0.0
      %v2739 = vmax.f32 %v2611, 0.0
      %v2740 = vmax.f32 %v2612, 0.0
      %v2741 = vmax.f32 %v2613, 0.0
      %v2742 = vmax.f32 %v2614, 0.0
      %v2743 = vmax.f32 %v2615, 0.0
      %v2744 = vmax.f32 %v2616, 0.0
      %v2745 = vmax.f32 %v2617, 0.0
      %v2746 = vmax.f32 %v2618, 0.0
      %v2747 = vmax.f32 %v2619, 0.0
      %v2748 = vmax.f32 %v2620, 0.0
      %v2749 = vmax.f32 %v2621, 0.0
      %v2750 = vmax.f32 %v2622, 0.0
      %v2751 = vmax.f32 %v2623, 0.0
      %v2752 = vmax.f32 %v2624, 0.0
      %v2753 = vmax.f32 %v2625, 0.0
      %v2754 = vmax.f32 %v2626, 0.0
      %v2755 = vmax.f32 %v2627, 0.0
      %v2756 = vmax.f32 %v2628, 0.0
      %v2757 = vmax.f32 %v2629, 0.0
      %v2758 = vmax.f32 %v2630, 0.0
      %v2759 = vmax.f32 %v2631, 0.0
      %v2760 = vmax.f32 %v2632, 0.0
      %v2761 = vmax.f32 %v2633, 0.0
      %v2762 = vmax.f32 %v2634, 0.0
      %v2763 = vmax.f32 %v2635, 0.0
      %v2764 = vmax.f32 %v2636, 0.0
      %v2765 = vmax.f32 %v2637, 0.0
      %v2766 = vmax.f32 %v2638, 0.0
      %v2767 = vmax.f32 %v2639, 0.0
      %v2768 = vmax.f32 %v2640, 0.0
      %v2769 = vmax.f32 %v2641, 0.0
      %v2770 = vmax.f32 %v2642, 0.0
      %v2771 = vmax.f32 %v2643, 0.0
      %v2772 = vmax.f32 %v2644, 0.0
      %v2773 = vmax.f32 %v2645, 0.0
      %v2774 = vmax.f32 %v2646, 0.0
      %v2775 = vmax.f32 %v2647, 0.0
      %v2776 = vmax.f32 %v2648, 0.0
      %v2777 = vmax.f32 %v2649, 0.0
      %v2778 = vmax.f32 %v2650, 0.0
      %v2779 = vmax.f32 %v2651, 0.0
      %v2780 = vmax.f32 %v2652, 0.0
      %v2781 = vmax.f32 %v2653, 0.0
      %v2782 = vmax.f32 %v2654, 0.0
      %v2783 = vmax.f32 %v2655, 0.0
      %v2784 = vmax.f32 %v2656, 0.0
      %v2785 = vmax.f32 %v2657, 0.0
      %v2786 = vmax.f32 %v2658, 0.0
      %v2787 = vmax.f32 %v2659, 0.0
      %v2788 = vmax.f32 %v2660, 0.0
      %v2789 = vmax.f32 %v2661, 0.0
      %v2790 = vmax.f32 %v2662, 0.0
      %v2791 = vmax.f32 %v2663, 0.0
      %v2792 = vmax.f32 %v2664, 0.0
      %v2793 = vmax.f32 %v2665, 0.0
      %v2794 = vmax.f32 %v2666, 0.0
      %v2795 = vmax.f32 %v2667, 0.0
      %v2796 = vmax.f32 %v2668, 0.0
      %v2797 = vmax.f32 %v2669, 0.0
      %v2798 = vmax.f32 %v2670, 0.0
      %v2799 = vmax.f32 %v2671, 0.0
      %v2800 = vmax.f32 %v2672, 0.0
      %v2801 = vmax.f32 %v2673, 0.0
      %v2802 = vmax.f32 %v2674, 0.0
      %v2803 = vmax.f32 %v2675, 0.0
      %v2804 = vmax.f32 %v2676, 0.0
      %v2805 = vmax.f32 %v2677, 0.0
      %v2806 = vmax.f32 %v2678, 0.0
      %v2807 = vmax.f32 %v2679, 0.0
      %v2808 = vmax.f32 %v2680, 0.0
      %v2809 = vmax.f32 %v2681, 0.0
      %v2810 = vpack.c.bf16 %v2684, %v2682
      %v2811 = vpack.c.bf16 %v2685, %v2683
      %v2812 = vpack.c.bf16 %v2688, %v2686
      %v2813 = vpack.c.bf16 %v2689, %v2687
      %v2814 = vpack.c.bf16 %v2692, %v2690
      %v2815 = vpack.c.bf16 %v2693, %v2691
      %v2816 = vpack.c.bf16 %v2696, %v2694
      %v2817 = vpack.c.bf16 %v2697, %v2695
      %v2818 = vpack.c.bf16 %v2700, %v2698
      %v2819 = vpack.c.bf16 %v2701, %v2699
      %v2820 = vpack.c.bf16 %v2704, %v2702
      %v2821 = vpack.c.bf16 %v2705, %v2703
      %v2822 = vpack.c.bf16 %v2708, %v2706
      %v2823 = vpack.c.bf16 %v2709, %v2707
      %v2824 = vpack.c.bf16 %v2712, %v2710
      %v2825 = vpack.c.bf16 %v2713, %v2711
      %v2826 = vpack.c.bf16 %v2716, %v2714
      %v2827 = vpack.c.bf16 %v2717, %v2715
      %v2828 = vpack.c.bf16 %v2720, %v2718
      %v2829 = vpack.c.bf16 %v2721, %v2719
      %v2830 = vpack.c.bf16 %v2724, %v2722
      %v2831 = vpack.c.bf16 %v2725, %v2723
      %v2832 = vpack.c.bf16 %v2728, %v2726
      %v2833 = vpack.c.bf16 %v2729, %v2727
      %v2834 = vpack.c.bf16 %v2732, %v2730
      %v2835 = vpack.c.bf16 %v2733, %v2731
      %v2836 = vpack.c.bf16 %v2736, %v2734
      %v2837 = vpack.c.bf16 %v2737, %v2735
      %v2838 = vpack.c.bf16 %v2740, %v2738
      %v2839 = vpack.c.bf16 %v2741, %v2739
      %v2840 = vpack.c.bf16 %v2744, %v2742
      %v2841 = vpack.c.bf16 %v2745, %v2743
      %v2842 = vpack.c.bf16 %v2748, %v2746
      %v2843 = vpack.c.bf16 %v2749, %v2747
      %v2844 = vpack.c.bf16 %v2752, %v2750
      %v2845 = vpack.c.bf16 %v2753, %v2751
      %v2846 = vpack.c.bf16 %v2756, %v2754
      %v2847 = vpack.c.bf16 %v2757, %v2755
      %v2848 = vpack.c.bf16 %v2760, %v2758
      %v2849 = vpack.c.bf16 %v2761, %v2759
      %v2850 = vpack.c.bf16 %v2764, %v2762
      %v2851 = vpack.c.bf16 %v2765, %v2763
      %v2852 = vpack.c.bf16 %v2768, %v2766
      %v2853 = vpack.c.bf16 %v2769, %v2767
      %v2854 = vpack.c.bf16 %v2772, %v2770
      %v2855 = vpack.c.bf16 %v2773, %v2771
      %v2856 = vpack.c.bf16 %v2776, %v2774
      %v2857 = vpack.c.bf16 %v2777, %v2775
      %v2858 = vpack.c.bf16 %v2780, %v2778
      %v2859 = vpack.c.bf16 %v2781, %v2779
      %v2860 = vpack.c.bf16 %v2784, %v2782
      %v2861 = vpack.c.bf16 %v2785, %v2783
      %v2862 = vpack.c.bf16 %v2788, %v2786
      %v2863 = vpack.c.bf16 %v2789, %v2787
      %v2864 = vpack.c.bf16 %v2792, %v2790
      %v2865 = vpack.c.bf16 %v2793, %v2791
      %v2866 = vpack.c.bf16 %v2796, %v2794
      %v2867 = vpack.c.bf16 %v2797, %v2795
      %v2868 = vpack.c.bf16 %v2800, %v2798
      %v2869 = vpack.c.bf16 %v2801, %v2799
      %v2870 = vpack.c.bf16 %v2804, %v2802
      %v2871 = vpack.c.bf16 %v2805, %v2803
      %v2872 = vpack.c.bf16 %v2808, %v2806
      %v2873 = vpack.c.bf16 %v2809, %v2807
      %v2874 = vld [vmem:[%s2] sm:$0xff]
      %v2875 = vld [vmem:[%s2 + $0x8] sm:$0xff]
      %v2876 = vld [vmem:[%s2 + $0x10] sm:$0xff]
      %v2877 = vld [vmem:[%s2 + $0x18] sm:$0xff]
      %v2878 = vld [vmem:[%s2 + $0x20] sm:$0xff]
      %v2879 = vld [vmem:[%s2 + $0x28] sm:$0xff]
      %v2880 = vld [vmem:[%s2 + $0x30] sm:$0xff]
      %v2881 = vld [vmem:[%s2 + $0x38] sm:$0xff]
      %v2882 = vld [vmem:[%s2 + $0x40] sm:$0xff]
      %v2883 = vld [vmem:[%s2 + $0x48] sm:$0xff]
      %v2884 = vld [vmem:[%s2 + $0x50] sm:$0xff]
      %v2885 = vld [vmem:[%s2 + $0x58] sm:$0xff]
      %v2886 = vld [vmem:[%s2 + $0x60] sm:$0xff]
      %v2887 = vld [vmem:[%s2 + $0x68] sm:$0xff]
      %v2888 = vld [vmem:[%s2 + $0x70] sm:$0xff]
      %v2889 = vld [vmem:[%s2 + $0x78] sm:$0xff]
      %v2890 = vld [vmem:[%s2 + $0x80] sm:$0xff]
      %v2891 = vld [vmem:[%s2 + $0x88] sm:$0xff]
      %v2892 = vld [vmem:[%s2 + $0x90] sm:$0xff]
      %v2893 = vld [vmem:[%s2 + $0x98] sm:$0xff]
      %v2894 = vld [vmem:[%s2 + $0xa0] sm:$0xff]
      %v2895 = vld [vmem:[%s2 + $0xa8] sm:$0xff]
      %v2896 = vld [vmem:[%s2 + $0xb0] sm:$0xff]
      %v2897 = vld [vmem:[%s2 + $0xb8] sm:$0xff]
      %v2898 = vld [vmem:[%s2 + $0xc0] sm:$0xff]
      %v2899 = vld [vmem:[%s2 + $0xc8] sm:$0xff]
      %v2900 = vld [vmem:[%s2 + $0xd0] sm:$0xff]
      %v2901 = vld [vmem:[%s2 + $0xd8] sm:$0xff]
      %v2902 = vld [vmem:[%s2 + $0xe0] sm:$0xff]
      %v2903 = vld [vmem:[%s2 + $0xe8] sm:$0xff]
      %v2904 = vld [vmem:[%s2 + $0xf0] sm:$0xff]
      %v2905 = vld [vmem:[%s2 + $0xf8] sm:$0xff]
      %v2906 = vlaneseq
      %v2907 = vshrl.u32 %v2906, 7
      %v2908 = vsub.s32 1, %v2907
      %v2909 = vrot.slane %v322, %v2908
      %v2910 = vlaneseq
      %v2911 = vshrl.u32 %v2910, 7
      %v2912 = vsub.s32 1, %v2911
      %v2913 = vrot.slane %v323, %v2912
      %v2946 = vunpack.c.l.b16 %v2874
      %v2947 = vunpack.c.h.b16 %v2874
      %v2948 = vunpack.c.l.b16 %v2875
      %v2949 = vunpack.c.h.b16 %v2875
      %v2950 = vunpack.c.l.b16 %v2876
      %v2951 = vunpack.c.h.b16 %v2876
      %v2952 = vunpack.c.l.b16 %v2877
      %v2953 = vunpack.c.h.b16 %v2877
      %v2954 = vunpack.c.l.b16 %v2878
      %v2955 = vunpack.c.h.b16 %v2878
      %v2956 = vunpack.c.l.b16 %v2879
      %v2957 = vunpack.c.h.b16 %v2879
      %v2958 = vunpack.c.l.b16 %v2880
      %v2959 = vunpack.c.h.b16 %v2880
      %v2960 = vunpack.c.l.b16 %v2881
      %v2961 = vunpack.c.h.b16 %v2881
      %v2962 = vunpack.c.l.b16 %v2882
      %v2963 = vunpack.c.h.b16 %v2882
      %v2964 = vunpack.c.l.b16 %v2883
      %v2965 = vunpack.c.h.b16 %v2883
      %v2966 = vunpack.c.l.b16 %v2884
      %v2967 = vunpack.c.h.b16 %v2884
      %v2968 = vunpack.c.l.b16 %v2885
      %v2969 = vunpack.c.h.b16 %v2885
      %v2970 = vunpack.c.l.b16 %v2886
      %v2971 = vunpack.c.h.b16 %v2886
      %v2972 = vunpack.c.l.b16 %v2887
      %v2973 = vunpack.c.h.b16 %v2887
      %v2974 = vunpack.c.l.b16 %v2888
      %v2975 = vunpack.c.h.b16 %v2888
      %v2976 = vunpack.c.l.b16 %v2889
      %v2977 = vunpack.c.h.b16 %v2889
      %v2978 = vunpack.c.l.b16 %v2890
      %v2979 = vunpack.c.h.b16 %v2890
      %v2980 = vunpack.c.l.b16 %v2891
      %v2981 = vunpack.c.h.b16 %v2891
      %v2982 = vunpack.c.l.b16 %v2892
      %v2983 = vunpack.c.h.b16 %v2892
      %v2984 = vunpack.c.l.b16 %v2893
      %v2985 = vunpack.c.h.b16 %v2893
      %v2986 = vunpack.c.l.b16 %v2894
      %v2987 = vunpack.c.h.b16 %v2894
      %v2988 = vunpack.c.l.b16 %v2895
      %v2989 = vunpack.c.h.b16 %v2895
      %v2990 = vunpack.c.l.b16 %v2896
      %v2991 = vunpack.c.h.b16 %v2896
      %v2992 = vunpack.c.l.b16 %v2897
      %v2993 = vunpack.c.h.b16 %v2897
      %v2994 = vunpack.c.l.b16 %v2898
      %v2995 = vunpack.c.h.b16 %v2898
      %v2996 = vunpack.c.l.b16 %v2899
      %v2997 = vunpack.c.h.b16 %v2899
      %v2998 = vunpack.c.l.b16 %v2900
      %v2999 = vunpack.c.h.b16 %v2900
      %v3000 = vunpack.c.l.b16 %v2901
      %v3001 = vunpack.c.h.b16 %v2901
      %v3002 = vunpack.c.l.b16 %v2902
      %v3003 = vunpack.c.h.b16 %v2902
      %v3004 = vunpack.c.l.b16 %v2903
      %v3005 = vunpack.c.h.b16 %v2903
      %v3006 = vunpack.c.l.b16 %v2904
      %v3007 = vunpack.c.h.b16 %v2904
      %v3008 = vunpack.c.l.b16 %v2905
      %v3009 = vunpack.c.h.b16 %v2905
      %v3010 = vpack.c.b16 %v2948, %v2946
      %v3011 = vpack.c.b16 %v2949, %v2947
      %v3012 = vpack.c.b16 %v2952, %v2950
      %v3013 = vpack.c.b16 %v2953, %v2951
      %v3014 = vpack.c.b16 %v2956, %v2954
      %v3015 = vpack.c.b16 %v2957, %v2955
      %v3016 = vpack.c.b16 %v2960, %v2958
      %v3017 = vpack.c.b16 %v2961, %v2959
      %v3018 = vpack.c.b16 %v2964, %v2962
      %v3019 = vpack.c.b16 %v2965, %v2963
      %v3020 = vpack.c.b16 %v2968, %v2966
      %v3021 = vpack.c.b16 %v2969, %v2967
      %v3022 = vpack.c.b16 %v2972, %v2970
      %v3023 = vpack.c.b16 %v2973, %v2971
      %v3024 = vpack.c.b16 %v2976, %v2974
      %v3025 = vpack.c.b16 %v2977, %v2975
      %v3026 = vpack.c.b16 %v2980, %v2978
      %v3027 = vpack.c.b16 %v2981, %v2979
      %v3028 = vpack.c.b16 %v2984, %v2982
      %v3029 = vpack.c.b16 %v2985, %v2983
      %v3030 = vpack.c.b16 %v2988, %v2986
      %v3031 = vpack.c.b16 %v2989, %v2987
      %v3032 = vpack.c.b16 %v2992, %v2990
      %v3033 = vpack.c.b16 %v2993, %v2991
      %v3034 = vpack.c.b16 %v2996, %v2994
      %v3035 = vpack.c.b16 %v2997, %v2995
      %v3036 = vpack.c.b16 %v3000, %v2998
      %v3037 = vpack.c.b16 %v3001, %v2999
      %v3038 = vpack.c.b16 %v3004, %v3002
      %v3039 = vpack.c.b16 %v3005, %v3003
      %v3040 = vpack.c.b16 %v3008, %v3006
      %v3041 = vpack.c.b16 %v3009, %v3007
      %3074 = vmatprep.subr.bf16.mxu0 %v3025
      %3075 = vmatpush1.bf16.msra.mxu0 %v3024
      %3076 = vmatprep.subr.bf16.mxu0 %v3023
      %3077 = vmatpush1.bf16.msra.mxu0 %v3022
      %3078 = vmatprep.subr.bf16.mxu0 %v3021
      %3079 = vmatpush1.bf16.msra.mxu0 %v3020
      %3080 = vmatprep.subr.bf16.mxu0 %v3019
      %3081 = vmatpush1.bf16.msra.mxu0 %v3018
      %3082 = vmatprep.subr.bf16.mxu0 %v3017
      %3083 = vmatpush1.bf16.msra.mxu0 %v3016
      %3084 = vmatprep.subr.bf16.mxu0 %v3015
      %3085 = vmatpush1.bf16.msra.mxu0 %v3014
      %3086 = vmatprep.subr.bf16.mxu0 %v3013
      %3087 = vmatpush1.bf16.msra.mxu0 %v3012
      %3088 = vmatprep.subr.bf16.mxu0 %v3011
      %3089 = vmatpush1.bf16.msra.mxu0 %v3010
      %3090 = vmatprep.subr.bf16.mxu0 %v3041
      %3091 = vmatpush2.bf16.msra.mxu0 %v3040
      %3092 = vmatprep.subr.bf16.mxu0 %v3039
      %3093 = vmatpush2.bf16.msra.mxu0 %v3038
      %3094 = vmatprep.subr.bf16.mxu0 %v3037
      %3095 = vmatpush2.bf16.msra.mxu0 %v3036
      %3096 = vmatprep.subr.bf16.mxu0 %v3035
      %3097 = vmatpush2.bf16.msra.mxu0 %v3034
      %3098 = vmatprep.subr.bf16.mxu0 %v3033
      %3099 = vmatpush2.bf16.msra.mxu0 %v3032
      %3100 = vmatprep.subr.bf16.mxu0 %v3031
      %3101 = vmatpush2.bf16.msra.mxu0 %v3030
      %3102 = vmatprep.subr.bf16.mxu0 %v3029
      %3103 = vmatpush2.bf16.msra.mxu0 %v3028
      %3104 = vmatprep.subr.bf16.mxu0 %v3027
      %3105 = vmatpush2.bf16.msra.mxu0 %v3026
      %3106 = vmatprep.mubr.bf16.mxu0 %v2811
      %3107 = vmatmul.mubr.bf16.gmra.mxu0 %v2810
      %v3108 = vpop.f32.mrf.mxu0
      %v3109 = vadd.f32 %v2909, %v3108
      %v3110 = vpop.f32.mrf.mxu0
      %v3111 = vadd.f32 %v2913, %v3110
      %v3112 = vpop.f32.mrf.mxu0
      %v3113 = vadd.f32 %v2909, %v3112
      %v3114 = vpop.f32.mrf.mxu0
      %v3115 = vadd.f32 %v2913, %v3114
      %3116 = vmatprep.mubr.bf16.mxu0 %v2813
      %3117 = vmatmul.mubr.bf16.gmra.mxu0 %v2812
      %v3118 = vpop.f32.mrf.mxu0
      %v3119 = vadd.f32 %v2909, %v3118
      %v3120 = vpop.f32.mrf.mxu0
      %v3121 = vadd.f32 %v2913, %v3120
      %v3122 = vpop.f32.mrf.mxu0
      %v3123 = vadd.f32 %v2909, %v3122
      %v3124 = vpop.f32.mrf.mxu0
      %v3125 = vadd.f32 %v2913, %v3124
      %3126 = vmatprep.mubr.bf16.mxu0 %v2815
      %3127 = vmatmul.mubr.bf16.gmra.mxu0 %v2814
      %v3128 = vpop.f32.mrf.mxu0
      %v3129 = vadd.f32 %v2909, %v3128
      %v3130 = vpop.f32.mrf.mxu0
      %v3131 = vadd.f32 %v2913, %v3130
      %v3132 = vpop.f32.mrf.mxu0
      %v3133 = vadd.f32 %v2909, %v3132
      %v3134 = vpop.f32.mrf.mxu0
      %v3135 = vadd.f32 %v2913, %v3134
      %3136 = vmatprep.mubr.bf16.mxu0 %v2817
      %3137 = vmatmul.mubr.bf16.gmra.mxu0 %v2816
      %v3138 = vpop.f32.mrf.mxu0
      %v3139 = vadd.f32 %v2909, %v3138
      %v3140 = vpop.f32.mrf.mxu0
      %v3141 = vadd.f32 %v2913, %v3140
      %v3142 = vpop.f32.mrf.mxu0
      %v3143 = vadd.f32 %v2909, %v3142
      %v3144 = vpop.f32.mrf.mxu0
      %v3145 = vadd.f32 %v2913, %v3144
      %3146 = vmatprep.mubr.bf16.mxu0 %v2819
      %3147 = vmatmul.mubr.bf16.gmra.mxu0 %v2818
      %v3148 = vpop.f32.mrf.mxu0
      %v3149 = vadd.f32 %v2909, %v3148
      %v3150 = vpop.f32.mrf.mxu0
      %v3151 = vadd.f32 %v2913, %v3150
      %v3152 = vpop.f32.mrf.mxu0
      %v3153 = vadd.f32 %v2909, %v3152
      %v3154 = vpop.f32.mrf.mxu0
      %v3155 = vadd.f32 %v2913, %v3154
      %3156 = vmatprep.mubr.bf16.mxu0 %v2821
      %3157 = vmatmul.mubr.bf16.gmra.mxu0 %v2820
      %v3158 = vpop.f32.mrf.mxu0
      %v3159 = vadd.f32 %v2909, %v3158
      %v3160 = vpop.f32.mrf.mxu0
      %v3161 = vadd.f32 %v2913, %v3160
      %v3162 = vpop.f32.mrf.mxu0
      %v3163 = vadd.f32 %v2909, %v3162
      %v3164 = vpop.f32.mrf.mxu0
      %v3165 = vadd.f32 %v2913, %v3164
      %3166 = vmatprep.mubr.bf16.mxu0 %v2823
      %3167 = vmatmul.mubr.bf16.gmra.mxu0 %v2822
      %v3168 = vpop.f32.mrf.mxu0
      %v3169 = vadd.f32 %v2909, %v3168
      %v3170 = vpop.f32.mrf.mxu0
      %v3171 = vadd.f32 %v2913, %v3170
      %v3172 = vpop.f32.mrf.mxu0
      %v3173 = vadd.f32 %v2909, %v3172
      %v3174 = vpop.f32.mrf.mxu0
      %v3175 = vadd.f32 %v2913, %v3174
      %3176 = vmatprep.mubr.bf16.mxu0 %v2825
      %3177 = vmatmul.mubr.bf16.gmra.mxu0 %v2824
      %v3178 = vpop.f32.mrf.mxu0
      %v3179 = vadd.f32 %v2909, %v3178
      %v3180 = vpop.f32.mrf.mxu0
      %v3181 = vadd.f32 %v2913, %v3180
      %v3182 = vpop.f32.mrf.mxu0
      %v3183 = vadd.f32 %v2909, %v3182
      %v3184 = vpop.f32.mrf.mxu0
      %v3185 = vadd.f32 %v2913, %v3184
      %3186 = vmatprep.mubr.bf16.mxu0 %v2827
      %3187 = vmatmul.mubr.bf16.gmra.mxu0 %v2826
      %v3188 = vpop.f32.mrf.mxu0
      %v3189 = vadd.f32 %v2909, %v3188
      %v3190 = vpop.f32.mrf.mxu0
      %v3191 = vadd.f32 %v2913, %v3190
      %v3192 = vpop.f32.mrf.mxu0
      %v3193 = vadd.f32 %v2909, %v3192
      %v3194 = vpop.f32.mrf.mxu0
      %v3195 = vadd.f32 %v2913, %v3194
      %3196 = vmatprep.mubr.bf16.mxu0 %v2829
      %3197 = vmatmul.mubr.bf16.gmra.mxu0 %v2828
      %v3198 = vpop.f32.mrf.mxu0
      %v3199 = vadd.f32 %v2909, %v3198
      %v3200 = vpop.f32.mrf.mxu0
      %v3201 = vadd.f32 %v2913, %v3200
      %v3202 = vpop.f32.mrf.mxu0
      %v3203 = vadd.f32 %v2909, %v3202
      %v3204 = vpop.f32.mrf.mxu0
      %v3205 = vadd.f32 %v2913, %v3204
      %3206 = vmatprep.mubr.bf16.mxu0 %v2831
      %3207 = vmatmul.mubr.bf16.gmra.mxu0 %v2830
      %v3208 = vpop.f32.mrf.mxu0
      %v3209 = vadd.f32 %v2909, %v3208
      %v3210 = vpop.f32.mrf.mxu0
      %v3211 = vadd.f32 %v2913, %v3210
      %v3212 = vpop.f32.mrf.mxu0
      %v3213 = vadd.f32 %v2909, %v3212
      %v3214 = vpop.f32.mrf.mxu0
      %v3215 = vadd.f32 %v2913, %v3214
      %3216 = vmatprep.mubr.bf16.mxu0 %v2833
      %3217 = vmatmul.mubr.bf16.gmra.mxu0 %v2832
      %v3218 = vpop.f32.mrf.mxu0
      %v3219 = vadd.f32 %v2909, %v3218
      %v3220 = vpop.f32.mrf.mxu0
      %v3221 = vadd.f32 %v2913, %v3220
      %v3222 = vpop.f32.mrf.mxu0
      %v3223 = vadd.f32 %v2909, %v3222
      %v3224 = vpop.f32.mrf.mxu0
      %v3225 = vadd.f32 %v2913, %v3224
      %3226 = vmatprep.mubr.bf16.mxu0 %v2835
      %3227 = vmatmul.mubr.bf16.gmra.mxu0 %v2834
      %v3228 = vpop.f32.mrf.mxu0
      %v3229 = vadd.f32 %v2909, %v3228
      %v3230 = vpop.f32.mrf.mxu0
      %v3231 = vadd.f32 %v2913, %v3230
      %v3232 = vpop.f32.mrf.mxu0
      %v3233 = vadd.f32 %v2909, %v3232
      %v3234 = vpop.f32.mrf.mxu0
      %v3235 = vadd.f32 %v2913, %v3234
      %3236 = vmatprep.mubr.bf16.mxu0 %v2837
      %3237 = vmatmul.mubr.bf16.gmra.mxu0 %v2836
      %v3238 = vpop.f32.mrf.mxu0
      %v3239 = vadd.f32 %v2909, %v3238
      %v3240 = vpop.f32.mrf.mxu0
      %v3241 = vadd.f32 %v2913, %v3240
      %v3242 = vpop.f32.mrf.mxu0
      %v3243 = vadd.f32 %v2909, %v3242
      %v3244 = vpop.f32.mrf.mxu0
      %v3245 = vadd.f32 %v2913, %v3244
      %3246 = vmatprep.mubr.bf16.mxu0 %v2839
      %3247 = vmatmul.mubr.bf16.gmra.mxu0 %v2838
      %v3248 = vpop.f32.mrf.mxu0
      %v3249 = vadd.f32 %v2909, %v3248
      %v3250 = vpop.f32.mrf.mxu0
      %v3251 = vadd.f32 %v2913, %v3250
      %v3252 = vpop.f32.mrf.mxu0
      %v3253 = vadd.f32 %v2909, %v3252
      %v3254 = vpop.f32.mrf.mxu0
      %v3255 = vadd.f32 %v2913, %v3254
      %3256 = vmatprep.mubr.bf16.mxu0 %v2841
      %3257 = vmatmul.mubr.bf16.gmra.mxu0 %v2840
      %v3258 = vpop.f32.mrf.mxu0
      %v3259 = vadd.f32 %v2909, %v3258
      %v3260 = vpop.f32.mrf.mxu0
      %v3261 = vadd.f32 %v2913, %v3260
      %v3262 = vpop.f32.mrf.mxu0
      %v3263 = vadd.f32 %v2909, %v3262
      %v3264 = vpop.f32.mrf.mxu0
      %v3265 = vadd.f32 %v2913, %v3264
      %3266 = vmatprep.mubr.bf16.mxu0 %v2843
      %3267 = vmatmul.mubr.bf16.gmra.mxu0 %v2842
      %v3268 = vpop.f32.mrf.mxu0
      %v3269 = vadd.f32 %v2909, %v3268
      %v3270 = vpop.f32.mrf.mxu0
      %v3271 = vadd.f32 %v2913, %v3270
      %v3272 = vpop.f32.mrf.mxu0
      %v3273 = vadd.f32 %v2909, %v3272
      %v3274 = vpop.f32.mrf.mxu0
      %v3275 = vadd.f32 %v2913, %v3274
      %3276 = vmatprep.mubr.bf16.mxu0 %v2845
      %3277 = vmatmul.mubr.bf16.gmra.mxu0 %v2844
      %v3278 = vpop.f32.mrf.mxu0
      %v3279 = vadd.f32 %v2909, %v3278
      %v3280 = vpop.f32.mrf.mxu0
      %v3281 = vadd.f32 %v2913, %v3280
      %v3282 = vpop.f32.mrf.mxu0
      %v3283 = vadd.f32 %v2909, %v3282
      %v3284 = vpop.f32.mrf.mxu0
      %v3285 = vadd.f32 %v2913, %v3284
      %3286 = vmatprep.mubr.bf16.mxu0 %v2847
      %3287 = vmatmul.mubr.bf16.gmra.mxu0 %v2846
      %v3288 = vpop.f32.mrf.mxu0
      %v3289 = vadd.f32 %v2909, %v3288
      %v3290 = vpop.f32.mrf.mxu0
      %v3291 = vadd.f32 %v2913, %v3290
      %v3292 = vpop.f32.mrf.mxu0
      %v3293 = vadd.f32 %v2909, %v3292
      %v3294 = vpop.f32.mrf.mxu0
      %v3295 = vadd.f32 %v2913, %v3294
      %3296 = vmatprep.mubr.bf16.mxu0 %v2849
      %3297 = vmatmul.mubr.bf16.gmra.mxu0 %v2848
      %v3298 = vpop.f32.mrf.mxu0
      %v3299 = vadd.f32 %v2909, %v3298
      %v3300 = vpop.f32.mrf.mxu0
      %v3301 = vadd.f32 %v2913, %v3300
      %v3302 = vpop.f32.mrf.mxu0
      %v3303 = vadd.f32 %v2909, %v3302
      %v3304 = vpop.f32.mrf.mxu0
      %v3305 = vadd.f32 %v2913, %v3304
      %3306 = vmatprep.mubr.bf16.mxu0 %v2851
      %3307 = vmatmul.mubr.bf16.gmra.mxu0 %v2850
      %v3308 = vpop.f32.mrf.mxu0
      %v3309 = vadd.f32 %v2909, %v3308
      %v3310 = vpop.f32.mrf.mxu0
      %v3311 = vadd.f32 %v2913, %v3310
      %v3312 = vpop.f32.mrf.mxu0
      %v3313 = vadd.f32 %v2909, %v3312
      %v3314 = vpop.f32.mrf.mxu0
      %v3315 = vadd.f32 %v2913, %v3314
      %3316 = vmatprep.mubr.bf16.mxu0 %v2853
      %3317 = vmatmul.mubr.bf16.gmra.mxu0 %v2852
      %v3318 = vpop.f32.mrf.mxu0
      %v3319 = vadd.f32 %v2909, %v3318
      %v3320 = vpop.f32.mrf.mxu0
      %v3321 = vadd.f32 %v2913, %v3320
      %v3322 = vpop.f32.mrf.mxu0
      %v3323 = vadd.f32 %v2909, %v3322
      %v3324 = vpop.f32.mrf.mxu0
      %v3325 = vadd.f32 %v2913, %v3324
      %3326 = vmatprep.mubr.bf16.mxu0 %v2855
      %3327 = vmatmul.mubr.bf16.gmra.mxu0 %v2854
      %v3328 = vpop.f32.mrf.mxu0
      %v3329 = vadd.f32 %v2909, %v3328
      %v3330 = vpop.f32.mrf.mxu0
      %v3331 = vadd.f32 %v2913, %v3330
      %v3332 = vpop.f32.mrf.mxu0
      %v3333 = vadd.f32 %v2909, %v3332
      %v3334 = vpop.f32.mrf.mxu0
      %v3335 = vadd.f32 %v2913, %v3334
      %3336 = vmatprep.mubr.bf16.mxu0 %v2857
      %3337 = vmatmul.mubr.bf16.gmra.mxu0 %v2856
      %v3338 = vpop.f32.mrf.mxu0
      %v3339 = vadd.f32 %v2909, %v3338
      %v3340 = vpop.f32.mrf.mxu0
      %v3341 = vadd.f32 %v2913, %v3340
      %v3342 = vpop.f32.mrf.mxu0
      %v3343 = vadd.f32 %v2909, %v3342
      %v3344 = vpop.f32.mrf.mxu0
      %v3345 = vadd.f32 %v2913, %v3344
      %3346 = vmatprep.mubr.bf16.mxu0 %v2859
      %3347 = vmatmul.mubr.bf16.gmra.mxu0 %v2858
      %v3348 = vpop.f32.mrf.mxu0
      %v3349 = vadd.f32 %v2909, %v3348
      %v3350 = vpop.f32.mrf.mxu0
      %v3351 = vadd.f32 %v2913, %v3350
      %v3352 = vpop.f32.mrf.mxu0
      %v3353 = vadd.f32 %v2909, %v3352
      %v3354 = vpop.f32.mrf.mxu0
      %v3355 = vadd.f32 %v2913, %v3354
      %3356 = vmatprep.mubr.bf16.mxu0 %v2861
      %3357 = vmatmul.mubr.bf16.gmra.mxu0 %v2860
      %v3358 = vpop.f32.mrf.mxu0
      %v3359 = vadd.f32 %v2909, %v3358
      %v3360 = vpop.f32.mrf.mxu0
      %v3361 = vadd.f32 %v2913, %v3360
      %v3362 = vpop.f32.mrf.mxu0
      %v3363 = vadd.f32 %v2909, %v3362
      %v3364 = vpop.f32.mrf.mxu0
      %v3365 = vadd.f32 %v2913, %v3364
      %3366 = vmatprep.mubr.bf16.mxu0 %v2863
      %3367 = vmatmul.mubr.bf16.gmra.mxu0 %v2862
      %v3368 = vpop.f32.mrf.mxu0
      %v3369 = vadd.f32 %v2909, %v3368
      %v3370 = vpop.f32.mrf.mxu0
      %v3371 = vadd.f32 %v2913, %v3370
      %v3372 = vpop.f32.mrf.mxu0
      %v3373 = vadd.f32 %v2909, %v3372
      %v3374 = vpop.f32.mrf.mxu0
      %v3375 = vadd.f32 %v2913, %v3374
      %3376 = vmatprep.mubr.bf16.mxu0 %v2865
      %3377 = vmatmul.mubr.bf16.gmra.mxu0 %v2864
      %v3378 = vpop.f32.mrf.mxu0
      %v3379 = vadd.f32 %v2909, %v3378
      %v3380 = vpop.f32.mrf.mxu0
      %v3381 = vadd.f32 %v2913, %v3380
      %v3382 = vpop.f32.mrf.mxu0
      %v3383 = vadd.f32 %v2909, %v3382
      %v3384 = vpop.f32.mrf.mxu0
      %v3385 = vadd.f32 %v2913, %v3384
      %3386 = vmatprep.mubr.bf16.mxu0 %v2867
      %3387 = vmatmul.mubr.bf16.gmra.mxu0 %v2866
      %v3388 = vpop.f32.mrf.mxu0
      %v3389 = vadd.f32 %v2909, %v3388
      %v3390 = vpop.f32.mrf.mxu0
      %v3391 = vadd.f32 %v2913, %v3390
      %v3392 = vpop.f32.mrf.mxu0
      %v3393 = vadd.f32 %v2909, %v3392
      %v3394 = vpop.f32.mrf.mxu0
      %v3395 = vadd.f32 %v2913, %v3394
      %3396 = vmatprep.mubr.bf16.mxu0 %v2869
      %3397 = vmatmul.mubr.bf16.gmra.mxu0 %v2868
      %v3398 = vpop.f32.mrf.mxu0
      %v3399 = vadd.f32 %v2909, %v3398
      %v3400 = vpop.f32.mrf.mxu0
      %v3401 = vadd.f32 %v2913, %v3400
      %v3402 = vpop.f32.mrf.mxu0
      %v3403 = vadd.f32 %v2909, %v3402
      %v3404 = vpop.f32.mrf.mxu0
      %v3405 = vadd.f32 %v2913, %v3404
      %3406 = vmatprep.mubr.bf16.mxu0 %v2871
      %3407 = vmatmul.mubr.bf16.gmra.mxu0 %v2870
      %v3408 = vpop.f32.mrf.mxu0
      %v3409 = vadd.f32 %v2909, %v3408
      %v3410 = vpop.f32.mrf.mxu0
      %v3411 = vadd.f32 %v2913, %v3410
      %v3412 = vpop.f32.mrf.mxu0
      %v3413 = vadd.f32 %v2909, %v3412
      %v3414 = vpop.f32.mrf.mxu0
      %v3415 = vadd.f32 %v2913, %v3414
      %3416 = vmatprep.mubr.bf16.mxu0 %v2873
      %3417 = vmatmul.mubr.bf16.gmra.mxu0 %v2872
      %v3418 = vpop.f32.mrf.mxu0
      %v3419 = vadd.f32 %v2909, %v3418
      %v3420 = vpop.f32.mrf.mxu0
      %v3421 = vadd.f32 %v2913, %v3420
      %v3422 = vpop.f32.mrf.mxu0
      %v3423 = vadd.f32 %v2909, %v3422
      %v3424 = vpop.f32.mrf.mxu0
      %v3425 = vadd.f32 %v2913, %v3424
      %3426 = vdwg.mxu0
      %v3427 = vmax.f32 %v3109, 0.0
      %v3428 = vmax.f32 %v3111, 0.0
      %v3429 = vmax.f32 %v3113, 0.0
      %v3430 = vmax.f32 %v3115, 0.0
      %v3431 = vmax.f32 %v3119, 0.0
      %v3432 = vmax.f32 %v3121, 0.0
      %v3433 = vmax.f32 %v3123, 0.0
      %v3434 = vmax.f32 %v3125, 0.0
      %v3435 = vmax.f32 %v3129, 0.0
      %v3436 = vmax.f32 %v3131, 0.0
      %v3437 = vmax.f32 %v3133, 0.0
      %v3438 = vmax.f32 %v3135, 0.0
      %v3439 = vmax.f32 %v3139, 0.0
      %v3440 = vmax.f32 %v3141, 0.0
      %v3441 = vmax.f32 %v3143, 0.0
      %v3442 = vmax.f32 %v3145, 0.0
      %v3443 = vmax.f32 %v3149, 0.0
      %v3444 = vmax.f32 %v3151, 0.0
      %v3445 = vmax.f32 %v3153, 0.0
      %v3446 = vmax.f32 %v3155, 0.0
      %v3447 = vmax.f32 %v3159, 0.0
      %v3448 = vmax.f32 %v3161, 0.0
      %v3449 = vmax.f32 %v3163, 0.0
      %v3450 = vmax.f32 %v3165, 0.0
      %v3451 = vmax.f32 %v3169, 0.0
      %v3452 = vmax.f32 %v3171, 0.0
      %v3453 = vmax.f32 %v3173, 0.0
      %v3454 = vmax.f32 %v3175, 0.0
      %v3455 = vmax.f32 %v3179, 0.0
      %v3456 = vmax.f32 %v3181, 0.0
      %v3457 = vmax.f32 %v3183, 0.0
      %v3458 = vmax.f32 %v3185, 0.0
      %v3459 = vmax.f32 %v3189, 0.0
      %v3460 = vmax.f32 %v3191, 0.0
      %v3461 = vmax.f32 %v3193, 0.0
      %v3462 = vmax.f32 %v3195, 0.0
      %v3463 = vmax.f32 %v3199, 0.0
      %v3464 = vmax.f32 %v3201, 0.0
      %v3465 = vmax.f32 %v3203, 0.0
      %v3466 = vmax.f32 %v3205, 0.0
      %v3467 = vmax.f32 %v3209, 0.0
      %v3468 = vmax.f32 %v3211, 0.0
      %v3469 = vmax.f32 %v3213, 0.0
      %v3470 = vmax.f32 %v3215, 0.0
      %v3471 = vmax.f32 %v3219, 0.0
      %v3472 = vmax.f32 %v3221, 0.0
      %v3473 = vmax.f32 %v3223, 0.0
      %v3474 = vmax.f32 %v3225, 0.0
      %v3475 = vmax.f32 %v3229, 0.0
      %v3476 = vmax.f32 %v3231, 0.0
      %v3477 = vmax.f32 %v3233, 0.0
      %v3478 = vmax.f32 %v3235, 0.0
      %v3479 = vmax.f32 %v3239, 0.0
      %v3480 = vmax.f32 %v3241, 0.0
      %v3481 = vmax.f32 %v3243, 0.0
      %v3482 = vmax.f32 %v3245, 0.0
      %v3483 = vmax.f32 %v3249, 0.0
      %v3484 = vmax.f32 %v3251, 0.0
      %v3485 = vmax.f32 %v3253, 0.0
      %v3486 = vmax.f32 %v3255, 0.0
      %v3487 = vmax.f32 %v3259, 0.0
      %v3488 = vmax.f32 %v3261, 0.0
      %v3489 = vmax.f32 %v3263, 0.0
      %v3490 = vmax.f32 %v3265, 0.0
      %v3491 = vmax.f32 %v3269, 0.0
      %v3492 = vmax.f32 %v3271, 0.0
      %v3493 = vmax.f32 %v3273, 0.0
      %v3494 = vmax.f32 %v3275, 0.0
      %v3495 = vmax.f32 %v3279, 0.0
      %v3496 = vmax.f32 %v3281, 0.0
      %v3497 = vmax.f32 %v3283, 0.0
      %v3498 = vmax.f32 %v3285, 0.0
      %v3499 = vmax.f32 %v3289, 0.0
      %v3500 = vmax.f32 %v3291, 0.0
      %v3501 = vmax.f32 %v3293, 0.0
      %v3502 = vmax.f32 %v3295, 0.0
      %v3503 = vmax.f32 %v3299, 0.0
      %v3504 = vmax.f32 %v3301, 0.0
      %v3505 = vmax.f32 %v3303, 0.0
      %v3506 = vmax.f32 %v3305, 0.0
      %v3507 = vmax.f32 %v3309, 0.0
      %v3508 = vmax.f32 %v3311, 0.0
      %v3509 = vmax.f32 %v3313, 0.0
      %v3510 = vmax.f32 %v3315, 0.0
      %v3511 = vmax.f32 %v3319, 0.0
      %v3512 = vmax.f32 %v3321, 0.0
      %v3513 = vmax.f32 %v3323, 0.0
      %v3514 = vmax.f32 %v3325, 0.0
      %v3515 = vmax.f32 %v3329, 0.0
      %v3516 = vmax.f32 %v3331, 0.0
      %v3517 = vmax.f32 %v3333, 0.0
      %v3518 = vmax.f32 %v3335, 0.0
      %v3519 = vmax.f32 %v3339, 0.0
      %v3520 = vmax.f32 %v3341, 0.0
      %v3521 = vmax.f32 %v3343, 0.0
      %v3522 = vmax.f32 %v3345, 0.0
      %v3523 = vmax.f32 %v3349, 0.0
      %v3524 = vmax.f32 %v3351, 0.0
      %v3525 = vmax.f32 %v3353, 0.0
      %v3526 = vmax.f32 %v3355, 0.0
      %v3527 = vmax.f32 %v3359, 0.0
      %v3528 = vmax.f32 %v3361, 0.0
      %v3529 = vmax.f32 %v3363, 0.0
      %v3530 = vmax.f32 %v3365, 0.0
      %v3531 = vmax.f32 %v3369, 0.0
      %v3532 = vmax.f32 %v3371, 0.0
      %v3533 = vmax.f32 %v3373, 0.0
      %v3534 = vmax.f32 %v3375, 0.0
      %v3535 = vmax.f32 %v3379, 0.0
      %v3536 = vmax.f32 %v3381, 0.0
      %v3537 = vmax.f32 %v3383, 0.0
      %v3538 = vmax.f32 %v3385, 0.0
      %v3539 = vmax.f32 %v3389, 0.0
      %v3540 = vmax.f32 %v3391, 0.0
      %v3541 = vmax.f32 %v3393, 0.0
      %v3542 = vmax.f32 %v3395, 0.0
      %v3543 = vmax.f32 %v3399, 0.0
      %v3544 = vmax.f32 %v3401, 0.0
      %v3545 = vmax.f32 %v3403, 0.0
      %v3546 = vmax.f32 %v3405, 0.0
      %v3547 = vmax.f32 %v3409, 0.0
      %v3548 = vmax.f32 %v3411, 0.0
      %v3549 = vmax.f32 %v3413, 0.0
      %v3550 = vmax.f32 %v3415, 0.0
      %v3551 = vmax.f32 %v3419, 0.0
      %v3552 = vmax.f32 %v3421, 0.0
      %v3553 = vmax.f32 %v3423, 0.0
      %v3554 = vmax.f32 %v3425, 0.0
      %v3555 = vpack.c.bf16 %v3429, %v3427
      %v3556 = vpack.c.bf16 %v3430, %v3428
      %v3557 = vpack.c.bf16 %v3433, %v3431
      %v3558 = vpack.c.bf16 %v3434, %v3432
      %v3559 = vpack.c.bf16 %v3437, %v3435
      %v3560 = vpack.c.bf16 %v3438, %v3436
      %v3561 = vpack.c.bf16 %v3441, %v3439
      %v3562 = vpack.c.bf16 %v3442, %v3440
      %v3563 = vpack.c.bf16 %v3445, %v3443
      %v3564 = vpack.c.bf16 %v3446, %v3444
      %v3565 = vpack.c.bf16 %v3449, %v3447
      %v3566 = vpack.c.bf16 %v3450, %v3448
      %v3567 = vpack.c.bf16 %v3453, %v3451
      %v3568 = vpack.c.bf16 %v3454, %v3452
      %v3569 = vpack.c.bf16 %v3457, %v3455
      %v3570 = vpack.c.bf16 %v3458, %v3456
      %v3571 = vpack.c.bf16 %v3461, %v3459
      %v3572 = vpack.c.bf16 %v3462, %v3460
      %v3573 = vpack.c.bf16 %v3465, %v3463
      %v3574 = vpack.c.bf16 %v3466, %v3464
      %v3575 = vpack.c.bf16 %v3469, %v3467
      %v3576 = vpack.c.bf16 %v3470, %v3468
      %v3577 = vpack.c.bf16 %v3473, %v3471
      %v3578 = vpack.c.bf16 %v3474, %v3472
      %v3579 = vpack.c.bf16 %v3477, %v3475
      %v3580 = vpack.c.bf16 %v3478, %v3476
      %v3581 = vpack.c.bf16 %v3481, %v3479
      %v3582 = vpack.c.bf16 %v3482, %v3480
      %v3583 = vpack.c.bf16 %v3485, %v3483
      %v3584 = vpack.c.bf16 %v3486, %v3484
      %v3585 = vpack.c.bf16 %v3489, %v3487
      %v3586 = vpack.c.bf16 %v3490, %v3488
      %v3587 = vpack.c.bf16 %v3493, %v3491
      %v3588 = vpack.c.bf16 %v3494, %v3492
      %v3589 = vpack.c.bf16 %v3497, %v3495
      %v3590 = vpack.c.bf16 %v3498, %v3496
      %v3591 = vpack.c.bf16 %v3501, %v3499
      %v3592 = vpack.c.bf16 %v3502, %v3500
      %v3593 = vpack.c.bf16 %v3505, %v3503
      %v3594 = vpack.c.bf16 %v3506, %v3504
      %v3595 = vpack.c.bf16 %v3509, %v3507
      %v3596 = vpack.c.bf16 %v3510, %v3508
      %v3597 = vpack.c.bf16 %v3513, %v3511
      %v3598 = vpack.c.bf16 %v3514, %v3512
      %v3599 = vpack.c.bf16 %v3517, %v3515
      %v3600 = vpack.c.bf16 %v3518, %v3516
      %v3601 = vpack.c.bf16 %v3521, %v3519
      %v3602 = vpack.c.bf16 %v3522, %v3520
      %v3603 = vpack.c.bf16 %v3525, %v3523
      %v3604 = vpack.c.bf16 %v3526, %v3524
      %v3605 = vpack.c.bf16 %v3529, %v3527
      %v3606 = vpack.c.bf16 %v3530, %v3528
      %v3607 = vpack.c.bf16 %v3533, %v3531
      %v3608 = vpack.c.bf16 %v3534, %v3532
      %v3609 = vpack.c.bf16 %v3537, %v3535
      %v3610 = vpack.c.bf16 %v3538, %v3536
      %v3611 = vpack.c.bf16 %v3541, %v3539
      %v3612 = vpack.c.bf16 %v3542, %v3540
      %v3613 = vpack.c.bf16 %v3545, %v3543
      %v3614 = vpack.c.bf16 %v3546, %v3544
      %v3615 = vpack.c.bf16 %v3549, %v3547
      %v3616 = vpack.c.bf16 %v3550, %v3548
      %v3617 = vpack.c.bf16 %v3553, %v3551
      %v3618 = vpack.c.bf16 %v3554, %v3552
      %s3619 = scalar_lea.vmem %s2, 256
      %v3620 = vld [vmem:[%s3619] sm:$0xff]
      %v3621 = vld [vmem:[%s3619 + $0x8] sm:$0xff]
      %v3622 = vld [vmem:[%s3619 + $0x10] sm:$0xff]
      %v3623 = vld [vmem:[%s3619 + $0x18] sm:$0xff]
      %v3624 = vld [vmem:[%s3619 + $0x20] sm:$0xff]
      %v3625 = vld [vmem:[%s3619 + $0x28] sm:$0xff]
      %v3626 = vld [vmem:[%s3619 + $0x30] sm:$0xff]
      %v3627 = vld [vmem:[%s3619 + $0x38] sm:$0xff]
      %v3628 = vld [vmem:[%s3619 + $0x40] sm:$0xff]
      %v3629 = vld [vmem:[%s3619 + $0x48] sm:$0xff]
      %v3630 = vld [vmem:[%s3619 + $0x50] sm:$0xff]
      %v3631 = vld [vmem:[%s3619 + $0x58] sm:$0xff]
      %v3632 = vld [vmem:[%s3619 + $0x60] sm:$0xff]
      %v3633 = vld [vmem:[%s3619 + $0x68] sm:$0xff]
      %v3634 = vld [vmem:[%s3619 + $0x70] sm:$0xff]
      %v3635 = vld [vmem:[%s3619 + $0x78] sm:$0xff]
      %v3636 = vld [vmem:[%s3619 + $0x80] sm:$0xff]
      %v3637 = vld [vmem:[%s3619 + $0x88] sm:$0xff]
      %v3638 = vld [vmem:[%s3619 + $0x90] sm:$0xff]
      %v3639 = vld [vmem:[%s3619 + $0x98] sm:$0xff]
      %v3640 = vld [vmem:[%s3619 + $0xa0] sm:$0xff]
      %v3641 = vld [vmem:[%s3619 + $0xa8] sm:$0xff]
      %v3642 = vld [vmem:[%s3619 + $0xb0] sm:$0xff]
      %v3643 = vld [vmem:[%s3619 + $0xb8] sm:$0xff]
      %v3644 = vld [vmem:[%s3619 + $0xc0] sm:$0xff]
      %v3645 = vld [vmem:[%s3619 + $0xc8] sm:$0xff]
      %v3646 = vld [vmem:[%s3619 + $0xd0] sm:$0xff]
      %v3647 = vld [vmem:[%s3619 + $0xd8] sm:$0xff]
      %v3648 = vld [vmem:[%s3619 + $0xe0] sm:$0xff]
      %v3649 = vld [vmem:[%s3619 + $0xe8] sm:$0xff]
      %v3650 = vld [vmem:[%s3619 + $0xf0] sm:$0xff]
      %v3651 = vld [vmem:[%s3619 + $0xf8] sm:$0xff]
      %v3652 = vlaneseq
      %v3653 = vshrl.u32 %v3652, 7
      %v3654 = vsub.s32 2, %v3653
      %v3655 = vrot.slane %v322, %v3654
      %v3656 = vlaneseq
      %v3657 = vshrl.u32 %v3656, 7
      %v3658 = vsub.s32 2, %v3657
      %v3659 = vrot.slane %v323, %v3658
      %v3692 = vunpack.c.l.b16 %v3620
      %v3693 = vunpack.c.h.b16 %v3620
      %v3694 = vunpack.c.l.b16 %v3621
      %v3695 = vunpack.c.h.b16 %v3621
      %v3696 = vunpack.c.l.b16 %v3622
      %v3697 = vunpack.c.h.b16 %v3622
      %v3698 = vunpack.c.l.b16 %v3623
      %v3699 = vunpack.c.h.b16 %v3623
      %v3700 = vunpack.c.l.b16 %v3624
      %v3701 = vunpack.c.h.b16 %v3624
      %v3702 = vunpack.c.l.b16 %v3625
      %v3703 = vunpack.c.h.b16 %v3625
      %v3704 = vunpack.c.l.b16 %v3626
      %v3705 = vunpack.c.h.b16 %v3626
      %v3706 = vunpack.c.l.b16 %v3627
      %v3707 = vunpack.c.h.b16 %v3627
      %v3708 = vunpack.c.l.b16 %v3628
      %v3709 = vunpack.c.h.b16 %v3628
      %v3710 = vunpack.c.l.b16 %v3629
      %v3711 = vunpack.c.h.b16 %v3629
      %v3712 = vunpack.c.l.b16 %v3630
      %v3713 = vunpack.c.h.b16 %v3630
      %v3714 = vunpack.c.l.b16 %v3631
      %v3715 = vunpack.c.h.b16 %v3631
      %v3716 = vunpack.c.l.b16 %v3632
      %v3717 = vunpack.c.h.b16 %v3632
      %v3718 = vunpack.c.l.b16 %v3633
      %v3719 = vunpack.c.h.b16 %v3633
      %v3720 = vunpack.c.l.b16 %v3634
      %v3721 = vunpack.c.h.b16 %v3634
      %v3722 = vunpack.c.l.b16 %v3635
      %v3723 = vunpack.c.h.b16 %v3635
      %v3724 = vunpack.c.l.b16 %v3636
      %v3725 = vunpack.c.h.b16 %v3636
      %v3726 = vunpack.c.l.b16 %v3637
      %v3727 = vunpack.c.h.b16 %v3637
      %v3728 = vunpack.c.l.b16 %v3638
      %v3729 = vunpack.c.h.b16 %v3638
      %v3730 = vunpack.c.l.b16 %v3639
      %v3731 = vunpack.c.h.b16 %v3639
      %v3732 = vunpack.c.l.b16 %v3640
      %v3733 = vunpack.c.h.b16 %v3640
      %v3734 = vunpack.c.l.b16 %v3641
      %v3735 = vunpack.c.h.b16 %v3641
      %v3736 = vunpack.c.l.b16 %v3642
      %v3737 = vunpack.c.h.b16 %v3642
      %v3738 = vunpack.c.l.b16 %v3643
      %v3739 = vunpack.c.h.b16 %v3643
      %v3740 = vunpack.c.l.b16 %v3644
      %v3741 = vunpack.c.h.b16 %v3644
      %v3742 = vunpack.c.l.b16 %v3645
      %v3743 = vunpack.c.h.b16 %v3645
      %v3744 = vunpack.c.l.b16 %v3646
      %v3745 = vunpack.c.h.b16 %v3646
      %v3746 = vunpack.c.l.b16 %v3647
      %v3747 = vunpack.c.h.b16 %v3647
      %v3748 = vunpack.c.l.b16 %v3648
      %v3749 = vunpack.c.h.b16 %v3648
      %v3750 = vunpack.c.l.b16 %v3649
      %v3751 = vunpack.c.h.b16 %v3649
      %v3752 = vunpack.c.l.b16 %v3650
      %v3753 = vunpack.c.h.b16 %v3650
      %v3754 = vunpack.c.l.b16 %v3651
      %v3755 = vunpack.c.h.b16 %v3651
      %v3756 = vpack.c.b16 %v3694, %v3692
      %v3757 = vpack.c.b16 %v3695, %v3693
      %v3758 = vpack.c.b16 %v3698, %v3696
      %v3759 = vpack.c.b16 %v3699, %v3697
      %v3760 = vpack.c.b16 %v3702, %v3700
      %v3761 = vpack.c.b16 %v3703, %v3701
      %v3762 = vpack.c.b16 %v3706, %v3704
      %v3763 = vpack.c.b16 %v3707, %v3705
      %v3764 = vpack.c.b16 %v3710, %v3708
      %v3765 = vpack.c.b16 %v3711, %v3709
      %v3766 = vpack.c.b16 %v3714, %v3712
      %v3767 = vpack.c.b16 %v3715, %v3713
      %v3768 = vpack.c.b16 %v3718, %v3716
      %v3769 = vpack.c.b16 %v3719, %v3717
      %v3770 = vpack.c.b16 %v3722, %v3720
      %v3771 = vpack.c.b16 %v3723, %v3721
      %v3772 = vpack.c.b16 %v3726, %v3724
      %v3773 = vpack.c.b16 %v3727, %v3725
      %v3774 = vpack.c.b16 %v3730, %v3728
      %v3775 = vpack.c.b16 %v3731, %v3729
      %v3776 = vpack.c.b16 %v3734, %v3732
      %v3777 = vpack.c.b16 %v3735, %v3733
      %v3778 = vpack.c.b16 %v3738, %v3736
      %v3779 = vpack.c.b16 %v3739, %v3737
      %v3780 = vpack.c.b16 %v3742, %v3740
      %v3781 = vpack.c.b16 %v3743, %v3741
      %v3782 = vpack.c.b16 %v3746, %v3744
      %v3783 = vpack.c.b16 %v3747, %v3745
      %v3784 = vpack.c.b16 %v3750, %v3748
      %v3785 = vpack.c.b16 %v3751, %v3749
      %v3786 = vpack.c.b16 %v3754, %v3752
      %v3787 = vpack.c.b16 %v3755, %v3753
      %3820 = vmatprep.subr.bf16.mxu0 %v3771
      %3821 = vmatpush1.bf16.msra.mxu0 %v3770
      %3822 = vmatprep.subr.bf16.mxu0 %v3769
      %3823 = vmatpush1.bf16.msra.mxu0 %v3768
      %3824 = vmatprep.subr.bf16.mxu0 %v3767
      %3825 = vmatpush1.bf16.msra.mxu0 %v3766
      %3826 = vmatprep.subr.bf16.mxu0 %v3765
      %3827 = vmatpush1.bf16.msra.mxu0 %v3764
      %3828 = vmatprep.subr.bf16.mxu0 %v3763
      %3829 = vmatpush1.bf16.msra.mxu0 %v3762
      %3830 = vmatprep.subr.bf16.mxu0 %v3761
      %3831 = vmatpush1.bf16.msra.mxu0 %v3760
      %3832 = vmatprep.subr.bf16.mxu0 %v3759
      %3833 = vmatpush1.bf16.msra.mxu0 %v3758
      %3834 = vmatprep.subr.bf16.mxu0 %v3757
      %3835 = vmatpush1.bf16.msra.mxu0 %v3756
      %3836 = vmatprep.subr.bf16.mxu0 %v3787
      %3837 = vmatpush2.bf16.msra.mxu0 %v3786
      %3838 = vmatprep.subr.bf16.mxu0 %v3785
      %3839 = vmatpush2.bf16.msra.mxu0 %v3784
      %3840 = vmatprep.subr.bf16.mxu0 %v3783
      %3841 = vmatpush2.bf16.msra.mxu0 %v3782
      %3842 = vmatprep.subr.bf16.mxu0 %v3781
      %3843 = vmatpush2.bf16.msra.mxu0 %v3780
      %3844 = vmatprep.subr.bf16.mxu0 %v3779
      %3845 = vmatpush2.bf16.msra.mxu0 %v3778
      %3846 = vmatprep.subr.bf16.mxu0 %v3777
      %3847 = vmatpush2.bf16.msra.mxu0 %v3776
      %3848 = vmatprep.subr.bf16.mxu0 %v3775
      %3849 = vmatpush2.bf16.msra.mxu0 %v3774
      %3850 = vmatprep.subr.bf16.mxu0 %v3773
      %3851 = vmatpush2.bf16.msra.mxu0 %v3772
      %3852 = vmatprep.mubr.bf16.mxu0 %v3556
      %3853 = vmatmul.mubr.bf16.gmra.mxu0 %v3555
      %v3854 = vpop.f32.mrf.mxu0
      %v3855 = vadd.f32 %v3655, %v3854
      %v3856 = vpop.f32.mrf.mxu0
      %v3857 = vadd.f32 %v3659, %v3856
      %v3858 = vpop.f32.mrf.mxu0
      %v3859 = vadd.f32 %v3655, %v3858
      %v3860 = vpop.f32.mrf.mxu0
      %v3861 = vadd.f32 %v3659, %v3860
      %3862 = vmatprep.mubr.bf16.mxu0 %v3558
      %3863 = vmatmul.mubr.bf16.gmra.mxu0 %v3557
      %v3864 = vpop.f32.mrf.mxu0
      %v3865 = vadd.f32 %v3655, %v3864
      %v3866 = vpop.f32.mrf.mxu0
      %v3867 = vadd.f32 %v3659, %v3866
      %v3868 = vpop.f32.mrf.mxu0
      %v3869 = vadd.f32 %v3655, %v3868
      %v3870 = vpop.f32.mrf.mxu0
      %v3871 = vadd.f32 %v3659, %v3870
      %3872 = vmatprep.mubr.bf16.mxu0 %v3560
      %3873 = vmatmul.mubr.bf16.gmra.mxu0 %v3559
      %v3874 = vpop.f32.mrf.mxu0
      %v3875 = vadd.f32 %v3655, %v3874
      %v3876 = vpop.f32.mrf.mxu0
      %v3877 = vadd.f32 %v3659, %v3876
      %v3878 = vpop.f32.mrf.mxu0
      %v3879 = vadd.f32 %v3655, %v3878
      %v3880 = vpop.f32.mrf.mxu0
      %v3881 = vadd.f32 %v3659, %v3880
      %3882 = vmatprep.mubr.bf16.mxu0 %v3562
      %3883 = vmatmul.mubr.bf16.gmra.mxu0 %v3561
      %v3884 = vpop.f32.mrf.mxu0
      %v3885 = vadd.f32 %v3655, %v3884
      %v3886 = vpop.f32.mrf.mxu0
      %v3887 = vadd.f32 %v3659, %v3886
      %v3888 = vpop.f32.mrf.mxu0
      %v3889 = vadd.f32 %v3655, %v3888
      %v3890 = vpop.f32.mrf.mxu0
      %v3891 = vadd.f32 %v3659, %v3890
      %3892 = vmatprep.mubr.bf16.mxu0 %v3564
      %3893 = vmatmul.mubr.bf16.gmra.mxu0 %v3563
      %v3894 = vpop.f32.mrf.mxu0
      %v3895 = vadd.f32 %v3655, %v3894
      %v3896 = vpop.f32.mrf.mxu0
      %v3897 = vadd.f32 %v3659, %v3896
      %v3898 = vpop.f32.mrf.mxu0
      %v3899 = vadd.f32 %v3655, %v3898
      %v3900 = vpop.f32.mrf.mxu0
      %v3901 = vadd.f32 %v3659, %v3900
      %3902 = vmatprep.mubr.bf16.mxu0 %v3566
      %3903 = vmatmul.mubr.bf16.gmra.mxu0 %v3565
      %v3904 = vpop.f32.mrf.mxu0
      %v3905 = vadd.f32 %v3655, %v3904
      %v3906 = vpop.f32.mrf.mxu0
      %v3907 = vadd.f32 %v3659, %v3906
      %v3908 = vpop.f32.mrf.mxu0
      %v3909 = vadd.f32 %v3655, %v3908
      %v3910 = vpop.f32.mrf.mxu0
      %v3911 = vadd.f32 %v3659, %v3910
      %3912 = vmatprep.mubr.bf16.mxu0 %v3568
      %3913 = vmatmul.mubr.bf16.gmra.mxu0 %v3567
      %v3914 = vpop.f32.mrf.mxu0
      %v3915 = vadd.f32 %v3655, %v3914
      %v3916 = vpop.f32.mrf.mxu0
      %v3917 = vadd.f32 %v3659, %v3916
      %v3918 = vpop.f32.mrf.mxu0
      %v3919 = vadd.f32 %v3655, %v3918
      %v3920 = vpop.f32.mrf.mxu0
      %v3921 = vadd.f32 %v3659, %v3920
      %3922 = vmatprep.mubr.bf16.mxu0 %v3570
      %3923 = vmatmul.mubr.bf16.gmra.mxu0 %v3569
      %v3924 = vpop.f32.mrf.mxu0
      %v3925 = vadd.f32 %v3655, %v3924
      %v3926 = vpop.f32.mrf.mxu0
      %v3927 = vadd.f32 %v3659, %v3926
      %v3928 = vpop.f32.mrf.mxu0
      %v3929 = vadd.f32 %v3655, %v3928
      %v3930 = vpop.f32.mrf.mxu0
      %v3931 = vadd.f32 %v3659, %v3930
      %3932 = vmatprep.mubr.bf16.mxu0 %v3572
      %3933 = vmatmul.mubr.bf16.gmra.mxu0 %v3571
      %v3934 = vpop.f32.mrf.mxu0
      %v3935 = vadd.f32 %v3655, %v3934
      %v3936 = vpop.f32.mrf.mxu0
      %v3937 = vadd.f32 %v3659, %v3936
      %v3938 = vpop.f32.mrf.mxu0
      %v3939 = vadd.f32 %v3655, %v3938
      %v3940 = vpop.f32.mrf.mxu0
      %v3941 = vadd.f32 %v3659, %v3940
      %3942 = vmatprep.mubr.bf16.mxu0 %v3574
      %3943 = vmatmul.mubr.bf16.gmra.mxu0 %v3573
      %v3944 = vpop.f32.mrf.mxu0
      %v3945 = vadd.f32 %v3655, %v3944
      %v3946 = vpop.f32.mrf.mxu0
      %v3947 = vadd.f32 %v3659, %v3946
      %v3948 = vpop.f32.mrf.mxu0
      %v3949 = vadd.f32 %v3655, %v3948
      %v3950 = vpop.f32.mrf.mxu0
      %v3951 = vadd.f32 %v3659, %v3950
      %3952 = vmatprep.mubr.bf16.mxu0 %v3576
      %3953 = vmatmul.mubr.bf16.gmra.mxu0 %v3575
      %v3954 = vpop.f32.mrf.mxu0
      %v3955 = vadd.f32 %v3655, %v3954
      %v3956 = vpop.f32.mrf.mxu0
      %v3957 = vadd.f32 %v3659, %v3956
      %v3958 = vpop.f32.mrf.mxu0
      %v3959 = vadd.f32 %v3655, %v3958
      %v3960 = vpop.f32.mrf.mxu0
      %v3961 = vadd.f32 %v3659, %v3960
      %3962 = vmatprep.mubr.bf16.mxu0 %v3578
      %3963 = vmatmul.mubr.bf16.gmra.mxu0 %v3577
      %v3964 = vpop.f32.mrf.mxu0
      %v3965 = vadd.f32 %v3655, %v3964
      %v3966 = vpop.f32.mrf.mxu0
      %v3967 = vadd.f32 %v3659, %v3966
      %v3968 = vpop.f32.mrf.mxu0
      %v3969 = vadd.f32 %v3655, %v3968
      %v3970 = vpop.f32.mrf.mxu0
      %v3971 = vadd.f32 %v3659, %v3970
      %3972 = vmatprep.mubr.bf16.mxu0 %v3580
      %3973 = vmatmul.mubr.bf16.gmra.mxu0 %v3579
      %v3974 = vpop.f32.mrf.mxu0
      %v3975 = vadd.f32 %v3655, %v3974
      %v3976 = vpop.f32.mrf.mxu0
      %v3977 = vadd.f32 %v3659, %v3976
      %v3978 = vpop.f32.mrf.mxu0
      %v3979 = vadd.f32 %v3655, %v3978
      %v3980 = vpop.f32.mrf.mxu0
      %v3981 = vadd.f32 %v3659, %v3980
      %3982 = vmatprep.mubr.bf16.mxu0 %v3582
      %3983 = vmatmul.mubr.bf16.gmra.mxu0 %v3581
      %v3984 = vpop.f32.mrf.mxu0
      %v3985 = vadd.f32 %v3655, %v3984
      %v3986 = vpop.f32.mrf.mxu0
      %v3987 = vadd.f32 %v3659, %v3986
      %v3988 = vpop.f32.mrf.mxu0
      %v3989 = vadd.f32 %v3655, %v3988
      %v3990 = vpop.f32.mrf.mxu0
      %v3991 = vadd.f32 %v3659, %v3990
      %3992 = vmatprep.mubr.bf16.mxu0 %v3584
      %3993 = vmatmul.mubr.bf16.gmra.mxu0 %v3583
      %v3994 = vpop.f32.mrf.mxu0
      %v3995 = vadd.f32 %v3655, %v3994
      %v3996 = vpop.f32.mrf.mxu0
      %v3997 = vadd.f32 %v3659, %v3996
      %v3998 = vpop.f32.mrf.mxu0
      %v3999 = vadd.f32 %v3655, %v3998
      %v4000 = vpop.f32.mrf.mxu0
      %v4001 = vadd.f32 %v3659, %v4000
      %4002 = vmatprep.mubr.bf16.mxu0 %v3586
      %4003 = vmatmul.mubr.bf16.gmra.mxu0 %v3585
      %v4004 = vpop.f32.mrf.mxu0
      %v4005 = vadd.f32 %v3655, %v4004
      %v4006 = vpop.f32.mrf.mxu0
      %v4007 = vadd.f32 %v3659, %v4006
      %v4008 = vpop.f32.mrf.mxu0
      %v4009 = vadd.f32 %v3655, %v4008
      %v4010 = vpop.f32.mrf.mxu0
      %v4011 = vadd.f32 %v3659, %v4010
      %4012 = vmatprep.mubr.bf16.mxu0 %v3588
      %4013 = vmatmul.mubr.bf16.gmra.mxu0 %v3587
      %v4014 = vpop.f32.mrf.mxu0
      %v4015 = vadd.f32 %v3655, %v4014
      %v4016 = vpop.f32.mrf.mxu0
      %v4017 = vadd.f32 %v3659, %v4016
      %v4018 = vpop.f32.mrf.mxu0
      %v4019 = vadd.f32 %v3655, %v4018
      %v4020 = vpop.f32.mrf.mxu0
      %v4021 = vadd.f32 %v3659, %v4020
      %4022 = vmatprep.mubr.bf16.mxu0 %v3590
      %4023 = vmatmul.mubr.bf16.gmra.mxu0 %v3589
      %v4024 = vpop.f32.mrf.mxu0
      %v4025 = vadd.f32 %v3655, %v4024
      %v4026 = vpop.f32.mrf.mxu0
      %v4027 = vadd.f32 %v3659, %v4026
      %v4028 = vpop.f32.mrf.mxu0
      %v4029 = vadd.f32 %v3655, %v4028
      %v4030 = vpop.f32.mrf.mxu0
      %v4031 = vadd.f32 %v3659, %v4030
      %4032 = vmatprep.mubr.bf16.mxu0 %v3592
      %4033 = vmatmul.mubr.bf16.gmra.mxu0 %v3591
      %v4034 = vpop.f32.mrf.mxu0
      %v4035 = vadd.f32 %v3655, %v4034
      %v4036 = vpop.f32.mrf.mxu0
      %v4037 = vadd.f32 %v3659, %v4036
      %v4038 = vpop.f32.mrf.mxu0
      %v4039 = vadd.f32 %v3655, %v4038
      %v4040 = vpop.f32.mrf.mxu0
      %v4041 = vadd.f32 %v3659, %v4040
      %4042 = vmatprep.mubr.bf16.mxu0 %v3594
      %4043 = vmatmul.mubr.bf16.gmra.mxu0 %v3593
      %v4044 = vpop.f32.mrf.mxu0
      %v4045 = vadd.f32 %v3655, %v4044
      %v4046 = vpop.f32.mrf.mxu0
      %v4047 = vadd.f32 %v3659, %v4046
      %v4048 = vpop.f32.mrf.mxu0
      %v4049 = vadd.f32 %v3655, %v4048
      %v4050 = vpop.f32.mrf.mxu0
      %v4051 = vadd.f32 %v3659, %v4050
      %4052 = vmatprep.mubr.bf16.mxu0 %v3596
      %4053 = vmatmul.mubr.bf16.gmra.mxu0 %v3595
      %v4054 = vpop.f32.mrf.mxu0
      %v4055 = vadd.f32 %v3655, %v4054
      %v4056 = vpop.f32.mrf.mxu0
      %v4057 = vadd.f32 %v3659, %v4056
      %v4058 = vpop.f32.mrf.mxu0
      %v4059 = vadd.f32 %v3655, %v4058
      %v4060 = vpop.f32.mrf.mxu0
      %v4061 = vadd.f32 %v3659, %v4060
      %4062 = vmatprep.mubr.bf16.mxu0 %v3598
      %4063 = vmatmul.mubr.bf16.gmra.mxu0 %v3597
      %v4064 = vpop.f32.mrf.mxu0
      %v4065 = vadd.f32 %v3655, %v4064
      %v4066 = vpop.f32.mrf.mxu0
      %v4067 = vadd.f32 %v3659, %v4066
      %v4068 = vpop.f32.mrf.mxu0
      %v4069 = vadd.f32 %v3655, %v4068
      %v4070 = vpop.f32.mrf.mxu0
      %v4071 = vadd.f32 %v3659, %v4070
      %4072 = vmatprep.mubr.bf16.mxu0 %v3600
      %4073 = vmatmul.mubr.bf16.gmra.mxu0 %v3599
      %v4074 = vpop.f32.mrf.mxu0
      %v4075 = vadd.f32 %v3655, %v4074
      %v4076 = vpop.f32.mrf.mxu0
      %v4077 = vadd.f32 %v3659, %v4076
      %v4078 = vpop.f32.mrf.mxu0
      %v4079 = vadd.f32 %v3655, %v4078
      %v4080 = vpop.f32.mrf.mxu0
      %v4081 = vadd.f32 %v3659, %v4080
      %4082 = vmatprep.mubr.bf16.mxu0 %v3602
      %4083 = vmatmul.mubr.bf16.gmra.mxu0 %v3601
      %v4084 = vpop.f32.mrf.mxu0
      %v4085 = vadd.f32 %v3655, %v4084
      %v4086 = vpop.f32.mrf.mxu0
      %v4087 = vadd.f32 %v3659, %v4086
      %v4088 = vpop.f32.mrf.mxu0
      %v4089 = vadd.f32 %v3655, %v4088
      %v4090 = vpop.f32.mrf.mxu0
      %v4091 = vadd.f32 %v3659, %v4090
      %4092 = vmatprep.mubr.bf16.mxu0 %v3604
      %4093 = vmatmul.mubr.bf16.gmra.mxu0 %v3603
      %v4094 = vpop.f32.mrf.mxu0
      %v4095 = vadd.f32 %v3655, %v4094
      %v4096 = vpop.f32.mrf.mxu0
      %v4097 = vadd.f32 %v3659, %v4096
      %v4098 = vpop.f32.mrf.mxu0
      %v4099 = vadd.f32 %v3655, %v4098
      %v4100 = vpop.f32.mrf.mxu0
      %v4101 = vadd.f32 %v3659, %v4100
      %4102 = vmatprep.mubr.bf16.mxu0 %v3606
      %4103 = vmatmul.mubr.bf16.gmra.mxu0 %v3605
      %v4104 = vpop.f32.mrf.mxu0
      %v4105 = vadd.f32 %v3655, %v4104
      %v4106 = vpop.f32.mrf.mxu0
      %v4107 = vadd.f32 %v3659, %v4106
      %v4108 = vpop.f32.mrf.mxu0
      %v4109 = vadd.f32 %v3655, %v4108
      %v4110 = vpop.f32.mrf.mxu0
      %v4111 = vadd.f32 %v3659, %v4110
      %4112 = vmatprep.mubr.bf16.mxu0 %v3608
      %4113 = vmatmul.mubr.bf16.gmra.mxu0 %v3607
      %v4114 = vpop.f32.mrf.mxu0
      %v4115 = vadd.f32 %v3655, %v4114
      %v4116 = vpop.f32.mrf.mxu0
      %v4117 = vadd.f32 %v3659, %v4116
      %v4118 = vpop.f32.mrf.mxu0
      %v4119 = vadd.f32 %v3655, %v4118
      %v4120 = vpop.f32.mrf.mxu0
      %v4121 = vadd.f32 %v3659, %v4120
      %4122 = vmatprep.mubr.bf16.mxu0 %v3610
      %4123 = vmatmul.mubr.bf16.gmra.mxu0 %v3609
      %v4124 = vpop.f32.mrf.mxu0
      %v4125 = vadd.f32 %v3655, %v4124
      %v4126 = vpop.f32.mrf.mxu0
      %v4127 = vadd.f32 %v3659, %v4126
      %v4128 = vpop.f32.mrf.mxu0
      %v4129 = vadd.f32 %v3655, %v4128
      %v4130 = vpop.f32.mrf.mxu0
      %v4131 = vadd.f32 %v3659, %v4130
      %4132 = vmatprep.mubr.bf16.mxu0 %v3612
      %4133 = vmatmul.mubr.bf16.gmra.mxu0 %v3611
      %v4134 = vpop.f32.mrf.mxu0
      %v4135 = vadd.f32 %v3655, %v4134
      %v4136 = vpop.f32.mrf.mxu0
      %v4137 = vadd.f32 %v3659, %v4136
      %v4138 = vpop.f32.mrf.mxu0
      %v4139 = vadd.f32 %v3655, %v4138
      %v4140 = vpop.f32.mrf.mxu0
      %v4141 = vadd.f32 %v3659, %v4140
      %4142 = vmatprep.mubr.bf16.mxu0 %v3614
      %4143 = vmatmul.mubr.bf16.gmra.mxu0 %v3613
      %v4144 = vpop.f32.mrf.mxu0
      %v4145 = vadd.f32 %v3655, %v4144
      %v4146 = vpop.f32.mrf.mxu0
      %v4147 = vadd.f32 %v3659, %v4146
      %v4148 = vpop.f32.mrf.mxu0
      %v4149 = vadd.f32 %v3655, %v4148
      %v4150 = vpop.f32.mrf.mxu0
      %v4151 = vadd.f32 %v3659, %v4150
      %4152 = vmatprep.mubr.bf16.mxu0 %v3616
      %4153 = vmatmul.mubr.bf16.gmra.mxu0 %v3615
      %v4154 = vpop.f32.mrf.mxu0
      %v4155 = vadd.f32 %v3655, %v4154
      %v4156 = vpop.f32.mrf.mxu0
      %v4157 = vadd.f32 %v3659, %v4156
      %v4158 = vpop.f32.mrf.mxu0
      %v4159 = vadd.f32 %v3655, %v4158
      %v4160 = vpop.f32.mrf.mxu0
      %v4161 = vadd.f32 %v3659, %v4160
      %4162 = vmatprep.mubr.bf16.mxu0 %v3618
      %4163 = vmatmul.mubr.bf16.gmra.mxu0 %v3617
      %v4164 = vpop.f32.mrf.mxu0
      %v4165 = vadd.f32 %v3655, %v4164
      %v4166 = vpop.f32.mrf.mxu0
      %v4167 = vadd.f32 %v3659, %v4166
      %v4168 = vpop.f32.mrf.mxu0
      %v4169 = vadd.f32 %v3655, %v4168
      %v4170 = vpop.f32.mrf.mxu0
      %v4171 = vadd.f32 %v3659, %v4170
      %4172 = vdwg.mxu0
      %v4173 = vmax.f32 %v3855, 0.0
      %v4174 = vmax.f32 %v3857, 0.0
      %v4175 = vmax.f32 %v3859, 0.0
      %v4176 = vmax.f32 %v3861, 0.0
      %v4177 = vmax.f32 %v3865, 0.0
      %v4178 = vmax.f32 %v3867, 0.0
      %v4179 = vmax.f32 %v3869, 0.0
      %v4180 = vmax.f32 %v3871, 0.0
      %v4181 = vmax.f32 %v3875, 0.0
      %v4182 = vmax.f32 %v3877, 0.0
      %v4183 = vmax.f32 %v3879, 0.0
      %v4184 = vmax.f32 %v3881, 0.0
      %v4185 = vmax.f32 %v3885, 0.0
      %v4186 = vmax.f32 %v3887, 0.0
      %v4187 = vmax.f32 %v3889, 0.0
      %v4188 = vmax.f32 %v3891, 0.0
      %v4189 = vmax.f32 %v3895, 0.0
      %v4190 = vmax.f32 %v3897, 0.0
      %v4191 = vmax.f32 %v3899, 0.0
      %v4192 = vmax.f32 %v3901, 0.0
      %v4193 = vmax.f32 %v3905, 0.0
      %v4194 = vmax.f32 %v3907, 0.0
      %v4195 = vmax.f32 %v3909, 0.0
      %v4196 = vmax.f32 %v3911, 0.0
      %v4197 = vmax.f32 %v3915, 0.0
      %v4198 = vmax.f32 %v3917, 0.0
      %v4199 = vmax.f32 %v3919, 0.0
      %v4200 = vmax.f32 %v3921, 0.0
      %v4201 = vmax.f32 %v3925, 0.0
      %v4202 = vmax.f32 %v3927, 0.0
      %v4203 = vmax.f32 %v3929, 0.0
      %v4204 = vmax.f32 %v3931, 0.0
      %v4205 = vmax.f32 %v3935, 0.0
      %v4206 = vmax.f32 %v3937, 0.0
      %v4207 = vmax.f32 %v3939, 0.0
      %v4208 = vmax.f32 %v3941, 0.0
      %v4209 = vmax.f32 %v3945, 0.0
      %v4210 = vmax.f32 %v3947, 0.0
      %v4211 = vmax.f32 %v3949, 0.0
      %v4212 = vmax.f32 %v3951, 0.0
      %v4213 = vmax.f32 %v3955, 0.0
      %v4214 = vmax.f32 %v3957, 0.0
      %v4215 = vmax.f32 %v3959, 0.0
      %v4216 = vmax.f32 %v3961, 0.0
      %v4217 = vmax.f32 %v3965, 0.0
      %v4218 = vmax.f32 %v3967, 0.0
      %v4219 = vmax.f32 %v3969, 0.0
      %v4220 = vmax.f32 %v3971, 0.0
      %v4221 = vmax.f32 %v3975, 0.0
      %v4222 = vmax.f32 %v3977, 0.0
      %v4223 = vmax.f32 %v3979, 0.0
      %v4224 = vmax.f32 %v3981, 0.0
      %v4225 = vmax.f32 %v3985, 0.0
      %v4226 = vmax.f32 %v3987, 0.0
      %v4227 = vmax.f32 %v3989, 0.0
      %v4228 = vmax.f32 %v3991, 0.0
      %v4229 = vmax.f32 %v3995, 0.0
      %v4230 = vmax.f32 %v3997, 0.0
      %v4231 = vmax.f32 %v3999, 0.0
      %v4232 = vmax.f32 %v4001, 0.0
      %v4233 = vmax.f32 %v4005, 0.0
      %v4234 = vmax.f32 %v4007, 0.0
      %v4235 = vmax.f32 %v4009, 0.0
      %v4236 = vmax.f32 %v4011, 0.0
      %v4237 = vmax.f32 %v4015, 0.0
      %v4238 = vmax.f32 %v4017, 0.0
      %v4239 = vmax.f32 %v4019, 0.0
      %v4240 = vmax.f32 %v4021, 0.0
      %v4241 = vmax.f32 %v4025, 0.0
      %v4242 = vmax.f32 %v4027, 0.0
      %v4243 = vmax.f32 %v4029, 0.0
      %v4244 = vmax.f32 %v4031, 0.0
      %v4245 = vmax.f32 %v4035, 0.0
      %v4246 = vmax.f32 %v4037, 0.0
      %v4247 = vmax.f32 %v4039, 0.0
      %v4248 = vmax.f32 %v4041, 0.0
      %v4249 = vmax.f32 %v4045, 0.0
      %v4250 = vmax.f32 %v4047, 0.0
      %v4251 = vmax.f32 %v4049, 0.0
      %v4252 = vmax.f32 %v4051, 0.0
      %v4253 = vmax.f32 %v4055, 0.0
      %v4254 = vmax.f32 %v4057, 0.0
      %v4255 = vmax.f32 %v4059, 0.0
      %v4256 = vmax.f32 %v4061, 0.0
      %v4257 = vmax.f32 %v4065, 0.0
      %v4258 = vmax.f32 %v4067, 0.0
      %v4259 = vmax.f32 %v4069, 0.0
      %v4260 = vmax.f32 %v4071, 0.0
      %v4261 = vmax.f32 %v4075, 0.0
      %v4262 = vmax.f32 %v4077, 0.0
      %v4263 = vmax.f32 %v4079, 0.0
      %v4264 = vmax.f32 %v4081, 0.0
      %v4265 = vmax.f32 %v4085, 0.0
      %v4266 = vmax.f32 %v4087, 0.0
      %v4267 = vmax.f32 %v4089, 0.0
      %v4268 = vmax.f32 %v4091, 0.0
      %v4269 = vmax.f32 %v4095, 0.0
      %v4270 = vmax.f32 %v4097, 0.0
      %v4271 = vmax.f32 %v4099, 0.0
      %v4272 = vmax.f32 %v4101, 0.0
      %v4273 = vmax.f32 %v4105, 0.0
      %v4274 = vmax.f32 %v4107, 0.0
      %v4275 = vmax.f32 %v4109, 0.0
      %v4276 = vmax.f32 %v4111, 0.0
      %v4277 = vmax.f32 %v4115, 0.0
      %v4278 = vmax.f32 %v4117, 0.0
      %v4279 = vmax.f32 %v4119, 0.0
      %v4280 = vmax.f32 %v4121, 0.0
      %v4281 = vmax.f32 %v4125, 0.0
      %v4282 = vmax.f32 %v4127, 0.0
      %v4283 = vmax.f32 %v4129, 0.0
      %v4284 = vmax.f32 %v4131, 0.0
      %v4285 = vmax.f32 %v4135, 0.0
      %v4286 = vmax.f32 %v4137, 0.0
      %v4287 = vmax.f32 %v4139, 0.0
      %v4288 = vmax.f32 %v4141, 0.0
      %v4289 = vmax.f32 %v4145, 0.0
      %v4290 = vmax.f32 %v4147, 0.0
      %v4291 = vmax.f32 %v4149, 0.0
      %v4292 = vmax.f32 %v4151, 0.0
      %v4293 = vmax.f32 %v4155, 0.0
      %v4294 = vmax.f32 %v4157, 0.0
      %v4295 = vmax.f32 %v4159, 0.0
      %v4296 = vmax.f32 %v4161, 0.0
      %v4297 = vmax.f32 %v4165, 0.0
      %v4298 = vmax.f32 %v4167, 0.0
      %v4299 = vmax.f32 %v4169, 0.0
      %v4300 = vmax.f32 %v4171, 0.0
      %v4301 = vpack.c.bf16 %v4175, %v4173
      %v4302 = vpack.c.bf16 %v4176, %v4174
      %v4303 = vpack.c.bf16 %v4179, %v4177
      %v4304 = vpack.c.bf16 %v4180, %v4178
      %v4305 = vpack.c.bf16 %v4183, %v4181
      %v4306 = vpack.c.bf16 %v4184, %v4182
      %v4307 = vpack.c.bf16 %v4187, %v4185
      %v4308 = vpack.c.bf16 %v4188, %v4186
      %v4309 = vpack.c.bf16 %v4191, %v4189
      %v4310 = vpack.c.bf16 %v4192, %v4190
      %v4311 = vpack.c.bf16 %v4195, %v4193
      %v4312 = vpack.c.bf16 %v4196, %v4194
      %v4313 = vpack.c.bf16 %v4199, %v4197
      %v4314 = vpack.c.bf16 %v4200, %v4198
      %v4315 = vpack.c.bf16 %v4203, %v4201
      %v4316 = vpack.c.bf16 %v4204, %v4202
      %v4317 = vpack.c.bf16 %v4207, %v4205
      %v4318 = vpack.c.bf16 %v4208, %v4206
      %v4319 = vpack.c.bf16 %v4211, %v4209
      %v4320 = vpack.c.bf16 %v4212, %v4210
      %v4321 = vpack.c.bf16 %v4215, %v4213
      %v4322 = vpack.c.bf16 %v4216, %v4214
      %v4323 = vpack.c.bf16 %v4219, %v4217
      %v4324 = vpack.c.bf16 %v4220, %v4218
      %v4325 = vpack.c.bf16 %v4223, %v4221
      %v4326 = vpack.c.bf16 %v4224, %v4222
      %v4327 = vpack.c.bf16 %v4227, %v4225
      %v4328 = vpack.c.bf16 %v4228, %v4226
      %v4329 = vpack.c.bf16 %v4231, %v4229
      %v4330 = vpack.c.bf16 %v4232, %v4230
      %v4331 = vpack.c.bf16 %v4235, %v4233
      %v4332 = vpack.c.bf16 %v4236, %v4234
      %v4333 = vpack.c.bf16 %v4239, %v4237
      %v4334 = vpack.c.bf16 %v4240, %v4238
      %v4335 = vpack.c.bf16 %v4243, %v4241
      %v4336 = vpack.c.bf16 %v4244, %v4242
      %v4337 = vpack.c.bf16 %v4247, %v4245
      %v4338 = vpack.c.bf16 %v4248, %v4246
      %v4339 = vpack.c.bf16 %v4251, %v4249
      %v4340 = vpack.c.bf16 %v4252, %v4250
      %v4341 = vpack.c.bf16 %v4255, %v4253
      %v4342 = vpack.c.bf16 %v4256, %v4254
      %v4343 = vpack.c.bf16 %v4259, %v4257
      %v4344 = vpack.c.bf16 %v4260, %v4258
      %v4345 = vpack.c.bf16 %v4263, %v4261
      %v4346 = vpack.c.bf16 %v4264, %v4262
      %v4347 = vpack.c.bf16 %v4267, %v4265
      %v4348 = vpack.c.bf16 %v4268, %v4266
      %v4349 = vpack.c.bf16 %v4271, %v4269
      %v4350 = vpack.c.bf16 %v4272, %v4270
      %v4351 = vpack.c.bf16 %v4275, %v4273
      %v4352 = vpack.c.bf16 %v4276, %v4274
      %v4353 = vpack.c.bf16 %v4279, %v4277
      %v4354 = vpack.c.bf16 %v4280, %v4278
      %v4355 = vpack.c.bf16 %v4283, %v4281
      %v4356 = vpack.c.bf16 %v4284, %v4282
      %v4357 = vpack.c.bf16 %v4287, %v4285
      %v4358 = vpack.c.bf16 %v4288, %v4286
      %v4359 = vpack.c.bf16 %v4291, %v4289
      %v4360 = vpack.c.bf16 %v4292, %v4290
      %v4361 = vpack.c.bf16 %v4295, %v4293
      %v4362 = vpack.c.bf16 %v4296, %v4294
      %v4363 = vpack.c.bf16 %v4299, %v4297
      %v4364 = vpack.c.bf16 %v4300, %v4298
      %s4365 = scalar_lea.vmem %s2, 512
      %v4366 = vld [vmem:[%s4365] sm:$0xff]
      %v4367 = vld [vmem:[%s4365 + $0x8] sm:$0xff]
      %v4368 = vld [vmem:[%s4365 + $0x10] sm:$0xff]
      %v4369 = vld [vmem:[%s4365 + $0x18] sm:$0xff]
      %v4370 = vld [vmem:[%s4365 + $0x20] sm:$0xff]
      %v4371 = vld [vmem:[%s4365 + $0x28] sm:$0xff]
      %v4372 = vld [vmem:[%s4365 + $0x30] sm:$0xff]
      %v4373 = vld [vmem:[%s4365 + $0x38] sm:$0xff]
      %v4374 = vld [vmem:[%s4365 + $0x40] sm:$0xff]
      %v4375 = vld [vmem:[%s4365 + $0x48] sm:$0xff]
      %v4376 = vld [vmem:[%s4365 + $0x50] sm:$0xff]
      %v4377 = vld [vmem:[%s4365 + $0x58] sm:$0xff]
      %v4378 = vld [vmem:[%s4365 + $0x60] sm:$0xff]
      %v4379 = vld [vmem:[%s4365 + $0x68] sm:$0xff]
      %v4380 = vld [vmem:[%s4365 + $0x70] sm:$0xff]
      %v4381 = vld [vmem:[%s4365 + $0x78] sm:$0xff]
      %v4382 = vld [vmem:[%s4365 + $0x80] sm:$0xff]
      %v4383 = vld [vmem:[%s4365 + $0x88] sm:$0xff]
      %v4384 = vld [vmem:[%s4365 + $0x90] sm:$0xff]
      %v4385 = vld [vmem:[%s4365 + $0x98] sm:$0xff]
      %v4386 = vld [vmem:[%s4365 + $0xa0] sm:$0xff]
      %v4387 = vld [vmem:[%s4365 + $0xa8] sm:$0xff]
      %v4388 = vld [vmem:[%s4365 + $0xb0] sm:$0xff]
      %v4389 = vld [vmem:[%s4365 + $0xb8] sm:$0xff]
      %v4390 = vld [vmem:[%s4365 + $0xc0] sm:$0xff]
      %v4391 = vld [vmem:[%s4365 + $0xc8] sm:$0xff]
      %v4392 = vld [vmem:[%s4365 + $0xd0] sm:$0xff]
      %v4393 = vld [vmem:[%s4365 + $0xd8] sm:$0xff]
      %v4394 = vld [vmem:[%s4365 + $0xe0] sm:$0xff]
      %v4395 = vld [vmem:[%s4365 + $0xe8] sm:$0xff]
      %v4396 = vld [vmem:[%s4365 + $0xf0] sm:$0xff]
      %v4397 = vld [vmem:[%s4365 + $0xf8] sm:$0xff]
      %v4398 = vlaneseq
      %v4399 = vshrl.u32 %v4398, 7
      %v4400 = vsub.s32 3, %v4399
      %v4401 = vrot.slane %v322, %v4400
      %v4402 = vlaneseq
      %v4403 = vshrl.u32 %v4402, 7
      %v4404 = vsub.s32 3, %v4403
      %v4405 = vrot.slane %v323, %v4404
      %v4438 = vunpack.c.l.b16 %v4366
      %v4439 = vunpack.c.h.b16 %v4366
      %v4440 = vunpack.c.l.b16 %v4367
      %v4441 = vunpack.c.h.b16 %v4367
      %v4442 = vunpack.c.l.b16 %v4368
      %v4443 = vunpack.c.h.b16 %v4368
      %v4444 = vunpack.c.l.b16 %v4369
      %v4445 = vunpack.c.h.b16 %v4369
      %v4446 = vunpack.c.l.b16 %v4370
      %v4447 = vunpack.c.h.b16 %v4370
      %v4448 = vunpack.c.l.b16 %v4371
      %v4449 = vunpack.c.h.b16 %v4371
      %v4450 = vunpack.c.l.b16 %v4372
      %v4451 = vunpack.c.h.b16 %v4372
      %v4452 = vunpack.c.l.b16 %v4373
      %v4453 = vunpack.c.h.b16 %v4373
      %v4454 = vunpack.c.l.b16 %v4374
      %v4455 = vunpack.c.h.b16 %v4374
      %v4456 = vunpack.c.l.b16 %v4375
      %v4457 = vunpack.c.h.b16 %v4375
      %v4458 = vunpack.c.l.b16 %v4376
      %v4459 = vunpack.c.h.b16 %v4376
      %v4460 = vunpack.c.l.b16 %v4377
      %v4461 = vunpack.c.h.b16 %v4377
      %v4462 = vunpack.c.l.b16 %v4378
      %v4463 = vunpack.c.h.b16 %v4378
      %v4464 = vunpack.c.l.b16 %v4379
      %v4465 = vunpack.c.h.b16 %v4379
      %v4466 = vunpack.c.l.b16 %v4380
      %v4467 = vunpack.c.h.b16 %v4380
      %v4468 = vunpack.c.l.b16 %v4381
      %v4469 = vunpack.c.h.b16 %v4381
      %v4470 = vunpack.c.l.b16 %v4382
      %v4471 = vunpack.c.h.b16 %v4382
      %v4472 = vunpack.c.l.b16 %v4383
      %v4473 = vunpack.c.h.b16 %v4383
      %v4474 = vunpack.c.l.b16 %v4384
      %v4475 = vunpack.c.h.b16 %v4384
      %v4476 = vunpack.c.l.b16 %v4385
      %v4477 = vunpack.c.h.b16 %v4385
      %v4478 = vunpack.c.l.b16 %v4386
      %v4479 = vunpack.c.h.b16 %v4386
      %v4480 = vunpack.c.l.b16 %v4387
      %v4481 = vunpack.c.h.b16 %v4387
      %v4482 = vunpack.c.l.b16 %v4388
      %v4483 = vunpack.c.h.b16 %v4388
      %v4484 = vunpack.c.l.b16 %v4389
      %v4485 = vunpack.c.h.b16 %v4389
      %v4486 = vunpack.c.l.b16 %v4390
      %v4487 = vunpack.c.h.b16 %v4390
      %v4488 = vunpack.c.l.b16 %v4391
      %v4489 = vunpack.c.h.b16 %v4391
      %v4490 = vunpack.c.l.b16 %v4392
      %v4491 = vunpack.c.h.b16 %v4392
      %v4492 = vunpack.c.l.b16 %v4393
      %v4493 = vunpack.c.h.b16 %v4393
      %v4494 = vunpack.c.l.b16 %v4394
      %v4495 = vunpack.c.h.b16 %v4394
      %v4496 = vunpack.c.l.b16 %v4395
      %v4497 = vunpack.c.h.b16 %v4395
      %v4498 = vunpack.c.l.b16 %v4396
      %v4499 = vunpack.c.h.b16 %v4396
      %v4500 = vunpack.c.l.b16 %v4397
      %v4501 = vunpack.c.h.b16 %v4397
      %v4502 = vpack.c.b16 %v4440, %v4438
      %v4503 = vpack.c.b16 %v4441, %v4439
      %v4504 = vpack.c.b16 %v4444, %v4442
      %v4505 = vpack.c.b16 %v4445, %v4443
      %v4506 = vpack.c.b16 %v4448, %v4446
      %v4507 = vpack.c.b16 %v4449, %v4447
      %v4508 = vpack.c.b16 %v4452, %v4450
      %v4509 = vpack.c.b16 %v4453, %v4451
      %v4510 = vpack.c.b16 %v4456, %v4454
      %v4511 = vpack.c.b16 %v4457, %v4455
      %v4512 = vpack.c.b16 %v4460, %v4458
      %v4513 = vpack.c.b16 %v4461, %v4459
      %v4514 = vpack.c.b16 %v4464, %v4462
      %v4515 = vpack.c.b16 %v4465, %v4463
      %v4516 = vpack.c.b16 %v4468, %v4466
      %v4517 = vpack.c.b16 %v4469, %v4467
      %v4518 = vpack.c.b16 %v4472, %v4470
      %v4519 = vpack.c.b16 %v4473, %v4471
      %v4520 = vpack.c.b16 %v4476, %v4474
      %v4521 = vpack.c.b16 %v4477, %v4475
      %v4522 = vpack.c.b16 %v4480, %v4478
      %v4523 = vpack.c.b16 %v4481, %v4479
      %v4524 = vpack.c.b16 %v4484, %v4482
      %v4525 = vpack.c.b16 %v4485, %v4483
      %v4526 = vpack.c.b16 %v4488, %v4486
      %v4527 = vpack.c.b16 %v4489, %v4487
      %v4528 = vpack.c.b16 %v4492, %v4490
      %v4529 = vpack.c.b16 %v4493, %v4491
      %v4530 = vpack.c.b16 %v4496, %v4494
      %v4531 = vpack.c.b16 %v4497, %v4495
      %v4532 = vpack.c.b16 %v4500, %v4498
      %v4533 = vpack.c.b16 %v4501, %v4499
      %4566 = vmatprep.subr.bf16.mxu0 %v4517
      %4567 = vmatpush1.bf16.msra.mxu0 %v4516
      %4568 = vmatprep.subr.bf16.mxu0 %v4515
      %4569 = vmatpush1.bf16.msra.mxu0 %v4514
      %4570 = vmatprep.subr.bf16.mxu0 %v4513
      %4571 = vmatpush1.bf16.msra.mxu0 %v4512
      %4572 = vmatprep.subr.bf16.mxu0 %v4511
      %4573 = vmatpush1.bf16.msra.mxu0 %v4510
      %4574 = vmatprep.subr.bf16.mxu0 %v4509
      %4575 = vmatpush1.bf16.msra.mxu0 %v4508
      %4576 = vmatprep.subr.bf16.mxu0 %v4507
      %4577 = vmatpush1.bf16.msra.mxu0 %v4506
      %4578 = vmatprep.subr.bf16.mxu0 %v4505
      %4579 = vmatpush1.bf16.msra.mxu0 %v4504
      %4580 = vmatprep.subr.bf16.mxu0 %v4503
      %4581 = vmatpush1.bf16.msra.mxu0 %v4502
      %4582 = vmatprep.subr.bf16.mxu0 %v4533
      %4583 = vmatpush2.bf16.msra.mxu0 %v4532
      %4584 = vmatprep.subr.bf16.mxu0 %v4531
      %4585 = vmatpush2.bf16.msra.mxu0 %v4530
      %4586 = vmatprep.subr.bf16.mxu0 %v4529
      %4587 = vmatpush2.bf16.msra.mxu0 %v4528
      %4588 = vmatprep.subr.bf16.mxu0 %v4527
      %4589 = vmatpush2.bf16.msra.mxu0 %v4526
      %4590 = vmatprep.subr.bf16.mxu0 %v4525
      %4591 = vmatpush2.bf16.msra.mxu0 %v4524
      %4592 = vmatprep.subr.bf16.mxu0 %v4523
      %4593 = vmatpush2.bf16.msra.mxu0 %v4522
      %4594 = vmatprep.subr.bf16.mxu0 %v4521
      %4595 = vmatpush2.bf16.msra.mxu0 %v4520
      %4596 = vmatprep.subr.bf16.mxu0 %v4519
      %4597 = vmatpush2.bf16.msra.mxu0 %v4518
      %4598 = vmatprep.mubr.bf16.mxu0 %v4302
      %4599 = vmatmul.mubr.bf16.gmra.mxu0 %v4301
      %v4600 = vpop.f32.mrf.mxu0
      %v4601 = vadd.f32 %v4401, %v4600
      %v4602 = vpop.f32.mrf.mxu0
      %v4603 = vadd.f32 %v4405, %v4602
      %v4604 = vpop.f32.mrf.mxu0
      %v4605 = vadd.f32 %v4401, %v4604
      %v4606 = vpop.f32.mrf.mxu0
      %v4607 = vadd.f32 %v4405, %v4606
      %4608 = vmatprep.mubr.bf16.mxu0 %v4304
      %4609 = vmatmul.mubr.bf16.gmra.mxu0 %v4303
      %v4610 = vpop.f32.mrf.mxu0
      %v4611 = vadd.f32 %v4401, %v4610
      %v4612 = vpop.f32.mrf.mxu0
      %v4613 = vadd.f32 %v4405, %v4612
      %v4614 = vpop.f32.mrf.mxu0
      %v4615 = vadd.f32 %v4401, %v4614
      %v4616 = vpop.f32.mrf.mxu0
      %v4617 = vadd.f32 %v4405, %v4616
      %4618 = vmatprep.mubr.bf16.mxu0 %v4306
      %4619 = vmatmul.mubr.bf16.gmra.mxu0 %v4305
      %v4620 = vpop.f32.mrf.mxu0
      %v4621 = vadd.f32 %v4401, %v4620
      %v4622 = vpop.f32.mrf.mxu0
      %v4623 = vadd.f32 %v4405, %v4622
      %v4624 = vpop.f32.mrf.mxu0
      %v4625 = vadd.f32 %v4401, %v4624
      %v4626 = vpop.f32.mrf.mxu0
      %v4627 = vadd.f32 %v4405, %v4626
      %4628 = vmatprep.mubr.bf16.mxu0 %v4308
      %4629 = vmatmul.mubr.bf16.gmra.mxu0 %v4307
      %v4630 = vpop.f32.mrf.mxu0
      %v4631 = vadd.f32 %v4401, %v4630
      %v4632 = vpop.f32.mrf.mxu0
      %v4633 = vadd.f32 %v4405, %v4632
      %v4634 = vpop.f32.mrf.mxu0
      %v4635 = vadd.f32 %v4401, %v4634
      %v4636 = vpop.f32.mrf.mxu0
      %v4637 = vadd.f32 %v4405, %v4636
      %4638 = vmatprep.mubr.bf16.mxu0 %v4310
      %4639 = vmatmul.mubr.bf16.gmra.mxu0 %v4309
      %v4640 = vpop.f32.mrf.mxu0
      %v4641 = vadd.f32 %v4401, %v4640
      %v4642 = vpop.f32.mrf.mxu0
      %v4643 = vadd.f32 %v4405, %v4642
      %v4644 = vpop.f32.mrf.mxu0
      %v4645 = vadd.f32 %v4401, %v4644
      %v4646 = vpop.f32.mrf.mxu0
      %v4647 = vadd.f32 %v4405, %v4646
      %4648 = vmatprep.mubr.bf16.mxu0 %v4312
      %4649 = vmatmul.mubr.bf16.gmra.mxu0 %v4311
      %v4650 = vpop.f32.mrf.mxu0
      %v4651 = vadd.f32 %v4401, %v4650
      %v4652 = vpop.f32.mrf.mxu0
      %v4653 = vadd.f32 %v4405, %v4652
      %v4654 = vpop.f32.mrf.mxu0
      %v4655 = vadd.f32 %v4401, %v4654
      %v4656 = vpop.f32.mrf.mxu0
      %v4657 = vadd.f32 %v4405, %v4656
      %4658 = vmatprep.mubr.bf16.mxu0 %v4314
      %4659 = vmatmul.mubr.bf16.gmra.mxu0 %v4313
      %v4660 = vpop.f32.mrf.mxu0
      %v4661 = vadd.f32 %v4401, %v4660
      %v4662 = vpop.f32.mrf.mxu0
      %v4663 = vadd.f32 %v4405, %v4662
      %v4664 = vpop.f32.mrf.mxu0
      %v4665 = vadd.f32 %v4401, %v4664
      %v4666 = vpop.f32.mrf.mxu0
      %v4667 = vadd.f32 %v4405, %v4666
      %4668 = vmatprep.mubr.bf16.mxu0 %v4316
      %4669 = vmatmul.mubr.bf16.gmra.mxu0 %v4315
      %v4670 = vpop.f32.mrf.mxu0
      %v4671 = vadd.f32 %v4401, %v4670
      %v4672 = vpop.f32.mrf.mxu0
      %v4673 = vadd.f32 %v4405, %v4672
      %v4674 = vpop.f32.mrf.mxu0
      %v4675 = vadd.f32 %v4401, %v4674
      %v4676 = vpop.f32.mrf.mxu0
      %v4677 = vadd.f32 %v4405, %v4676
      %4678 = vmatprep.mubr.bf16.mxu0 %v4318
      %4679 = vmatmul.mubr.bf16.gmra.mxu0 %v4317
      %v4680 = vpop.f32.mrf.mxu0
      %v4681 = vadd.f32 %v4401, %v4680
      %v4682 = vpop.f32.mrf.mxu0
      %v4683 = vadd.f32 %v4405, %v4682
      %v4684 = vpop.f32.mrf.mxu0
      %v4685 = vadd.f32 %v4401, %v4684
      %v4686 = vpop.f32.mrf.mxu0
      %v4687 = vadd.f32 %v4405, %v4686
      %4688 = vmatprep.mubr.bf16.mxu0 %v4320
      %4689 = vmatmul.mubr.bf16.gmra.mxu0 %v4319
      %v4690 = vpop.f32.mrf.mxu0
      %v4691 = vadd.f32 %v4401, %v4690
      %v4692 = vpop.f32.mrf.mxu0
      %v4693 = vadd.f32 %v4405, %v4692
      %v4694 = vpop.f32.mrf.mxu0
      %v4695 = vadd.f32 %v4401, %v4694
      %v4696 = vpop.f32.mrf.mxu0
      %v4697 = vadd.f32 %v4405, %v4696
      %4698 = vmatprep.mubr.bf16.mxu0 %v4322
      %4699 = vmatmul.mubr.bf16.gmra.mxu0 %v4321
      %v4700 = vpop.f32.mrf.mxu0
      %v4701 = vadd.f32 %v4401, %v4700
      %v4702 = vpop.f32.mrf.mxu0
      %v4703 = vadd.f32 %v4405, %v4702
      %v4704 = vpop.f32.mrf.mxu0
      %v4705 = vadd.f32 %v4401, %v4704
      %v4706 = vpop.f32.mrf.mxu0
      %v4707 = vadd.f32 %v4405, %v4706
      %4708 = vmatprep.mubr.bf16.mxu0 %v4324
      %4709 = vmatmul.mubr.bf16.gmra.mxu0 %v4323
      %v4710 = vpop.f32.mrf.mxu0
      %v4711 = vadd.f32 %v4401, %v4710
      %v4712 = vpop.f32.mrf.mxu0
      %v4713 = vadd.f32 %v4405, %v4712
      %v4714 = vpop.f32.mrf.mxu0
      %v4715 = vadd.f32 %v4401, %v4714
      %v4716 = vpop.f32.mrf.mxu0
      %v4717 = vadd.f32 %v4405, %v4716
      %4718 = vmatprep.mubr.bf16.mxu0 %v4326
      %4719 = vmatmul.mubr.bf16.gmra.mxu0 %v4325
      %v4720 = vpop.f32.mrf.mxu0
      %v4721 = vadd.f32 %v4401, %v4720
      %v4722 = vpop.f32.mrf.mxu0
      %v4723 = vadd.f32 %v4405, %v4722
      %v4724 = vpop.f32.mrf.mxu0
      %v4725 = vadd.f32 %v4401, %v4724
      %v4726 = vpop.f32.mrf.mxu0
      %v4727 = vadd.f32 %v4405, %v4726
      %4728 = vmatprep.mubr.bf16.mxu0 %v4328
      %4729 = vmatmul.mubr.bf16.gmra.mxu0 %v4327
      %v4730 = vpop.f32.mrf.mxu0
      %v4731 = vadd.f32 %v4401, %v4730
      %v4732 = vpop.f32.mrf.mxu0
      %v4733 = vadd.f32 %v4405, %v4732
      %v4734 = vpop.f32.mrf.mxu0
      %v4735 = vadd.f32 %v4401, %v4734
      %v4736 = vpop.f32.mrf.mxu0
      %v4737 = vadd.f32 %v4405, %v4736
      %4738 = vmatprep.mubr.bf16.mxu0 %v4330
      %4739 = vmatmul.mubr.bf16.gmra.mxu0 %v4329
      %v4740 = vpop.f32.mrf.mxu0
      %v4741 = vadd.f32 %v4401, %v4740
      %v4742 = vpop.f32.mrf.mxu0
      %v4743 = vadd.f32 %v4405, %v4742
      %v4744 = vpop.f32.mrf.mxu0
      %v4745 = vadd.f32 %v4401, %v4744
      %v4746 = vpop.f32.mrf.mxu0
      %v4747 = vadd.f32 %v4405, %v4746
      %4748 = vmatprep.mubr.bf16.mxu0 %v4332
      %4749 = vmatmul.mubr.bf16.gmra.mxu0 %v4331
      %v4750 = vpop.f32.mrf.mxu0
      %v4751 = vadd.f32 %v4401, %v4750
      %v4752 = vpop.f32.mrf.mxu0
      %v4753 = vadd.f32 %v4405, %v4752
      %v4754 = vpop.f32.mrf.mxu0
      %v4755 = vadd.f32 %v4401, %v4754
      %v4756 = vpop.f32.mrf.mxu0
      %v4757 = vadd.f32 %v4405, %v4756
      %4758 = vmatprep.mubr.bf16.mxu0 %v4334
      %4759 = vmatmul.mubr.bf16.gmra.mxu0 %v4333
      %v4760 = vpop.f32.mrf.mxu0
      %v4761 = vadd.f32 %v4401, %v4760
      %v4762 = vpop.f32.mrf.mxu0
      %v4763 = vadd.f32 %v4405, %v4762
      %v4764 = vpop.f32.mrf.mxu0
      %v4765 = vadd.f32 %v4401, %v4764
      %v4766 = vpop.f32.mrf.mxu0
      %v4767 = vadd.f32 %v4405, %v4766
      %4768 = vmatprep.mubr.bf16.mxu0 %v4336
      %4769 = vmatmul.mubr.bf16.gmra.mxu0 %v4335
      %v4770 = vpop.f32.mrf.mxu0
      %v4771 = vadd.f32 %v4401, %v4770
      %v4772 = vpop.f32.mrf.mxu0
      %v4773 = vadd.f32 %v4405, %v4772
      %v4774 = vpop.f32.mrf.mxu0
      %v4775 = vadd.f32 %v4401, %v4774
      %v4776 = vpop.f32.mrf.mxu0
      %v4777 = vadd.f32 %v4405, %v4776
      %4778 = vmatprep.mubr.bf16.mxu0 %v4338
      %4779 = vmatmul.mubr.bf16.gmra.mxu0 %v4337
      %v4780 = vpop.f32.mrf.mxu0
      %v4781 = vadd.f32 %v4401, %v4780
      %v4782 = vpop.f32.mrf.mxu0
      %v4783 = vadd.f32 %v4405, %v4782
      %v4784 = vpop.f32.mrf.mxu0
      %v4785 = vadd.f32 %v4401, %v4784
      %v4786 = vpop.f32.mrf.mxu0
      %v4787 = vadd.f32 %v4405, %v4786
      %4788 = vmatprep.mubr.bf16.mxu0 %v4340
      %4789 = vmatmul.mubr.bf16.gmra.mxu0 %v4339
      %v4790 = vpop.f32.mrf.mxu0
      %v4791 = vadd.f32 %v4401, %v4790
      %v4792 = vpop.f32.mrf.mxu0
      %v4793 = vadd.f32 %v4405, %v4792
      %v4794 = vpop.f32.mrf.mxu0
      %v4795 = vadd.f32 %v4401, %v4794
      %v4796 = vpop.f32.mrf.mxu0
      %v4797 = vadd.f32 %v4405, %v4796
      %4798 = vmatprep.mubr.bf16.mxu0 %v4342
      %4799 = vmatmul.mubr.bf16.gmra.mxu0 %v4341
      %v4800 = vpop.f32.mrf.mxu0
      %v4801 = vadd.f32 %v4401, %v4800
      %v4802 = vpop.f32.mrf.mxu0
      %v4803 = vadd.f32 %v4405, %v4802
      %v4804 = vpop.f32.mrf.mxu0
      %v4805 = vadd.f32 %v4401, %v4804
      %v4806 = vpop.f32.mrf.mxu0
      %v4807 = vadd.f32 %v4405, %v4806
      %4808 = vmatprep.mubr.bf16.mxu0 %v4344
      %4809 = vmatmul.mubr.bf16.gmra.mxu0 %v4343
      %v4810 = vpop.f32.mrf.mxu0
      %v4811 = vadd.f32 %v4401, %v4810
      %v4812 = vpop.f32.mrf.mxu0
      %v4813 = vadd.f32 %v4405, %v4812
      %v4814 = vpop.f32.mrf.mxu0
      %v4815 = vadd.f32 %v4401, %v4814
      %v4816 = vpop.f32.mrf.mxu0
      %v4817 = vadd.f32 %v4405, %v4816
      %4818 = vmatprep.mubr.bf16.mxu0 %v4346
      %4819 = vmatmul.mubr.bf16.gmra.mxu0 %v4345
      %v4820 = vpop.f32.mrf.mxu0
      %v4821 = vadd.f32 %v4401, %v4820
      %v4822 = vpop.f32.mrf.mxu0
      %v4823 = vadd.f32 %v4405, %v4822
      %v4824 = vpop.f32.mrf.mxu0
      %v4825 = vadd.f32 %v4401, %v4824
      %v4826 = vpop.f32.mrf.mxu0
      %v4827 = vadd.f32 %v4405, %v4826
      %4828 = vmatprep.mubr.bf16.mxu0 %v4348
      %4829 = vmatmul.mubr.bf16.gmra.mxu0 %v4347
      %v4830 = vpop.f32.mrf.mxu0
      %v4831 = vadd.f32 %v4401, %v4830
      %v4832 = vpop.f32.mrf.mxu0
      %v4833 = vadd.f32 %v4405, %v4832
      %v4834 = vpop.f32.mrf.mxu0
      %v4835 = vadd.f32 %v4401, %v4834
      %v4836 = vpop.f32.mrf.mxu0
      %v4837 = vadd.f32 %v4405, %v4836
      %4838 = vmatprep.mubr.bf16.mxu0 %v4350
      %4839 = vmatmul.mubr.bf16.gmra.mxu0 %v4349
      %v4840 = vpop.f32.mrf.mxu0
      %v4841 = vadd.f32 %v4401, %v4840
      %v4842 = vpop.f32.mrf.mxu0
      %v4843 = vadd.f32 %v4405, %v4842
      %v4844 = vpop.f32.mrf.mxu0
      %v4845 = vadd.f32 %v4401, %v4844
      %v4846 = vpop.f32.mrf.mxu0
      %v4847 = vadd.f32 %v4405, %v4846
      %4848 = vmatprep.mubr.bf16.mxu0 %v4352
      %4849 = vmatmul.mubr.bf16.gmra.mxu0 %v4351
      %v4850 = vpop.f32.mrf.mxu0
      %v4851 = vadd.f32 %v4401, %v4850
      %v4852 = vpop.f32.mrf.mxu0
      %v4853 = vadd.f32 %v4405, %v4852
      %v4854 = vpop.f32.mrf.mxu0
      %v4855 = vadd.f32 %v4401, %v4854
      %v4856 = vpop.f32.mrf.mxu0
      %v4857 = vadd.f32 %v4405, %v4856
      %4858 = vmatprep.mubr.bf16.mxu0 %v4354
      %4859 = vmatmul.mubr.bf16.gmra.mxu0 %v4353
      %v4860 = vpop.f32.mrf.mxu0
      %v4861 = vadd.f32 %v4401, %v4860
      %v4862 = vpop.f32.mrf.mxu0
      %v4863 = vadd.f32 %v4405, %v4862
      %v4864 = vpop.f32.mrf.mxu0
      %v4865 = vadd.f32 %v4401, %v4864
      %v4866 = vpop.f32.mrf.mxu0
      %v4867 = vadd.f32 %v4405, %v4866
      %4868 = vmatprep.mubr.bf16.mxu0 %v4356
      %4869 = vmatmul.mubr.bf16.gmra.mxu0 %v4355
      %v4870 = vpop.f32.mrf.mxu0
      %v4871 = vadd.f32 %v4401, %v4870
      %v4872 = vpop.f32.mrf.mxu0
      %v4873 = vadd.f32 %v4405, %v4872
      %v4874 = vpop.f32.mrf.mxu0
      %v4875 = vadd.f32 %v4401, %v4874
      %v4876 = vpop.f32.mrf.mxu0
      %v4877 = vadd.f32 %v4405, %v4876
      %4878 = vmatprep.mubr.bf16.mxu0 %v4358
      %4879 = vmatmul.mubr.bf16.gmra.mxu0 %v4357
      %v4880 = vpop.f32.mrf.mxu0
      %v4881 = vadd.f32 %v4401, %v4880
      %v4882 = vpop.f32.mrf.mxu0
      %v4883 = vadd.f32 %v4405, %v4882
      %v4884 = vpop.f32.mrf.mxu0
      %v4885 = vadd.f32 %v4401, %v4884
      %v4886 = vpop.f32.mrf.mxu0
      %v4887 = vadd.f32 %v4405, %v4886
      %4888 = vmatprep.mubr.bf16.mxu0 %v4360
      %4889 = vmatmul.mubr.bf16.gmra.mxu0 %v4359
      %v4890 = vpop.f32.mrf.mxu0
      %v4891 = vadd.f32 %v4401, %v4890
      %v4892 = vpop.f32.mrf.mxu0
      %v4893 = vadd.f32 %v4405, %v4892
      %v4894 = vpop.f32.mrf.mxu0
      %v4895 = vadd.f32 %v4401, %v4894
      %v4896 = vpop.f32.mrf.mxu0
      %v4897 = vadd.f32 %v4405, %v4896
      %4898 = vmatprep.mubr.bf16.mxu0 %v4362
      %4899 = vmatmul.mubr.bf16.gmra.mxu0 %v4361
      %v4900 = vpop.f32.mrf.mxu0
      %v4901 = vadd.f32 %v4401, %v4900
      %v4902 = vpop.f32.mrf.mxu0
      %v4903 = vadd.f32 %v4405, %v4902
      %v4904 = vpop.f32.mrf.mxu0
      %v4905 = vadd.f32 %v4401, %v4904
      %v4906 = vpop.f32.mrf.mxu0
      %v4907 = vadd.f32 %v4405, %v4906
      %4908 = vmatprep.mubr.bf16.mxu0 %v4364
      %4909 = vmatmul.mubr.bf16.gmra.mxu0 %v4363
      %v4910 = vpop.f32.mrf.mxu0
      %v4911 = vadd.f32 %v4401, %v4910
      %v4912 = vpop.f32.mrf.mxu0
      %v4913 = vadd.f32 %v4405, %v4912
      %v4914 = vpop.f32.mrf.mxu0
      %v4915 = vadd.f32 %v4401, %v4914
      %v4916 = vpop.f32.mrf.mxu0
      %v4917 = vadd.f32 %v4405, %v4916
      %4918 = vdwg.mxu0
      %v4919 = vmax.f32 %v4601, 0.0
      %v4920 = vmax.f32 %v4603, 0.0
      %v4921 = vmax.f32 %v4605, 0.0
      %v4922 = vmax.f32 %v4607, 0.0
      %v4923 = vmax.f32 %v4611, 0.0
      %v4924 = vmax.f32 %v4613, 0.0
      %v4925 = vmax.f32 %v4615, 0.0
      %v4926 = vmax.f32 %v4617, 0.0
      %v4927 = vmax.f32 %v4621, 0.0
      %v4928 = vmax.f32 %v4623, 0.0
      %v4929 = vmax.f32 %v4625, 0.0
      %v4930 = vmax.f32 %v4627, 0.0
      %v4931 = vmax.f32 %v4631, 0.0
      %v4932 = vmax.f32 %v4633, 0.0
      %v4933 = vmax.f32 %v4635, 0.0
      %v4934 = vmax.f32 %v4637, 0.0
      %v4935 = vmax.f32 %v4641, 0.0
      %v4936 = vmax.f32 %v4643, 0.0
      %v4937 = vmax.f32 %v4645, 0.0
      %v4938 = vmax.f32 %v4647, 0.0
      %v4939 = vmax.f32 %v4651, 0.0
      %v4940 = vmax.f32 %v4653, 0.0
      %v4941 = vmax.f32 %v4655, 0.0
      %v4942 = vmax.f32 %v4657, 0.0
      %v4943 = vmax.f32 %v4661, 0.0
      %v4944 = vmax.f32 %v4663, 0.0
      %v4945 = vmax.f32 %v4665, 0.0
      %v4946 = vmax.f32 %v4667, 0.0
      %v4947 = vmax.f32 %v4671, 0.0
      %v4948 = vmax.f32 %v4673, 0.0
      %v4949 = vmax.f32 %v4675, 0.0
      %v4950 = vmax.f32 %v4677, 0.0
      %v4951 = vmax.f32 %v4681, 0.0
      %v4952 = vmax.f32 %v4683, 0.0
      %v4953 = vmax.f32 %v4685, 0.0
      %v4954 = vmax.f32 %v4687, 0.0
      %v4955 = vmax.f32 %v4691, 0.0
      %v4956 = vmax.f32 %v4693, 0.0
      %v4957 = vmax.f32 %v4695, 0.0
      %v4958 = vmax.f32 %v4697, 0.0
      %v4959 = vmax.f32 %v4701, 0.0
      %v4960 = vmax.f32 %v4703, 0.0
      %v4961 = vmax.f32 %v4705, 0.0
      %v4962 = vmax.f32 %v4707, 0.0
      %v4963 = vmax.f32 %v4711, 0.0
      %v4964 = vmax.f32 %v4713, 0.0
      %v4965 = vmax.f32 %v4715, 0.0
      %v4966 = vmax.f32 %v4717, 0.0
      %v4967 = vmax.f32 %v4721, 0.0
      %v4968 = vmax.f32 %v4723, 0.0
      %v4969 = vmax.f32 %v4725, 0.0
      %v4970 = vmax.f32 %v4727, 0.0
      %v4971 = vmax.f32 %v4731, 0.0
      %v4972 = vmax.f32 %v4733, 0.0
      %v4973 = vmax.f32 %v4735, 0.0
      %v4974 = vmax.f32 %v4737, 0.0
      %v4975 = vmax.f32 %v4741, 0.0
      %v4976 = vmax.f32 %v4743, 0.0
      %v4977 = vmax.f32 %v4745, 0.0
      %v4978 = vmax.f32 %v4747, 0.0
      %v4979 = vmax.f32 %v4751, 0.0
      %v4980 = vmax.f32 %v4753, 0.0
      %v4981 = vmax.f32 %v4755, 0.0
      %v4982 = vmax.f32 %v4757, 0.0
      %v4983 = vmax.f32 %v4761, 0.0
      %v4984 = vmax.f32 %v4763, 0.0
      %v4985 = vmax.f32 %v4765, 0.0
      %v4986 = vmax.f32 %v4767, 0.0
      %v4987 = vmax.f32 %v4771, 0.0
      %v4988 = vmax.f32 %v4773, 0.0
      %v4989 = vmax.f32 %v4775, 0.0
      %v4990 = vmax.f32 %v4777, 0.0
      %v4991 = vmax.f32 %v4781, 0.0
      %v4992 = vmax.f32 %v4783, 0.0
      %v4993 = vmax.f32 %v4785, 0.0
      %v4994 = vmax.f32 %v4787, 0.0
      %v4995 = vmax.f32 %v4791, 0.0
      %v4996 = vmax.f32 %v4793, 0.0
      %v4997 = vmax.f32 %v4795, 0.0
      %v4998 = vmax.f32 %v4797, 0.0
      %v4999 = vmax.f32 %v4801, 0.0
      %v5000 = vmax.f32 %v4803, 0.0
      %v5001 = vmax.f32 %v4805, 0.0
      %v5002 = vmax.f32 %v4807, 0.0
      %v5003 = vmax.f32 %v4811, 0.0
      %v5004 = vmax.f32 %v4813, 0.0
      %v5005 = vmax.f32 %v4815, 0.0
      %v5006 = vmax.f32 %v4817, 0.0
      %v5007 = vmax.f32 %v4821, 0.0
      %v5008 = vmax.f32 %v4823, 0.0
      %v5009 = vmax.f32 %v4825, 0.0
      %v5010 = vmax.f32 %v4827, 0.0
      %v5011 = vmax.f32 %v4831, 0.0
      %v5012 = vmax.f32 %v4833, 0.0
      %v5013 = vmax.f32 %v4835, 0.0
      %v5014 = vmax.f32 %v4837, 0.0
      %v5015 = vmax.f32 %v4841, 0.0
      %v5016 = vmax.f32 %v4843, 0.0
      %v5017 = vmax.f32 %v4845, 0.0
      %v5018 = vmax.f32 %v4847, 0.0
      %v5019 = vmax.f32 %v4851, 0.0
      %v5020 = vmax.f32 %v4853, 0.0
      %v5021 = vmax.f32 %v4855, 0.0
      %v5022 = vmax.f32 %v4857, 0.0
      %v5023 = vmax.f32 %v4861, 0.0
      %v5024 = vmax.f32 %v4863, 0.0
      %v5025 = vmax.f32 %v4865, 0.0
      %v5026 = vmax.f32 %v4867, 0.0
      %v5027 = vmax.f32 %v4871, 0.0
      %v5028 = vmax.f32 %v4873, 0.0
      %v5029 = vmax.f32 %v4875, 0.0
      %v5030 = vmax.f32 %v4877, 0.0
      %v5031 = vmax.f32 %v4881, 0.0
      %v5032 = vmax.f32 %v4883, 0.0
      %v5033 = vmax.f32 %v4885, 0.0
      %v5034 = vmax.f32 %v4887, 0.0
      %v5035 = vmax.f32 %v4891, 0.0
      %v5036 = vmax.f32 %v4893, 0.0
      %v5037 = vmax.f32 %v4895, 0.0
      %v5038 = vmax.f32 %v4897, 0.0
      %v5039 = vmax.f32 %v4901, 0.0
      %v5040 = vmax.f32 %v4903, 0.0
      %v5041 = vmax.f32 %v4905, 0.0
      %v5042 = vmax.f32 %v4907, 0.0
      %v5043 = vmax.f32 %v4911, 0.0
      %v5044 = vmax.f32 %v4913, 0.0
      %v5045 = vmax.f32 %v4915, 0.0
      %v5046 = vmax.f32 %v4917, 0.0
      %v5047 = vpack.c.bf16 %v4921, %v4919
      %v5048 = vpack.c.bf16 %v4922, %v4920
      %v5049 = vpack.c.bf16 %v4925, %v4923
      %v5050 = vpack.c.bf16 %v4926, %v4924
      %v5051 = vpack.c.bf16 %v4929, %v4927
      %v5052 = vpack.c.bf16 %v4930, %v4928
      %v5053 = vpack.c.bf16 %v4933, %v4931
      %v5054 = vpack.c.bf16 %v4934, %v4932
      %v5055 = vpack.c.bf16 %v4937, %v4935
      %v5056 = vpack.c.bf16 %v4938, %v4936
      %v5057 = vpack.c.bf16 %v4941, %v4939
      %v5058 = vpack.c.bf16 %v4942, %v4940
      %v5059 = vpack.c.bf16 %v4945, %v4943
      %v5060 = vpack.c.bf16 %v4946, %v4944
      %v5061 = vpack.c.bf16 %v4949, %v4947
      %v5062 = vpack.c.bf16 %v4950, %v4948
      %v5063 = vpack.c.bf16 %v4953, %v4951
      %v5064 = vpack.c.bf16 %v4954, %v4952
      %v5065 = vpack.c.bf16 %v4957, %v4955
      %v5066 = vpack.c.bf16 %v4958, %v4956
      %v5067 = vpack.c.bf16 %v4961, %v4959
      %v5068 = vpack.c.bf16 %v4962, %v4960
      %v5069 = vpack.c.bf16 %v4965, %v4963
      %v5070 = vpack.c.bf16 %v4966, %v4964
      %v5071 = vpack.c.bf16 %v4969, %v4967
      %v5072 = vpack.c.bf16 %v4970, %v4968
      %v5073 = vpack.c.bf16 %v4973, %v4971
      %v5074 = vpack.c.bf16 %v4974, %v4972
      %v5075 = vpack.c.bf16 %v4977, %v4975
      %v5076 = vpack.c.bf16 %v4978, %v4976
      %v5077 = vpack.c.bf16 %v4981, %v4979
      %v5078 = vpack.c.bf16 %v4982, %v4980
      %v5079 = vpack.c.bf16 %v4985, %v4983
      %v5080 = vpack.c.bf16 %v4986, %v4984
      %v5081 = vpack.c.bf16 %v4989, %v4987
      %v5082 = vpack.c.bf16 %v4990, %v4988
      %v5083 = vpack.c.bf16 %v4993, %v4991
      %v5084 = vpack.c.bf16 %v4994, %v4992
      %v5085 = vpack.c.bf16 %v4997, %v4995
      %v5086 = vpack.c.bf16 %v4998, %v4996
      %v5087 = vpack.c.bf16 %v5001, %v4999
      %v5088 = vpack.c.bf16 %v5002, %v5000
      %v5089 = vpack.c.bf16 %v5005, %v5003
      %v5090 = vpack.c.bf16 %v5006, %v5004
      %v5091 = vpack.c.bf16 %v5009, %v5007
      %v5092 = vpack.c.bf16 %v5010, %v5008
      %v5093 = vpack.c.bf16 %v5013, %v5011
      %v5094 = vpack.c.bf16 %v5014, %v5012
      %v5095 = vpack.c.bf16 %v5017, %v5015
      %v5096 = vpack.c.bf16 %v5018, %v5016
      %v5097 = vpack.c.bf16 %v5021, %v5019
      %v5098 = vpack.c.bf16 %v5022, %v5020
      %v5099 = vpack.c.bf16 %v5025, %v5023
      %v5100 = vpack.c.bf16 %v5026, %v5024
      %v5101 = vpack.c.bf16 %v5029, %v5027
      %v5102 = vpack.c.bf16 %v5030, %v5028
      %v5103 = vpack.c.bf16 %v5033, %v5031
      %v5104 = vpack.c.bf16 %v5034, %v5032
      %v5105 = vpack.c.bf16 %v5037, %v5035
      %v5106 = vpack.c.bf16 %v5038, %v5036
      %v5107 = vpack.c.bf16 %v5041, %v5039
      %v5108 = vpack.c.bf16 %v5042, %v5040
      %v5109 = vpack.c.bf16 %v5045, %v5043
      %v5110 = vpack.c.bf16 %v5046, %v5044
      %s5111 = scalar_lea.vmem %s2, 768
      %v5112 = vld [vmem:[%s5111] sm:$0xff]
      %v5113 = vld [vmem:[%s5111 + $0x8] sm:$0xff]
      %v5114 = vld [vmem:[%s5111 + $0x10] sm:$0xff]
      %v5115 = vld [vmem:[%s5111 + $0x18] sm:$0xff]
      %v5116 = vld [vmem:[%s5111 + $0x20] sm:$0xff]
      %v5117 = vld [vmem:[%s5111 + $0x28] sm:$0xff]
      %v5118 = vld [vmem:[%s5111 + $0x30] sm:$0xff]
      %v5119 = vld [vmem:[%s5111 + $0x38] sm:$0xff]
      %v5120 = vld [vmem:[%s5111 + $0x40] sm:$0xff]
      %v5121 = vld [vmem:[%s5111 + $0x48] sm:$0xff]
      %v5122 = vld [vmem:[%s5111 + $0x50] sm:$0xff]
      %v5123 = vld [vmem:[%s5111 + $0x58] sm:$0xff]
      %v5124 = vld [vmem:[%s5111 + $0x60] sm:$0xff]
      %v5125 = vld [vmem:[%s5111 + $0x68] sm:$0xff]
      %v5126 = vld [vmem:[%s5111 + $0x70] sm:$0xff]
      %v5127 = vld [vmem:[%s5111 + $0x78] sm:$0xff]
      %v5128 = vld [vmem:[%s5111 + $0x80] sm:$0xff]
      %v5129 = vld [vmem:[%s5111 + $0x88] sm:$0xff]
      %v5130 = vld [vmem:[%s5111 + $0x90] sm:$0xff]
      %v5131 = vld [vmem:[%s5111 + $0x98] sm:$0xff]
      %v5132 = vld [vmem:[%s5111 + $0xa0] sm:$0xff]
      %v5133 = vld [vmem:[%s5111 + $0xa8] sm:$0xff]
      %v5134 = vld [vmem:[%s5111 + $0xb0] sm:$0xff]
      %v5135 = vld [vmem:[%s5111 + $0xb8] sm:$0xff]
      %v5136 = vld [vmem:[%s5111 + $0xc0] sm:$0xff]
      %v5137 = vld [vmem:[%s5111 + $0xc8] sm:$0xff]
      %v5138 = vld [vmem:[%s5111 + $0xd0] sm:$0xff]
      %v5139 = vld [vmem:[%s5111 + $0xd8] sm:$0xff]
      %v5140 = vld [vmem:[%s5111 + $0xe0] sm:$0xff]
      %v5141 = vld [vmem:[%s5111 + $0xe8] sm:$0xff]
      %v5142 = vld [vmem:[%s5111 + $0xf0] sm:$0xff]
      %v5143 = vld [vmem:[%s5111 + $0xf8] sm:$0xff]
      %v5144 = vlaneseq
      %v5145 = vshrl.u32 %v5144, 7
      %v5146 = vsub.s32 4, %v5145
      %v5147 = vrot.slane %v322, %v5146
      %v5148 = vlaneseq
      %v5149 = vshrl.u32 %v5148, 7
      %v5150 = vsub.s32 4, %v5149
      %v5151 = vrot.slane %v323, %v5150
      %v5184 = vunpack.c.l.b16 %v5112
      %v5185 = vunpack.c.h.b16 %v5112
      %v5186 = vunpack.c.l.b16 %v5113
      %v5187 = vunpack.c.h.b16 %v5113
      %v5188 = vunpack.c.l.b16 %v5114
      %v5189 = vunpack.c.h.b16 %v5114
      %v5190 = vunpack.c.l.b16 %v5115
      %v5191 = vunpack.c.h.b16 %v5115
      %v5192 = vunpack.c.l.b16 %v5116
      %v5193 = vunpack.c.h.b16 %v5116
      %v5194 = vunpack.c.l.b16 %v5117
      %v5195 = vunpack.c.h.b16 %v5117
      %v5196 = vunpack.c.l.b16 %v5118
      %v5197 = vunpack.c.h.b16 %v5118
      %v5198 = vunpack.c.l.b16 %v5119
      %v5199 = vunpack.c.h.b16 %v5119
      %v5200 = vunpack.c.l.b16 %v5120
      %v5201 = vunpack.c.h.b16 %v5120
      %v5202 = vunpack.c.l.b16 %v5121
      %v5203 = vunpack.c.h.b16 %v5121
      %v5204 = vunpack.c.l.b16 %v5122
      %v5205 = vunpack.c.h.b16 %v5122
      %v5206 = vunpack.c.l.b16 %v5123
      %v5207 = vunpack.c.h.b16 %v5123
      %v5208 = vunpack.c.l.b16 %v5124
      %v5209 = vunpack.c.h.b16 %v5124
      %v5210 = vunpack.c.l.b16 %v5125
      %v5211 = vunpack.c.h.b16 %v5125
      %v5212 = vunpack.c.l.b16 %v5126
      %v5213 = vunpack.c.h.b16 %v5126
      %v5214 = vunpack.c.l.b16 %v5127
      %v5215 = vunpack.c.h.b16 %v5127
      %v5216 = vunpack.c.l.b16 %v5128
      %v5217 = vunpack.c.h.b16 %v5128
      %v5218 = vunpack.c.l.b16 %v5129
      %v5219 = vunpack.c.h.b16 %v5129
      %v5220 = vunpack.c.l.b16 %v5130
      %v5221 = vunpack.c.h.b16 %v5130
      %v5222 = vunpack.c.l.b16 %v5131
      %v5223 = vunpack.c.h.b16 %v5131
      %v5224 = vunpack.c.l.b16 %v5132
      %v5225 = vunpack.c.h.b16 %v5132
      %v5226 = vunpack.c.l.b16 %v5133
      %v5227 = vunpack.c.h.b16 %v5133
      %v5228 = vunpack.c.l.b16 %v5134
      %v5229 = vunpack.c.h.b16 %v5134
      %v5230 = vunpack.c.l.b16 %v5135
      %v5231 = vunpack.c.h.b16 %v5135
      %v5232 = vunpack.c.l.b16 %v5136
      %v5233 = vunpack.c.h.b16 %v5136
      %v5234 = vunpack.c.l.b16 %v5137
      %v5235 = vunpack.c.h.b16 %v5137
      %v5236 = vunpack.c.l.b16 %v5138
      %v5237 = vunpack.c.h.b16 %v5138
      %v5238 = vunpack.c.l.b16 %v5139
      %v5239 = vunpack.c.h.b16 %v5139
      %v5240 = vunpack.c.l.b16 %v5140
      %v5241 = vunpack.c.h.b16 %v5140
      %v5242 = vunpack.c.l.b16 %v5141
      %v5243 = vunpack.c.h.b16 %v5141
      %v5244 = vunpack.c.l.b16 %v5142
      %v5245 = vunpack.c.h.b16 %v5142
      %v5246 = vunpack.c.l.b16 %v5143
      %v5247 = vunpack.c.h.b16 %v5143
      %v5248 = vpack.c.b16 %v5186, %v5184
      %v5249 = vpack.c.b16 %v5187, %v5185
      %v5250 = vpack.c.b16 %v5190, %v5188
      %v5251 = vpack.c.b16 %v5191, %v5189
      %v5252 = vpack.c.b16 %v5194, %v5192
      %v5253 = vpack.c.b16 %v5195, %v5193
      %v5254 = vpack.c.b16 %v5198, %v5196
      %v5255 = vpack.c.b16 %v5199, %v5197
      %v5256 = vpack.c.b16 %v5202, %v5200
      %v5257 = vpack.c.b16 %v5203, %v5201
      %v5258 = vpack.c.b16 %v5206, %v5204
      %v5259 = vpack.c.b16 %v5207, %v5205
      %v5260 = vpack.c.b16 %v5210, %v5208
      %v5261 = vpack.c.b16 %v5211, %v5209
      %v5262 = vpack.c.b16 %v5214, %v5212
      %v5263 = vpack.c.b16 %v5215, %v5213
      %v5264 = vpack.c.b16 %v5218, %v5216
      %v5265 = vpack.c.b16 %v5219, %v5217
      %v5266 = vpack.c.b16 %v5222, %v5220
      %v5267 = vpack.c.b16 %v5223, %v5221
      %v5268 = vpack.c.b16 %v5226, %v5224
      %v5269 = vpack.c.b16 %v5227, %v5225
      %v5270 = vpack.c.b16 %v5230, %v5228
      %v5271 = vpack.c.b16 %v5231, %v5229
      %v5272 = vpack.c.b16 %v5234, %v5232
      %v5273 = vpack.c.b16 %v5235, %v5233
      %v5274 = vpack.c.b16 %v5238, %v5236
      %v5275 = vpack.c.b16 %v5239, %v5237
      %v5276 = vpack.c.b16 %v5242, %v5240
      %v5277 = vpack.c.b16 %v5243, %v5241
      %v5278 = vpack.c.b16 %v5246, %v5244
      %v5279 = vpack.c.b16 %v5247, %v5245
      %5312 = vmatprep.subr.bf16.mxu0 %v5263
      %5313 = vmatpush1.bf16.msra.mxu0 %v5262
      %5314 = vmatprep.subr.bf16.mxu0 %v5261
      %5315 = vmatpush1.bf16.msra.mxu0 %v5260
      %5316 = vmatprep.subr.bf16.mxu0 %v5259
      %5317 = vmatpush1.bf16.msra.mxu0 %v5258
      %5318 = vmatprep.subr.bf16.mxu0 %v5257
      %5319 = vmatpush1.bf16.msra.mxu0 %v5256
      %5320 = vmatprep.subr.bf16.mxu0 %v5255
      %5321 = vmatpush1.bf16.msra.mxu0 %v5254
      %5322 = vmatprep.subr.bf16.mxu0 %v5253
      %5323 = vmatpush1.bf16.msra.mxu0 %v5252
      %5324 = vmatprep.subr.bf16.mxu0 %v5251
      %5325 = vmatpush1.bf16.msra.mxu0 %v5250
      %5326 = vmatprep.subr.bf16.mxu0 %v5249
      %5327 = vmatpush1.bf16.msra.mxu0 %v5248
      %5328 = vmatprep.subr.bf16.mxu0 %v5279
      %5329 = vmatpush2.bf16.msra.mxu0 %v5278
      %5330 = vmatprep.subr.bf16.mxu0 %v5277
      %5331 = vmatpush2.bf16.msra.mxu0 %v5276
      %5332 = vmatprep.subr.bf16.mxu0 %v5275
      %5333 = vmatpush2.bf16.msra.mxu0 %v5274
      %5334 = vmatprep.subr.bf16.mxu0 %v5273
      %5335 = vmatpush2.bf16.msra.mxu0 %v5272
      %5336 = vmatprep.subr.bf16.mxu0 %v5271
      %5337 = vmatpush2.bf16.msra.mxu0 %v5270
      %5338 = vmatprep.subr.bf16.mxu0 %v5269
      %5339 = vmatpush2.bf16.msra.mxu0 %v5268
      %5340 = vmatprep.subr.bf16.mxu0 %v5267
      %5341 = vmatpush2.bf16.msra.mxu0 %v5266
      %5342 = vmatprep.subr.bf16.mxu0 %v5265
      %5343 = vmatpush2.bf16.msra.mxu0 %v5264
      %5344 = vmatprep.mubr.bf16.mxu0 %v5048
      %5345 = vmatmul.mubr.bf16.gmra.mxu0 %v5047
      %v5346 = vpop.f32.mrf.mxu0
      %v5347 = vadd.f32 %v5147, %v5346
      %v5348 = vpop.f32.mrf.mxu0
      %v5349 = vadd.f32 %v5151, %v5348
      %v5350 = vpop.f32.mrf.mxu0
      %v5351 = vadd.f32 %v5147, %v5350
      %v5352 = vpop.f32.mrf.mxu0
      %v5353 = vadd.f32 %v5151, %v5352
      %5354 = vmatprep.mubr.bf16.mxu0 %v5050
      %5355 = vmatmul.mubr.bf16.gmra.mxu0 %v5049
      %v5356 = vpop.f32.mrf.mxu0
      %v5357 = vadd.f32 %v5147, %v5356
      %v5358 = vpop.f32.mrf.mxu0
      %v5359 = vadd.f32 %v5151, %v5358
      %v5360 = vpop.f32.mrf.mxu0
      %v5361 = vadd.f32 %v5147, %v5360
      %v5362 = vpop.f32.mrf.mxu0
      %v5363 = vadd.f32 %v5151, %v5362
      %5364 = vmatprep.mubr.bf16.mxu0 %v5052
      %5365 = vmatmul.mubr.bf16.gmra.mxu0 %v5051
      %v5366 = vpop.f32.mrf.mxu0
      %v5367 = vadd.f32 %v5147, %v5366
      %v5368 = vpop.f32.mrf.mxu0
      %v5369 = vadd.f32 %v5151, %v5368
      %v5370 = vpop.f32.mrf.mxu0
      %v5371 = vadd.f32 %v5147, %v5370
      %v5372 = vpop.f32.mrf.mxu0
      %v5373 = vadd.f32 %v5151, %v5372
      %5374 = vmatprep.mubr.bf16.mxu0 %v5054
      %5375 = vmatmul.mubr.bf16.gmra.mxu0 %v5053
      %v5376 = vpop.f32.mrf.mxu0
      %v5377 = vadd.f32 %v5147, %v5376
      %v5378 = vpop.f32.mrf.mxu0
      %v5379 = vadd.f32 %v5151, %v5378
      %v5380 = vpop.f32.mrf.mxu0
      %v5381 = vadd.f32 %v5147, %v5380
      %v5382 = vpop.f32.mrf.mxu0
      %v5383 = vadd.f32 %v5151, %v5382
      %5384 = vmatprep.mubr.bf16.mxu0 %v5056
      %5385 = vmatmul.mubr.bf16.gmra.mxu0 %v5055
      %v5386 = vpop.f32.mrf.mxu0
      %v5387 = vadd.f32 %v5147, %v5386
      %v5388 = vpop.f32.mrf.mxu0
      %v5389 = vadd.f32 %v5151, %v5388
      %v5390 = vpop.f32.mrf.mxu0
      %v5391 = vadd.f32 %v5147, %v5390
      %v5392 = vpop.f32.mrf.mxu0
      %v5393 = vadd.f32 %v5151, %v5392
      %5394 = vmatprep.mubr.bf16.mxu0 %v5058
      %5395 = vmatmul.mubr.bf16.gmra.mxu0 %v5057
      %v5396 = vpop.f32.mrf.mxu0
      %v5397 = vadd.f32 %v5147, %v5396
      %v5398 = vpop.f32.mrf.mxu0
      %v5399 = vadd.f32 %v5151, %v5398
      %v5400 = vpop.f32.mrf.mxu0
      %v5401 = vadd.f32 %v5147, %v5400
      %v5402 = vpop.f32.mrf.mxu0
      %v5403 = vadd.f32 %v5151, %v5402
      %5404 = vmatprep.mubr.bf16.mxu0 %v5060
      %5405 = vmatmul.mubr.bf16.gmra.mxu0 %v5059
      %v5406 = vpop.f32.mrf.mxu0
      %v5407 = vadd.f32 %v5147, %v5406
      %v5408 = vpop.f32.mrf.mxu0
      %v5409 = vadd.f32 %v5151, %v5408
      %v5410 = vpop.f32.mrf.mxu0
      %v5411 = vadd.f32 %v5147, %v5410
      %v5412 = vpop.f32.mrf.mxu0
      %v5413 = vadd.f32 %v5151, %v5412
      %5414 = vmatprep.mubr.bf16.mxu0 %v5062
      %5415 = vmatmul.mubr.bf16.gmra.mxu0 %v5061
      %v5416 = vpop.f32.mrf.mxu0
      %v5417 = vadd.f32 %v5147, %v5416
      %v5418 = vpop.f32.mrf.mxu0
      %v5419 = vadd.f32 %v5151, %v5418
      %v5420 = vpop.f32.mrf.mxu0
      %v5421 = vadd.f32 %v5147, %v5420
      %v5422 = vpop.f32.mrf.mxu0
      %v5423 = vadd.f32 %v5151, %v5422
      %5424 = vmatprep.mubr.bf16.mxu0 %v5064
      %5425 = vmatmul.mubr.bf16.gmra.mxu0 %v5063
      %v5426 = vpop.f32.mrf.mxu0
      %v5427 = vadd.f32 %v5147, %v5426
      %v5428 = vpop.f32.mrf.mxu0
      %v5429 = vadd.f32 %v5151, %v5428
      %v5430 = vpop.f32.mrf.mxu0
      %v5431 = vadd.f32 %v5147, %v5430
      %v5432 = vpop.f32.mrf.mxu0
      %v5433 = vadd.f32 %v5151, %v5432
      %5434 = vmatprep.mubr.bf16.mxu0 %v5066
      %5435 = vmatmul.mubr.bf16.gmra.mxu0 %v5065
      %v5436 = vpop.f32.mrf.mxu0
      %v5437 = vadd.f32 %v5147, %v5436
      %v5438 = vpop.f32.mrf.mxu0
      %v5439 = vadd.f32 %v5151, %v5438
      %v5440 = vpop.f32.mrf.mxu0
      %v5441 = vadd.f32 %v5147, %v5440
      %v5442 = vpop.f32.mrf.mxu0
      %v5443 = vadd.f32 %v5151, %v5442
      %5444 = vmatprep.mubr.bf16.mxu0 %v5068
      %5445 = vmatmul.mubr.bf16.gmra.mxu0 %v5067
      %v5446 = vpop.f32.mrf.mxu0
      %v5447 = vadd.f32 %v5147, %v5446
      %v5448 = vpop.f32.mrf.mxu0
      %v5449 = vadd.f32 %v5151, %v5448
      %v5450 = vpop.f32.mrf.mxu0
      %v5451 = vadd.f32 %v5147, %v5450
      %v5452 = vpop.f32.mrf.mxu0
      %v5453 = vadd.f32 %v5151, %v5452
      %5454 = vmatprep.mubr.bf16.mxu0 %v5070
      %5455 = vmatmul.mubr.bf16.gmra.mxu0 %v5069
      %v5456 = vpop.f32.mrf.mxu0
      %v5457 = vadd.f32 %v5147, %v5456
      %v5458 = vpop.f32.mrf.mxu0
      %v5459 = vadd.f32 %v5151, %v5458
      %v5460 = vpop.f32.mrf.mxu0
      %v5461 = vadd.f32 %v5147, %v5460
      %v5462 = vpop.f32.mrf.mxu0
      %v5463 = vadd.f32 %v5151, %v5462
      %5464 = vmatprep.mubr.bf16.mxu0 %v5072
      %5465 = vmatmul.mubr.bf16.gmra.mxu0 %v5071
      %v5466 = vpop.f32.mrf.mxu0
      %v5467 = vadd.f32 %v5147, %v5466
      %v5468 = vpop.f32.mrf.mxu0
      %v5469 = vadd.f32 %v5151, %v5468
      %v5470 = vpop.f32.mrf.mxu0
      %v5471 = vadd.f32 %v5147, %v5470
      %v5472 = vpop.f32.mrf.mxu0
      %v5473 = vadd.f32 %v5151, %v5472
      %5474 = vmatprep.mubr.bf16.mxu0 %v5074
      %5475 = vmatmul.mubr.bf16.gmra.mxu0 %v5073
      %v5476 = vpop.f32.mrf.mxu0
      %v5477 = vadd.f32 %v5147, %v5476
      %v5478 = vpop.f32.mrf.mxu0
      %v5479 = vadd.f32 %v5151, %v5478
      %v5480 = vpop.f32.mrf.mxu0
      %v5481 = vadd.f32 %v5147, %v5480
      %v5482 = vpop.f32.mrf.mxu0
      %v5483 = vadd.f32 %v5151, %v5482
      %5484 = vmatprep.mubr.bf16.mxu0 %v5076
      %5485 = vmatmul.mubr.bf16.gmra.mxu0 %v5075
      %v5486 = vpop.f32.mrf.mxu0
      %v5487 = vadd.f32 %v5147, %v5486
      %v5488 = vpop.f32.mrf.mxu0
      %v5489 = vadd.f32 %v5151, %v5488
      %v5490 = vpop.f32.mrf.mxu0
      %v5491 = vadd.f32 %v5147, %v5490
      %v5492 = vpop.f32.mrf.mxu0
      %v5493 = vadd.f32 %v5151, %v5492
      %5494 = vmatprep.mubr.bf16.mxu0 %v5078
      %5495 = vmatmul.mubr.bf16.gmra.mxu0 %v5077
      %v5496 = vpop.f32.mrf.mxu0
      %v5497 = vadd.f32 %v5147, %v5496
      %v5498 = vpop.f32.mrf.mxu0
      %v5499 = vadd.f32 %v5151, %v5498
      %v5500 = vpop.f32.mrf.mxu0
      %v5501 = vadd.f32 %v5147, %v5500
      %v5502 = vpop.f32.mrf.mxu0
      %v5503 = vadd.f32 %v5151, %v5502
      %5504 = vmatprep.mubr.bf16.mxu0 %v5080
      %5505 = vmatmul.mubr.bf16.gmra.mxu0 %v5079
      %v5506 = vpop.f32.mrf.mxu0
      %v5507 = vadd.f32 %v5147, %v5506
      %v5508 = vpop.f32.mrf.mxu0
      %v5509 = vadd.f32 %v5151, %v5508
      %v5510 = vpop.f32.mrf.mxu0
      %v5511 = vadd.f32 %v5147, %v5510
      %v5512 = vpop.f32.mrf.mxu0
      %v5513 = vadd.f32 %v5151, %v5512
      %5514 = vmatprep.mubr.bf16.mxu0 %v5082
      %5515 = vmatmul.mubr.bf16.gmra.mxu0 %v5081
      %v5516 = vpop.f32.mrf.mxu0
      %v5517 = vadd.f32 %v5147, %v5516
      %v5518 = vpop.f32.mrf.mxu0
      %v5519 = vadd.f32 %v5151, %v5518
      %v5520 = vpop.f32.mrf.mxu0
      %v5521 = vadd.f32 %v5147, %v5520
      %v5522 = vpop.f32.mrf.mxu0
      %v5523 = vadd.f32 %v5151, %v5522
      %5524 = vmatprep.mubr.bf16.mxu0 %v5084
      %5525 = vmatmul.mubr.bf16.gmra.mxu0 %v5083
      %v5526 = vpop.f32.mrf.mxu0
      %v5527 = vadd.f32 %v5147, %v5526
      %v5528 = vpop.f32.mrf.mxu0
      %v5529 = vadd.f32 %v5151, %v5528
      %v5530 = vpop.f32.mrf.mxu0
      %v5531 = vadd.f32 %v5147, %v5530
      %v5532 = vpop.f32.mrf.mxu0
      %v5533 = vadd.f32 %v5151, %v5532
      %5534 = vmatprep.mubr.bf16.mxu0 %v5086
      %5535 = vmatmul.mubr.bf16.gmra.mxu0 %v5085
      %v5536 = vpop.f32.mrf.mxu0
      %v5537 = vadd.f32 %v5147, %v5536
      %v5538 = vpop.f32.mrf.mxu0
      %v5539 = vadd.f32 %v5151, %v5538
      %v5540 = vpop.f32.mrf.mxu0
      %v5541 = vadd.f32 %v5147, %v5540
      %v5542 = vpop.f32.mrf.mxu0
      %v5543 = vadd.f32 %v5151, %v5542
      %5544 = vmatprep.mubr.bf16.mxu0 %v5088
      %5545 = vmatmul.mubr.bf16.gmra.mxu0 %v5087
      %v5546 = vpop.f32.mrf.mxu0
      %v5547 = vadd.f32 %v5147, %v5546
      %v5548 = vpop.f32.mrf.mxu0
      %v5549 = vadd.f32 %v5151, %v5548
      %v5550 = vpop.f32.mrf.mxu0
      %v5551 = vadd.f32 %v5147, %v5550
      %v5552 = vpop.f32.mrf.mxu0
      %v5553 = vadd.f32 %v5151, %v5552
      %5554 = vmatprep.mubr.bf16.mxu0 %v5090
      %5555 = vmatmul.mubr.bf16.gmra.mxu0 %v5089
      %v5556 = vpop.f32.mrf.mxu0
      %v5557 = vadd.f32 %v5147, %v5556
      %v5558 = vpop.f32.mrf.mxu0
      %v5559 = vadd.f32 %v5151, %v5558
      %v5560 = vpop.f32.mrf.mxu0
      %v5561 = vadd.f32 %v5147, %v5560
      %v5562 = vpop.f32.mrf.mxu0
      %v5563 = vadd.f32 %v5151, %v5562
      %5564 = vmatprep.mubr.bf16.mxu0 %v5092
      %5565 = vmatmul.mubr.bf16.gmra.mxu0 %v5091
      %v5566 = vpop.f32.mrf.mxu0
      %v5567 = vadd.f32 %v5147, %v5566
      %v5568 = vpop.f32.mrf.mxu0
      %v5569 = vadd.f32 %v5151, %v5568
      %v5570 = vpop.f32.mrf.mxu0
      %v5571 = vadd.f32 %v5147, %v5570
      %v5572 = vpop.f32.mrf.mxu0
      %v5573 = vadd.f32 %v5151, %v5572
      %5574 = vmatprep.mubr.bf16.mxu0 %v5094
      %5575 = vmatmul.mubr.bf16.gmra.mxu0 %v5093
      %v5576 = vpop.f32.mrf.mxu0
      %v5577 = vadd.f32 %v5147, %v5576
      %v5578 = vpop.f32.mrf.mxu0
      %v5579 = vadd.f32 %v5151, %v5578
      %v5580 = vpop.f32.mrf.mxu0
      %v5581 = vadd.f32 %v5147, %v5580
      %v5582 = vpop.f32.mrf.mxu0
      %v5583 = vadd.f32 %v5151, %v5582
      %5584 = vmatprep.mubr.bf16.mxu0 %v5096
      %5585 = vmatmul.mubr.bf16.gmra.mxu0 %v5095
      %v5586 = vpop.f32.mrf.mxu0
      %v5587 = vadd.f32 %v5147, %v5586
      %v5588 = vpop.f32.mrf.mxu0
      %v5589 = vadd.f32 %v5151, %v5588
      %v5590 = vpop.f32.mrf.mxu0
      %v5591 = vadd.f32 %v5147, %v5590
      %v5592 = vpop.f32.mrf.mxu0
      %v5593 = vadd.f32 %v5151, %v5592
      %5594 = vmatprep.mubr.bf16.mxu0 %v5098
      %5595 = vmatmul.mubr.bf16.gmra.mxu0 %v5097
      %v5596 = vpop.f32.mrf.mxu0
      %v5597 = vadd.f32 %v5147, %v5596
      %v5598 = vpop.f32.mrf.mxu0
      %v5599 = vadd.f32 %v5151, %v5598
      %v5600 = vpop.f32.mrf.mxu0
      %v5601 = vadd.f32 %v5147, %v5600
      %v5602 = vpop.f32.mrf.mxu0
      %v5603 = vadd.f32 %v5151, %v5602
      %5604 = vmatprep.mubr.bf16.mxu0 %v5100
      %5605 = vmatmul.mubr.bf16.gmra.mxu0 %v5099
      %v5606 = vpop.f32.mrf.mxu0
      %v5607 = vadd.f32 %v5147, %v5606
      %v5608 = vpop.f32.mrf.mxu0
      %v5609 = vadd.f32 %v5151, %v5608
      %v5610 = vpop.f32.mrf.mxu0
      %v5611 = vadd.f32 %v5147, %v5610
      %v5612 = vpop.f32.mrf.mxu0
      %v5613 = vadd.f32 %v5151, %v5612
      %5614 = vmatprep.mubr.bf16.mxu0 %v5102
      %5615 = vmatmul.mubr.bf16.gmra.mxu0 %v5101
      %v5616 = vpop.f32.mrf.mxu0
      %v5617 = vadd.f32 %v5147, %v5616
      %v5618 = vpop.f32.mrf.mxu0
      %v5619 = vadd.f32 %v5151, %v5618
      %v5620 = vpop.f32.mrf.mxu0
      %v5621 = vadd.f32 %v5147, %v5620
      %v5622 = vpop.f32.mrf.mxu0
      %v5623 = vadd.f32 %v5151, %v5622
      %5624 = vmatprep.mubr.bf16.mxu0 %v5104
      %5625 = vmatmul.mubr.bf16.gmra.mxu0 %v5103
      %v5626 = vpop.f32.mrf.mxu0
      %v5627 = vadd.f32 %v5147, %v5626
      %v5628 = vpop.f32.mrf.mxu0
      %v5629 = vadd.f32 %v5151, %v5628
      %v5630 = vpop.f32.mrf.mxu0
      %v5631 = vadd.f32 %v5147, %v5630
      %v5632 = vpop.f32.mrf.mxu0
      %v5633 = vadd.f32 %v5151, %v5632
      %5634 = vmatprep.mubr.bf16.mxu0 %v5106
      %5635 = vmatmul.mubr.bf16.gmra.mxu0 %v5105
      %v5636 = vpop.f32.mrf.mxu0
      %v5637 = vadd.f32 %v5147, %v5636
      %v5638 = vpop.f32.mrf.mxu0
      %v5639 = vadd.f32 %v5151, %v5638
      %v5640 = vpop.f32.mrf.mxu0
      %v5641 = vadd.f32 %v5147, %v5640
      %v5642 = vpop.f32.mrf.mxu0
      %v5643 = vadd.f32 %v5151, %v5642
      %5644 = vmatprep.mubr.bf16.mxu0 %v5108
      %5645 = vmatmul.mubr.bf16.gmra.mxu0 %v5107
      %v5646 = vpop.f32.mrf.mxu0
      %v5647 = vadd.f32 %v5147, %v5646
      %v5648 = vpop.f32.mrf.mxu0
      %v5649 = vadd.f32 %v5151, %v5648
      %v5650 = vpop.f32.mrf.mxu0
      %v5651 = vadd.f32 %v5147, %v5650
      %v5652 = vpop.f32.mrf.mxu0
      %v5653 = vadd.f32 %v5151, %v5652
      %5654 = vmatprep.mubr.bf16.mxu0 %v5110
      %5655 = vmatmul.mubr.bf16.gmra.mxu0 %v5109
      %v5656 = vpop.f32.mrf.mxu0
      %v5657 = vadd.f32 %v5147, %v5656
      %v5658 = vpop.f32.mrf.mxu0
      %v5659 = vadd.f32 %v5151, %v5658
      %v5660 = vpop.f32.mrf.mxu0
      %v5661 = vadd.f32 %v5147, %v5660
      %v5662 = vpop.f32.mrf.mxu0
      %v5663 = vadd.f32 %v5151, %v5662
      %5664 = vdwg.mxu0
      %v5665 = vmax.f32 %v5347, 0.0
      %v5666 = vmax.f32 %v5349, 0.0
      %v5667 = vmax.f32 %v5351, 0.0
      %v5668 = vmax.f32 %v5353, 0.0
      %v5669 = vmax.f32 %v5357, 0.0
      %v5670 = vmax.f32 %v5359, 0.0
      %v5671 = vmax.f32 %v5361, 0.0
      %v5672 = vmax.f32 %v5363, 0.0
      %v5673 = vmax.f32 %v5367, 0.0
      %v5674 = vmax.f32 %v5369, 0.0
      %v5675 = vmax.f32 %v5371, 0.0
      %v5676 = vmax.f32 %v5373, 0.0
      %v5677 = vmax.f32 %v5377, 0.0
      %v5678 = vmax.f32 %v5379, 0.0
      %v5679 = vmax.f32 %v5381, 0.0
      %v5680 = vmax.f32 %v5383, 0.0
      %v5681 = vmax.f32 %v5387, 0.0
      %v5682 = vmax.f32 %v5389, 0.0
      %v5683 = vmax.f32 %v5391, 0.0
      %v5684 = vmax.f32 %v5393, 0.0
      %v5685 = vmax.f32 %v5397, 0.0
      %v5686 = vmax.f32 %v5399, 0.0
      %v5687 = vmax.f32 %v5401, 0.0
      %v5688 = vmax.f32 %v5403, 0.0
      %v5689 = vmax.f32 %v5407, 0.0
      %v5690 = vmax.f32 %v5409, 0.0
      %v5691 = vmax.f32 %v5411, 0.0
      %v5692 = vmax.f32 %v5413, 0.0
      %v5693 = vmax.f32 %v5417, 0.0
      %v5694 = vmax.f32 %v5419, 0.0
      %v5695 = vmax.f32 %v5421, 0.0
      %v5696 = vmax.f32 %v5423, 0.0
      %v5697 = vmax.f32 %v5427, 0.0
      %v5698 = vmax.f32 %v5429, 0.0
      %v5699 = vmax.f32 %v5431, 0.0
      %v5700 = vmax.f32 %v5433, 0.0
      %v5701 = vmax.f32 %v5437, 0.0
      %v5702 = vmax.f32 %v5439, 0.0
      %v5703 = vmax.f32 %v5441, 0.0
      %v5704 = vmax.f32 %v5443, 0.0
      %v5705 = vmax.f32 %v5447, 0.0
      %v5706 = vmax.f32 %v5449, 0.0
      %v5707 = vmax.f32 %v5451, 0.0
      %v5708 = vmax.f32 %v5453, 0.0
      %v5709 = vmax.f32 %v5457, 0.0
      %v5710 = vmax.f32 %v5459, 0.0
      %v5711 = vmax.f32 %v5461, 0.0
      %v5712 = vmax.f32 %v5463, 0.0
      %v5713 = vmax.f32 %v5467, 0.0
      %v5714 = vmax.f32 %v5469, 0.0
      %v5715 = vmax.f32 %v5471, 0.0
      %v5716 = vmax.f32 %v5473, 0.0
      %v5717 = vmax.f32 %v5477, 0.0
      %v5718 = vmax.f32 %v5479, 0.0
      %v5719 = vmax.f32 %v5481, 0.0
      %v5720 = vmax.f32 %v5483, 0.0
      %v5721 = vmax.f32 %v5487, 0.0
      %v5722 = vmax.f32 %v5489, 0.0
      %v5723 = vmax.f32 %v5491, 0.0
      %v5724 = vmax.f32 %v5493, 0.0
      %v5725 = vmax.f32 %v5497, 0.0
      %v5726 = vmax.f32 %v5499, 0.0
      %v5727 = vmax.f32 %v5501, 0.0
      %v5728 = vmax.f32 %v5503, 0.0
      %v5729 = vmax.f32 %v5507, 0.0
      %v5730 = vmax.f32 %v5509, 0.0
      %v5731 = vmax.f32 %v5511, 0.0
      %v5732 = vmax.f32 %v5513, 0.0
      %v5733 = vmax.f32 %v5517, 0.0
      %v5734 = vmax.f32 %v5519, 0.0
      %v5735 = vmax.f32 %v5521, 0.0
      %v5736 = vmax.f32 %v5523, 0.0
      %v5737 = vmax.f32 %v5527, 0.0
      %v5738 = vmax.f32 %v5529, 0.0
      %v5739 = vmax.f32 %v5531, 0.0
      %v5740 = vmax.f32 %v5533, 0.0
      %v5741 = vmax.f32 %v5537, 0.0
      %v5742 = vmax.f32 %v5539, 0.0
      %v5743 = vmax.f32 %v5541, 0.0
      %v5744 = vmax.f32 %v5543, 0.0
      %v5745 = vmax.f32 %v5547, 0.0
      %v5746 = vmax.f32 %v5549, 0.0
      %v5747 = vmax.f32 %v5551, 0.0
      %v5748 = vmax.f32 %v5553, 0.0
      %v5749 = vmax.f32 %v5557, 0.0
      %v5750 = vmax.f32 %v5559, 0.0
      %v5751 = vmax.f32 %v5561, 0.0
      %v5752 = vmax.f32 %v5563, 0.0
      %v5753 = vmax.f32 %v5567, 0.0
      %v5754 = vmax.f32 %v5569, 0.0
      %v5755 = vmax.f32 %v5571, 0.0
      %v5756 = vmax.f32 %v5573, 0.0
      %v5757 = vmax.f32 %v5577, 0.0
      %v5758 = vmax.f32 %v5579, 0.0
      %v5759 = vmax.f32 %v5581, 0.0
      %v5760 = vmax.f32 %v5583, 0.0
      %v5761 = vmax.f32 %v5587, 0.0
      %v5762 = vmax.f32 %v5589, 0.0
      %v5763 = vmax.f32 %v5591, 0.0
      %v5764 = vmax.f32 %v5593, 0.0
      %v5765 = vmax.f32 %v5597, 0.0
      %v5766 = vmax.f32 %v5599, 0.0
      %v5767 = vmax.f32 %v5601, 0.0
      %v5768 = vmax.f32 %v5603, 0.0
      %v5769 = vmax.f32 %v5607, 0.0
      %v5770 = vmax.f32 %v5609, 0.0
      %v5771 = vmax.f32 %v5611, 0.0
      %v5772 = vmax.f32 %v5613, 0.0
      %v5773 = vmax.f32 %v5617, 0.0
      %v5774 = vmax.f32 %v5619, 0.0
      %v5775 = vmax.f32 %v5621, 0.0
      %v5776 = vmax.f32 %v5623, 0.0
      %v5777 = vmax.f32 %v5627, 0.0
      %v5778 = vmax.f32 %v5629, 0.0
      %v5779 = vmax.f32 %v5631, 0.0
      %v5780 = vmax.f32 %v5633, 0.0
      %v5781 = vmax.f32 %v5637, 0.0
      %v5782 = vmax.f32 %v5639, 0.0
      %v5783 = vmax.f32 %v5641, 0.0
      %v5784 = vmax.f32 %v5643, 0.0
      %v5785 = vmax.f32 %v5647, 0.0
      %v5786 = vmax.f32 %v5649, 0.0
      %v5787 = vmax.f32 %v5651, 0.0
      %v5788 = vmax.f32 %v5653, 0.0
      %v5789 = vmax.f32 %v5657, 0.0
      %v5790 = vmax.f32 %v5659, 0.0
      %v5791 = vmax.f32 %v5661, 0.0
      %v5792 = vmax.f32 %v5663, 0.0
      %v5793 = vpack.c.bf16 %v5667, %v5665
      %v5794 = vpack.c.bf16 %v5668, %v5666
      %v5795 = vpack.c.bf16 %v5671, %v5669
      %v5796 = vpack.c.bf16 %v5672, %v5670
      %v5797 = vpack.c.bf16 %v5675, %v5673
      %v5798 = vpack.c.bf16 %v5676, %v5674
      %v5799 = vpack.c.bf16 %v5679, %v5677
      %v5800 = vpack.c.bf16 %v5680, %v5678
      %v5801 = vpack.c.bf16 %v5683, %v5681
      %v5802 = vpack.c.bf16 %v5684, %v5682
      %v5803 = vpack.c.bf16 %v5687, %v5685
      %v5804 = vpack.c.bf16 %v5688, %v5686
      %v5805 = vpack.c.bf16 %v5691, %v5689
      %v5806 = vpack.c.bf16 %v5692, %v5690
      %v5807 = vpack.c.bf16 %v5695, %v5693
      %v5808 = vpack.c.bf16 %v5696, %v5694
      %v5809 = vpack.c.bf16 %v5699, %v5697
      %v5810 = vpack.c.bf16 %v5700, %v5698
      %v5811 = vpack.c.bf16 %v5703, %v5701
      %v5812 = vpack.c.bf16 %v5704, %v5702
      %v5813 = vpack.c.bf16 %v5707, %v5705
      %v5814 = vpack.c.bf16 %v5708, %v5706
      %v5815 = vpack.c.bf16 %v5711, %v5709
      %v5816 = vpack.c.bf16 %v5712, %v5710
      %v5817 = vpack.c.bf16 %v5715, %v5713
      %v5818 = vpack.c.bf16 %v5716, %v5714
      %v5819 = vpack.c.bf16 %v5719, %v5717
      %v5820 = vpack.c.bf16 %v5720, %v5718
      %v5821 = vpack.c.bf16 %v5723, %v5721
      %v5822 = vpack.c.bf16 %v5724, %v5722
      %v5823 = vpack.c.bf16 %v5727, %v5725
      %v5824 = vpack.c.bf16 %v5728, %v5726
      %v5825 = vpack.c.bf16 %v5731, %v5729
      %v5826 = vpack.c.bf16 %v5732, %v5730
      %v5827 = vpack.c.bf16 %v5735, %v5733
      %v5828 = vpack.c.bf16 %v5736, %v5734
      %v5829 = vpack.c.bf16 %v5739, %v5737
      %v5830 = vpack.c.bf16 %v5740, %v5738
      %v5831 = vpack.c.bf16 %v5743, %v5741
      %v5832 = vpack.c.bf16 %v5744, %v5742
      %v5833 = vpack.c.bf16 %v5747, %v5745
      %v5834 = vpack.c.bf16 %v5748, %v5746
      %v5835 = vpack.c.bf16 %v5751, %v5749
      %v5836 = vpack.c.bf16 %v5752, %v5750
      %v5837 = vpack.c.bf16 %v5755, %v5753
      %v5838 = vpack.c.bf16 %v5756, %v5754
      %v5839 = vpack.c.bf16 %v5759, %v5757
      %v5840 = vpack.c.bf16 %v5760, %v5758
      %v5841 = vpack.c.bf16 %v5763, %v5761
      %v5842 = vpack.c.bf16 %v5764, %v5762
      %v5843 = vpack.c.bf16 %v5767, %v5765
      %v5844 = vpack.c.bf16 %v5768, %v5766
      %v5845 = vpack.c.bf16 %v5771, %v5769
      %v5846 = vpack.c.bf16 %v5772, %v5770
      %v5847 = vpack.c.bf16 %v5775, %v5773
      %v5848 = vpack.c.bf16 %v5776, %v5774
      %v5849 = vpack.c.bf16 %v5779, %v5777
      %v5850 = vpack.c.bf16 %v5780, %v5778
      %v5851 = vpack.c.bf16 %v5783, %v5781
      %v5852 = vpack.c.bf16 %v5784, %v5782
      %v5853 = vpack.c.bf16 %v5787, %v5785
      %v5854 = vpack.c.bf16 %v5788, %v5786
      %v5855 = vpack.c.bf16 %v5791, %v5789
      %v5856 = vpack.c.bf16 %v5792, %v5790
      %s5857 = scalar_lea.vmem %s2, 1024
      %v5858 = vld [vmem:[%s5857] sm:$0xff]
      %v5859 = vld [vmem:[%s5857 + $0x8] sm:$0xff]
      %v5860 = vld [vmem:[%s5857 + $0x10] sm:$0xff]
      %v5861 = vld [vmem:[%s5857 + $0x18] sm:$0xff]
      %v5862 = vld [vmem:[%s5857 + $0x20] sm:$0xff]
      %v5863 = vld [vmem:[%s5857 + $0x28] sm:$0xff]
      %v5864 = vld [vmem:[%s5857 + $0x30] sm:$0xff]
      %v5865 = vld [vmem:[%s5857 + $0x38] sm:$0xff]
      %v5866 = vld [vmem:[%s5857 + $0x40] sm:$0xff]
      %v5867 = vld [vmem:[%s5857 + $0x48] sm:$0xff]
      %v5868 = vld [vmem:[%s5857 + $0x50] sm:$0xff]
      %v5869 = vld [vmem:[%s5857 + $0x58] sm:$0xff]
      %v5870 = vld [vmem:[%s5857 + $0x60] sm:$0xff]
      %v5871 = vld [vmem:[%s5857 + $0x68] sm:$0xff]
      %v5872 = vld [vmem:[%s5857 + $0x70] sm:$0xff]
      %v5873 = vld [vmem:[%s5857 + $0x78] sm:$0xff]
      %v5874 = vld [vmem:[%s5857 + $0x80] sm:$0xff]
      %v5875 = vld [vmem:[%s5857 + $0x88] sm:$0xff]
      %v5876 = vld [vmem:[%s5857 + $0x90] sm:$0xff]
      %v5877 = vld [vmem:[%s5857 + $0x98] sm:$0xff]
      %v5878 = vld [vmem:[%s5857 + $0xa0] sm:$0xff]
      %v5879 = vld [vmem:[%s5857 + $0xa8] sm:$0xff]
      %v5880 = vld [vmem:[%s5857 + $0xb0] sm:$0xff]
      %v5881 = vld [vmem:[%s5857 + $0xb8] sm:$0xff]
      %v5882 = vld [vmem:[%s5857 + $0xc0] sm:$0xff]
      %v5883 = vld [vmem:[%s5857 + $0xc8] sm:$0xff]
      %v5884 = vld [vmem:[%s5857 + $0xd0] sm:$0xff]
      %v5885 = vld [vmem:[%s5857 + $0xd8] sm:$0xff]
      %v5886 = vld [vmem:[%s5857 + $0xe0] sm:$0xff]
      %v5887 = vld [vmem:[%s5857 + $0xe8] sm:$0xff]
      %v5888 = vld [vmem:[%s5857 + $0xf0] sm:$0xff]
      %v5889 = vld [vmem:[%s5857 + $0xf8] sm:$0xff]
      %v5922 = vunpack.c.l.b16 %v5858
      %v5923 = vunpack.c.h.b16 %v5858
      %v5924 = vunpack.c.l.b16 %v5859
      %v5925 = vunpack.c.h.b16 %v5859
      %v5926 = vunpack.c.l.b16 %v5860
      %v5927 = vunpack.c.h.b16 %v5860
      %v5928 = vunpack.c.l.b16 %v5861
      %v5929 = vunpack.c.h.b16 %v5861
      %v5930 = vunpack.c.l.b16 %v5862
      %v5931 = vunpack.c.h.b16 %v5862
      %v5932 = vunpack.c.l.b16 %v5863
      %v5933 = vunpack.c.h.b16 %v5863
      %v5934 = vunpack.c.l.b16 %v5864
      %v5935 = vunpack.c.h.b16 %v5864
      %v5936 = vunpack.c.l.b16 %v5865
      %v5937 = vunpack.c.h.b16 %v5865
      %v5938 = vunpack.c.l.b16 %v5866
      %v5939 = vunpack.c.h.b16 %v5866
      %v5940 = vunpack.c.l.b16 %v5867
      %v5941 = vunpack.c.h.b16 %v5867
      %v5942 = vunpack.c.l.b16 %v5868
      %v5943 = vunpack.c.h.b16 %v5868
      %v5944 = vunpack.c.l.b16 %v5869
      %v5945 = vunpack.c.h.b16 %v5869
      %v5946 = vunpack.c.l.b16 %v5870
      %v5947 = vunpack.c.h.b16 %v5870
      %v5948 = vunpack.c.l.b16 %v5871
      %v5949 = vunpack.c.h.b16 %v5871
      %v5950 = vunpack.c.l.b16 %v5872
      %v5951 = vunpack.c.h.b16 %v5872
      %v5952 = vunpack.c.l.b16 %v5873
      %v5953 = vunpack.c.h.b16 %v5873
      %v5954 = vunpack.c.l.b16 %v5874
      %v5955 = vunpack.c.h.b16 %v5874
      %v5956 = vunpack.c.l.b16 %v5875
      %v5957 = vunpack.c.h.b16 %v5875
      %v5958 = vunpack.c.l.b16 %v5876
      %v5959 = vunpack.c.h.b16 %v5876
      %v5960 = vunpack.c.l.b16 %v5877
      %v5961 = vunpack.c.h.b16 %v5877
      %v5962 = vunpack.c.l.b16 %v5878
      %v5963 = vunpack.c.h.b16 %v5878
      %v5964 = vunpack.c.l.b16 %v5879
      %v5965 = vunpack.c.h.b16 %v5879
      %v5966 = vunpack.c.l.b16 %v5880
      %v5967 = vunpack.c.h.b16 %v5880
      %v5968 = vunpack.c.l.b16 %v5881
      %v5969 = vunpack.c.h.b16 %v5881
      %v5970 = vunpack.c.l.b16 %v5882
      %v5971 = vunpack.c.h.b16 %v5882
      %v5972 = vunpack.c.l.b16 %v5883
      %v5973 = vunpack.c.h.b16 %v5883
      %v5974 = vunpack.c.l.b16 %v5884
      %v5975 = vunpack.c.h.b16 %v5884
      %v5976 = vunpack.c.l.b16 %v5885
      %v5977 = vunpack.c.h.b16 %v5885
      %v5978 = vunpack.c.l.b16 %v5886
      %v5979 = vunpack.c.h.b16 %v5886
      %v5980 = vunpack.c.l.b16 %v5887
      %v5981 = vunpack.c.h.b16 %v5887
      %v5982 = vunpack.c.l.b16 %v5888
      %v5983 = vunpack.c.h.b16 %v5888
      %v5984 = vunpack.c.l.b16 %v5889
      %v5985 = vunpack.c.h.b16 %v5889
      %v5986 = vpack.c.b16 %v5924, %v5922
      %v5987 = vpack.c.b16 %v5925, %v5923
      %v5988 = vpack.c.b16 %v5928, %v5926
      %v5989 = vpack.c.b16 %v5929, %v5927
      %v5990 = vpack.c.b16 %v5932, %v5930
      %v5991 = vpack.c.b16 %v5933, %v5931
      %v5992 = vpack.c.b16 %v5936, %v5934
      %v5993 = vpack.c.b16 %v5937, %v5935
      %v5994 = vpack.c.b16 %v5940, %v5938
      %v5995 = vpack.c.b16 %v5941, %v5939
      %v5996 = vpack.c.b16 %v5944, %v5942
      %v5997 = vpack.c.b16 %v5945, %v5943
      %v5998 = vpack.c.b16 %v5948, %v5946
      %v5999 = vpack.c.b16 %v5949, %v5947
      %v6000 = vpack.c.b16 %v5952, %v5950
      %v6001 = vpack.c.b16 %v5953, %v5951
      %v6002 = vpack.c.b16 %v5956, %v5954
      %v6003 = vpack.c.b16 %v5957, %v5955
      %v6004 = vpack.c.b16 %v5960, %v5958
      %v6005 = vpack.c.b16 %v5961, %v5959
      %v6006 = vpack.c.b16 %v5964, %v5962
      %v6007 = vpack.c.b16 %v5965, %v5963
      %v6008 = vpack.c.b16 %v5968, %v5966
      %v6009 = vpack.c.b16 %v5969, %v5967
      %v6010 = vpack.c.b16 %v5972, %v5970
      %v6011 = vpack.c.b16 %v5973, %v5971
      %v6012 = vpack.c.b16 %v5976, %v5974
      %v6013 = vpack.c.b16 %v5977, %v5975
      %v6014 = vpack.c.b16 %v5980, %v5978
      %v6015 = vpack.c.b16 %v5981, %v5979
      %v6016 = vpack.c.b16 %v5984, %v5982
      %v6017 = vpack.c.b16 %v5985, %v5983
      %6050 = vmatprep.subr.bf16.mxu0 %v6001
      %6051 = vmatpush1.bf16.msra.mxu0 %v6000
      %6052 = vmatprep.subr.bf16.mxu0 %v5999
      %6053 = vmatpush1.bf16.msra.mxu0 %v5998
      %6054 = vmatprep.subr.bf16.mxu0 %v5997
      %6055 = vmatpush1.bf16.msra.mxu0 %v5996
      %6056 = vmatprep.subr.bf16.mxu0 %v5995
      %6057 = vmatpush1.bf16.msra.mxu0 %v5994
      %6058 = vmatprep.subr.bf16.mxu0 %v5993
      %6059 = vmatpush1.bf16.msra.mxu0 %v5992
      %6060 = vmatprep.subr.bf16.mxu0 %v5991
      %6061 = vmatpush1.bf16.msra.mxu0 %v5990
      %6062 = vmatprep.subr.bf16.mxu0 %v5989
      %6063 = vmatpush1.bf16.msra.mxu0 %v5988
      %6064 = vmatprep.subr.bf16.mxu0 %v5987
      %6065 = vmatpush1.bf16.msra.mxu0 %v5986
      %6066 = vmatprep.subr.bf16.mxu0 %v6017
      %6067 = vmatpush2.bf16.msra.mxu0 %v6016
      %6068 = vmatprep.subr.bf16.mxu0 %v6015
      %6069 = vmatpush2.bf16.msra.mxu0 %v6014
      %6070 = vmatprep.subr.bf16.mxu0 %v6013
      %6071 = vmatpush2.bf16.msra.mxu0 %v6012
      %6072 = vmatprep.subr.bf16.mxu0 %v6011
      %6073 = vmatpush2.bf16.msra.mxu0 %v6010
      %6074 = vmatprep.subr.bf16.mxu0 %v6009
      %6075 = vmatpush2.bf16.msra.mxu0 %v6008
      %6076 = vmatprep.subr.bf16.mxu0 %v6007
      %6077 = vmatpush2.bf16.msra.mxu0 %v6006
      %6078 = vmatprep.subr.bf16.mxu0 %v6005
      %6079 = vmatpush2.bf16.msra.mxu0 %v6004
      %6080 = vmatprep.subr.bf16.mxu0 %v6003
      %6081 = vmatpush2.bf16.msra.mxu0 %v6002
      %6082 = vmatprep.mubr.bf16.mxu0 %v5794
      %6083 = vmatmul.mubr.bf16.gmra.mxu0 %v5793
      %v6084 = vpop.f32.mrf.mxu0
      %v6085 = vadd.f32 %v1723, %v6084
      %v6086 = vpop.f32.mrf.mxu0
      %v6087 = vadd.f32 %v1724, %v6086
      %v6088 = vpop.f32.mrf.mxu0
      %v6089 = vadd.f32 %v1725, %v6088
      %v6090 = vpop.f32.mrf.mxu0
      %v6091 = vadd.f32 %v1726, %v6090
      %6092 = vmatprep.mubr.bf16.mxu0 %v5796
      %6093 = vmatmul.mubr.bf16.gmra.mxu0 %v5795
      %v6094 = vpop.f32.mrf.mxu0
      %v6095 = vadd.f32 %v1727, %v6094
      %v6096 = vpop.f32.mrf.mxu0
      %v6097 = vadd.f32 %v1728, %v6096
      %v6098 = vpop.f32.mrf.mxu0
      %v6099 = vadd.f32 %v1729, %v6098
      %v6100 = vpop.f32.mrf.mxu0
      %v6101 = vadd.f32 %v1730, %v6100
      %6102 = vmatprep.mubr.bf16.mxu0 %v5798
      %6103 = vmatmul.mubr.bf16.gmra.mxu0 %v5797
      %v6104 = vpop.f32.mrf.mxu0
      %v6105 = vadd.f32 %v1731, %v6104
      %v6106 = vpop.f32.mrf.mxu0
      %v6107 = vadd.f32 %v1732, %v6106
      %v6108 = vpop.f32.mrf.mxu0
      %v6109 = vadd.f32 %v1733, %v6108
      %v6110 = vpop.f32.mrf.mxu0
      %v6111 = vadd.f32 %v1734, %v6110
      %6112 = vmatprep.mubr.bf16.mxu0 %v5800
      %6113 = vmatmul.mubr.bf16.gmra.mxu0 %v5799
      %v6114 = vpop.f32.mrf.mxu0
      %v6115 = vadd.f32 %v1735, %v6114
      %v6116 = vpop.f32.mrf.mxu0
      %v6117 = vadd.f32 %v1736, %v6116
      %v6118 = vpop.f32.mrf.mxu0
      %v6119 = vadd.f32 %v1737, %v6118
      %v6120 = vpop.f32.mrf.mxu0
      %v6121 = vadd.f32 %v1738, %v6120
      %6122 = vmatprep.mubr.bf16.mxu0 %v5802
      %6123 = vmatmul.mubr.bf16.gmra.mxu0 %v5801
      %v6124 = vpop.f32.mrf.mxu0
      %v6125 = vadd.f32 %v1739, %v6124
      %v6126 = vpop.f32.mrf.mxu0
      %v6127 = vadd.f32 %v1740, %v6126
      %v6128 = vpop.f32.mrf.mxu0
      %v6129 = vadd.f32 %v1741, %v6128
      %v6130 = vpop.f32.mrf.mxu0
      %v6131 = vadd.f32 %v1742, %v6130
      %6132 = vmatprep.mubr.bf16.mxu0 %v5804
      %6133 = vmatmul.mubr.bf16.gmra.mxu0 %v5803
      %v6134 = vpop.f32.mrf.mxu0
      %v6135 = vadd.f32 %v1743, %v6134
      %v6136 = vpop.f32.mrf.mxu0
      %v6137 = vadd.f32 %v1744, %v6136
      %v6138 = vpop.f32.mrf.mxu0
      %v6139 = vadd.f32 %v1745, %v6138
      %v6140 = vpop.f32.mrf.mxu0
      %v6141 = vadd.f32 %v1746, %v6140
      %6142 = vmatprep.mubr.bf16.mxu0 %v5806
      %6143 = vmatmul.mubr.bf16.gmra.mxu0 %v5805
      %v6144 = vpop.f32.mrf.mxu0
      %v6145 = vadd.f32 %v1747, %v6144
      %v6146 = vpop.f32.mrf.mxu0
      %v6147 = vadd.f32 %v1748, %v6146
      %v6148 = vpop.f32.mrf.mxu0
      %v6149 = vadd.f32 %v1749, %v6148
      %v6150 = vpop.f32.mrf.mxu0
      %v6151 = vadd.f32 %v1750, %v6150
      %6152 = vmatprep.mubr.bf16.mxu0 %v5808
      %6153 = vmatmul.mubr.bf16.gmra.mxu0 %v5807
      %v6154 = vpop.f32.mrf.mxu0
      %v6155 = vadd.f32 %v1751, %v6154
      %v6156 = vpop.f32.mrf.mxu0
      %v6157 = vadd.f32 %v1752, %v6156
      %v6158 = vpop.f32.mrf.mxu0
      %v6159 = vadd.f32 %v1753, %v6158
      %v6160 = vpop.f32.mrf.mxu0
      %v6161 = vadd.f32 %v1754, %v6160
      %6162 = vmatprep.mubr.bf16.mxu0 %v5810
      %6163 = vmatmul.mubr.bf16.gmra.mxu0 %v5809
      %v6164 = vpop.f32.mrf.mxu0
      %v6165 = vadd.f32 %v1755, %v6164
      %v6166 = vpop.f32.mrf.mxu0
      %v6167 = vadd.f32 %v1756, %v6166
      %v6168 = vpop.f32.mrf.mxu0
      %v6169 = vadd.f32 %v1757, %v6168
      %v6170 = vpop.f32.mrf.mxu0
      %v6171 = vadd.f32 %v1758, %v6170
      %6172 = vmatprep.mubr.bf16.mxu0 %v5812
      %6173 = vmatmul.mubr.bf16.gmra.mxu0 %v5811
      %v6174 = vpop.f32.mrf.mxu0
      %v6175 = vadd.f32 %v1759, %v6174
      %v6176 = vpop.f32.mrf.mxu0
      %v6177 = vadd.f32 %v1760, %v6176
      %v6178 = vpop.f32.mrf.mxu0
      %v6179 = vadd.f32 %v1761, %v6178
      %v6180 = vpop.f32.mrf.mxu0
      %v6181 = vadd.f32 %v1762, %v6180
      %6182 = vmatprep.mubr.bf16.mxu0 %v5814
      %6183 = vmatmul.mubr.bf16.gmra.mxu0 %v5813
      %v6184 = vpop.f32.mrf.mxu0
      %v6185 = vadd.f32 %v1763, %v6184
      %v6186 = vpop.f32.mrf.mxu0
      %v6187 = vadd.f32 %v1764, %v6186
      %v6188 = vpop.f32.mrf.mxu0
      %v6189 = vadd.f32 %v1765, %v6188
      %v6190 = vpop.f32.mrf.mxu0
      %v6191 = vadd.f32 %v1766, %v6190
      %6192 = vmatprep.mubr.bf16.mxu0 %v5816
      %6193 = vmatmul.mubr.bf16.gmra.mxu0 %v5815
      %v6194 = vpop.f32.mrf.mxu0
      %v6195 = vadd.f32 %v1767, %v6194
      %v6196 = vpop.f32.mrf.mxu0
      %v6197 = vadd.f32 %v1768, %v6196
      %v6198 = vpop.f32.mrf.mxu0
      %v6199 = vadd.f32 %v1769, %v6198
      %v6200 = vpop.f32.mrf.mxu0
      %v6201 = vadd.f32 %v1770, %v6200
      %6202 = vmatprep.mubr.bf16.mxu0 %v5818
      %6203 = vmatmul.mubr.bf16.gmra.mxu0 %v5817
      %v6204 = vpop.f32.mrf.mxu0
      %v6205 = vadd.f32 %v1771, %v6204
      %v6206 = vpop.f32.mrf.mxu0
      %v6207 = vadd.f32 %v1772, %v6206
      %v6208 = vpop.f32.mrf.mxu0
      %v6209 = vadd.f32 %v1773, %v6208
      %v6210 = vpop.f32.mrf.mxu0
      %v6211 = vadd.f32 %v1774, %v6210
      %6212 = vmatprep.mubr.bf16.mxu0 %v5820
      %6213 = vmatmul.mubr.bf16.gmra.mxu0 %v5819
      %v6214 = vpop.f32.mrf.mxu0
      %v6215 = vadd.f32 %v1775, %v6214
      %v6216 = vpop.f32.mrf.mxu0
      %v6217 = vadd.f32 %v1776, %v6216
      %v6218 = vpop.f32.mrf.mxu0
      %v6219 = vadd.f32 %v1777, %v6218
      %v6220 = vpop.f32.mrf.mxu0
      %v6221 = vadd.f32 %v1778, %v6220
      %6222 = vmatprep.mubr.bf16.mxu0 %v5822
      %6223 = vmatmul.mubr.bf16.gmra.mxu0 %v5821
      %v6224 = vpop.f32.mrf.mxu0
      %v6225 = vadd.f32 %v1779, %v6224
      %v6226 = vpop.f32.mrf.mxu0
      %v6227 = vadd.f32 %v1780, %v6226
      %v6228 = vpop.f32.mrf.mxu0
      %v6229 = vadd.f32 %v1781, %v6228
      %v6230 = vpop.f32.mrf.mxu0
      %v6231 = vadd.f32 %v1782, %v6230
      %6232 = vmatprep.mubr.bf16.mxu0 %v5824
      %6233 = vmatmul.mubr.bf16.gmra.mxu0 %v5823
      %v6234 = vpop.f32.mrf.mxu0
      %v6235 = vadd.f32 %v1783, %v6234
      %v6236 = vpop.f32.mrf.mxu0
      %v6237 = vadd.f32 %v1784, %v6236
      %v6238 = vpop.f32.mrf.mxu0
      %v6239 = vadd.f32 %v1785, %v6238
      %v6240 = vpop.f32.mrf.mxu0
      %v6241 = vadd.f32 %v1786, %v6240
      %6242 = vmatprep.mubr.bf16.mxu0 %v5826
      %6243 = vmatmul.mubr.bf16.gmra.mxu0 %v5825
      %v6244 = vpop.f32.mrf.mxu0
      %v6245 = vadd.f32 %v1787, %v6244
      %v6246 = vpop.f32.mrf.mxu0
      %v6247 = vadd.f32 %v1788, %v6246
      %v6248 = vpop.f32.mrf.mxu0
      %v6249 = vadd.f32 %v1789, %v6248
      %v6250 = vpop.f32.mrf.mxu0
      %v6251 = vadd.f32 %v1790, %v6250
      %6252 = vmatprep.mubr.bf16.mxu0 %v5828
      %6253 = vmatmul.mubr.bf16.gmra.mxu0 %v5827
      %v6254 = vpop.f32.mrf.mxu0
      %v6255 = vadd.f32 %v1791, %v6254
      %v6256 = vpop.f32.mrf.mxu0
      %v6257 = vadd.f32 %v1792, %v6256
      %v6258 = vpop.f32.mrf.mxu0
      %v6259 = vadd.f32 %v1793, %v6258
      %v6260 = vpop.f32.mrf.mxu0
      %v6261 = vadd.f32 %v1794, %v6260
      %6262 = vmatprep.mubr.bf16.mxu0 %v5830
      %6263 = vmatmul.mubr.bf16.gmra.mxu0 %v5829
      %v6264 = vpop.f32.mrf.mxu0
      %v6265 = vadd.f32 %v1795, %v6264
      %v6266 = vpop.f32.mrf.mxu0
      %v6267 = vadd.f32 %v1796, %v6266
      %v6268 = vpop.f32.mrf.mxu0
      %v6269 = vadd.f32 %v1797, %v6268
      %v6270 = vpop.f32.mrf.mxu0
      %v6271 = vadd.f32 %v1798, %v6270
      %6272 = vmatprep.mubr.bf16.mxu0 %v5832
      %6273 = vmatmul.mubr.bf16.gmra.mxu0 %v5831
      %v6274 = vpop.f32.mrf.mxu0
      %v6275 = vadd.f32 %v1799, %v6274
      %v6276 = vpop.f32.mrf.mxu0
      %v6277 = vadd.f32 %v1800, %v6276
      %v6278 = vpop.f32.mrf.mxu0
      %v6279 = vadd.f32 %v1801, %v6278
      %v6280 = vpop.f32.mrf.mxu0
      %v6281 = vadd.f32 %v1802, %v6280
      %6282 = vmatprep.mubr.bf16.mxu0 %v5834
      %6283 = vmatmul.mubr.bf16.gmra.mxu0 %v5833
      %v6284 = vpop.f32.mrf.mxu0
      %v6285 = vadd.f32 %v1803, %v6284
      %v6286 = vpop.f32.mrf.mxu0
      %v6287 = vadd.f32 %v1804, %v6286
      %v6288 = vpop.f32.mrf.mxu0
      %v6289 = vadd.f32 %v1805, %v6288
      %v6290 = vpop.f32.mrf.mxu0
      %v6291 = vadd.f32 %v1806, %v6290
      %6292 = vmatprep.mubr.bf16.mxu0 %v5836
      %6293 = vmatmul.mubr.bf16.gmra.mxu0 %v5835
      %v6294 = vpop.f32.mrf.mxu0
      %v6295 = vadd.f32 %v1807, %v6294
      %v6296 = vpop.f32.mrf.mxu0
      %v6297 = vadd.f32 %v1808, %v6296
      %v6298 = vpop.f32.mrf.mxu0
      %v6299 = vadd.f32 %v1809, %v6298
      %v6300 = vpop.f32.mrf.mxu0
      %v6301 = vadd.f32 %v1810, %v6300
      %6302 = vmatprep.mubr.bf16.mxu0 %v5838
      %6303 = vmatmul.mubr.bf16.gmra.mxu0 %v5837
      %v6304 = vpop.f32.mrf.mxu0
      %v6305 = vadd.f32 %v1811, %v6304
      %v6306 = vpop.f32.mrf.mxu0
      %v6307 = vadd.f32 %v1812, %v6306
      %v6308 = vpop.f32.mrf.mxu0
      %v6309 = vadd.f32 %v1813, %v6308
      %v6310 = vpop.f32.mrf.mxu0
      %v6311 = vadd.f32 %v1814, %v6310
      %6312 = vmatprep.mubr.bf16.mxu0 %v5840
      %6313 = vmatmul.mubr.bf16.gmra.mxu0 %v5839
      %v6314 = vpop.f32.mrf.mxu0
      %v6315 = vadd.f32 %v1815, %v6314
      %v6316 = vpop.f32.mrf.mxu0
      %v6317 = vadd.f32 %v1816, %v6316
      %v6318 = vpop.f32.mrf.mxu0
      %v6319 = vadd.f32 %v1817, %v6318
      %v6320 = vpop.f32.mrf.mxu0
      %v6321 = vadd.f32 %v1818, %v6320
      %6322 = vmatprep.mubr.bf16.mxu0 %v5842
      %6323 = vmatmul.mubr.bf16.gmra.mxu0 %v5841
      %v6324 = vpop.f32.mrf.mxu0
      %v6325 = vadd.f32 %v1819, %v6324
      %v6326 = vpop.f32.mrf.mxu0
      %v6327 = vadd.f32 %v1820, %v6326
      %v6328 = vpop.f32.mrf.mxu0
      %v6329 = vadd.f32 %v1821, %v6328
      %v6330 = vpop.f32.mrf.mxu0
      %v6331 = vadd.f32 %v1822, %v6330
      %6332 = vmatprep.mubr.bf16.mxu0 %v5844
      %6333 = vmatmul.mubr.bf16.gmra.mxu0 %v5843
      %v6334 = vpop.f32.mrf.mxu0
      %v6335 = vadd.f32 %v1823, %v6334
      %v6336 = vpop.f32.mrf.mxu0
      %v6337 = vadd.f32 %v1824, %v6336
      %v6338 = vpop.f32.mrf.mxu0
      %v6339 = vadd.f32 %v1825, %v6338
      %v6340 = vpop.f32.mrf.mxu0
      %v6341 = vadd.f32 %v1826, %v6340
      %6342 = vmatprep.mubr.bf16.mxu0 %v5846
      %6343 = vmatmul.mubr.bf16.gmra.mxu0 %v5845
      %v6344 = vpop.f32.mrf.mxu0
      %v6345 = vadd.f32 %v1827, %v6344
      %v6346 = vpop.f32.mrf.mxu0
      %v6347 = vadd.f32 %v1828, %v6346
      %v6348 = vpop.f32.mrf.mxu0
      %v6349 = vadd.f32 %v1829, %v6348
      %v6350 = vpop.f32.mrf.mxu0
      %v6351 = vadd.f32 %v1830, %v6350
      %6352 = vmatprep.mubr.bf16.mxu0 %v5848
      %6353 = vmatmul.mubr.bf16.gmra.mxu0 %v5847
      %v6354 = vpop.f32.mrf.mxu0
      %v6355 = vadd.f32 %v1831, %v6354
      %v6356 = vpop.f32.mrf.mxu0
      %v6357 = vadd.f32 %v1832, %v6356
      %v6358 = vpop.f32.mrf.mxu0
      %v6359 = vadd.f32 %v1833, %v6358
      %v6360 = vpop.f32.mrf.mxu0
      %v6361 = vadd.f32 %v1834, %v6360
      %6362 = vmatprep.mubr.bf16.mxu0 %v5850
      %6363 = vmatmul.mubr.bf16.gmra.mxu0 %v5849
      %v6364 = vpop.f32.mrf.mxu0
      %v6365 = vadd.f32 %v1835, %v6364
      %v6366 = vpop.f32.mrf.mxu0
      %v6367 = vadd.f32 %v1836, %v6366
      %v6368 = vpop.f32.mrf.mxu0
      %v6369 = vadd.f32 %v1837, %v6368
      %v6370 = vpop.f32.mrf.mxu0
      %v6371 = vadd.f32 %v1838, %v6370
      %6372 = vmatprep.mubr.bf16.mxu0 %v5852
      %6373 = vmatmul.mubr.bf16.gmra.mxu0 %v5851
      %v6374 = vpop.f32.mrf.mxu0
      %v6375 = vadd.f32 %v1839, %v6374
      %v6376 = vpop.f32.mrf.mxu0
      %v6377 = vadd.f32 %v1840, %v6376
      %v6378 = vpop.f32.mrf.mxu0
      %v6379 = vadd.f32 %v1841, %v6378
      %v6380 = vpop.f32.mrf.mxu0
      %v6381 = vadd.f32 %v1842, %v6380
      %6382 = vmatprep.mubr.bf16.mxu0 %v5854
      %6383 = vmatmul.mubr.bf16.gmra.mxu0 %v5853
      %v6384 = vpop.f32.mrf.mxu0
      %v6385 = vadd.f32 %v1843, %v6384
      %v6386 = vpop.f32.mrf.mxu0
      %v6387 = vadd.f32 %v1844, %v6386
      %v6388 = vpop.f32.mrf.mxu0
      %v6389 = vadd.f32 %v1845, %v6388
      %v6390 = vpop.f32.mrf.mxu0
      %v6391 = vadd.f32 %v1846, %v6390
      %6392 = vmatprep.mubr.bf16.mxu0 %v5856
      %6393 = vmatmul.mubr.bf16.gmra.mxu0 %v5855
      %v6394 = vpop.f32.mrf.mxu0
      %v6395 = vadd.f32 %v1847, %v6394
      %v6396 = vpop.f32.mrf.mxu0
      %v6397 = vadd.f32 %v1848, %v6396
      %v6398 = vpop.f32.mrf.mxu0
      %v6399 = vadd.f32 %v1849, %v6398
      %v6400 = vpop.f32.mrf.mxu0
      %v6401 = vadd.f32 %v1850, %v6400
      %6402 = vdwg.mxu0
      %v6403 = vlaneseq
      %v6404 = vshrl.u32 %v6403, 7
      %v6405 = vsub.s32 5, %v6404
      %v6406 = vrot.slane %v322, %v6405
      %v6407 = vlaneseq
      %v6408 = vshrl.u32 %v6407, 7
      %v6409 = vsub.s32 5, %v6408
      %v6410 = vrot.slane %v323, %v6409
      %v6411 = vadd.f32 %v6085, %v6406
      %v6412 = vadd.f32 %v6087, %v6410
      %v6413 = vadd.f32 %v6089, %v6406
      %v6414 = vadd.f32 %v6091, %v6410
      %v6415 = vadd.f32 %v6095, %v6406
      %v6416 = vadd.f32 %v6097, %v6410
      %v6417 = vadd.f32 %v6099, %v6406
      %v6418 = vadd.f32 %v6101, %v6410
      %v6419 = vadd.f32 %v6105, %v6406
      %v6420 = vadd.f32 %v6107, %v6410
      %v6421 = vadd.f32 %v6109, %v6406
      %v6422 = vadd.f32 %v6111, %v6410
      %v6423 = vadd.f32 %v6115, %v6406
      %v6424 = vadd.f32 %v6117, %v6410
      %v6425 = vadd.f32 %v6119, %v6406
      %v6426 = vadd.f32 %v6121, %v6410
      %v6427 = vadd.f32 %v6125, %v6406
      %v6428 = vadd.f32 %v6127, %v6410
      %v6429 = vadd.f32 %v6129, %v6406
      %v6430 = vadd.f32 %v6131, %v6410
      %v6431 = vadd.f32 %v6135, %v6406
      %v6432 = vadd.f32 %v6137, %v6410
      %v6433 = vadd.f32 %v6139, %v6406
      %v6434 = vadd.f32 %v6141, %v6410
      %v6435 = vadd.f32 %v6145, %v6406
      %v6436 = vadd.f32 %v6147, %v6410
      %v6437 = vadd.f32 %v6149, %v6406
      %v6438 = vadd.f32 %v6151, %v6410
      %v6439 = vadd.f32 %v6155, %v6406
      %v6440 = vadd.f32 %v6157, %v6410
      %v6441 = vadd.f32 %v6159, %v6406
      %v6442 = vadd.f32 %v6161, %v6410
      %v6443 = vadd.f32 %v6165, %v6406
      %v6444 = vadd.f32 %v6167, %v6410
      %v6445 = vadd.f32 %v6169, %v6406
      %v6446 = vadd.f32 %v6171, %v6410
      %v6447 = vadd.f32 %v6175, %v6406
      %v6448 = vadd.f32 %v6177, %v6410
      %v6449 = vadd.f32 %v6179, %v6406
      %v6450 = vadd.f32 %v6181, %v6410
      %v6451 = vadd.f32 %v6185, %v6406
      %v6452 = vadd.f32 %v6187, %v6410
      %v6453 = vadd.f32 %v6189, %v6406
      %v6454 = vadd.f32 %v6191, %v6410
      %v6455 = vadd.f32 %v6195, %v6406
      %v6456 = vadd.f32 %v6197, %v6410
      %v6457 = vadd.f32 %v6199, %v6406
      %v6458 = vadd.f32 %v6201, %v6410
      %v6459 = vadd.f32 %v6205, %v6406
      %v6460 = vadd.f32 %v6207, %v6410
      %v6461 = vadd.f32 %v6209, %v6406
      %v6462 = vadd.f32 %v6211, %v6410
      %v6463 = vadd.f32 %v6215, %v6406
      %v6464 = vadd.f32 %v6217, %v6410
      %v6465 = vadd.f32 %v6219, %v6406
      %v6466 = vadd.f32 %v6221, %v6410
      %v6467 = vadd.f32 %v6225, %v6406
      %v6468 = vadd.f32 %v6227, %v6410
      %v6469 = vadd.f32 %v6229, %v6406
      %v6470 = vadd.f32 %v6231, %v6410
      %v6471 = vadd.f32 %v6235, %v6406
      %v6472 = vadd.f32 %v6237, %v6410
      %v6473 = vadd.f32 %v6239, %v6406
      %v6474 = vadd.f32 %v6241, %v6410
      %v6475 = vadd.f32 %v6245, %v6406
      %v6476 = vadd.f32 %v6247, %v6410
      %v6477 = vadd.f32 %v6249, %v6406
      %v6478 = vadd.f32 %v6251, %v6410
      %v6479 = vadd.f32 %v6255, %v6406
      %v6480 = vadd.f32 %v6257, %v6410
      %v6481 = vadd.f32 %v6259, %v6406
      %v6482 = vadd.f32 %v6261, %v6410
      %v6483 = vadd.f32 %v6265, %v6406
      %v6484 = vadd.f32 %v6267, %v6410
      %v6485 = vadd.f32 %v6269, %v6406
      %v6486 = vadd.f32 %v6271, %v6410
      %v6487 = vadd.f32 %v6275, %v6406
      %v6488 = vadd.f32 %v6277, %v6410
      %v6489 = vadd.f32 %v6279, %v6406
      %v6490 = vadd.f32 %v6281, %v6410
      %v6491 = vadd.f32 %v6285, %v6406
      %v6492 = vadd.f32 %v6287, %v6410
      %v6493 = vadd.f32 %v6289, %v6406
      %v6494 = vadd.f32 %v6291, %v6410
      %v6495 = vadd.f32 %v6295, %v6406
      %v6496 = vadd.f32 %v6297, %v6410
      %v6497 = vadd.f32 %v6299, %v6406
      %v6498 = vadd.f32 %v6301, %v6410
      %v6499 = vadd.f32 %v6305, %v6406
      %v6500 = vadd.f32 %v6307, %v6410
      %v6501 = vadd.f32 %v6309, %v6406
      %v6502 = vadd.f32 %v6311, %v6410
      %v6503 = vadd.f32 %v6315, %v6406
      %v6504 = vadd.f32 %v6317, %v6410
      %v6505 = vadd.f32 %v6319, %v6406
      %v6506 = vadd.f32 %v6321, %v6410
      %v6507 = vadd.f32 %v6325, %v6406
      %v6508 = vadd.f32 %v6327, %v6410
      %v6509 = vadd.f32 %v6329, %v6406
      %v6510 = vadd.f32 %v6331, %v6410
      %v6511 = vadd.f32 %v6335, %v6406
      %v6512 = vadd.f32 %v6337, %v6410
      %v6513 = vadd.f32 %v6339, %v6406
      %v6514 = vadd.f32 %v6341, %v6410
      %v6515 = vadd.f32 %v6345, %v6406
      %v6516 = vadd.f32 %v6347, %v6410
      %v6517 = vadd.f32 %v6349, %v6406
      %v6518 = vadd.f32 %v6351, %v6410
      %v6519 = vadd.f32 %v6355, %v6406
      %v6520 = vadd.f32 %v6357, %v6410
      %v6521 = vadd.f32 %v6359, %v6406
      %v6522 = vadd.f32 %v6361, %v6410
      %v6523 = vadd.f32 %v6365, %v6406
      %v6524 = vadd.f32 %v6367, %v6410
      %v6525 = vadd.f32 %v6369, %v6406
      %v6526 = vadd.f32 %v6371, %v6410
      %v6527 = vadd.f32 %v6375, %v6406
      %v6528 = vadd.f32 %v6377, %v6410
      %v6529 = vadd.f32 %v6379, %v6406
      %v6530 = vadd.f32 %v6381, %v6410
      %v6531 = vadd.f32 %v6385, %v6406
      %v6532 = vadd.f32 %v6387, %v6410
      %v6533 = vadd.f32 %v6389, %v6406
      %v6534 = vadd.f32 %v6391, %v6410
      %v6535 = vadd.f32 %v6395, %v6406
      %v6536 = vadd.f32 %v6397, %v6410
      %v6537 = vadd.f32 %v6399, %v6406
      %v6538 = vadd.f32 %v6401, %v6410
      %v6539 = vmax.f32 %v6411, 0.0
      %v6540 = vmax.f32 %v6412, 0.0
      %v6541 = vmax.f32 %v6413, 0.0
      %v6542 = vmax.f32 %v6414, 0.0
      %v6543 = vmax.f32 %v6415, 0.0
      %v6544 = vmax.f32 %v6416, 0.0
      %v6545 = vmax.f32 %v6417, 0.0
      %v6546 = vmax.f32 %v6418, 0.0
      %v6547 = vmax.f32 %v6419, 0.0
      %v6548 = vmax.f32 %v6420, 0.0
      %v6549 = vmax.f32 %v6421, 0.0
      %v6550 = vmax.f32 %v6422, 0.0
      %v6551 = vmax.f32 %v6423, 0.0
      %v6552 = vmax.f32 %v6424, 0.0
      %v6553 = vmax.f32 %v6425, 0.0
      %v6554 = vmax.f32 %v6426, 0.0
      %v6555 = vmax.f32 %v6427, 0.0
      %v6556 = vmax.f32 %v6428, 0.0
      %v6557 = vmax.f32 %v6429, 0.0
      %v6558 = vmax.f32 %v6430, 0.0
      %v6559 = vmax.f32 %v6431, 0.0
      %v6560 = vmax.f32 %v6432, 0.0
      %v6561 = vmax.f32 %v6433, 0.0
      %v6562 = vmax.f32 %v6434, 0.0
      %v6563 = vmax.f32 %v6435, 0.0
      %v6564 = vmax.f32 %v6436, 0.0
      %v6565 = vmax.f32 %v6437, 0.0
      %v6566 = vmax.f32 %v6438, 0.0
      %v6567 = vmax.f32 %v6439, 0.0
      %v6568 = vmax.f32 %v6440, 0.0
      %v6569 = vmax.f32 %v6441, 0.0
      %v6570 = vmax.f32 %v6442, 0.0
      %v6571 = vmax.f32 %v6443, 0.0
      %v6572 = vmax.f32 %v6444, 0.0
      %v6573 = vmax.f32 %v6445, 0.0
      %v6574 = vmax.f32 %v6446, 0.0
      %v6575 = vmax.f32 %v6447, 0.0
      %v6576 = vmax.f32 %v6448, 0.0
      %v6577 = vmax.f32 %v6449, 0.0
      %v6578 = vmax.f32 %v6450, 0.0
      %v6579 = vmax.f32 %v6451, 0.0
      %v6580 = vmax.f32 %v6452, 0.0
      %v6581 = vmax.f32 %v6453, 0.0
      %v6582 = vmax.f32 %v6454, 0.0
      %v6583 = vmax.f32 %v6455, 0.0
      %v6584 = vmax.f32 %v6456, 0.0
      %v6585 = vmax.f32 %v6457, 0.0
      %v6586 = vmax.f32 %v6458, 0.0
      %v6587 = vmax.f32 %v6459, 0.0
      %v6588 = vmax.f32 %v6460, 0.0
      %v6589 = vmax.f32 %v6461, 0.0
      %v6590 = vmax.f32 %v6462, 0.0
      %v6591 = vmax.f32 %v6463, 0.0
      %v6592 = vmax.f32 %v6464, 0.0
      %v6593 = vmax.f32 %v6465, 0.0
      %v6594 = vmax.f32 %v6466, 0.0
      %v6595 = vmax.f32 %v6467, 0.0
      %v6596 = vmax.f32 %v6468, 0.0
      %v6597 = vmax.f32 %v6469, 0.0
      %v6598 = vmax.f32 %v6470, 0.0
      %v6599 = vmax.f32 %v6471, 0.0
      %v6600 = vmax.f32 %v6472, 0.0
      %v6601 = vmax.f32 %v6473, 0.0
      %v6602 = vmax.f32 %v6474, 0.0
      %v6603 = vmax.f32 %v6475, 0.0
      %v6604 = vmax.f32 %v6476, 0.0
      %v6605 = vmax.f32 %v6477, 0.0
      %v6606 = vmax.f32 %v6478, 0.0
      %v6607 = vmax.f32 %v6479, 0.0
      %v6608 = vmax.f32 %v6480, 0.0
      %v6609 = vmax.f32 %v6481, 0.0
      %v6610 = vmax.f32 %v6482, 0.0
      %v6611 = vmax.f32 %v6483, 0.0
      %v6612 = vmax.f32 %v6484, 0.0
      %v6613 = vmax.f32 %v6485, 0.0
      %v6614 = vmax.f32 %v6486, 0.0
      %v6615 = vmax.f32 %v6487, 0.0
      %v6616 = vmax.f32 %v6488, 0.0
      %v6617 = vmax.f32 %v6489, 0.0
      %v6618 = vmax.f32 %v6490, 0.0
      %v6619 = vmax.f32 %v6491, 0.0
      %v6620 = vmax.f32 %v6492, 0.0
      %v6621 = vmax.f32 %v6493, 0.0
      %v6622 = vmax.f32 %v6494, 0.0
      %v6623 = vmax.f32 %v6495, 0.0
      %v6624 = vmax.f32 %v6496, 0.0
      %v6625 = vmax.f32 %v6497, 0.0
      %v6626 = vmax.f32 %v6498, 0.0
      %v6627 = vmax.f32 %v6499, 0.0
      %v6628 = vmax.f32 %v6500, 0.0
      %v6629 = vmax.f32 %v6501, 0.0
      %v6630 = vmax.f32 %v6502, 0.0
      %v6631 = vmax.f32 %v6503, 0.0
      %v6632 = vmax.f32 %v6504, 0.0
      %v6633 = vmax.f32 %v6505, 0.0
      %v6634 = vmax.f32 %v6506, 0.0
      %v6635 = vmax.f32 %v6507, 0.0
      %v6636 = vmax.f32 %v6508, 0.0
      %v6637 = vmax.f32 %v6509, 0.0
      %v6638 = vmax.f32 %v6510, 0.0
      %v6639 = vmax.f32 %v6511, 0.0
      %v6640 = vmax.f32 %v6512, 0.0
      %v6641 = vmax.f32 %v6513, 0.0
      %v6642 = vmax.f32 %v6514, 0.0
      %v6643 = vmax.f32 %v6515, 0.0
      %v6644 = vmax.f32 %v6516, 0.0
      %v6645 = vmax.f32 %v6517, 0.0
      %v6646 = vmax.f32 %v6518, 0.0
      %v6647 = vmax.f32 %v6519, 0.0
      %v6648 = vmax.f32 %v6520, 0.0
      %v6649 = vmax.f32 %v6521, 0.0
      %v6650 = vmax.f32 %v6522, 0.0
      %v6651 = vmax.f32 %v6523, 0.0
      %v6652 = vmax.f32 %v6524, 0.0
      %v6653 = vmax.f32 %v6525, 0.0
      %v6654 = vmax.f32 %v6526, 0.0
      %v6655 = vmax.f32 %v6527, 0.0
      %v6656 = vmax.f32 %v6528, 0.0
      %v6657 = vmax.f32 %v6529, 0.0
      %v6658 = vmax.f32 %v6530, 0.0
      %v6659 = vmax.f32 %v6531, 0.0
      %v6660 = vmax.f32 %v6532, 0.0
      %v6661 = vmax.f32 %v6533, 0.0
      %v6662 = vmax.f32 %v6534, 0.0
      %v6663 = vmax.f32 %v6535, 0.0
      %v6664 = vmax.f32 %v6536, 0.0
      %v6665 = vmax.f32 %v6537, 0.0
      %v6666 = vmax.f32 %v6538, 0.0
      %v6667 = vpack.c.bf16 %v6541, %v6539
      %v6668 = vpack.c.bf16 %v6542, %v6540
      %v6669 = vpack.c.bf16 %v6545, %v6543
      %v6670 = vpack.c.bf16 %v6546, %v6544
      %v6671 = vpack.c.bf16 %v6549, %v6547
      %v6672 = vpack.c.bf16 %v6550, %v6548
      %v6673 = vpack.c.bf16 %v6553, %v6551
      %v6674 = vpack.c.bf16 %v6554, %v6552
      %v6675 = vpack.c.bf16 %v6557, %v6555
      %v6676 = vpack.c.bf16 %v6558, %v6556
      %v6677 = vpack.c.bf16 %v6561, %v6559
      %v6678 = vpack.c.bf16 %v6562, %v6560
      %v6679 = vpack.c.bf16 %v6565, %v6563
      %v6680 = vpack.c.bf16 %v6566, %v6564
      %v6681 = vpack.c.bf16 %v6569, %v6567
      %v6682 = vpack.c.bf16 %v6570, %v6568
      %v6683 = vpack.c.bf16 %v6573, %v6571
      %v6684 = vpack.c.bf16 %v6574, %v6572
      %v6685 = vpack.c.bf16 %v6577, %v6575
      %v6686 = vpack.c.bf16 %v6578, %v6576
      %v6687 = vpack.c.bf16 %v6581, %v6579
      %v6688 = vpack.c.bf16 %v6582, %v6580
      %v6689 = vpack.c.bf16 %v6585, %v6583
      %v6690 = vpack.c.bf16 %v6586, %v6584
      %v6691 = vpack.c.bf16 %v6589, %v6587
      %v6692 = vpack.c.bf16 %v6590, %v6588
      %v6693 = vpack.c.bf16 %v6593, %v6591
      %v6694 = vpack.c.bf16 %v6594, %v6592
      %v6695 = vpack.c.bf16 %v6597, %v6595
      %v6696 = vpack.c.bf16 %v6598, %v6596
      %v6697 = vpack.c.bf16 %v6601, %v6599
      %v6698 = vpack.c.bf16 %v6602, %v6600
      %v6699 = vpack.c.bf16 %v6605, %v6603
      %v6700 = vpack.c.bf16 %v6606, %v6604
      %v6701 = vpack.c.bf16 %v6609, %v6607
      %v6702 = vpack.c.bf16 %v6610, %v6608
      %v6703 = vpack.c.bf16 %v6613, %v6611
      %v6704 = vpack.c.bf16 %v6614, %v6612
      %v6705 = vpack.c.bf16 %v6617, %v6615
      %v6706 = vpack.c.bf16 %v6618, %v6616
      %v6707 = vpack.c.bf16 %v6621, %v6619
      %v6708 = vpack.c.bf16 %v6622, %v6620
      %v6709 = vpack.c.bf16 %v6625, %v6623
      %v6710 = vpack.c.bf16 %v6626, %v6624
      %v6711 = vpack.c.bf16 %v6629, %v6627
      %v6712 = vpack.c.bf16 %v6630, %v6628
      %v6713 = vpack.c.bf16 %v6633, %v6631
      %v6714 = vpack.c.bf16 %v6634, %v6632
      %v6715 = vpack.c.bf16 %v6637, %v6635
      %v6716 = vpack.c.bf16 %v6638, %v6636
      %v6717 = vpack.c.bf16 %v6641, %v6639
      %v6718 = vpack.c.bf16 %v6642, %v6640
      %v6719 = vpack.c.bf16 %v6645, %v6643
      %v6720 = vpack.c.bf16 %v6646, %v6644
      %v6721 = vpack.c.bf16 %v6649, %v6647
      %v6722 = vpack.c.bf16 %v6650, %v6648
      %v6723 = vpack.c.bf16 %v6653, %v6651
      %v6724 = vpack.c.bf16 %v6654, %v6652
      %v6725 = vpack.c.bf16 %v6657, %v6655
      %v6726 = vpack.c.bf16 %v6658, %v6656
      %v6727 = vpack.c.bf16 %v6661, %v6659
      %v6728 = vpack.c.bf16 %v6662, %v6660
      %v6729 = vpack.c.bf16 %v6665, %v6663
      %v6730 = vpack.c.bf16 %v6666, %v6664
      %s6731 = scalar_lea.vmem %s2, 1280
      %v6732 = vld [vmem:[%s6731] sm:$0xff]
      %v6733 = vld [vmem:[%s6731 + $0x8] sm:$0xff]
      %v6734 = vld [vmem:[%s6731 + $0x10] sm:$0xff]
      %v6735 = vld [vmem:[%s6731 + $0x18] sm:$0xff]
      %v6736 = vld [vmem:[%s6731 + $0x20] sm:$0xff]
      %v6737 = vld [vmem:[%s6731 + $0x28] sm:$0xff]
      %v6738 = vld [vmem:[%s6731 + $0x30] sm:$0xff]
      %v6739 = vld [vmem:[%s6731 + $0x38] sm:$0xff]
      %v6740 = vld [vmem:[%s6731 + $0x40] sm:$0xff]
      %v6741 = vld [vmem:[%s6731 + $0x48] sm:$0xff]
      %v6742 = vld [vmem:[%s6731 + $0x50] sm:$0xff]
      %v6743 = vld [vmem:[%s6731 + $0x58] sm:$0xff]
      %v6744 = vld [vmem:[%s6731 + $0x60] sm:$0xff]
      %v6745 = vld [vmem:[%s6731 + $0x68] sm:$0xff]
      %v6746 = vld [vmem:[%s6731 + $0x70] sm:$0xff]
      %v6747 = vld [vmem:[%s6731 + $0x78] sm:$0xff]
      %v6748 = vld [vmem:[%s6731 + $0x80] sm:$0xff]
      %v6749 = vld [vmem:[%s6731 + $0x88] sm:$0xff]
      %v6750 = vld [vmem:[%s6731 + $0x90] sm:$0xff]
      %v6751 = vld [vmem:[%s6731 + $0x98] sm:$0xff]
      %v6752 = vld [vmem:[%s6731 + $0xa0] sm:$0xff]
      %v6753 = vld [vmem:[%s6731 + $0xa8] sm:$0xff]
      %v6754 = vld [vmem:[%s6731 + $0xb0] sm:$0xff]
      %v6755 = vld [vmem:[%s6731 + $0xb8] sm:$0xff]
      %v6756 = vld [vmem:[%s6731 + $0xc0] sm:$0xff]
      %v6757 = vld [vmem:[%s6731 + $0xc8] sm:$0xff]
      %v6758 = vld [vmem:[%s6731 + $0xd0] sm:$0xff]
      %v6759 = vld [vmem:[%s6731 + $0xd8] sm:$0xff]
      %v6760 = vld [vmem:[%s6731 + $0xe0] sm:$0xff]
      %v6761 = vld [vmem:[%s6731 + $0xe8] sm:$0xff]
      %v6762 = vld [vmem:[%s6731 + $0xf0] sm:$0xff]
      %v6763 = vld [vmem:[%s6731 + $0xf8] sm:$0xff]
      %v6764 = vlaneseq
      %v6765 = vshrl.u32 %v6764, 7
      %v6766 = vsub.s32 6, %v6765
      %v6767 = vrot.slane %v322, %v6766
      %v6768 = vlaneseq
      %v6769 = vshrl.u32 %v6768, 7
      %v6770 = vsub.s32 6, %v6769
      %v6771 = vrot.slane %v323, %v6770
      %v6804 = vunpack.c.l.b16 %v6732
      %v6805 = vunpack.c.h.b16 %v6732
      %v6806 = vunpack.c.l.b16 %v6733
      %v6807 = vunpack.c.h.b16 %v6733
      %v6808 = vunpack.c.l.b16 %v6734
      %v6809 = vunpack.c.h.b16 %v6734
      %v6810 = vunpack.c.l.b16 %v6735
      %v6811 = vunpack.c.h.b16 %v6735
      %v6812 = vunpack.c.l.b16 %v6736
      %v6813 = vunpack.c.h.b16 %v6736
      %v6814 = vunpack.c.l.b16 %v6737
      %v6815 = vunpack.c.h.b16 %v6737
      %v6816 = vunpack.c.l.b16 %v6738
      %v6817 = vunpack.c.h.b16 %v6738
      %v6818 = vunpack.c.l.b16 %v6739
      %v6819 = vunpack.c.h.b16 %v6739
      %v6820 = vunpack.c.l.b16 %v6740
      %v6821 = vunpack.c.h.b16 %v6740
      %v6822 = vunpack.c.l.b16 %v6741
      %v6823 = vunpack.c.h.b16 %v6741
      %v6824 = vunpack.c.l.b16 %v6742
      %v6825 = vunpack.c.h.b16 %v6742
      %v6826 = vunpack.c.l.b16 %v6743
      %v6827 = vunpack.c.h.b16 %v6743
      %v6828 = vunpack.c.l.b16 %v6744
      %v6829 = vunpack.c.h.b16 %v6744
      %v6830 = vunpack.c.l.b16 %v6745
      %v6831 = vunpack.c.h.b16 %v6745
      %v6832 = vunpack.c.l.b16 %v6746
      %v6833 = vunpack.c.h.b16 %v6746
      %v6834 = vunpack.c.l.b16 %v6747
      %v6835 = vunpack.c.h.b16 %v6747
      %v6836 = vunpack.c.l.b16 %v6748
      %v6837 = vunpack.c.h.b16 %v6748
      %v6838 = vunpack.c.l.b16 %v6749
      %v6839 = vunpack.c.h.b16 %v6749
      %v6840 = vunpack.c.l.b16 %v6750
      %v6841 = vunpack.c.h.b16 %v6750
      %v6842 = vunpack.c.l.b16 %v6751
      %v6843 = vunpack.c.h.b16 %v6751
      %v6844 = vunpack.c.l.b16 %v6752
      %v6845 = vunpack.c.h.b16 %v6752
      %v6846 = vunpack.c.l.b16 %v6753
      %v6847 = vunpack.c.h.b16 %v6753
      %v6848 = vunpack.c.l.b16 %v6754
      %v6849 = vunpack.c.h.b16 %v6754
      %v6850 = vunpack.c.l.b16 %v6755
      %v6851 = vunpack.c.h.b16 %v6755
      %v6852 = vunpack.c.l.b16 %v6756
      %v6853 = vunpack.c.h.b16 %v6756
      %v6854 = vunpack.c.l.b16 %v6757
      %v6855 = vunpack.c.h.b16 %v6757
      %v6856 = vunpack.c.l.b16 %v6758
      %v6857 = vunpack.c.h.b16 %v6758
      %v6858 = vunpack.c.l.b16 %v6759
      %v6859 = vunpack.c.h.b16 %v6759
      %v6860 = vunpack.c.l.b16 %v6760
      %v6861 = vunpack.c.h.b16 %v6760
      %v6862 = vunpack.c.l.b16 %v6761
      %v6863 = vunpack.c.h.b16 %v6761
      %v6864 = vunpack.c.l.b16 %v6762
      %v6865 = vunpack.c.h.b16 %v6762
      %v6866 = vunpack.c.l.b16 %v6763
      %v6867 = vunpack.c.h.b16 %v6763
      %v6868 = vpack.c.b16 %v6806, %v6804
      %v6869 = vpack.c.b16 %v6807, %v6805
      %v6870 = vpack.c.b16 %v6810, %v6808
      %v6871 = vpack.c.b16 %v6811, %v6809
      %v6872 = vpack.c.b16 %v6814, %v6812
      %v6873 = vpack.c.b16 %v6815, %v6813
      %v6874 = vpack.c.b16 %v6818, %v6816
      %v6875 = vpack.c.b16 %v6819, %v6817
      %v6876 = vpack.c.b16 %v6822, %v6820
      %v6877 = vpack.c.b16 %v6823, %v6821
      %v6878 = vpack.c.b16 %v6826, %v6824
      %v6879 = vpack.c.b16 %v6827, %v6825
      %v6880 = vpack.c.b16 %v6830, %v6828
      %v6881 = vpack.c.b16 %v6831, %v6829
      %v6882 = vpack.c.b16 %v6834, %v6832
      %v6883 = vpack.c.b16 %v6835, %v6833
      %v6884 = vpack.c.b16 %v6838, %v6836
      %v6885 = vpack.c.b16 %v6839, %v6837
      %v6886 = vpack.c.b16 %v6842, %v6840
      %v6887 = vpack.c.b16 %v6843, %v6841
      %v6888 = vpack.c.b16 %v6846, %v6844
      %v6889 = vpack.c.b16 %v6847, %v6845
      %v6890 = vpack.c.b16 %v6850, %v6848
      %v6891 = vpack.c.b16 %v6851, %v6849
      %v6892 = vpack.c.b16 %v6854, %v6852
      %v6893 = vpack.c.b16 %v6855, %v6853
      %v6894 = vpack.c.b16 %v6858, %v6856
      %v6895 = vpack.c.b16 %v6859, %v6857
      %v6896 = vpack.c.b16 %v6862, %v6860
      %v6897 = vpack.c.b16 %v6863, %v6861
      %v6898 = vpack.c.b16 %v6866, %v6864
      %v6899 = vpack.c.b16 %v6867, %v6865
      %6932 = vmatprep.subr.bf16.mxu0 %v6883
      %6933 = vmatpush1.bf16.msra.mxu0 %v6882
      %6934 = vmatprep.subr.bf16.mxu0 %v6881
      %6935 = vmatpush1.bf16.msra.mxu0 %v6880
      %6936 = vmatprep.subr.bf16.mxu0 %v6879
      %6937 = vmatpush1.bf16.msra.mxu0 %v6878
      %6938 = vmatprep.subr.bf16.mxu0 %v6877
      %6939 = vmatpush1.bf16.msra.mxu0 %v6876
      %6940 = vmatprep.subr.bf16.mxu0 %v6875
      %6941 = vmatpush1.bf16.msra.mxu0 %v6874
      %6942 = vmatprep.subr.bf16.mxu0 %v6873
      %6943 = vmatpush1.bf16.msra.mxu0 %v6872
      %6944 = vmatprep.subr.bf16.mxu0 %v6871
      %6945 = vmatpush1.bf16.msra.mxu0 %v6870
      %6946 = vmatprep.subr.bf16.mxu0 %v6869
      %6947 = vmatpush1.bf16.msra.mxu0 %v6868
      %6948 = vmatprep.subr.bf16.mxu0 %v6899
      %6949 = vmatpush2.bf16.msra.mxu0 %v6898
      %6950 = vmatprep.subr.bf16.mxu0 %v6897
      %6951 = vmatpush2.bf16.msra.mxu0 %v6896
      %6952 = vmatprep.subr.bf16.mxu0 %v6895
      %6953 = vmatpush2.bf16.msra.mxu0 %v6894
      %6954 = vmatprep.subr.bf16.mxu0 %v6893
      %6955 = vmatpush2.bf16.msra.mxu0 %v6892
      %6956 = vmatprep.subr.bf16.mxu0 %v6891
      %6957 = vmatpush2.bf16.msra.mxu0 %v6890
      %6958 = vmatprep.subr.bf16.mxu0 %v6889
      %6959 = vmatpush2.bf16.msra.mxu0 %v6888
      %6960 = vmatprep.subr.bf16.mxu0 %v6887
      %6961 = vmatpush2.bf16.msra.mxu0 %v6886
      %6962 = vmatprep.subr.bf16.mxu0 %v6885
      %6963 = vmatpush2.bf16.msra.mxu0 %v6884
      %6964 = vmatprep.mubr.bf16.mxu0 %v6668
      %6965 = vmatmul.mubr.bf16.gmra.mxu0 %v6667
      %v6966 = vpop.f32.mrf.mxu0
      %v6967 = vadd.f32 %v6767, %v6966
      %v6968 = vpop.f32.mrf.mxu0
      %v6969 = vadd.f32 %v6771, %v6968
      %v6970 = vpop.f32.mrf.mxu0
      %v6971 = vadd.f32 %v6767, %v6970
      %v6972 = vpop.f32.mrf.mxu0
      %v6973 = vadd.f32 %v6771, %v6972
      %6974 = vmatprep.mubr.bf16.mxu0 %v6670
      %6975 = vmatmul.mubr.bf16.gmra.mxu0 %v6669
      %v6976 = vpop.f32.mrf.mxu0
      %v6977 = vadd.f32 %v6767, %v6976
      %v6978 = vpop.f32.mrf.mxu0
      %v6979 = vadd.f32 %v6771, %v6978
      %v6980 = vpop.f32.mrf.mxu0
      %v6981 = vadd.f32 %v6767, %v6980
      %v6982 = vpop.f32.mrf.mxu0
      %v6983 = vadd.f32 %v6771, %v6982
      %6984 = vmatprep.mubr.bf16.mxu0 %v6672
      %6985 = vmatmul.mubr.bf16.gmra.mxu0 %v6671
      %v6986 = vpop.f32.mrf.mxu0
      %v6987 = vadd.f32 %v6767, %v6986
      %v6988 = vpop.f32.mrf.mxu0
      %v6989 = vadd.f32 %v6771, %v6988
      %v6990 = vpop.f32.mrf.mxu0
      %v6991 = vadd.f32 %v6767, %v6990
      %v6992 = vpop.f32.mrf.mxu0
      %v6993 = vadd.f32 %v6771, %v6992
      %6994 = vmatprep.mubr.bf16.mxu0 %v6674
      %6995 = vmatmul.mubr.bf16.gmra.mxu0 %v6673
      %v6996 = vpop.f32.mrf.mxu0
      %v6997 = vadd.f32 %v6767, %v6996
      %v6998 = vpop.f32.mrf.mxu0
      %v6999 = vadd.f32 %v6771, %v6998
      %v7000 = vpop.f32.mrf.mxu0
      %v7001 = vadd.f32 %v6767, %v7000
      %v7002 = vpop.f32.mrf.mxu0
      %v7003 = vadd.f32 %v6771, %v7002
      %7004 = vmatprep.mubr.bf16.mxu0 %v6676
      %7005 = vmatmul.mubr.bf16.gmra.mxu0 %v6675
      %v7006 = vpop.f32.mrf.mxu0
      %v7007 = vadd.f32 %v6767, %v7006
      %v7008 = vpop.f32.mrf.mxu0
      %v7009 = vadd.f32 %v6771, %v7008
      %v7010 = vpop.f32.mrf.mxu0
      %v7011 = vadd.f32 %v6767, %v7010
      %v7012 = vpop.f32.mrf.mxu0
      %v7013 = vadd.f32 %v6771, %v7012
      %7014 = vmatprep.mubr.bf16.mxu0 %v6678
      %7015 = vmatmul.mubr.bf16.gmra.mxu0 %v6677
      %v7016 = vpop.f32.mrf.mxu0
      %v7017 = vadd.f32 %v6767, %v7016
      %v7018 = vpop.f32.mrf.mxu0
      %v7019 = vadd.f32 %v6771, %v7018
      %v7020 = vpop.f32.mrf.mxu0
      %v7021 = vadd.f32 %v6767, %v7020
      %v7022 = vpop.f32.mrf.mxu0
      %v7023 = vadd.f32 %v6771, %v7022
      %7024 = vmatprep.mubr.bf16.mxu0 %v6680
      %7025 = vmatmul.mubr.bf16.gmra.mxu0 %v6679
      %v7026 = vpop.f32.mrf.mxu0
      %v7027 = vadd.f32 %v6767, %v7026
      %v7028 = vpop.f32.mrf.mxu0
      %v7029 = vadd.f32 %v6771, %v7028
      %v7030 = vpop.f32.mrf.mxu0
      %v7031 = vadd.f32 %v6767, %v7030
      %v7032 = vpop.f32.mrf.mxu0
      %v7033 = vadd.f32 %v6771, %v7032
      %7034 = vmatprep.mubr.bf16.mxu0 %v6682
      %7035 = vmatmul.mubr.bf16.gmra.mxu0 %v6681
      %v7036 = vpop.f32.mrf.mxu0
      %v7037 = vadd.f32 %v6767, %v7036
      %v7038 = vpop.f32.mrf.mxu0
      %v7039 = vadd.f32 %v6771, %v7038
      %v7040 = vpop.f32.mrf.mxu0
      %v7041 = vadd.f32 %v6767, %v7040
      %v7042 = vpop.f32.mrf.mxu0
      %v7043 = vadd.f32 %v6771, %v7042
      %7044 = vmatprep.mubr.bf16.mxu0 %v6684
      %7045 = vmatmul.mubr.bf16.gmra.mxu0 %v6683
      %v7046 = vpop.f32.mrf.mxu0
      %v7047 = vadd.f32 %v6767, %v7046
      %v7048 = vpop.f32.mrf.mxu0
      %v7049 = vadd.f32 %v6771, %v7048
      %v7050 = vpop.f32.mrf.mxu0
      %v7051 = vadd.f32 %v6767, %v7050
      %v7052 = vpop.f32.mrf.mxu0
      %v7053 = vadd.f32 %v6771, %v7052
      %7054 = vmatprep.mubr.bf16.mxu0 %v6686
      %7055 = vmatmul.mubr.bf16.gmra.mxu0 %v6685
      %v7056 = vpop.f32.mrf.mxu0
      %v7057 = vadd.f32 %v6767, %v7056
      %v7058 = vpop.f32.mrf.mxu0
      %v7059 = vadd.f32 %v6771, %v7058
      %v7060 = vpop.f32.mrf.mxu0
      %v7061 = vadd.f32 %v6767, %v7060
      %v7062 = vpop.f32.mrf.mxu0
      %v7063 = vadd.f32 %v6771, %v7062
      %7064 = vmatprep.mubr.bf16.mxu0 %v6688
      %7065 = vmatmul.mubr.bf16.gmra.mxu0 %v6687
      %v7066 = vpop.f32.mrf.mxu0
      %v7067 = vadd.f32 %v6767, %v7066
      %v7068 = vpop.f32.mrf.mxu0
      %v7069 = vadd.f32 %v6771, %v7068
      %v7070 = vpop.f32.mrf.mxu0
      %v7071 = vadd.f32 %v6767, %v7070
      %v7072 = vpop.f32.mrf.mxu0
      %v7073 = vadd.f32 %v6771, %v7072
      %7074 = vmatprep.mubr.bf16.mxu0 %v6690
      %7075 = vmatmul.mubr.bf16.gmra.mxu0 %v6689
      %v7076 = vpop.f32.mrf.mxu0
      %v7077 = vadd.f32 %v6767, %v7076
      %v7078 = vpop.f32.mrf.mxu0
      %v7079 = vadd.f32 %v6771, %v7078
      %v7080 = vpop.f32.mrf.mxu0
      %v7081 = vadd.f32 %v6767, %v7080
      %v7082 = vpop.f32.mrf.mxu0
      %v7083 = vadd.f32 %v6771, %v7082
      %7084 = vmatprep.mubr.bf16.mxu0 %v6692
      %7085 = vmatmul.mubr.bf16.gmra.mxu0 %v6691
      %v7086 = vpop.f32.mrf.mxu0
      %v7087 = vadd.f32 %v6767, %v7086
      %v7088 = vpop.f32.mrf.mxu0
      %v7089 = vadd.f32 %v6771, %v7088
      %v7090 = vpop.f32.mrf.mxu0
      %v7091 = vadd.f32 %v6767, %v7090
      %v7092 = vpop.f32.mrf.mxu0
      %v7093 = vadd.f32 %v6771, %v7092
      %7094 = vmatprep.mubr.bf16.mxu0 %v6694
      %7095 = vmatmul.mubr.bf16.gmra.mxu0 %v6693
      %v7096 = vpop.f32.mrf.mxu0
      %v7097 = vadd.f32 %v6767, %v7096
      %v7098 = vpop.f32.mrf.mxu0
      %v7099 = vadd.f32 %v6771, %v7098
      %v7100 = vpop.f32.mrf.mxu0
      %v7101 = vadd.f32 %v6767, %v7100
      %v7102 = vpop.f32.mrf.mxu0
      %v7103 = vadd.f32 %v6771, %v7102
      %7104 = vmatprep.mubr.bf16.mxu0 %v6696
      %7105 = vmatmul.mubr.bf16.gmra.mxu0 %v6695
      %v7106 = vpop.f32.mrf.mxu0
      %v7107 = vadd.f32 %v6767, %v7106
      %v7108 = vpop.f32.mrf.mxu0
      %v7109 = vadd.f32 %v6771, %v7108
      %v7110 = vpop.f32.mrf.mxu0
      %v7111 = vadd.f32 %v6767, %v7110
      %v7112 = vpop.f32.mrf.mxu0
      %v7113 = vadd.f32 %v6771, %v7112
      %7114 = vmatprep.mubr.bf16.mxu0 %v6698
      %7115 = vmatmul.mubr.bf16.gmra.mxu0 %v6697
      %v7116 = vpop.f32.mrf.mxu0
      %v7117 = vadd.f32 %v6767, %v7116
      %v7118 = vpop.f32.mrf.mxu0
      %v7119 = vadd.f32 %v6771, %v7118
      %v7120 = vpop.f32.mrf.mxu0
      %v7121 = vadd.f32 %v6767, %v7120
      %v7122 = vpop.f32.mrf.mxu0
      %v7123 = vadd.f32 %v6771, %v7122
      %7124 = vmatprep.mubr.bf16.mxu0 %v6700
      %7125 = vmatmul.mubr.bf16.gmra.mxu0 %v6699
      %v7126 = vpop.f32.mrf.mxu0
      %v7127 = vadd.f32 %v6767, %v7126
      %v7128 = vpop.f32.mrf.mxu0
      %v7129 = vadd.f32 %v6771, %v7128
      %v7130 = vpop.f32.mrf.mxu0
      %v7131 = vadd.f32 %v6767, %v7130
      %v7132 = vpop.f32.mrf.mxu0
      %v7133 = vadd.f32 %v6771, %v7132
      %7134 = vmatprep.mubr.bf16.mxu0 %v6702
      %7135 = vmatmul.mubr.bf16.gmra.mxu0 %v6701
      %v7136 = vpop.f32.mrf.mxu0
      %v7137 = vadd.f32 %v6767, %v7136
      %v7138 = vpop.f32.mrf.mxu0
      %v7139 = vadd.f32 %v6771, %v7138
      %v7140 = vpop.f32.mrf.mxu0
      %v7141 = vadd.f32 %v6767, %v7140
      %v7142 = vpop.f32.mrf.mxu0
      %v7143 = vadd.f32 %v6771, %v7142
      %7144 = vmatprep.mubr.bf16.mxu0 %v6704
      %7145 = vmatmul.mubr.bf16.gmra.mxu0 %v6703
      %v7146 = vpop.f32.mrf.mxu0
      %v7147 = vadd.f32 %v6767, %v7146
      %v7148 = vpop.f32.mrf.mxu0
      %v7149 = vadd.f32 %v6771, %v7148
      %v7150 = vpop.f32.mrf.mxu0
      %v7151 = vadd.f32 %v6767, %v7150
      %v7152 = vpop.f32.mrf.mxu0
      %v7153 = vadd.f32 %v6771, %v7152
      %7154 = vmatprep.mubr.bf16.mxu0 %v6706
      %7155 = vmatmul.mubr.bf16.gmra.mxu0 %v6705
      %v7156 = vpop.f32.mrf.mxu0
      %v7157 = vadd.f32 %v6767, %v7156
      %v7158 = vpop.f32.mrf.mxu0
      %v7159 = vadd.f32 %v6771, %v7158
      %v7160 = vpop.f32.mrf.mxu0
      %v7161 = vadd.f32 %v6767, %v7160
      %v7162 = vpop.f32.mrf.mxu0
      %v7163 = vadd.f32 %v6771, %v7162
      %7164 = vmatprep.mubr.bf16.mxu0 %v6708
      %7165 = vmatmul.mubr.bf16.gmra.mxu0 %v6707
      %v7166 = vpop.f32.mrf.mxu0
      %v7167 = vadd.f32 %v6767, %v7166
      %v7168 = vpop.f32.mrf.mxu0
      %v7169 = vadd.f32 %v6771, %v7168
      %v7170 = vpop.f32.mrf.mxu0
      %v7171 = vadd.f32 %v6767, %v7170
      %v7172 = vpop.f32.mrf.mxu0
      %v7173 = vadd.f32 %v6771, %v7172
      %7174 = vmatprep.mubr.bf16.mxu0 %v6710
      %7175 = vmatmul.mubr.bf16.gmra.mxu0 %v6709
      %v7176 = vpop.f32.mrf.mxu0
      %v7177 = vadd.f32 %v6767, %v7176
      %v7178 = vpop.f32.mrf.mxu0
      %v7179 = vadd.f32 %v6771, %v7178
      %v7180 = vpop.f32.mrf.mxu0
      %v7181 = vadd.f32 %v6767, %v7180
      %v7182 = vpop.f32.mrf.mxu0
      %v7183 = vadd.f32 %v6771, %v7182
      %7184 = vmatprep.mubr.bf16.mxu0 %v6712
      %7185 = vmatmul.mubr.bf16.gmra.mxu0 %v6711
      %v7186 = vpop.f32.mrf.mxu0
      %v7187 = vadd.f32 %v6767, %v7186
      %v7188 = vpop.f32.mrf.mxu0
      %v7189 = vadd.f32 %v6771, %v7188
      %v7190 = vpop.f32.mrf.mxu0
      %v7191 = vadd.f32 %v6767, %v7190
      %v7192 = vpop.f32.mrf.mxu0
      %v7193 = vadd.f32 %v6771, %v7192
      %7194 = vmatprep.mubr.bf16.mxu0 %v6714
      %7195 = vmatmul.mubr.bf16.gmra.mxu0 %v6713
      %v7196 = vpop.f32.mrf.mxu0
      %v7197 = vadd.f32 %v6767, %v7196
      %v7198 = vpop.f32.mrf.mxu0
      %v7199 = vadd.f32 %v6771, %v7198
      %v7200 = vpop.f32.mrf.mxu0
      %v7201 = vadd.f32 %v6767, %v7200
      %v7202 = vpop.f32.mrf.mxu0
      %v7203 = vadd.f32 %v6771, %v7202
      %7204 = vmatprep.mubr.bf16.mxu0 %v6716
      %7205 = vmatmul.mubr.bf16.gmra.mxu0 %v6715
      %v7206 = vpop.f32.mrf.mxu0
      %v7207 = vadd.f32 %v6767, %v7206
      %v7208 = vpop.f32.mrf.mxu0
      %v7209 = vadd.f32 %v6771, %v7208
      %v7210 = vpop.f32.mrf.mxu0
      %v7211 = vadd.f32 %v6767, %v7210
      %v7212 = vpop.f32.mrf.mxu0
      %v7213 = vadd.f32 %v6771, %v7212
      %7214 = vmatprep.mubr.bf16.mxu0 %v6718
      %7215 = vmatmul.mubr.bf16.gmra.mxu0 %v6717
      %v7216 = vpop.f32.mrf.mxu0
      %v7217 = vadd.f32 %v6767, %v7216
      %v7218 = vpop.f32.mrf.mxu0
      %v7219 = vadd.f32 %v6771, %v7218
      %v7220 = vpop.f32.mrf.mxu0
      %v7221 = vadd.f32 %v6767, %v7220
      %v7222 = vpop.f32.mrf.mxu0
      %v7223 = vadd.f32 %v6771, %v7222
      %7224 = vmatprep.mubr.bf16.mxu0 %v6720
      %7225 = vmatmul.mubr.bf16.gmra.mxu0 %v6719
      %v7226 = vpop.f32.mrf.mxu0
      %v7227 = vadd.f32 %v6767, %v7226
      %v7228 = vpop.f32.mrf.mxu0
      %v7229 = vadd.f32 %v6771, %v7228
      %v7230 = vpop.f32.mrf.mxu0
      %v7231 = vadd.f32 %v6767, %v7230
      %v7232 = vpop.f32.mrf.mxu0
      %v7233 = vadd.f32 %v6771, %v7232
      %7234 = vmatprep.mubr.bf16.mxu0 %v6722
      %7235 = vmatmul.mubr.bf16.gmra.mxu0 %v6721
      %v7236 = vpop.f32.mrf.mxu0
      %v7237 = vadd.f32 %v6767, %v7236
      %v7238 = vpop.f32.mrf.mxu0
      %v7239 = vadd.f32 %v6771, %v7238
      %v7240 = vpop.f32.mrf.mxu0
      %v7241 = vadd.f32 %v6767, %v7240
      %v7242 = vpop.f32.mrf.mxu0
      %v7243 = vadd.f32 %v6771, %v7242
      %7244 = vmatprep.mubr.bf16.mxu0 %v6724
      %7245 = vmatmul.mubr.bf16.gmra.mxu0 %v6723
      %v7246 = vpop.f32.mrf.mxu0
      %v7247 = vadd.f32 %v6767, %v7246
      %v7248 = vpop.f32.mrf.mxu0
      %v7249 = vadd.f32 %v6771, %v7248
      %v7250 = vpop.f32.mrf.mxu0
      %v7251 = vadd.f32 %v6767, %v7250
      %v7252 = vpop.f32.mrf.mxu0
      %v7253 = vadd.f32 %v6771, %v7252
      %7254 = vmatprep.mubr.bf16.mxu0 %v6726
      %7255 = vmatmul.mubr.bf16.gmra.mxu0 %v6725
      %v7256 = vpop.f32.mrf.mxu0
      %v7257 = vadd.f32 %v6767, %v7256
      %v7258 = vpop.f32.mrf.mxu0
      %v7259 = vadd.f32 %v6771, %v7258
      %v7260 = vpop.f32.mrf.mxu0
      %v7261 = vadd.f32 %v6767, %v7260
      %v7262 = vpop.f32.mrf.mxu0
      %v7263 = vadd.f32 %v6771, %v7262
      %7264 = vmatprep.mubr.bf16.mxu0 %v6728
      %7265 = vmatmul.mubr.bf16.gmra.mxu0 %v6727
      %v7266 = vpop.f32.mrf.mxu0
      %v7267 = vadd.f32 %v6767, %v7266
      %v7268 = vpop.f32.mrf.mxu0
      %v7269 = vadd.f32 %v6771, %v7268
      %v7270 = vpop.f32.mrf.mxu0
      %v7271 = vadd.f32 %v6767, %v7270
      %v7272 = vpop.f32.mrf.mxu0
      %v7273 = vadd.f32 %v6771, %v7272
      %7274 = vmatprep.mubr.bf16.mxu0 %v6730
      %7275 = vmatmul.mubr.bf16.gmra.mxu0 %v6729
      %v7276 = vpop.f32.mrf.mxu0
      %v7277 = vadd.f32 %v6767, %v7276
      %v7278 = vpop.f32.mrf.mxu0
      %v7279 = vadd.f32 %v6771, %v7278
      %v7280 = vpop.f32.mrf.mxu0
      %v7281 = vadd.f32 %v6767, %v7280
      %v7282 = vpop.f32.mrf.mxu0
      %v7283 = vadd.f32 %v6771, %v7282
      %7284 = vdwg.mxu0
      %v7285 = vmax.f32 %v6967, 0.0
      %v7286 = vmax.f32 %v6969, 0.0
      %v7287 = vmax.f32 %v6971, 0.0
      %v7288 = vmax.f32 %v6973, 0.0
      %v7289 = vmax.f32 %v6977, 0.0
      %v7290 = vmax.f32 %v6979, 0.0
      %v7291 = vmax.f32 %v6981, 0.0
      %v7292 = vmax.f32 %v6983, 0.0
      %v7293 = vmax.f32 %v6987, 0.0
      %v7294 = vmax.f32 %v6989, 0.0
      %v7295 = vmax.f32 %v6991, 0.0
      %v7296 = vmax.f32 %v6993, 0.0
      %v7297 = vmax.f32 %v6997, 0.0
      %v7298 = vmax.f32 %v6999, 0.0
      %v7299 = vmax.f32 %v7001, 0.0
      %v7300 = vmax.f32 %v7003, 0.0
      %v7301 = vmax.f32 %v7007, 0.0
      %v7302 = vmax.f32 %v7009, 0.0
      %v7303 = vmax.f32 %v7011, 0.0
      %v7304 = vmax.f32 %v7013, 0.0
      %v7305 = vmax.f32 %v7017, 0.0
      %v7306 = vmax.f32 %v7019, 0.0
      %v7307 = vmax.f32 %v7021, 0.0
      %v7308 = vmax.f32 %v7023, 0.0
      %v7309 = vmax.f32 %v7027, 0.0
      %v7310 = vmax.f32 %v7029, 0.0
      %v7311 = vmax.f32 %v7031, 0.0
      %v7312 = vmax.f32 %v7033, 0.0
      %v7313 = vmax.f32 %v7037, 0.0
      %v7314 = vmax.f32 %v7039, 0.0
      %v7315 = vmax.f32 %v7041, 0.0
      %v7316 = vmax.f32 %v7043, 0.0
      %v7317 = vmax.f32 %v7047, 0.0
      %v7318 = vmax.f32 %v7049, 0.0
      %v7319 = vmax.f32 %v7051, 0.0
      %v7320 = vmax.f32 %v7053, 0.0
      %v7321 = vmax.f32 %v7057, 0.0
      %v7322 = vmax.f32 %v7059, 0.0
      %v7323 = vmax.f32 %v7061, 0.0
      %v7324 = vmax.f32 %v7063, 0.0
      %v7325 = vmax.f32 %v7067, 0.0
      %v7326 = vmax.f32 %v7069, 0.0
      %v7327 = vmax.f32 %v7071, 0.0
      %v7328 = vmax.f32 %v7073, 0.0
      %v7329 = vmax.f32 %v7077, 0.0
      %v7330 = vmax.f32 %v7079, 0.0
      %v7331 = vmax.f32 %v7081, 0.0
      %v7332 = vmax.f32 %v7083, 0.0
      %v7333 = vmax.f32 %v7087, 0.0
      %v7334 = vmax.f32 %v7089, 0.0
      %v7335 = vmax.f32 %v7091, 0.0
      %v7336 = vmax.f32 %v7093, 0.0
      %v7337 = vmax.f32 %v7097, 0.0
      %v7338 = vmax.f32 %v7099, 0.0
      %v7339 = vmax.f32 %v7101, 0.0
      %v7340 = vmax.f32 %v7103, 0.0
      %v7341 = vmax.f32 %v7107, 0.0
      %v7342 = vmax.f32 %v7109, 0.0
      %v7343 = vmax.f32 %v7111, 0.0
      %v7344 = vmax.f32 %v7113, 0.0
      %v7345 = vmax.f32 %v7117, 0.0
      %v7346 = vmax.f32 %v7119, 0.0
      %v7347 = vmax.f32 %v7121, 0.0
      %v7348 = vmax.f32 %v7123, 0.0
      %v7349 = vmax.f32 %v7127, 0.0
      %v7350 = vmax.f32 %v7129, 0.0
      %v7351 = vmax.f32 %v7131, 0.0
      %v7352 = vmax.f32 %v7133, 0.0
      %v7353 = vmax.f32 %v7137, 0.0
      %v7354 = vmax.f32 %v7139, 0.0
      %v7355 = vmax.f32 %v7141, 0.0
      %v7356 = vmax.f32 %v7143, 0.0
      %v7357 = vmax.f32 %v7147, 0.0
      %v7358 = vmax.f32 %v7149, 0.0
      %v7359 = vmax.f32 %v7151, 0.0
      %v7360 = vmax.f32 %v7153, 0.0
      %v7361 = vmax.f32 %v7157, 0.0
      %v7362 = vmax.f32 %v7159, 0.0
      %v7363 = vmax.f32 %v7161, 0.0
      %v7364 = vmax.f32 %v7163, 0.0
      %v7365 = vmax.f32 %v7167, 0.0
      %v7366 = vmax.f32 %v7169, 0.0
      %v7367 = vmax.f32 %v7171, 0.0
      %v7368 = vmax.f32 %v7173, 0.0
      %v7369 = vmax.f32 %v7177, 0.0
      %v7370 = vmax.f32 %v7179, 0.0
      %v7371 = vmax.f32 %v7181, 0.0
      %v7372 = vmax.f32 %v7183, 0.0
      %v7373 = vmax.f32 %v7187, 0.0
      %v7374 = vmax.f32 %v7189, 0.0
      %v7375 = vmax.f32 %v7191, 0.0
      %v7376 = vmax.f32 %v7193, 0.0
      %v7377 = vmax.f32 %v7197, 0.0
      %v7378 = vmax.f32 %v7199, 0.0
      %v7379 = vmax.f32 %v7201, 0.0
      %v7380 = vmax.f32 %v7203, 0.0
      %v7381 = vmax.f32 %v7207, 0.0
      %v7382 = vmax.f32 %v7209, 0.0
      %v7383 = vmax.f32 %v7211, 0.0
      %v7384 = vmax.f32 %v7213, 0.0
      %v7385 = vmax.f32 %v7217, 0.0
      %v7386 = vmax.f32 %v7219, 0.0
      %v7387 = vmax.f32 %v7221, 0.0
      %v7388 = vmax.f32 %v7223, 0.0
      %v7389 = vmax.f32 %v7227, 0.0
      %v7390 = vmax.f32 %v7229, 0.0
      %v7391 = vmax.f32 %v7231, 0.0
      %v7392 = vmax.f32 %v7233, 0.0
      %v7393 = vmax.f32 %v7237, 0.0
      %v7394 = vmax.f32 %v7239, 0.0
      %v7395 = vmax.f32 %v7241, 0.0
      %v7396 = vmax.f32 %v7243, 0.0
      %v7397 = vmax.f32 %v7247, 0.0
      %v7398 = vmax.f32 %v7249, 0.0
      %v7399 = vmax.f32 %v7251, 0.0
      %v7400 = vmax.f32 %v7253, 0.0
      %v7401 = vmax.f32 %v7257, 0.0
      %v7402 = vmax.f32 %v7259, 0.0
      %v7403 = vmax.f32 %v7261, 0.0
      %v7404 = vmax.f32 %v7263, 0.0
      %v7405 = vmax.f32 %v7267, 0.0
      %v7406 = vmax.f32 %v7269, 0.0
      %v7407 = vmax.f32 %v7271, 0.0
      %v7408 = vmax.f32 %v7273, 0.0
      %v7409 = vmax.f32 %v7277, 0.0
      %v7410 = vmax.f32 %v7279, 0.0
      %v7411 = vmax.f32 %v7281, 0.0
      %v7412 = vmax.f32 %v7283, 0.0
      %v7413 = vpack.c.bf16 %v7287, %v7285
      %v7414 = vpack.c.bf16 %v7288, %v7286
      %v7415 = vpack.c.bf16 %v7291, %v7289
      %v7416 = vpack.c.bf16 %v7292, %v7290
      %v7417 = vpack.c.bf16 %v7295, %v7293
      %v7418 = vpack.c.bf16 %v7296, %v7294
      %v7419 = vpack.c.bf16 %v7299, %v7297
      %v7420 = vpack.c.bf16 %v7300, %v7298
      %v7421 = vpack.c.bf16 %v7303, %v7301
      %v7422 = vpack.c.bf16 %v7304, %v7302
      %v7423 = vpack.c.bf16 %v7307, %v7305
      %v7424 = vpack.c.bf16 %v7308, %v7306
      %v7425 = vpack.c.bf16 %v7311, %v7309
      %v7426 = vpack.c.bf16 %v7312, %v7310
      %v7427 = vpack.c.bf16 %v7315, %v7313
      %v7428 = vpack.c.bf16 %v7316, %v7314
      %v7429 = vpack.c.bf16 %v7319, %v7317
      %v7430 = vpack.c.bf16 %v7320, %v7318
      %v7431 = vpack.c.bf16 %v7323, %v7321
      %v7432 = vpack.c.bf16 %v7324, %v7322
      %v7433 = vpack.c.bf16 %v7327, %v7325
      %v7434 = vpack.c.bf16 %v7328, %v7326
      %v7435 = vpack.c.bf16 %v7331, %v7329
      %v7436 = vpack.c.bf16 %v7332, %v7330
      %v7437 = vpack.c.bf16 %v7335, %v7333
      %v7438 = vpack.c.bf16 %v7336, %v7334
      %v7439 = vpack.c.bf16 %v7339, %v7337
      %v7440 = vpack.c.bf16 %v7340, %v7338
      %v7441 = vpack.c.bf16 %v7343, %v7341
      %v7442 = vpack.c.bf16 %v7344, %v7342
      %v7443 = vpack.c.bf16 %v7347, %v7345
      %v7444 = vpack.c.bf16 %v7348, %v7346
      %v7445 = vpack.c.bf16 %v7351, %v7349
      %v7446 = vpack.c.bf16 %v7352, %v7350
      %v7447 = vpack.c.bf16 %v7355, %v7353
      %v7448 = vpack.c.bf16 %v7356, %v7354
      %v7449 = vpack.c.bf16 %v7359, %v7357
      %v7450 = vpack.c.bf16 %v7360, %v7358
      %v7451 = vpack.c.bf16 %v7363, %v7361
      %v7452 = vpack.c.bf16 %v7364, %v7362
      %v7453 = vpack.c.bf16 %v7367, %v7365
      %v7454 = vpack.c.bf16 %v7368, %v7366
      %v7455 = vpack.c.bf16 %v7371, %v7369
      %v7456 = vpack.c.bf16 %v7372, %v7370
      %v7457 = vpack.c.bf16 %v7375, %v7373
      %v7458 = vpack.c.bf16 %v7376, %v7374
      %v7459 = vpack.c.bf16 %v7379, %v7377
      %v7460 = vpack.c.bf16 %v7380, %v7378
      %v7461 = vpack.c.bf16 %v7383, %v7381
      %v7462 = vpack.c.bf16 %v7384, %v7382
      %v7463 = vpack.c.bf16 %v7387, %v7385
      %v7464 = vpack.c.bf16 %v7388, %v7386
      %v7465 = vpack.c.bf16 %v7391, %v7389
      %v7466 = vpack.c.bf16 %v7392, %v7390
      %v7467 = vpack.c.bf16 %v7395, %v7393
      %v7468 = vpack.c.bf16 %v7396, %v7394
      %v7469 = vpack.c.bf16 %v7399, %v7397
      %v7470 = vpack.c.bf16 %v7400, %v7398
      %v7471 = vpack.c.bf16 %v7403, %v7401
      %v7472 = vpack.c.bf16 %v7404, %v7402
      %v7473 = vpack.c.bf16 %v7407, %v7405
      %v7474 = vpack.c.bf16 %v7408, %v7406
      %v7475 = vpack.c.bf16 %v7411, %v7409
      %v7476 = vpack.c.bf16 %v7412, %v7410
      %s7477 = scalar_lea.vmem %s2, 1536
      %v7478 = vld [vmem:[%s7477] sm:$0xff]
      %v7479 = vld [vmem:[%s7477 + $0x8] sm:$0xff]
      %v7480 = vld [vmem:[%s7477 + $0x10] sm:$0xff]
      %v7481 = vld [vmem:[%s7477 + $0x18] sm:$0xff]
      %v7482 = vld [vmem:[%s7477 + $0x20] sm:$0xff]
      %v7483 = vld [vmem:[%s7477 + $0x28] sm:$0xff]
      %v7484 = vld [vmem:[%s7477 + $0x30] sm:$0xff]
      %v7485 = vld [vmem:[%s7477 + $0x38] sm:$0xff]
      %v7486 = vld [vmem:[%s7477 + $0x40] sm:$0xff]
      %v7487 = vld [vmem:[%s7477 + $0x48] sm:$0xff]
      %v7488 = vld [vmem:[%s7477 + $0x50] sm:$0xff]
      %v7489 = vld [vmem:[%s7477 + $0x58] sm:$0xff]
      %v7490 = vld [vmem:[%s7477 + $0x60] sm:$0xff]
      %v7491 = vld [vmem:[%s7477 + $0x68] sm:$0xff]
      %v7492 = vld [vmem:[%s7477 + $0x70] sm:$0xff]
      %v7493 = vld [vmem:[%s7477 + $0x78] sm:$0xff]
      %v7494 = vld [vmem:[%s7477 + $0x80] sm:$0xff]
      %v7495 = vld [vmem:[%s7477 + $0x88] sm:$0xff]
      %v7496 = vld [vmem:[%s7477 + $0x90] sm:$0xff]
      %v7497 = vld [vmem:[%s7477 + $0x98] sm:$0xff]
      %v7498 = vld [vmem:[%s7477 + $0xa0] sm:$0xff]
      %v7499 = vld [vmem:[%s7477 + $0xa8] sm:$0xff]
      %v7500 = vld [vmem:[%s7477 + $0xb0] sm:$0xff]
      %v7501 = vld [vmem:[%s7477 + $0xb8] sm:$0xff]
      %v7502 = vld [vmem:[%s7477 + $0xc0] sm:$0xff]
      %v7503 = vld [vmem:[%s7477 + $0xc8] sm:$0xff]
      %v7504 = vld [vmem:[%s7477 + $0xd0] sm:$0xff]
      %v7505 = vld [vmem:[%s7477 + $0xd8] sm:$0xff]
      %v7506 = vld [vmem:[%s7477 + $0xe0] sm:$0xff]
      %v7507 = vld [vmem:[%s7477 + $0xe8] sm:$0xff]
      %v7508 = vld [vmem:[%s7477 + $0xf0] sm:$0xff]
      %v7509 = vld [vmem:[%s7477 + $0xf8] sm:$0xff]
      %v7510 = vlaneseq
      %v7511 = vshrl.u32 %v7510, 7
      %v7512 = vsub.s32 7, %v7511
      %v7513 = vrot.slane %v322, %v7512
      %v7514 = vlaneseq
      %v7515 = vshrl.u32 %v7514, 7
      %v7516 = vsub.s32 7, %v7515
      %v7517 = vrot.slane %v323, %v7516
      %v7550 = vunpack.c.l.b16 %v7478
      %v7551 = vunpack.c.h.b16 %v7478
      %v7552 = vunpack.c.l.b16 %v7479
      %v7553 = vunpack.c.h.b16 %v7479
      %v7554 = vunpack.c.l.b16 %v7480
      %v7555 = vunpack.c.h.b16 %v7480
      %v7556 = vunpack.c.l.b16 %v7481
      %v7557 = vunpack.c.h.b16 %v7481
      %v7558 = vunpack.c.l.b16 %v7482
      %v7559 = vunpack.c.h.b16 %v7482
      %v7560 = vunpack.c.l.b16 %v7483
      %v7561 = vunpack.c.h.b16 %v7483
      %v7562 = vunpack.c.l.b16 %v7484
      %v7563 = vunpack.c.h.b16 %v7484
      %v7564 = vunpack.c.l.b16 %v7485
      %v7565 = vunpack.c.h.b16 %v7485
      %v7566 = vunpack.c.l.b16 %v7486
      %v7567 = vunpack.c.h.b16 %v7486
      %v7568 = vunpack.c.l.b16 %v7487
      %v7569 = vunpack.c.h.b16 %v7487
      %v7570 = vunpack.c.l.b16 %v7488
      %v7571 = vunpack.c.h.b16 %v7488
      %v7572 = vunpack.c.l.b16 %v7489
      %v7573 = vunpack.c.h.b16 %v7489
      %v7574 = vunpack.c.l.b16 %v7490
      %v7575 = vunpack.c.h.b16 %v7490
      %v7576 = vunpack.c.l.b16 %v7491
      %v7577 = vunpack.c.h.b16 %v7491
      %v7578 = vunpack.c.l.b16 %v7492
      %v7579 = vunpack.c.h.b16 %v7492
      %v7580 = vunpack.c.l.b16 %v7493
      %v7581 = vunpack.c.h.b16 %v7493
      %v7582 = vunpack.c.l.b16 %v7494
      %v7583 = vunpack.c.h.b16 %v7494
      %v7584 = vunpack.c.l.b16 %v7495
      %v7585 = vunpack.c.h.b16 %v7495
      %v7586 = vunpack.c.l.b16 %v7496
      %v7587 = vunpack.c.h.b16 %v7496
      %v7588 = vunpack.c.l.b16 %v7497
      %v7589 = vunpack.c.h.b16 %v7497
      %v7590 = vunpack.c.l.b16 %v7498
      %v7591 = vunpack.c.h.b16 %v7498
      %v7592 = vunpack.c.l.b16 %v7499
      %v7593 = vunpack.c.h.b16 %v7499
      %v7594 = vunpack.c.l.b16 %v7500
      %v7595 = vunpack.c.h.b16 %v7500
      %v7596 = vunpack.c.l.b16 %v7501
      %v7597 = vunpack.c.h.b16 %v7501
      %v7598 = vunpack.c.l.b16 %v7502
      %v7599 = vunpack.c.h.b16 %v7502
      %v7600 = vunpack.c.l.b16 %v7503
      %v7601 = vunpack.c.h.b16 %v7503
      %v7602 = vunpack.c.l.b16 %v7504
      %v7603 = vunpack.c.h.b16 %v7504
      %v7604 = vunpack.c.l.b16 %v7505
      %v7605 = vunpack.c.h.b16 %v7505
      %v7606 = vunpack.c.l.b16 %v7506
      %v7607 = vunpack.c.h.b16 %v7506
      %v7608 = vunpack.c.l.b16 %v7507
      %v7609 = vunpack.c.h.b16 %v7507
      %v7610 = vunpack.c.l.b16 %v7508
      %v7611 = vunpack.c.h.b16 %v7508
      %v7612 = vunpack.c.l.b16 %v7509
      %v7613 = vunpack.c.h.b16 %v7509
      %v7614 = vpack.c.b16 %v7552, %v7550
      %v7615 = vpack.c.b16 %v7553, %v7551
      %v7616 = vpack.c.b16 %v7556, %v7554
      %v7617 = vpack.c.b16 %v7557, %v7555
      %v7618 = vpack.c.b16 %v7560, %v7558
      %v7619 = vpack.c.b16 %v7561, %v7559
      %v7620 = vpack.c.b16 %v7564, %v7562
      %v7621 = vpack.c.b16 %v7565, %v7563
      %v7622 = vpack.c.b16 %v7568, %v7566
      %v7623 = vpack.c.b16 %v7569, %v7567
      %v7624 = vpack.c.b16 %v7572, %v7570
      %v7625 = vpack.c.b16 %v7573, %v7571
      %v7626 = vpack.c.b16 %v7576, %v7574
      %v7627 = vpack.c.b16 %v7577, %v7575
      %v7628 = vpack.c.b16 %v7580, %v7578
      %v7629 = vpack.c.b16 %v7581, %v7579
      %v7630 = vpack.c.b16 %v7584, %v7582
      %v7631 = vpack.c.b16 %v7585, %v7583
      %v7632 = vpack.c.b16 %v7588, %v7586
      %v7633 = vpack.c.b16 %v7589, %v7587
      %v7634 = vpack.c.b16 %v7592, %v7590
      %v7635 = vpack.c.b16 %v7593, %v7591
      %v7636 = vpack.c.b16 %v7596, %v7594
      %v7637 = vpack.c.b16 %v7597, %v7595
      %v7638 = vpack.c.b16 %v7600, %v7598
      %v7639 = vpack.c.b16 %v7601, %v7599
      %v7640 = vpack.c.b16 %v7604, %v7602
      %v7641 = vpack.c.b16 %v7605, %v7603
      %v7642 = vpack.c.b16 %v7608, %v7606
      %v7643 = vpack.c.b16 %v7609, %v7607
      %v7644 = vpack.c.b16 %v7612, %v7610
      %v7645 = vpack.c.b16 %v7613, %v7611
      %7678 = vmatprep.subr.bf16.mxu0 %v7629
      %7679 = vmatpush1.bf16.msra.mxu0 %v7628
      %7680 = vmatprep.subr.bf16.mxu0 %v7627
      %7681 = vmatpush1.bf16.msra.mxu0 %v7626
      %7682 = vmatprep.subr.bf16.mxu0 %v7625
      %7683 = vmatpush1.bf16.msra.mxu0 %v7624
      %7684 = vmatprep.subr.bf16.mxu0 %v7623
      %7685 = vmatpush1.bf16.msra.mxu0 %v7622
      %7686 = vmatprep.subr.bf16.mxu0 %v7621
      %7687 = vmatpush1.bf16.msra.mxu0 %v7620
      %7688 = vmatprep.subr.bf16.mxu0 %v7619
      %7689 = vmatpush1.bf16.msra.mxu0 %v7618
      %7690 = vmatprep.subr.bf16.mxu0 %v7617
      %7691 = vmatpush1.bf16.msra.mxu0 %v7616
      %7692 = vmatprep.subr.bf16.mxu0 %v7615
      %7693 = vmatpush1.bf16.msra.mxu0 %v7614
      %7694 = vmatprep.subr.bf16.mxu0 %v7645
      %7695 = vmatpush2.bf16.msra.mxu0 %v7644
      %7696 = vmatprep.subr.bf16.mxu0 %v7643
      %7697 = vmatpush2.bf16.msra.mxu0 %v7642
      %7698 = vmatprep.subr.bf16.mxu0 %v7641
      %7699 = vmatpush2.bf16.msra.mxu0 %v7640
      %7700 = vmatprep.subr.bf16.mxu0 %v7639
      %7701 = vmatpush2.bf16.msra.mxu0 %v7638
      %7702 = vmatprep.subr.bf16.mxu0 %v7637
      %7703 = vmatpush2.bf16.msra.mxu0 %v7636
      %7704 = vmatprep.subr.bf16.mxu0 %v7635
      %7705 = vmatpush2.bf16.msra.mxu0 %v7634
      %7706 = vmatprep.subr.bf16.mxu0 %v7633
      %7707 = vmatpush2.bf16.msra.mxu0 %v7632
      %7708 = vmatprep.subr.bf16.mxu0 %v7631
      %7709 = vmatpush2.bf16.msra.mxu0 %v7630
      %7710 = vmatprep.mubr.bf16.mxu0 %v7414
      %7711 = vmatmul.mubr.bf16.gmra.mxu0 %v7413
      %v7712 = vpop.f32.mrf.mxu0
      %v7713 = vadd.f32 %v7513, %v7712
      %v7714 = vpop.f32.mrf.mxu0
      %v7715 = vadd.f32 %v7517, %v7714
      %v7716 = vpop.f32.mrf.mxu0
      %v7717 = vadd.f32 %v7513, %v7716
      %v7718 = vpop.f32.mrf.mxu0
      %v7719 = vadd.f32 %v7517, %v7718
      %7720 = vmatprep.mubr.bf16.mxu0 %v7416
      %7721 = vmatmul.mubr.bf16.gmra.mxu0 %v7415
      %v7722 = vpop.f32.mrf.mxu0
      %v7723 = vadd.f32 %v7513, %v7722
      %v7724 = vpop.f32.mrf.mxu0
      %v7725 = vadd.f32 %v7517, %v7724
      %v7726 = vpop.f32.mrf.mxu0
      %v7727 = vadd.f32 %v7513, %v7726
      %v7728 = vpop.f32.mrf.mxu0
      %v7729 = vadd.f32 %v7517, %v7728
      %7730 = vmatprep.mubr.bf16.mxu0 %v7418
      %7731 = vmatmul.mubr.bf16.gmra.mxu0 %v7417
      %v7732 = vpop.f32.mrf.mxu0
      %v7733 = vadd.f32 %v7513, %v7732
      %v7734 = vpop.f32.mrf.mxu0
      %v7735 = vadd.f32 %v7517, %v7734
      %v7736 = vpop.f32.mrf.mxu0
      %v7737 = vadd.f32 %v7513, %v7736
      %v7738 = vpop.f32.mrf.mxu0
      %v7739 = vadd.f32 %v7517, %v7738
      %7740 = vmatprep.mubr.bf16.mxu0 %v7420
      %7741 = vmatmul.mubr.bf16.gmra.mxu0 %v7419
      %v7742 = vpop.f32.mrf.mxu0
      %v7743 = vadd.f32 %v7513, %v7742
      %v7744 = vpop.f32.mrf.mxu0
      %v7745 = vadd.f32 %v7517, %v7744
      %v7746 = vpop.f32.mrf.mxu0
      %v7747 = vadd.f32 %v7513, %v7746
      %v7748 = vpop.f32.mrf.mxu0
      %v7749 = vadd.f32 %v7517, %v7748
      %7750 = vmatprep.mubr.bf16.mxu0 %v7422
      %7751 = vmatmul.mubr.bf16.gmra.mxu0 %v7421
      %v7752 = vpop.f32.mrf.mxu0
      %v7753 = vadd.f32 %v7513, %v7752
      %v7754 = vpop.f32.mrf.mxu0
      %v7755 = vadd.f32 %v7517, %v7754
      %v7756 = vpop.f32.mrf.mxu0
      %v7757 = vadd.f32 %v7513, %v7756
      %v7758 = vpop.f32.mrf.mxu0
      %v7759 = vadd.f32 %v7517, %v7758
      %7760 = vmatprep.mubr.bf16.mxu0 %v7424
      %7761 = vmatmul.mubr.bf16.gmra.mxu0 %v7423
      %v7762 = vpop.f32.mrf.mxu0
      %v7763 = vadd.f32 %v7513, %v7762
      %v7764 = vpop.f32.mrf.mxu0
      %v7765 = vadd.f32 %v7517, %v7764
      %v7766 = vpop.f32.mrf.mxu0
      %v7767 = vadd.f32 %v7513, %v7766
      %v7768 = vpop.f32.mrf.mxu0
      %v7769 = vadd.f32 %v7517, %v7768
      %7770 = vmatprep.mubr.bf16.mxu0 %v7426
      %7771 = vmatmul.mubr.bf16.gmra.mxu0 %v7425
      %v7772 = vpop.f32.mrf.mxu0
      %v7773 = vadd.f32 %v7513, %v7772
      %v7774 = vpop.f32.mrf.mxu0
      %v7775 = vadd.f32 %v7517, %v7774
      %v7776 = vpop.f32.mrf.mxu0
      %v7777 = vadd.f32 %v7513, %v7776
      %v7778 = vpop.f32.mrf.mxu0
      %v7779 = vadd.f32 %v7517, %v7778
      %7780 = vmatprep.mubr.bf16.mxu0 %v7428
      %7781 = vmatmul.mubr.bf16.gmra.mxu0 %v7427
      %v7782 = vpop.f32.mrf.mxu0
      %v7783 = vadd.f32 %v7513, %v7782
      %v7784 = vpop.f32.mrf.mxu0
      %v7785 = vadd.f32 %v7517, %v7784
      %v7786 = vpop.f32.mrf.mxu0
      %v7787 = vadd.f32 %v7513, %v7786
      %v7788 = vpop.f32.mrf.mxu0
      %v7789 = vadd.f32 %v7517, %v7788
      %7790 = vmatprep.mubr.bf16.mxu0 %v7430
      %7791 = vmatmul.mubr.bf16.gmra.mxu0 %v7429
      %v7792 = vpop.f32.mrf.mxu0
      %v7793 = vadd.f32 %v7513, %v7792
      %v7794 = vpop.f32.mrf.mxu0
      %v7795 = vadd.f32 %v7517, %v7794
      %v7796 = vpop.f32.mrf.mxu0
      %v7797 = vadd.f32 %v7513, %v7796
      %v7798 = vpop.f32.mrf.mxu0
      %v7799 = vadd.f32 %v7517, %v7798
      %7800 = vmatprep.mubr.bf16.mxu0 %v7432
      %7801 = vmatmul.mubr.bf16.gmra.mxu0 %v7431
      %v7802 = vpop.f32.mrf.mxu0
      %v7803 = vadd.f32 %v7513, %v7802
      %v7804 = vpop.f32.mrf.mxu0
      %v7805 = vadd.f32 %v7517, %v7804
      %v7806 = vpop.f32.mrf.mxu0
      %v7807 = vadd.f32 %v7513, %v7806
      %v7808 = vpop.f32.mrf.mxu0
      %v7809 = vadd.f32 %v7517, %v7808
      %7810 = vmatprep.mubr.bf16.mxu0 %v7434
      %7811 = vmatmul.mubr.bf16.gmra.mxu0 %v7433
      %v7812 = vpop.f32.mrf.mxu0
      %v7813 = vadd.f32 %v7513, %v7812
      %v7814 = vpop.f32.mrf.mxu0
      %v7815 = vadd.f32 %v7517, %v7814
      %v7816 = vpop.f32.mrf.mxu0
      %v7817 = vadd.f32 %v7513, %v7816
      %v7818 = vpop.f32.mrf.mxu0
      %v7819 = vadd.f32 %v7517, %v7818
      %7820 = vmatprep.mubr.bf16.mxu0 %v7436
      %7821 = vmatmul.mubr.bf16.gmra.mxu0 %v7435
      %v7822 = vpop.f32.mrf.mxu0
      %v7823 = vadd.f32 %v7513, %v7822
      %v7824 = vpop.f32.mrf.mxu0
      %v7825 = vadd.f32 %v7517, %v7824
      %v7826 = vpop.f32.mrf.mxu0
      %v7827 = vadd.f32 %v7513, %v7826
      %v7828 = vpop.f32.mrf.mxu0
      %v7829 = vadd.f32 %v7517, %v7828
      %7830 = vmatprep.mubr.bf16.mxu0 %v7438
      %7831 = vmatmul.mubr.bf16.gmra.mxu0 %v7437
      %v7832 = vpop.f32.mrf.mxu0
      %v7833 = vadd.f32 %v7513, %v7832
      %v7834 = vpop.f32.mrf.mxu0
      %v7835 = vadd.f32 %v7517, %v7834
      %v7836 = vpop.f32.mrf.mxu0
      %v7837 = vadd.f32 %v7513, %v7836
      %v7838 = vpop.f32.mrf.mxu0
      %v7839 = vadd.f32 %v7517, %v7838
      %7840 = vmatprep.mubr.bf16.mxu0 %v7440
      %7841 = vmatmul.mubr.bf16.gmra.mxu0 %v7439
      %v7842 = vpop.f32.mrf.mxu0
      %v7843 = vadd.f32 %v7513, %v7842
      %v7844 = vpop.f32.mrf.mxu0
      %v7845 = vadd.f32 %v7517, %v7844
      %v7846 = vpop.f32.mrf.mxu0
      %v7847 = vadd.f32 %v7513, %v7846
      %v7848 = vpop.f32.mrf.mxu0
      %v7849 = vadd.f32 %v7517, %v7848
      %7850 = vmatprep.mubr.bf16.mxu0 %v7442
      %7851 = vmatmul.mubr.bf16.gmra.mxu0 %v7441
      %v7852 = vpop.f32.mrf.mxu0
      %v7853 = vadd.f32 %v7513, %v7852
      %v7854 = vpop.f32.mrf.mxu0
      %v7855 = vadd.f32 %v7517, %v7854
      %v7856 = vpop.f32.mrf.mxu0
      %v7857 = vadd.f32 %v7513, %v7856
      %v7858 = vpop.f32.mrf.mxu0
      %v7859 = vadd.f32 %v7517, %v7858
      %7860 = vmatprep.mubr.bf16.mxu0 %v7444
      %7861 = vmatmul.mubr.bf16.gmra.mxu0 %v7443
      %v7862 = vpop.f32.mrf.mxu0
      %v7863 = vadd.f32 %v7513, %v7862
      %v7864 = vpop.f32.mrf.mxu0
      %v7865 = vadd.f32 %v7517, %v7864
      %v7866 = vpop.f32.mrf.mxu0
      %v7867 = vadd.f32 %v7513, %v7866
      %v7868 = vpop.f32.mrf.mxu0
      %v7869 = vadd.f32 %v7517, %v7868
      %7870 = vmatprep.mubr.bf16.mxu0 %v7446
      %7871 = vmatmul.mubr.bf16.gmra.mxu0 %v7445
      %v7872 = vpop.f32.mrf.mxu0
      %v7873 = vadd.f32 %v7513, %v7872
      %v7874 = vpop.f32.mrf.mxu0
      %v7875 = vadd.f32 %v7517, %v7874
      %v7876 = vpop.f32.mrf.mxu0
      %v7877 = vadd.f32 %v7513, %v7876
      %v7878 = vpop.f32.mrf.mxu0
      %v7879 = vadd.f32 %v7517, %v7878
      %7880 = vmatprep.mubr.bf16.mxu0 %v7448
      %7881 = vmatmul.mubr.bf16.gmra.mxu0 %v7447
      %v7882 = vpop.f32.mrf.mxu0
      %v7883 = vadd.f32 %v7513, %v7882
      %v7884 = vpop.f32.mrf.mxu0
      %v7885 = vadd.f32 %v7517, %v7884
      %v7886 = vpop.f32.mrf.mxu0
      %v7887 = vadd.f32 %v7513, %v7886
      %v7888 = vpop.f32.mrf.mxu0
      %v7889 = vadd.f32 %v7517, %v7888
      %7890 = vmatprep.mubr.bf16.mxu0 %v7450
      %7891 = vmatmul.mubr.bf16.gmra.mxu0 %v7449
      %v7892 = vpop.f32.mrf.mxu0
      %v7893 = vadd.f32 %v7513, %v7892
      %v7894 = vpop.f32.mrf.mxu0
      %v7895 = vadd.f32 %v7517, %v7894
      %v7896 = vpop.f32.mrf.mxu0
      %v7897 = vadd.f32 %v7513, %v7896
      %v7898 = vpop.f32.mrf.mxu0
      %v7899 = vadd.f32 %v7517, %v7898
      %7900 = vmatprep.mubr.bf16.mxu0 %v7452
      %7901 = vmatmul.mubr.bf16.gmra.mxu0 %v7451
      %v7902 = vpop.f32.mrf.mxu0
      %v7903 = vadd.f32 %v7513, %v7902
      %v7904 = vpop.f32.mrf.mxu0
      %v7905 = vadd.f32 %v7517, %v7904
      %v7906 = vpop.f32.mrf.mxu0
      %v7907 = vadd.f32 %v7513, %v7906
      %v7908 = vpop.f32.mrf.mxu0
      %v7909 = vadd.f32 %v7517, %v7908
      %7910 = vmatprep.mubr.bf16.mxu0 %v7454
      %7911 = vmatmul.mubr.bf16.gmra.mxu0 %v7453
      %v7912 = vpop.f32.mrf.mxu0
      %v7913 = vadd.f32 %v7513, %v7912
      %v7914 = vpop.f32.mrf.mxu0
      %v7915 = vadd.f32 %v7517, %v7914
      %v7916 = vpop.f32.mrf.mxu0
      %v7917 = vadd.f32 %v7513, %v7916
      %v7918 = vpop.f32.mrf.mxu0
      %v7919 = vadd.f32 %v7517, %v7918
      %7920 = vmatprep.mubr.bf16.mxu0 %v7456
      %7921 = vmatmul.mubr.bf16.gmra.mxu0 %v7455
      %v7922 = vpop.f32.mrf.mxu0
      %v7923 = vadd.f32 %v7513, %v7922
      %v7924 = vpop.f32.mrf.mxu0
      %v7925 = vadd.f32 %v7517, %v7924
      %v7926 = vpop.f32.mrf.mxu0
      %v7927 = vadd.f32 %v7513, %v7926
      %v7928 = vpop.f32.mrf.mxu0
      %v7929 = vadd.f32 %v7517, %v7928
      %7930 = vmatprep.mubr.bf16.mxu0 %v7458
      %7931 = vmatmul.mubr.bf16.gmra.mxu0 %v7457
      %v7932 = vpop.f32.mrf.mxu0
      %v7933 = vadd.f32 %v7513, %v7932
      %v7934 = vpop.f32.mrf.mxu0
      %v7935 = vadd.f32 %v7517, %v7934
      %v7936 = vpop.f32.mrf.mxu0
      %v7937 = vadd.f32 %v7513, %v7936
      %v7938 = vpop.f32.mrf.mxu0
      %v7939 = vadd.f32 %v7517, %v7938
      %7940 = vmatprep.mubr.bf16.mxu0 %v7460
      %7941 = vmatmul.mubr.bf16.gmra.mxu0 %v7459
      %v7942 = vpop.f32.mrf.mxu0
      %v7943 = vadd.f32 %v7513, %v7942
      %v7944 = vpop.f32.mrf.mxu0
      %v7945 = vadd.f32 %v7517, %v7944
      %v7946 = vpop.f32.mrf.mxu0
      %v7947 = vadd.f32 %v7513, %v7946
      %v7948 = vpop.f32.mrf.mxu0
      %v7949 = vadd.f32 %v7517, %v7948
      %7950 = vmatprep.mubr.bf16.mxu0 %v7462
      %7951 = vmatmul.mubr.bf16.gmra.mxu0 %v7461
      %v7952 = vpop.f32.mrf.mxu0
      %v7953 = vadd.f32 %v7513, %v7952
      %v7954 = vpop.f32.mrf.mxu0
      %v7955 = vadd.f32 %v7517, %v7954
      %v7956 = vpop.f32.mrf.mxu0
      %v7957 = vadd.f32 %v7513, %v7956
      %v7958 = vpop.f32.mrf.mxu0
      %v7959 = vadd.f32 %v7517, %v7958
      %7960 = vmatprep.mubr.bf16.mxu0 %v7464
      %7961 = vmatmul.mubr.bf16.gmra.mxu0 %v7463
      %v7962 = vpop.f32.mrf.mxu0
      %v7963 = vadd.f32 %v7513, %v7962
      %v7964 = vpop.f32.mrf.mxu0
      %v7965 = vadd.f32 %v7517, %v7964
      %v7966 = vpop.f32.mrf.mxu0
      %v7967 = vadd.f32 %v7513, %v7966
      %v7968 = vpop.f32.mrf.mxu0
      %v7969 = vadd.f32 %v7517, %v7968
      %7970 = vmatprep.mubr.bf16.mxu0 %v7466
      %7971 = vmatmul.mubr.bf16.gmra.mxu0 %v7465
      %v7972 = vpop.f32.mrf.mxu0
      %v7973 = vadd.f32 %v7513, %v7972
      %v7974 = vpop.f32.mrf.mxu0
      %v7975 = vadd.f32 %v7517, %v7974
      %v7976 = vpop.f32.mrf.mxu0
      %v7977 = vadd.f32 %v7513, %v7976
      %v7978 = vpop.f32.mrf.mxu0
      %v7979 = vadd.f32 %v7517, %v7978
      %7980 = vmatprep.mubr.bf16.mxu0 %v7468
      %7981 = vmatmul.mubr.bf16.gmra.mxu0 %v7467
      %v7982 = vpop.f32.mrf.mxu0
      %v7983 = vadd.f32 %v7513, %v7982
      %v7984 = vpop.f32.mrf.mxu0
      %v7985 = vadd.f32 %v7517, %v7984
      %v7986 = vpop.f32.mrf.mxu0
      %v7987 = vadd.f32 %v7513, %v7986
      %v7988 = vpop.f32.mrf.mxu0
      %v7989 = vadd.f32 %v7517, %v7988
      %7990 = vmatprep.mubr.bf16.mxu0 %v7470
      %7991 = vmatmul.mubr.bf16.gmra.mxu0 %v7469
      %v7992 = vpop.f32.mrf.mxu0
      %v7993 = vadd.f32 %v7513, %v7992
      %v7994 = vpop.f32.mrf.mxu0
      %v7995 = vadd.f32 %v7517, %v7994
      %v7996 = vpop.f32.mrf.mxu0
      %v7997 = vadd.f32 %v7513, %v7996
      %v7998 = vpop.f32.mrf.mxu0
      %v7999 = vadd.f32 %v7517, %v7998
      %8000 = vmatprep.mubr.bf16.mxu0 %v7472
      %8001 = vmatmul.mubr.bf16.gmra.mxu0 %v7471
      %v8002 = vpop.f32.mrf.mxu0
      %v8003 = vadd.f32 %v7513, %v8002
      %v8004 = vpop.f32.mrf.mxu0
      %v8005 = vadd.f32 %v7517, %v8004
      %v8006 = vpop.f32.mrf.mxu0
      %v8007 = vadd.f32 %v7513, %v8006
      %v8008 = vpop.f32.mrf.mxu0
      %v8009 = vadd.f32 %v7517, %v8008
      %8010 = vmatprep.mubr.bf16.mxu0 %v7474
      %8011 = vmatmul.mubr.bf16.gmra.mxu0 %v7473
      %v8012 = vpop.f32.mrf.mxu0
      %v8013 = vadd.f32 %v7513, %v8012
      %v8014 = vpop.f32.mrf.mxu0
      %v8015 = vadd.f32 %v7517, %v8014
      %v8016 = vpop.f32.mrf.mxu0
      %v8017 = vadd.f32 %v7513, %v8016
      %v8018 = vpop.f32.mrf.mxu0
      %v8019 = vadd.f32 %v7517, %v8018
      %8020 = vmatprep.mubr.bf16.mxu0 %v7476
      %8021 = vmatmul.mubr.bf16.gmra.mxu0 %v7475
      %v8022 = vpop.f32.mrf.mxu0
      %v8023 = vadd.f32 %v7513, %v8022
      %v8024 = vpop.f32.mrf.mxu0
      %v8025 = vadd.f32 %v7517, %v8024
      %v8026 = vpop.f32.mrf.mxu0
      %v8027 = vadd.f32 %v7513, %v8026
      %v8028 = vpop.f32.mrf.mxu0
      %v8029 = vadd.f32 %v7517, %v8028
      %8030 = vdwg.mxu0
      %v8031 = vmax.f32 %v7713, 0.0
      %v8032 = vmax.f32 %v7715, 0.0
      %v8033 = vmax.f32 %v7717, 0.0
      %v8034 = vmax.f32 %v7719, 0.0
      %v8035 = vmax.f32 %v7723, 0.0
      %v8036 = vmax.f32 %v7725, 0.0
      %v8037 = vmax.f32 %v7727, 0.0
      %v8038 = vmax.f32 %v7729, 0.0
      %v8039 = vmax.f32 %v7733, 0.0
      %v8040 = vmax.f32 %v7735, 0.0
      %v8041 = vmax.f32 %v7737, 0.0
      %v8042 = vmax.f32 %v7739, 0.0
      %v8043 = vmax.f32 %v7743, 0.0
      %v8044 = vmax.f32 %v7745, 0.0
      %v8045 = vmax.f32 %v7747, 0.0
      %v8046 = vmax.f32 %v7749, 0.0
      %v8047 = vmax.f32 %v7753, 0.0
      %v8048 = vmax.f32 %v7755, 0.0
      %v8049 = vmax.f32 %v7757, 0.0
      %v8050 = vmax.f32 %v7759, 0.0
      %v8051 = vmax.f32 %v7763, 0.0
      %v8052 = vmax.f32 %v7765, 0.0
      %v8053 = vmax.f32 %v7767, 0.0
      %v8054 = vmax.f32 %v7769, 0.0
      %v8055 = vmax.f32 %v7773, 0.0
      %v8056 = vmax.f32 %v7775, 0.0
      %v8057 = vmax.f32 %v7777, 0.0
      %v8058 = vmax.f32 %v7779, 0.0
      %v8059 = vmax.f32 %v7783, 0.0
      %v8060 = vmax.f32 %v7785, 0.0
      %v8061 = vmax.f32 %v7787, 0.0
      %v8062 = vmax.f32 %v7789, 0.0
      %v8063 = vmax.f32 %v7793, 0.0
      %v8064 = vmax.f32 %v7795, 0.0
      %v8065 = vmax.f32 %v7797, 0.0
      %v8066 = vmax.f32 %v7799, 0.0
      %v8067 = vmax.f32 %v7803, 0.0
      %v8068 = vmax.f32 %v7805, 0.0
      %v8069 = vmax.f32 %v7807, 0.0
      %v8070 = vmax.f32 %v7809, 0.0
      %v8071 = vmax.f32 %v7813, 0.0
      %v8072 = vmax.f32 %v7815, 0.0
      %v8073 = vmax.f32 %v7817, 0.0
      %v8074 = vmax.f32 %v7819, 0.0
      %v8075 = vmax.f32 %v7823, 0.0
      %v8076 = vmax.f32 %v7825, 0.0
      %v8077 = vmax.f32 %v7827, 0.0
      %v8078 = vmax.f32 %v7829, 0.0
      %v8079 = vmax.f32 %v7833, 0.0
      %v8080 = vmax.f32 %v7835, 0.0
      %v8081 = vmax.f32 %v7837, 0.0
      %v8082 = vmax.f32 %v7839, 0.0
      %v8083 = vmax.f32 %v7843, 0.0
      %v8084 = vmax.f32 %v7845, 0.0
      %v8085 = vmax.f32 %v7847, 0.0
      %v8086 = vmax.f32 %v7849, 0.0
      %v8087 = vmax.f32 %v7853, 0.0
      %v8088 = vmax.f32 %v7855, 0.0
      %v8089 = vmax.f32 %v7857, 0.0
      %v8090 = vmax.f32 %v7859, 0.0
      %v8091 = vmax.f32 %v7863, 0.0
      %v8092 = vmax.f32 %v7865, 0.0
      %v8093 = vmax.f32 %v7867, 0.0
      %v8094 = vmax.f32 %v7869, 0.0
      %v8095 = vmax.f32 %v7873, 0.0
      %v8096 = vmax.f32 %v7875, 0.0
      %v8097 = vmax.f32 %v7877, 0.0
      %v8098 = vmax.f32 %v7879, 0.0
      %v8099 = vmax.f32 %v7883, 0.0
      %v8100 = vmax.f32 %v7885, 0.0
      %v8101 = vmax.f32 %v7887, 0.0
      %v8102 = vmax.f32 %v7889, 0.0
      %v8103 = vmax.f32 %v7893, 0.0
      %v8104 = vmax.f32 %v7895, 0.0
      %v8105 = vmax.f32 %v7897, 0.0
      %v8106 = vmax.f32 %v7899, 0.0
      %v8107 = vmax.f32 %v7903, 0.0
      %v8108 = vmax.f32 %v7905, 0.0
      %v8109 = vmax.f32 %v7907, 0.0
      %v8110 = vmax.f32 %v7909, 0.0
      %v8111 = vmax.f32 %v7913, 0.0
      %v8112 = vmax.f32 %v7915, 0.0
      %v8113 = vmax.f32 %v7917, 0.0
      %v8114 = vmax.f32 %v7919, 0.0
      %v8115 = vmax.f32 %v7923, 0.0
      %v8116 = vmax.f32 %v7925, 0.0
      %v8117 = vmax.f32 %v7927, 0.0
      %v8118 = vmax.f32 %v7929, 0.0
      %v8119 = vmax.f32 %v7933, 0.0
      %v8120 = vmax.f32 %v7935, 0.0
      %v8121 = vmax.f32 %v7937, 0.0
      %v8122 = vmax.f32 %v7939, 0.0
      %v8123 = vmax.f32 %v7943, 0.0
      %v8124 = vmax.f32 %v7945, 0.0
      %v8125 = vmax.f32 %v7947, 0.0
      %v8126 = vmax.f32 %v7949, 0.0
      %v8127 = vmax.f32 %v7953, 0.0
      %v8128 = vmax.f32 %v7955, 0.0
      %v8129 = vmax.f32 %v7957, 0.0
      %v8130 = vmax.f32 %v7959, 0.0
      %v8131 = vmax.f32 %v7963, 0.0
      %v8132 = vmax.f32 %v7965, 0.0
      %v8133 = vmax.f32 %v7967, 0.0
      %v8134 = vmax.f32 %v7969, 0.0
      %v8135 = vmax.f32 %v7973, 0.0
      %v8136 = vmax.f32 %v7975, 0.0
      %v8137 = vmax.f32 %v7977, 0.0
      %v8138 = vmax.f32 %v7979, 0.0
      %v8139 = vmax.f32 %v7983, 0.0
      %v8140 = vmax.f32 %v7985, 0.0
      %v8141 = vmax.f32 %v7987, 0.0
      %v8142 = vmax.f32 %v7989, 0.0
      %v8143 = vmax.f32 %v7993, 0.0
      %v8144 = vmax.f32 %v7995, 0.0
      %v8145 = vmax.f32 %v7997, 0.0
      %v8146 = vmax.f32 %v7999, 0.0
      %v8147 = vmax.f32 %v8003, 0.0
      %v8148 = vmax.f32 %v8005, 0.0
      %v8149 = vmax.f32 %v8007, 0.0
      %v8150 = vmax.f32 %v8009, 0.0
      %v8151 = vmax.f32 %v8013, 0.0
      %v8152 = vmax.f32 %v8015, 0.0
      %v8153 = vmax.f32 %v8017, 0.0
      %v8154 = vmax.f32 %v8019, 0.0
      %v8155 = vmax.f32 %v8023, 0.0
      %v8156 = vmax.f32 %v8025, 0.0
      %v8157 = vmax.f32 %v8027, 0.0
      %v8158 = vmax.f32 %v8029, 0.0
      %v8159 = vpack.c.bf16 %v8033, %v8031
      %v8160 = vpack.c.bf16 %v8034, %v8032
      %v8161 = vpack.c.bf16 %v8037, %v8035
      %v8162 = vpack.c.bf16 %v8038, %v8036
      %v8163 = vpack.c.bf16 %v8041, %v8039
      %v8164 = vpack.c.bf16 %v8042, %v8040
      %v8165 = vpack.c.bf16 %v8045, %v8043
      %v8166 = vpack.c.bf16 %v8046, %v8044
      %v8167 = vpack.c.bf16 %v8049, %v8047
      %v8168 = vpack.c.bf16 %v8050, %v8048
      %v8169 = vpack.c.bf16 %v8053, %v8051
      %v8170 = vpack.c.bf16 %v8054, %v8052
      %v8171 = vpack.c.bf16 %v8057, %v8055
      %v8172 = vpack.c.bf16 %v8058, %v8056
      %v8173 = vpack.c.bf16 %v8061, %v8059
      %v8174 = vpack.c.bf16 %v8062, %v8060
      %v8175 = vpack.c.bf16 %v8065, %v8063
      %v8176 = vpack.c.bf16 %v8066, %v8064
      %v8177 = vpack.c.bf16 %v8069, %v8067
      %v8178 = vpack.c.bf16 %v8070, %v8068
      %v8179 = vpack.c.bf16 %v8073, %v8071
      %v8180 = vpack.c.bf16 %v8074, %v8072
      %v8181 = vpack.c.bf16 %v8077, %v8075
      %v8182 = vpack.c.bf16 %v8078, %v8076
      %v8183 = vpack.c.bf16 %v8081, %v8079
      %v8184 = vpack.c.bf16 %v8082, %v8080
      %v8185 = vpack.c.bf16 %v8085, %v8083
      %v8186 = vpack.c.bf16 %v8086, %v8084
      %v8187 = vpack.c.bf16 %v8089, %v8087
      %v8188 = vpack.c.bf16 %v8090, %v8088
      %v8189 = vpack.c.bf16 %v8093, %v8091
      %v8190 = vpack.c.bf16 %v8094, %v8092
      %v8191 = vpack.c.bf16 %v8097, %v8095
      %v8192 = vpack.c.bf16 %v8098, %v8096
      %v8193 = vpack.c.bf16 %v8101, %v8099
      %v8194 = vpack.c.bf16 %v8102, %v8100
      %v8195 = vpack.c.bf16 %v8105, %v8103
      %v8196 = vpack.c.bf16 %v8106, %v8104
      %v8197 = vpack.c.bf16 %v8109, %v8107
      %v8198 = vpack.c.bf16 %v8110, %v8108
      %v8199 = vpack.c.bf16 %v8113, %v8111
      %v8200 = vpack.c.bf16 %v8114, %v8112
      %v8201 = vpack.c.bf16 %v8117, %v8115
      %v8202 = vpack.c.bf16 %v8118, %v8116
      %v8203 = vpack.c.bf16 %v8121, %v8119
      %v8204 = vpack.c.bf16 %v8122, %v8120
      %v8205 = vpack.c.bf16 %v8125, %v8123
      %v8206 = vpack.c.bf16 %v8126, %v8124
      %v8207 = vpack.c.bf16 %v8129, %v8127
      %v8208 = vpack.c.bf16 %v8130, %v8128
      %v8209 = vpack.c.bf16 %v8133, %v8131
      %v8210 = vpack.c.bf16 %v8134, %v8132
      %v8211 = vpack.c.bf16 %v8137, %v8135
      %v8212 = vpack.c.bf16 %v8138, %v8136
      %v8213 = vpack.c.bf16 %v8141, %v8139
      %v8214 = vpack.c.bf16 %v8142, %v8140
      %v8215 = vpack.c.bf16 %v8145, %v8143
      %v8216 = vpack.c.bf16 %v8146, %v8144
      %v8217 = vpack.c.bf16 %v8149, %v8147
      %v8218 = vpack.c.bf16 %v8150, %v8148
      %v8219 = vpack.c.bf16 %v8153, %v8151
      %v8220 = vpack.c.bf16 %v8154, %v8152
      %v8221 = vpack.c.bf16 %v8157, %v8155
      %v8222 = vpack.c.bf16 %v8158, %v8156
      %v8223 = vld [vmem:[%s4] sm:$0xf]
      %v8224 = vld [vmem:[%s4 + $0x4] sm:$0xf]
      %v8225 = vld [vmem:[%s4 + $0x8] sm:$0xf]
      %v8226 = vld [vmem:[%s4 + $0xc] sm:$0xf]
      %v8227 = vld [vmem:[%s4 + $0x10] sm:$0xf]
      %v8228 = vld [vmem:[%s4 + $0x14] sm:$0xf]
      %v8229 = vld [vmem:[%s4 + $0x18] sm:$0xf]
      %v8230 = vld [vmem:[%s4 + $0x1c] sm:$0xf]
      %v8231 = vld [vmem:[%s4 + $0x20] sm:$0xf]
      %v8232 = vld [vmem:[%s4 + $0x24] sm:$0xf]
      %v8233 = vld [vmem:[%s4 + $0x28] sm:$0xf]
      %v8234 = vld [vmem:[%s4 + $0x2c] sm:$0xf]
      %v8235 = vld [vmem:[%s4 + $0x30] sm:$0xf]
      %v8236 = vld [vmem:[%s4 + $0x34] sm:$0xf]
      %v8237 = vld [vmem:[%s4 + $0x38] sm:$0xf]
      %v8238 = vld [vmem:[%s4 + $0x3c] sm:$0xf]
      %v8239 = vld [vmem:[%s4 + $0x40] sm:$0xf]
      %v8240 = vld [vmem:[%s4 + $0x44] sm:$0xf]
      %v8241 = vld [vmem:[%s4 + $0x48] sm:$0xf]
      %v8242 = vld [vmem:[%s4 + $0x4c] sm:$0xf]
      %v8243 = vld [vmem:[%s4 + $0x50] sm:$0xf]
      %v8244 = vld [vmem:[%s4 + $0x54] sm:$0xf]
      %v8245 = vld [vmem:[%s4 + $0x58] sm:$0xf]
      %v8246 = vld [vmem:[%s4 + $0x5c] sm:$0xf]
      %v8247 = vld [vmem:[%s4 + $0x60] sm:$0xf]
      %v8248 = vld [vmem:[%s4 + $0x64] sm:$0xf]
      %v8249 = vld [vmem:[%s4 + $0x68] sm:$0xf]
      %v8250 = vld [vmem:[%s4 + $0x6c] sm:$0xf]
      %v8251 = vld [vmem:[%s4 + $0x70] sm:$0xf]
      %v8252 = vld [vmem:[%s4 + $0x74] sm:$0xf]
      %v8253 = vld [vmem:[%s4 + $0x78] sm:$0xf]
      %v8254 = vld [vmem:[%s4 + $0x7c] sm:$0xf]
      %v8255 = vld [vmem:[%s5] sm:$0x1]
      %v8257 = vlaneseq
      %v8258 = vshrl.u32 %v8257, 7
      %v8259 = vsub.s32 0, %v8258
      %v8260 = vrot.slane %v8255, %v8259
      %v8294 = vunpack.c.l.b16 %v8223
      %v8295 = vunpack.c.l.b16 %v8224
      %v8296 = vunpack.c.l.b16 %v8225
      %v8297 = vunpack.c.l.b16 %v8226
      %v8298 = vunpack.c.l.b16 %v8227
      %v8299 = vunpack.c.l.b16 %v8228
      %v8300 = vunpack.c.l.b16 %v8229
      %v8301 = vunpack.c.l.b16 %v8230
      %v8302 = vunpack.c.l.b16 %v8231
      %v8303 = vunpack.c.l.b16 %v8232
      %v8304 = vunpack.c.l.b16 %v8233
      %v8305 = vunpack.c.l.b16 %v8234
      %v8306 = vunpack.c.l.b16 %v8235
      %v8307 = vunpack.c.l.b16 %v8236
      %v8308 = vunpack.c.l.b16 %v8237
      %v8309 = vunpack.c.l.b16 %v8238
      %v8310 = vunpack.c.l.b16 %v8239
      %v8311 = vunpack.c.l.b16 %v8240
      %v8312 = vunpack.c.l.b16 %v8241
      %v8313 = vunpack.c.l.b16 %v8242
      %v8314 = vunpack.c.l.b16 %v8243
      %v8315 = vunpack.c.l.b16 %v8244
      %v8316 = vunpack.c.l.b16 %v8245
      %v8317 = vunpack.c.l.b16 %v8246
      %v8318 = vunpack.c.l.b16 %v8247
      %v8319 = vunpack.c.l.b16 %v8248
      %v8320 = vunpack.c.l.b16 %v8249
      %v8321 = vunpack.c.l.b16 %v8250
      %v8322 = vunpack.c.l.b16 %v8251
      %v8323 = vunpack.c.l.b16 %v8252
      %v8324 = vunpack.c.l.b16 %v8253
      %v8325 = vunpack.c.l.b16 %v8254
      %v8326 = vpack.c.b16 %v8295, %v8294
      %v8327 = vpack.c.b16 %v8297, %v8296
      %v8328 = vpack.c.b16 %v8299, %v8298
      %v8329 = vpack.c.b16 %v8301, %v8300
      %v8330 = vpack.c.b16 %v8303, %v8302
      %v8331 = vpack.c.b16 %v8305, %v8304
      %v8332 = vpack.c.b16 %v8307, %v8306
      %v8333 = vpack.c.b16 %v8309, %v8308
      %v8334 = vpack.c.b16 %v8311, %v8310
      %v8335 = vpack.c.b16 %v8313, %v8312
      %v8336 = vpack.c.b16 %v8315, %v8314
      %v8337 = vpack.c.b16 %v8317, %v8316
      %v8338 = vpack.c.b16 %v8319, %v8318
      %v8339 = vpack.c.b16 %v8321, %v8320
      %v8340 = vpack.c.b16 %v8323, %v8322
      %v8341 = vpack.c.b16 %v8325, %v8324
      %8358 = vmatprep.subr.bf16.mxu0 0
      %8359 = vmatpush1.bf16.msra.mxu0 %v8333
      %8360 = vmatprep.subr.bf16.mxu0 0
      %8361 = vmatpush1.bf16.msra.mxu0 %v8332
      %8362 = vmatprep.subr.bf16.mxu0 0
      %8363 = vmatpush1.bf16.msra.mxu0 %v8331
      %8364 = vmatprep.subr.bf16.mxu0 0
      %8365 = vmatpush1.bf16.msra.mxu0 %v8330
      %8366 = vmatprep.subr.bf16.mxu0 0
      %8367 = vmatpush1.bf16.msra.mxu0 %v8329
      %8368 = vmatprep.subr.bf16.mxu0 0
      %8369 = vmatpush1.bf16.msra.mxu0 %v8328
      %8370 = vmatprep.subr.bf16.mxu0 0
      %8371 = vmatpush1.bf16.msra.mxu0 %v8327
      %8372 = vmatprep.subr.bf16.mxu0 0
      %8373 = vmatpush1.bf16.msra.mxu0 %v8326
      %8374 = vmatprep.subr.bf16.mxu0 0
      %8375 = vmatpush2.bf16.msra.mxu0 %v8341
      %8376 = vmatprep.subr.bf16.mxu0 0
      %8377 = vmatpush2.bf16.msra.mxu0 %v8340
      %8378 = vmatprep.subr.bf16.mxu0 0
      %8379 = vmatpush2.bf16.msra.mxu0 %v8339
      %8380 = vmatprep.subr.bf16.mxu0 0
      %8381 = vmatpush2.bf16.msra.mxu0 %v8338
      %8382 = vmatprep.subr.bf16.mxu0 0
      %8383 = vmatpush2.bf16.msra.mxu0 %v8337
      %8384 = vmatprep.subr.bf16.mxu0 0
      %8385 = vmatpush2.bf16.msra.mxu0 %v8336
      %8386 = vmatprep.subr.bf16.mxu0 0
      %8387 = vmatpush2.bf16.msra.mxu0 %v8335
      %8388 = vmatprep.subr.bf16.mxu0 0
      %8389 = vmatpush2.bf16.msra.mxu0 %v8334
      %8390 = vmatprep.mubr.bf16.mxu0 %v8160
      %8391 = vmatmul.mubr.bf16.gmra.mxu0 %v8159
      %v8392 = vpop.f32.mrf.mxu0
      %v8393 = vadd.f32 %v8260, %v8392
      %v8394 = vpop.f32.mrf.mxu0
      %v8395 = vpop.f32.mrf.mxu0
      %v8396 = vadd.f32 %v8260, %v8395
      %v8397 = vpop.f32.mrf.mxu0
      %8398 = vmatprep.mubr.bf16.mxu0 %v8162
      %8399 = vmatmul.mubr.bf16.gmra.mxu0 %v8161
      %v8400 = vpop.f32.mrf.mxu0
      %v8401 = vadd.f32 %v8260, %v8400
      %v8402 = vpop.f32.mrf.mxu0
      %v8403 = vpop.f32.mrf.mxu0
      %v8404 = vadd.f32 %v8260, %v8403
      %v8405 = vpop.f32.mrf.mxu0
      %8406 = vmatprep.mubr.bf16.mxu0 %v8164
      %8407 = vmatmul.mubr.bf16.gmra.mxu0 %v8163
      %v8408 = vpop.f32.mrf.mxu0
      %v8409 = vadd.f32 %v8260, %v8408
      %v8410 = vpop.f32.mrf.mxu0
      %v8411 = vpop.f32.mrf.mxu0
      %v8412 = vadd.f32 %v8260, %v8411
      %v8413 = vpop.f32.mrf.mxu0
      %8414 = vmatprep.mubr.bf16.mxu0 %v8166
      %8415 = vmatmul.mubr.bf16.gmra.mxu0 %v8165
      %v8416 = vpop.f32.mrf.mxu0
      %v8417 = vadd.f32 %v8260, %v8416
      %v8418 = vpop.f32.mrf.mxu0
      %v8419 = vpop.f32.mrf.mxu0
      %v8420 = vadd.f32 %v8260, %v8419
      %v8421 = vpop.f32.mrf.mxu0
      %8422 = vmatprep.mubr.bf16.mxu0 %v8168
      %8423 = vmatmul.mubr.bf16.gmra.mxu0 %v8167
      %v8424 = vpop.f32.mrf.mxu0
      %v8425 = vadd.f32 %v8260, %v8424
      %v8426 = vpop.f32.mrf.mxu0
      %v8427 = vpop.f32.mrf.mxu0
      %v8428 = vadd.f32 %v8260, %v8427
      %v8429 = vpop.f32.mrf.mxu0
      %8430 = vmatprep.mubr.bf16.mxu0 %v8170
      %8431 = vmatmul.mubr.bf16.gmra.mxu0 %v8169
      %v8432 = vpop.f32.mrf.mxu0
      %v8433 = vadd.f32 %v8260, %v8432
      %v8434 = vpop.f32.mrf.mxu0
      %v8435 = vpop.f32.mrf.mxu0
      %v8436 = vadd.f32 %v8260, %v8435
      %v8437 = vpop.f32.mrf.mxu0
      %8438 = vmatprep.mubr.bf16.mxu0 %v8172
      %8439 = vmatmul.mubr.bf16.gmra.mxu0 %v8171
      %v8440 = vpop.f32.mrf.mxu0
      %v8441 = vadd.f32 %v8260, %v8440
      %v8442 = vpop.f32.mrf.mxu0
      %v8443 = vpop.f32.mrf.mxu0
      %v8444 = vadd.f32 %v8260, %v8443
      %v8445 = vpop.f32.mrf.mxu0
      %8446 = vmatprep.mubr.bf16.mxu0 %v8174
      %8447 = vmatmul.mubr.bf16.gmra.mxu0 %v8173
      %v8448 = vpop.f32.mrf.mxu0
      %v8449 = vadd.f32 %v8260, %v8448
      %v8450 = vpop.f32.mrf.mxu0
      %v8451 = vpop.f32.mrf.mxu0
      %v8452 = vadd.f32 %v8260, %v8451
      %v8453 = vpop.f32.mrf.mxu0
      %8454 = vmatprep.mubr.bf16.mxu0 %v8176
      %8455 = vmatmul.mubr.bf16.gmra.mxu0 %v8175
      %v8456 = vpop.f32.mrf.mxu0
      %v8457 = vadd.f32 %v8260, %v8456
      %v8458 = vpop.f32.mrf.mxu0
      %v8459 = vpop.f32.mrf.mxu0
      %v8460 = vadd.f32 %v8260, %v8459
      %v8461 = vpop.f32.mrf.mxu0
      %8462 = vmatprep.mubr.bf16.mxu0 %v8178
      %8463 = vmatmul.mubr.bf16.gmra.mxu0 %v8177
      %v8464 = vpop.f32.mrf.mxu0
      %v8465 = vadd.f32 %v8260, %v8464
      %v8466 = vpop.f32.mrf.mxu0
      %v8467 = vpop.f32.mrf.mxu0
      %v8468 = vadd.f32 %v8260, %v8467
      %v8469 = vpop.f32.mrf.mxu0
      %8470 = vmatprep.mubr.bf16.mxu0 %v8180
      %8471 = vmatmul.mubr.bf16.gmra.mxu0 %v8179
      %v8472 = vpop.f32.mrf.mxu0
      %v8473 = vadd.f32 %v8260, %v8472
      %v8474 = vpop.f32.mrf.mxu0
      %v8475 = vpop.f32.mrf.mxu0
      %v8476 = vadd.f32 %v8260, %v8475
      %v8477 = vpop.f32.mrf.mxu0
      %8478 = vmatprep.mubr.bf16.mxu0 %v8182
      %8479 = vmatmul.mubr.bf16.gmra.mxu0 %v8181
      %v8480 = vpop.f32.mrf.mxu0
      %v8481 = vadd.f32 %v8260, %v8480
      %v8482 = vpop.f32.mrf.mxu0
      %v8483 = vpop.f32.mrf.mxu0
      %v8484 = vadd.f32 %v8260, %v8483
      %v8485 = vpop.f32.mrf.mxu0
      %8486 = vmatprep.mubr.bf16.mxu0 %v8184
      %8487 = vmatmul.mubr.bf16.gmra.mxu0 %v8183
      %v8488 = vpop.f32.mrf.mxu0
      %v8489 = vadd.f32 %v8260, %v8488
      %v8490 = vpop.f32.mrf.mxu0
      %v8491 = vpop.f32.mrf.mxu0
      %v8492 = vadd.f32 %v8260, %v8491
      %v8493 = vpop.f32.mrf.mxu0
      %8494 = vmatprep.mubr.bf16.mxu0 %v8186
      %8495 = vmatmul.mubr.bf16.gmra.mxu0 %v8185
      %v8496 = vpop.f32.mrf.mxu0
      %v8497 = vadd.f32 %v8260, %v8496
      %v8498 = vpop.f32.mrf.mxu0
      %v8499 = vpop.f32.mrf.mxu0
      %v8500 = vadd.f32 %v8260, %v8499
      %v8501 = vpop.f32.mrf.mxu0
      %8502 = vmatprep.mubr.bf16.mxu0 %v8188
      %8503 = vmatmul.mubr.bf16.gmra.mxu0 %v8187
      %v8504 = vpop.f32.mrf.mxu0
      %v8505 = vadd.f32 %v8260, %v8504
      %v8506 = vpop.f32.mrf.mxu0
      %v8507 = vpop.f32.mrf.mxu0
      %v8508 = vadd.f32 %v8260, %v8507
      %v8509 = vpop.f32.mrf.mxu0
      %8510 = vmatprep.mubr.bf16.mxu0 %v8190
      %8511 = vmatmul.mubr.bf16.gmra.mxu0 %v8189
      %v8512 = vpop.f32.mrf.mxu0
      %v8513 = vadd.f32 %v8260, %v8512
      %v8514 = vpop.f32.mrf.mxu0
      %v8515 = vpop.f32.mrf.mxu0
      %v8516 = vadd.f32 %v8260, %v8515
      %v8517 = vpop.f32.mrf.mxu0
      %8518 = vmatprep.mubr.bf16.mxu0 %v8192
      %8519 = vmatmul.mubr.bf16.gmra.mxu0 %v8191
      %v8520 = vpop.f32.mrf.mxu0
      %v8521 = vadd.f32 %v8260, %v8520
      %v8522 = vpop.f32.mrf.mxu0
      %v8523 = vpop.f32.mrf.mxu0
      %v8524 = vadd.f32 %v8260, %v8523
      %v8525 = vpop.f32.mrf.mxu0
      %8526 = vmatprep.mubr.bf16.mxu0 %v8194
      %8527 = vmatmul.mubr.bf16.gmra.mxu0 %v8193
      %v8528 = vpop.f32.mrf.mxu0
      %v8529 = vadd.f32 %v8260, %v8528
      %v8530 = vpop.f32.mrf.mxu0
      %v8531 = vpop.f32.mrf.mxu0
      %v8532 = vadd.f32 %v8260, %v8531
      %v8533 = vpop.f32.mrf.mxu0
      %8534 = vmatprep.mubr.bf16.mxu0 %v8196
      %8535 = vmatmul.mubr.bf16.gmra.mxu0 %v8195
      %v8536 = vpop.f32.mrf.mxu0
      %v8537 = vadd.f32 %v8260, %v8536
      %v8538 = vpop.f32.mrf.mxu0
      %v8539 = vpop.f32.mrf.mxu0
      %v8540 = vadd.f32 %v8260, %v8539
      %v8541 = vpop.f32.mrf.mxu0
      %8542 = vmatprep.mubr.bf16.mxu0 %v8198
      %8543 = vmatmul.mubr.bf16.gmra.mxu0 %v8197
      %v8544 = vpop.f32.mrf.mxu0
      %v8545 = vadd.f32 %v8260, %v8544
      %v8546 = vpop.f32.mrf.mxu0
      %v8547 = vpop.f32.mrf.mxu0
      %v8548 = vadd.f32 %v8260, %v8547
      %v8549 = vpop.f32.mrf.mxu0
      %8550 = vmatprep.mubr.bf16.mxu0 %v8200
      %8551 = vmatmul.mubr.bf16.gmra.mxu0 %v8199
      %v8552 = vpop.f32.mrf.mxu0
      %v8553 = vadd.f32 %v8260, %v8552
      %v8554 = vpop.f32.mrf.mxu0
      %v8555 = vpop.f32.mrf.mxu0
      %v8556 = vadd.f32 %v8260, %v8555
      %v8557 = vpop.f32.mrf.mxu0
      %8558 = vmatprep.mubr.bf16.mxu0 %v8202
      %8559 = vmatmul.mubr.bf16.gmra.mxu0 %v8201
      %v8560 = vpop.f32.mrf.mxu0
      %v8561 = vadd.f32 %v8260, %v8560
      %v8562 = vpop.f32.mrf.mxu0
      %v8563 = vpop.f32.mrf.mxu0
      %v8564 = vadd.f32 %v8260, %v8563
      %v8565 = vpop.f32.mrf.mxu0
      %8566 = vmatprep.mubr.bf16.mxu0 %v8204
      %8567 = vmatmul.mubr.bf16.gmra.mxu0 %v8203
      %v8568 = vpop.f32.mrf.mxu0
      %v8569 = vadd.f32 %v8260, %v8568
      %v8570 = vpop.f32.mrf.mxu0
      %v8571 = vpop.f32.mrf.mxu0
      %v8572 = vadd.f32 %v8260, %v8571
      %v8573 = vpop.f32.mrf.mxu0
      %8574 = vmatprep.mubr.bf16.mxu0 %v8206
      %8575 = vmatmul.mubr.bf16.gmra.mxu0 %v8205
      %v8576 = vpop.f32.mrf.mxu0
      %v8577 = vadd.f32 %v8260, %v8576
      %v8578 = vpop.f32.mrf.mxu0
      %v8579 = vpop.f32.mrf.mxu0
      %v8580 = vadd.f32 %v8260, %v8579
      %v8581 = vpop.f32.mrf.mxu0
      %8582 = vmatprep.mubr.bf16.mxu0 %v8208
      %8583 = vmatmul.mubr.bf16.gmra.mxu0 %v8207
      %v8584 = vpop.f32.mrf.mxu0
      %v8585 = vadd.f32 %v8260, %v8584
      %v8586 = vpop.f32.mrf.mxu0
      %v8587 = vpop.f32.mrf.mxu0
      %v8588 = vadd.f32 %v8260, %v8587
      %v8589 = vpop.f32.mrf.mxu0
      %8590 = vmatprep.mubr.bf16.mxu0 %v8210
      %8591 = vmatmul.mubr.bf16.gmra.mxu0 %v8209
      %v8592 = vpop.f32.mrf.mxu0
      %v8593 = vadd.f32 %v8260, %v8592
      %v8594 = vpop.f32.mrf.mxu0
      %v8595 = vpop.f32.mrf.mxu0
      %v8596 = vadd.f32 %v8260, %v8595
      %v8597 = vpop.f32.mrf.mxu0
      %8598 = vmatprep.mubr.bf16.mxu0 %v8212
      %8599 = vmatmul.mubr.bf16.gmra.mxu0 %v8211
      %v8600 = vpop.f32.mrf.mxu0
      %v8601 = vadd.f32 %v8260, %v8600
      %v8602 = vpop.f32.mrf.mxu0
      %v8603 = vpop.f32.mrf.mxu0
      %v8604 = vadd.f32 %v8260, %v8603
      %v8605 = vpop.f32.mrf.mxu0
      %8606 = vmatprep.mubr.bf16.mxu0 %v8214
      %8607 = vmatmul.mubr.bf16.gmra.mxu0 %v8213
      %v8608 = vpop.f32.mrf.mxu0
      %v8609 = vadd.f32 %v8260, %v8608
      %v8610 = vpop.f32.mrf.mxu0
      %v8611 = vpop.f32.mrf.mxu0
      %v8612 = vadd.f32 %v8260, %v8611
      %v8613 = vpop.f32.mrf.mxu0
      %8614 = vmatprep.mubr.bf16.mxu0 %v8216
      %8615 = vmatmul.mubr.bf16.gmra.mxu0 %v8215
      %v8616 = vpop.f32.mrf.mxu0
      %v8617 = vadd.f32 %v8260, %v8616
      %v8618 = vpop.f32.mrf.mxu0
      %v8619 = vpop.f32.mrf.mxu0
      %v8620 = vadd.f32 %v8260, %v8619
      %v8621 = vpop.f32.mrf.mxu0
      %8622 = vmatprep.mubr.bf16.mxu0 %v8218
      %8623 = vmatmul.mubr.bf16.gmra.mxu0 %v8217
      %v8624 = vpop.f32.mrf.mxu0
      %v8625 = vadd.f32 %v8260, %v8624
      %v8626 = vpop.f32.mrf.mxu0
      %v8627 = vpop.f32.mrf.mxu0
      %v8628 = vadd.f32 %v8260, %v8627
      %v8629 = vpop.f32.mrf.mxu0
      %8630 = vmatprep.mubr.bf16.mxu0 %v8220
      %8631 = vmatmul.mubr.bf16.gmra.mxu0 %v8219
      %v8632 = vpop.f32.mrf.mxu0
      %v8633 = vadd.f32 %v8260, %v8632
      %v8634 = vpop.f32.mrf.mxu0
      %v8635 = vpop.f32.mrf.mxu0
      %v8636 = vadd.f32 %v8260, %v8635
      %v8637 = vpop.f32.mrf.mxu0
      %8638 = vmatprep.mubr.bf16.mxu0 %v8222
      %8639 = vmatmul.mubr.bf16.gmra.mxu0 %v8221
      %v8640 = vpop.f32.mrf.mxu0
      %v8641 = vadd.f32 %v8260, %v8640
      %v8642 = vpop.f32.mrf.mxu0
      %v8643 = vpop.f32.mrf.mxu0
      %v8644 = vadd.f32 %v8260, %v8643
      %v8645 = vpop.f32.mrf.mxu0
      %8646 = vdwg.mxu0
      %vm8647 = vcmask 31744
      %8648 = vst.msk [vmem:[%s253] sm:$0xff] %vm8647, %v8393
      %8649 = vst.msk [vmem:[%s253 + $0x8] sm:$0xff] %vm8647, %v8396
      %8650 = vst.msk [vmem:[%s253 + $0x10] sm:$0xff] %vm8647, %v8401
      %8651 = vst.msk [vmem:[%s253 + $0x18] sm:$0xff] %vm8647, %v8404
      %8652 = vst.msk [vmem:[%s253 + $0x20] sm:$0xff] %vm8647, %v8409
      %8653 = vst.msk [vmem:[%s253 + $0x28] sm:$0xff] %vm8647, %v8412
      %8654 = vst.msk [vmem:[%s253 + $0x30] sm:$0xff] %vm8647, %v8417
      %8655 = vst.msk [vmem:[%s253 + $0x38] sm:$0xff] %vm8647, %v8420
      %8656 = vst.msk [vmem:[%s253 + $0x40] sm:$0xff] %vm8647, %v8425
      %8657 = vst.msk [vmem:[%s253 + $0x48] sm:$0xff] %vm8647, %v8428
      %8658 = vst.msk [vmem:[%s253 + $0x50] sm:$0xff] %vm8647, %v8433
      %8659 = vst.msk [vmem:[%s253 + $0x58] sm:$0xff] %vm8647, %v8436
      %8660 = vst.msk [vmem:[%s253 + $0x60] sm:$0xff] %vm8647, %v8441
      %8661 = vst.msk [vmem:[%s253 + $0x68] sm:$0xff] %vm8647, %v8444
      %8662 = vst.msk [vmem:[%s253 + $0x70] sm:$0xff] %vm8647, %v8449
      %8663 = vst.msk [vmem:[%s253 + $0x78] sm:$0xff] %vm8647, %v8452
      %8664 = vst.msk [vmem:[%s253 + $0x80] sm:$0xff] %vm8647, %v8457
      %8665 = vst.msk [vmem:[%s253 + $0x88] sm:$0xff] %vm8647, %v8460
      %8666 = vst.msk [vmem:[%s253 + $0x90] sm:$0xff] %vm8647, %v8465
      %8667 = vst.msk [vmem:[%s253 + $0x98] sm:$0xff] %vm8647, %v8468
      %8668 = vst.msk [vmem:[%s253 + $0xa0] sm:$0xff] %vm8647, %v8473
      %8669 = vst.msk [vmem:[%s253 + $0xa8] sm:$0xff] %vm8647, %v8476
      %8670 = vst.msk [vmem:[%s253 + $0xb0] sm:$0xff] %vm8647, %v8481
      %8671 = vst.msk [vmem:[%s253 + $0xb8] sm:$0xff] %vm8647, %v8484
      %8672 = vst.msk [vmem:[%s253 + $0xc0] sm:$0xff] %vm8647, %v8489
      %8673 = vst.msk [vmem:[%s253 + $0xc8] sm:$0xff] %vm8647, %v8492
      %8674 = vst.msk [vmem:[%s253 + $0xd0] sm:$0xff] %vm8647, %v8497
      %8675 = vst.msk [vmem:[%s253 + $0xd8] sm:$0xff] %vm8647, %v8500
      %8676 = vst.msk [vmem:[%s253 + $0xe0] sm:$0xff] %vm8647, %v8505
      %8677 = vst.msk [vmem:[%s253 + $0xe8] sm:$0xff] %vm8647, %v8508
      %8678 = vst.msk [vmem:[%s253 + $0xf0] sm:$0xff] %vm8647, %v8513
      %8679 = vst.msk [vmem:[%s253 + $0xf8] sm:$0xff] %vm8647, %v8516
      %8680 = vst.msk [vmem:[%s253 + $0x100] sm:$0xff] %vm8647, %v8521
      %8681 = vst.msk [vmem:[%s253 + $0x108] sm:$0xff] %vm8647, %v8524
      %8682 = vst.msk [vmem:[%s253 + $0x110] sm:$0xff] %vm8647, %v8529
      %8683 = vst.msk [vmem:[%s253 + $0x118] sm:$0xff] %vm8647, %v8532
      %8684 = vst.msk [vmem:[%s253 + $0x120] sm:$0xff] %vm8647, %v8537
      %8685 = vst.msk [vmem:[%s253 + $0x128] sm:$0xff] %vm8647, %v8540
      %8686 = vst.msk [vmem:[%s253 + $0x130] sm:$0xff] %vm8647, %v8545
      %8687 = vst.msk [vmem:[%s253 + $0x138] sm:$0xff] %vm8647, %v8548
      %8688 = vst.msk [vmem:[%s253 + $0x140] sm:$0xff] %vm8647, %v8553
      %8689 = vst.msk [vmem:[%s253 + $0x148] sm:$0xff] %vm8647, %v8556
      %8690 = vst.msk [vmem:[%s253 + $0x150] sm:$0xff] %vm8647, %v8561
      %8691 = vst.msk [vmem:[%s253 + $0x158] sm:$0xff] %vm8647, %v8564
      %8692 = vst.msk [vmem:[%s253 + $0x160] sm:$0xff] %vm8647, %v8569
      %8693 = vst.msk [vmem:[%s253 + $0x168] sm:$0xff] %vm8647, %v8572
      %8694 = vst.msk [vmem:[%s253 + $0x170] sm:$0xff] %vm8647, %v8577
      %8695 = vst.msk [vmem:[%s253 + $0x178] sm:$0xff] %vm8647, %v8580
      %8696 = vst.msk [vmem:[%s253 + $0x180] sm:$0xff] %vm8647, %v8585
      %8697 = vst.msk [vmem:[%s253 + $0x188] sm:$0xff] %vm8647, %v8588
      %8698 = vst.msk [vmem:[%s253 + $0x190] sm:$0xff] %vm8647, %v8593
      %8699 = vst.msk [vmem:[%s253 + $0x198] sm:$0xff] %vm8647, %v8596
      %8700 = vst.msk [vmem:[%s253 + $0x1a0] sm:$0xff] %vm8647, %v8601
      %8701 = vst.msk [vmem:[%s253 + $0x1a8] sm:$0xff] %vm8647, %v8604
      %8702 = vst.msk [vmem:[%s253 + $0x1b0] sm:$0xff] %vm8647, %v8609
      %8703 = vst.msk [vmem:[%s253 + $0x1b8] sm:$0xff] %vm8647, %v8612
      %8704 = vst.msk [vmem:[%s253 + $0x1c0] sm:$0xff] %vm8647, %v8617
      %8705 = vst.msk [vmem:[%s253 + $0x1c8] sm:$0xff] %vm8647, %v8620
      %8706 = vst.msk [vmem:[%s253 + $0x1d0] sm:$0xff] %vm8647, %v8625
      %8707 = vst.msk [vmem:[%s253 + $0x1d8] sm:$0xff] %vm8647, %v8628
      %8708 = vst.msk [vmem:[%s253 + $0x1e0] sm:$0xff] %vm8647, %v8633
      %8709 = vst.msk [vmem:[%s253 + $0x1e8] sm:$0xff] %vm8647, %v8636
      %8710 = vst.msk [vmem:[%s253 + $0x1f0] sm:$0xff] %vm8647, %v8641
      %8711 = vst.msk [vmem:[%s253 + $0x1f8] sm:$0xff] %vm8647, %v8644
      %s8712 = smul.u32 64, %s17
      %p8713 = scmp.lt.s32.totalorder %s8712, 127
      %s8714 = scalar_select %p8713, %s8712, 127
      %s8715 = smul.addr %s8714, 8
      %s8716 = scalar_lea.vmem %s6, %s8715
      // Predicated region
      $region45: #{nerf_forward.1} parent=43 // pred_check
        %p8717 = pneg %p166
      $region46: #{nerf_forward.1} parent=43 // pred_check_branch
        %8719 = sbr.rel (%p8717) target = $region48
      $region47: #{nerf_forward.1} parent=43 // pred_region
        %s8720 = smul.u32 64, %s17
      $region48: #{nerf_forward.1} parent=43 // pred_fallthru
        _
    $region44: #{nerf_forward.1} parent=5 // pred_fallthru
      _
    %p8721 = scmp.le.s32.totalorder 2, %s12
    // Predicated region
    $region49: #{nerf_forward.1} parent=5 // pred_check
      %p8722 = pneg %p8721
    $region50: #{nerf_forward.1} parent=5 // pred_check_branch
      %8724 = sbr.rel (%p8722) target = $region52
    $region51: #{nerf_forward.1} parent=5 // pred_region
      %s8725 = ssub.s32 %s12, 2
      // Predicated region
      $region53: #{nerf_forward.1} parent=51 // pred_check
        %p8726 = pneg %p172
      $region54: #{nerf_forward.1} parent=51 // pred_check_branch
        %8728 = sbr.rel (%p8726) target = $region56
      $region55: #{nerf_forward.1} parent=51 // pred_region
        %s8729 = smul.u32 64, %s18
        %p8730 = scmp.lt.s32.totalorder %s8729, 127
        %s8731 = scalar_select %p8730, %s8729, 127
        %s8732 = smul.addr %s8731, 8
        %s8733 = scalar_lea.vmem %s6, %s8732
      $region56: #{nerf_forward.1} parent=51 // pred_fallthru
        _
    $region52: #{nerf_forward.1} parent=5 // pred_fallthru
      _
  $region6: #{nerf_forward.1} parent=0 // loop_footer
    %s16 = sadd.s32 1, %s12
  $region7: #{nerf_forward.1} parent=0 // loop_footer_branch
    %11 = sbr.rel target = $region3
  $region8: #{nerf_forward.1} parent=0 // loop_exit
    _

</llo_original>
